<compile_context>
chip_gen: v7x
topology: tpu7x:2x2x1
jax: 0.10.0
libtpu: 0.0.40
codegen_flags: <defaults>
</compile_context>

<pallas_src>
import functools

import jax
import jax.numpy as jnp
from jax import lax
from jax.experimental import pallas as pl
from jax.experimental.pallas import tpu as pltpu

# ----- synthetic, small hyper-parameters -----
IN_C = 8        # in_c
MD_D = 32       # D  (args.MD_D)
N_SLI = 3       # n
MD_R = 16       # NMF rank R
MD_S = 1        # NMF S (kernel assumes S == 1)
NMF_STEPS = 6   # local-inference steps
INV_T = 1.0     # softmax temperature for coef init
BN_EPS = 1e-5
NMF_EPS = 1e-6


def _hamburger_kernel(x_ref, wl_ref, bl_ref, wu_ref, shift_ref, bases0t_ref,
                      o_ref, y_ref, *, hw, n_sli, nmf_steps, inv_t):
    """One grid step = one group of `n_sli` images.

    x_ref      : (n, Cin, HW)  input slab (channels on sublane, spatial on lane)
    wl_ref     : (D, Cin)      lower 1x1 conv weight
    bl_ref     : (D, 1)        lower 1x1 conv bias
    wu_ref     : (Cin, D)      upper 1x1 conv weight with BN scale folded in
    shift_ref  : (Cin, 1)      folded BN shift
    bases0t_ref: (1, R, D)     initial NMF bases (transposed) for this group
    o_ref      : (n, Cin, HW)  output slab
    y_ref      : VMEM (D, n*HW) lower-bread activations (the NMF "x")
    """
    nt = (((1,), (1,)), ((), ()))   # contract last dims of both: A @ B^T

    # ---------------- lower bread: 1x1 conv + ReLU ----------------
    wl = wl_ref[...]
    bl = bl_ref[...]
    for j in range(n_sli):                                      # static, n=3
        yj = jnp.dot(wl, x_ref[j], preferred_element_type=jnp.float32)
        y_ref[:, j * hw:(j + 1) * hw] = jnp.maximum(yj + bl, 0.0)   # (D, HW)

    basesT = bases0t_ref[0]                                     # (R, D)

    # ------ coef init: softmax over R of inv_t * x^T @ bases, kept as (R, N) ------
    logits = inv_t * jnp.dot(basesT, y_ref[...],
                             preferred_element_type=jnp.float32)    # (R, N)
    logits = logits - jnp.max(logits, axis=0, keepdims=True)
    e = jnp.exp(logits)
    coefT = e * pl.reciprocal(jnp.sum(e, axis=0, keepdims=True), approx=True)

    def update_coef(basesT, coefT):
        y = y_ref[...]
        # num^T = bases^T @ x                                   (R, N), NN matmul
        numT = jnp.dot(basesT, y, preferred_element_type=jnp.float32)
        # den^T = (bases^T bases) @ coef^T  (Gram first -> (R,R), symmetric)
        gram = lax.dot_general(basesT, basesT, nt,
                               preferred_element_type=jnp.float32)   # (R, R)
        denT = jnp.dot(gram, coefT, preferred_element_type=jnp.float32)  # (R, N)
        return coefT * numT * pl.reciprocal(denT + NMF_EPS, approx=True)

    # ------------- multiplicative updates (fully unrolled, static trip) -------
    for _ in range(nmf_steps):
        coefT = update_coef(basesT, coefT)
        y = y_ref[...]
        # num^T = (x @ coef)^T = coef^T ·contract_N· x^T        (R, D), NT matmul
        numB = lax.dot_general(coefT, y, nt,
                               preferred_element_type=jnp.float32)   # (R, D)
        # den^T = (coef^T coef) @ bases^T  (Gram first, symmetric)
        ctc = lax.dot_general(coefT, coefT, nt,
                              preferred_element_type=jnp.float32)    # (R, R)
        denB = jnp.dot(ctc, basesT, preferred_element_type=jnp.float32)  # (R, D)
        basesT = basesT * numB * pl.reciprocal(denB + NMF_EPS, approx=True)

    coefT = update_coef(basesT, coefT)    # compute_coef (no-grad path in torch)

    # z = bases @ coef^T : (D, N) — one tiny (R, D) transpose, then NN matmul.
    bases = basesT.T                                              # (D, R)
    z = jnp.dot(bases, coefT, preferred_element_type=jnp.float32)  # (D, N)

    # -------- upper bread (BN folded into wu/shift) + residual + ReLU --------
    wu = wu_ref[...]
    shift = shift_ref[...]
    o_full = jnp.dot(wu, z, preferred_element_type=jnp.float32)    # (Cin, N)
    for j in range(n_sli):
        o_ref[j] = jnp.maximum(o_full[:, j * hw:(j + 1) * hw] + shift + x_ref[j],
                               0.0)


# ------------- parameter init (deterministic, matches _init_weight) -------------
def init_params(key):
    k1, k2, k3, k4 = jax.random.split(key, 4)
    # Conv2d weights ~ Normal(0, sqrt(2 / (kh*kw*out_channels)))
    w_lower = jax.random.normal(k1, (MD_D, IN_C), jnp.float32) * jnp.sqrt(2.0 / MD_D)
    b_lower = jax.random.uniform(k2, (MD_D, 1), jnp.float32,
                                 -1.0 / jnp.sqrt(IN_C), 1.0 / jnp.sqrt(IN_C))
    w_upper = jax.random.normal(k3, (IN_C, MD_D), jnp.float32) * jnp.sqrt(2.0 / IN_C)
    # BatchNorm (eval mode): gamma=1, beta=0, running_mean=0, running_var=1
    gamma = jnp.ones((IN_C,), jnp.float32)
    beta = jnp.zeros((IN_C,), jnp.float32)
    r_mean = jnp.zeros((IN_C,), jnp.float32)
    r_var = jnp.ones((IN_C,), jnp.float32)
    return dict(w_lower=w_lower, b_lower=b_lower, w_upper=w_upper,
                gamma=gamma, beta=beta, r_mean=r_mean, r_var=r_var, bases_key=k4)


# ---------------- full forward ----------------
def hamburger_v1_forward(x, params):
    b, cin, h, w = x.shape
    assert b % N_SLI == 0, "batch must be a multiple of n"
    bh = b // N_SLI
    hw = h * w
    d = params["w_lower"].shape[0]
    r = MD_R

    # NCHW is already channels-on-sublane / spatial-on-lane: just merge H and W.
    x3 = x.reshape(b, cin, hw)

    # TODO(synk): AIM's exact 5-D reshape convention inside its NMF ham is not
    # available here; approximated as joint factorization over N = n*H*W (S=1).
    bases0 = jax.random.uniform(params["bases_key"], (bh * MD_S, d, r), jnp.float32)
    bases0 = bases0 / (jnp.linalg.norm(bases0, axis=1, keepdims=True) + 1e-12)
    bases0t = jnp.swapaxes(bases0, 1, 2)                                  # (bh, R, D)

    # Fold eval-mode BatchNorm into the upper conv weight and a shift.
    scale = params["gamma"] / jnp.sqrt(params["r_var"] + BN_EPS)          # (Cin,)
    wu = params["w_upper"] * scale[:, None]                               # (Cin, D)
    shift = (params["beta"] - params["r_mean"] * scale)[:, None]          # (Cin, 1)

    kernel = functools.partial(_hamburger_kernel, hw=hw, n_sli=N_SLI,
                               nmf_steps=NMF_STEPS, inv_t=INV_T)

    out3 = pl.pallas_call(
        kernel,
        out_shape=jax.ShapeDtypeStruct((b, cin, hw), jnp.float32),
        grid=(bh,),
        in_specs=[
            pl.BlockSpec((N_SLI, cin, hw), lambda g: (g, 0, 0)),   # x slab (group g)
            pl.BlockSpec((d, cin), lambda g: (0, 0)),              # w_lower
            pl.BlockSpec((d, 1), lambda g: (0, 0)),                # b_lower
            pl.BlockSpec((cin, d), lambda g: (0, 0)),              # w_upper (BN-folded)
            pl.BlockSpec((cin, 1), lambda g: (0, 0)),              # BN shift
            pl.BlockSpec((1, r, d), lambda g: (g, 0, 0)),          # bases0^T (group g)
        ],
        out_specs=pl.BlockSpec((N_SLI, cin, hw), lambda g: (g, 0, 0)),
        scratch_shapes=[
            pltpu.VMEM((d, N_SLI * hw), jnp.float32),   # y (D, N) lower-bread activations
        ],
        compiler_params=pltpu.CompilerParams(
            # groups are fully independent -> shard across v7x's 2 TensorCores
            dimension_semantics=("parallel",),
        ),
    )(x3, params["w_lower"], params["b_lower"], wu, shift, bases0t)

    return out3.reshape(b, cin, h, w)


if __name__ == "__main__":
    key = jax.random.PRNGKey(0)
    kx, kp = jax.random.split(key)
    params = init_params(kp)

    # batch multiple of n=3; H*W = 256 (multiple of 128 -> lane-dense loads/stores)
    B, H, W = 6, 16, 16
    x = jax.random.normal(kx, (B, IN_C, H, W), jnp.float32)

    fwd = jax.jit(functools.partial(hamburger_v1_forward, params=params))
    out = fwd(x)
    jax.block_until_ready(out)

    assert out.shape == (B, IN_C, H, W)
    assert bool(jnp.all(jnp.isfinite(out)))
    assert bool(jnp.all(out >= 0.0))   # final ReLU
    print("KERNEL_OK")
</pallas_src>

<mosaic_0001>
module attributes {stable_mosaic.version = 11 : i64} {
  func.func @_hamburger_kernel(%arg0: i32, %arg1: memref<3x8x256xf32, #tpu.memory_space<vmem>>, %arg2: memref<32x8xf32, #tpu.memory_space<vmem>>, %arg3: memref<32x1xf32, #tpu.memory_space<vmem>>, %arg4: memref<8x32xf32, #tpu.memory_space<vmem>>, %arg5: memref<8x1xf32, #tpu.memory_space<vmem>>, %arg6: memref<1x16x32xf32, #tpu.memory_space<vmem>>, %arg7: memref<3x8x256xf32, #tpu.memory_space<vmem>>, %arg8: memref<32x768xf32, #tpu.memory_space<vmem>>) attributes {dimension_semantics = [#tpu.dimension_semantics<parallel>], iteration_bounds = array<i64: 2>, scalar_prefetch = 0 : i64, scratch_operands = 1 : i64, tpu.core_type = #tpu.core_type<tc>, window_params = [{transform_indices = @transform_0, window_bounds = array<i64: 3, 8, 256>}, {pipeline_mode = #tpu.pipeline_mode<synchronous>, transform_indices = @transform_1, window_bounds = array<i64: 32, 8>}, {pipeline_mode = #tpu.pipeline_mode<synchronous>, transform_indices = @transform_2, window_bounds = array<i64: 32, 1>}, {pipeline_mode = #tpu.pipeline_mode<synchronous>, transform_indices = @transform_3, window_bounds = array<i64: 8, 32>}, {pipeline_mode = #tpu.pipeline_mode<synchronous>, transform_indices = @transform_4, window_bounds = array<i64: 8, 1>}, {transform_indices = @transform_5, window_bounds = array<i64: 1, 16, 32>}, {transform_indices = @transform_6, window_bounds = array<i64: 3, 8, 256>}]} {
    %c0 = arith.constant 0 : index
    %c0_0 = arith.constant 0 : index
    %0 = vector.load %arg2[%c0, %c0_0] : memref<32x8xf32, #tpu.memory_space<vmem>>, vector<32x8xf32>
    %c0_1 = arith.constant 0 : index
    %c0_2 = arith.constant 0 : index
    %1 = vector.load %arg3[%c0_1, %c0_2] : memref<32x1xf32, #tpu.memory_space<vmem>>, vector<32x1xf32>
    %c0_3 = arith.constant 0 : index
    %c0_4 = arith.constant 0 : index
    %c0_5 = arith.constant 0 : index
    %2 = vector.load %arg1[%c0_3, %c0_4, %c0_5] : memref<3x8x256xf32, #tpu.memory_space<vmem>>, vector<1x8x256xf32>
    %3 = vector.shape_cast %2 : vector<1x8x256xf32> to vector<8x256xf32>
    %cst = arith.constant dense<0.000000e+00> : vector<32x256xf32>
    %4 = tpu.matmul %0, %3, %cst {dimension_numbers = #tpu.dot_dimension_numbers<[1], [0], [0], [1], [0, 0, 1, 1], [], []>} : vector<32x8xf32>, vector<8x256xf32>, vector<32x256xf32> -> vector<32x256xf32>
    %5 = vector.broadcast %1 : vector<32x1xf32> to vector<32x256xf32>
    %6 = arith.addf %4, %5 : vector<32x256xf32>
    %cst_6 = arith.constant 0.000000e+00 : f32
    %7 = vector.broadcast %cst_6 : f32 to vector<32x256xf32>
    %8 = arith.maximumf %6, %7 : vector<32x256xf32>
    %c0_7 = arith.constant 0 : index
    %c0_8 = arith.constant 0 : index
    %9 = vector.load %arg8[%c0_7, %c0_8] : memref<32x768xf32, #tpu.memory_space<vmem>>, vector<32x256xf32>
    tpu.vector_store %arg8[%c0_7, %c0_8], %8 {strides = array<i32>} : memref<32x768xf32, #tpu.memory_space<vmem>>, vector<32x256xf32>,
    %c1 = arith.constant 1 : index
    %c0_9 = arith.constant 0 : index
    %c0_10 = arith.constant 0 : index
    %10 = vector.load %arg1[%c1, %c0_9, %c0_10] : memref<3x8x256xf32, #tpu.memory_space<vmem>>, vector<1x8x256xf32>
    %11 = vector.shape_cast %10 : vector<1x8x256xf32> to vector<8x256xf32>
    %cst_11 = arith.constant dense<0.000000e+00> : vector<32x256xf32>
    %12 = tpu.matmul %0, %11, %cst_11 {dimension_numbers = #tpu.dot_dimension_numbers<[1], [0], [0], [1], [0, 0, 1, 1], [], []>} : vector<32x8xf32>, vector<8x256xf32>, vector<32x256xf32> -> vector<32x256xf32>
    %13 = vector.broadcast %1 : vector<32x1xf32> to vector<32x256xf32>
    %14 = arith.addf %12, %13 : vector<32x256xf32>
    %cst_12 = arith.constant 0.000000e+00 : f32
    %15 = vector.broadcast %cst_12 : f32 to vector<32x256xf32>
    %16 = arith.maximumf %14, %15 : vector<32x256xf32>
    %c0_13 = arith.constant 0 : index
    %c256 = arith.constant 256 : index
    %17 = vector.load %arg8[%c0_13, %c256] : memref<32x768xf32, #tpu.memory_space<vmem>>, vector<32x256xf32>
    tpu.vector_store %arg8[%c0_13, %c256], %16 {strides = array<i32>} : memref<32x768xf32, #tpu.memory_space<vmem>>, vector<32x256xf32>,
    %c2 = arith.constant 2 : index
    %c0_14 = arith.constant 0 : index
    %c0_15 = arith.constant 0 : index
    %18 = vector.load %arg1[%c2, %c0_14, %c0_15] : memref<3x8x256xf32, #tpu.memory_space<vmem>>, vector<1x8x256xf32>
    %19 = vector.shape_cast %18 : vector<1x8x256xf32> to vector<8x256xf32>
    %cst_16 = arith.constant dense<0.000000e+00> : vector<32x256xf32>
    %20 = tpu.matmul %0, %19, %cst_16 {dimension_numbers = #tpu.dot_dimension_numbers<[1], [0], [0], [1], [0, 0, 1, 1], [], []>} : vector<32x8xf32>, vector<8x256xf32>, vector<32x256xf32> -> vector<32x256xf32>
    %21 = vector.broadcast %1 : vector<32x1xf32> to vector<32x256xf32>
    %22 = arith.addf %20, %21 : vector<32x256xf32>
    %cst_17 = arith.constant 0.000000e+00 : f32
    %23 = vector.broadcast %cst_17 : f32 to vector<32x256xf32>
    %24 = arith.maximumf %22, %23 : vector<32x256xf32>
    %c0_18 = arith.constant 0 : index
    %c512 = arith.constant 512 : index
    %25 = vector.load %arg8[%c0_18, %c512] : memref<32x768xf32, #tpu.memory_space<vmem>>, vector<32x256xf32>
    tpu.vector_store %arg8[%c0_18, %c512], %24 {strides = array<i32>} : memref<32x768xf32, #tpu.memory_space<vmem>>, vector<32x256xf32>,
    %c0_19 = arith.constant 0 : index
    %c0_20 = arith.constant 0 : index
    %c0_21 = arith.constant 0 : index
    %26 = vector.load %arg6[%c0_19, %c0_20, %c0_21] : memref<1x16x32xf32, #tpu.memory_space<vmem>>, vector<1x16x32xf32>
    %27 = vector.shape_cast %26 : vector<1x16x32xf32> to vector<16x32xf32>
    %c0_22 = arith.constant 0 : index
    %c0_23 = arith.constant 0 : index
    %28 = vector.load %arg8[%c0_22, %c0_23] : memref<32x768xf32, #tpu.memory_space<vmem>>, vector<32x768xf32>
    %cst_24 = arith.constant dense<0.000000e+00> : vector<16x768xf32>
    %29 = tpu.matmul %27, %28, %cst_24 {dimension_numbers = #tpu.dot_dimension_numbers<[1], [0], [0], [1], [0, 0, 1, 1], [], []>} : vector<16x32xf32>, vector<32x768xf32>, vector<16x768xf32> -> vector<16x768xf32>
    %cst_25 = arith.constant 1.000000e+00 : f32
    %30 = vector.broadcast %cst_25 : f32 to vector<16x768xf32>
    %31 = arith.mulf %30, %29 : vector<16x768xf32>
    %cst_26 = arith.constant dense<0xFF800000> : vector<768xf32>
    %32 = vector.multi_reduction <maximumf>, %31, %cst_26 [0] : vector<16x768xf32> to vector<768xf32>
    %33 = vector.shape_cast %32 : vector<768xf32> to vector<1x768xf32>
    %34 = vector.broadcast %33 : vector<1x768xf32> to vector<16x768xf32>
    %35 = arith.subf %31, %34 : vector<16x768xf32>
    %36 = math.exp %35 : vector<16x768xf32>
    %cst_27 = arith.constant dense<0.000000e+00> : vector<768xf32>
    %37 = vector.multi_reduction <add>, %36, %cst_27 [0] : vector<16x768xf32> to vector<768xf32>
    %38 = vector.shape_cast %37 : vector<768xf32> to vector<1x768xf32>
    %39 = tpu.reciprocal %38 {approx = true} : vector<1x768xf32> -> vector<1x768xf32>
    %40 = vector.broadcast %39 : vector<1x768xf32> to vector<16x768xf32>
    %41 = arith.mulf %36, %40 : vector<16x768xf32>
    %c0_28 = arith.constant 0 : index
    %c0_29 = arith.constant 0 : index
    %42 = vector.load %arg8[%c0_28, %c0_29] : memref<32x768xf32, #tpu.memory_space<vmem>>, vector<32x768xf32>
    %cst_30 = arith.constant dense<0.000000e+00> : vector<16x768xf32>
    %43 = tpu.matmul %27, %42, %cst_30 {dimension_numbers = #tpu.dot_dimension_numbers<[1], [0], [0], [1], [0, 0, 1, 1], [], []>} : vector<16x32xf32>, vector<32x768xf32>, vector<16x768xf32> -> vector<16x768xf32>
    %cst_31 = arith.constant dense<0.000000e+00> : vector<16x16xf32>
    %44 = tpu.matmul %27, %27, %cst_31 {dimension_numbers = #tpu.dot_dimension_numbers<[1], [1], [0], [0], [0, 0, 1, 0], [], []>} : vector<16x32xf32>, vector<16x32xf32>, vector<16x16xf32> -> vector<16x16xf32>
    %cst_32 = arith.constant dense<0.000000e+00> : vector<16x768xf32>
    %45 = tpu.matmul %44, %41, %cst_32 {dimension_numbers = #tpu.dot_dimension_numbers<[1], [0], [0], [1], [0, 0, 1, 1], [], []>} : vector<16x16xf32>, vector<16x768xf32>, vector<16x768xf32> -> vector<16x768xf32>
    %46 = arith.mulf %41, %43 : vector<16x768xf32>
    %cst_33 = arith.constant 9.99999997E-7 : f32
    %47 = vector.broadcast %cst_33 : f32 to vector<16x768xf32>
    %48 = arith.addf %45, %47 : vector<16x768xf32>
    %49 = tpu.reciprocal %48 {approx = true} : vector<16x768xf32> -> vector<16x768xf32>
    %50 = arith.mulf %46, %49 : vector<16x768xf32>
    %c0_34 = arith.constant 0 : index
    %c0_35 = arith.constant 0 : index
    %51 = vector.load %arg8[%c0_34, %c0_35] : memref<32x768xf32, #tpu.memory_space<vmem>>, vector<32x768xf32>
    %cst_36 = arith.constant dense<0.000000e+00> : vector<16x32xf32>
    %52 = tpu.matmul %50, %51, %cst_36 {dimension_numbers = #tpu.dot_dimension_numbers<[1], [1], [0], [0], [0, 0, 1, 0], [], []>} : vector<16x768xf32>, vector<32x768xf32>, vector<16x32xf32> -> vector<16x32xf32>
    %cst_37 = arith.constant dense<0.000000e+00> : vector<16x16xf32>
    %53 = tpu.matmul %50, %50, %cst_37 {dimension_numbers = #tpu.dot_dimension_numbers<[1], [1], [0], [0], [0, 0, 1, 0], [], []>} : vector<16x768xf32>, vector<16x768xf32>, vector<16x16xf32> -> vector<16x16xf32>
    %cst_38 = arith.constant dense<0.000000e+00> : vector<16x32xf32>
    %54 = tpu.matmul %53, %27, %cst_38 {dimension_numbers = #tpu.dot_dimension_numbers<[1], [0], [0], [1], [0, 0, 1, 1], [], []>} : vector<16x16xf32>, vector<16x32xf32>, vector<16x32xf32> -> vector<16x32xf32>
    %55 = arith.mulf %27, %52 : vector<16x32xf32>
    %cst_39 = arith.constant 9.99999997E-7 : f32
    %56 = vector.broadcast %cst_39 : f32 to vector<16x32xf32>
    %57 = arith.addf %54, %56 : vector<16x32xf32>
    %58 = tpu.reciprocal %57 {approx = true} : vector<16x32xf32> -> vector<16x32xf32>
    %59 = arith.mulf %55, %58 : vector<16x32xf32>
    %c0_40 = arith.constant 0 : index
    %c0_41 = arith.constant 0 : index
    %60 = vector.load %arg8[%c0_40, %c0_41] : memref<32x768xf32, #tpu.memory_space<vmem>>, vector<32x768xf32>
    %cst_42 = arith.constant dense<0.000000e+00> : vector<16x768xf32>
    %61 = tpu.matmul %59, %60, %cst_42 {dimension_numbers = #tpu.dot_dimension_numbers<[1], [0], [0], [1], [0, 0, 1, 1], [], []>} : vector<16x32xf32>, vector<32x768xf32>, vector<16x768xf32> -> vector<16x768xf32>
    %cst_43 = arith.constant dense<0.000000e+00> : vector<16x16xf32>
    %62 = tpu.matmul %59, %59, %cst_43 {dimension_numbers = #tpu.dot_dimension_numbers<[1], [1], [0], [0], [0, 0, 1, 0], [], []>} : vector<16x32xf32>, vector<16x32xf32>, vector<16x16xf32> -> vector<16x16xf32>
    %cst_44 = arith.constant dense<0.000000e+00> : vector<16x768xf32>
    %63 = tpu.matmul %62, %50, %cst_44 {dimension_numbers = #tpu.dot_dimension_numbers<[1], [0], [0], [1], [0, 0, 1, 1], [], []>} : vector<16x16xf32>, vector<16x768xf32>, vector<16x768xf32> -> vector<16x768xf32>
    %64 = arith.mulf %50, %61 : vector<16x768xf32>
    %cst_45 = arith.constant 9.99999997E-7 : f32
    %65 = vector.broadcast %cst_45 : f32 to vector<16x768xf32>
    %66 = arith.addf %63, %65 : vector<16x768xf32>
    %67 = tpu.reciprocal %66 {approx = true} : vector<16x768xf32> -> vector<16x768xf32>
    %68 = arith.mulf %64, %67 : vector<16x768xf32>
    %c0_46 = arith.constant 0 : index
    %c0_47 = arith.constant 0 : index
    %69 = vector.load %arg8[%c0_46, %c0_47] : memref<32x768xf32, #tpu.memory_space<vmem>>, vector<32x768xf32>
    %cst_48 = arith.constant dense<0.000000e+00> : vector<16x32xf32>
    %70 = tpu.matmul %68, %69, %cst_48 {dimension_numbers = #tpu.dot_dimension_numbers<[1], [1], [0], [0], [0, 0, 1, 0], [], []>} : vector<16x768xf32>, vector<32x768xf32>, vector<16x32xf32> -> vector<16x32xf32>
    %cst_49 = arith.constant dense<0.000000e+00> : vector<16x16xf32>
    %71 = tpu.matmul %68, %68, %cst_49 {dimension_numbers = #tpu.dot_dimension_numbers<[1], [1], [0], [0], [0, 0, 1, 0], [], []>} : vector<16x768xf32>, vector<16x768xf32>, vector<16x16xf32> -> vector<16x16xf32>
    %cst_50 = arith.constant dense<0.000000e+00> : vector<16x32xf32>
    %72 = tpu.matmul %71, %59, %cst_50 {dimension_numbers = #tpu.dot_dimension_numbers<[1], [0], [0], [1], [0, 0, 1, 1], [], []>} : vector<16x16xf32>, vector<16x32xf32>, vector<16x32xf32> -> vector<16x32xf32>
    %73 = arith.mulf %59, %70 : vector<16x32xf32>
    %cst_51 = arith.constant 9.99999997E-7 : f32
    %74 = vector.broadcast %cst_51 : f32 to vector<16x32xf32>
    %75 = arith.addf %72, %74 : vector<16x32xf32>
    %76 = tpu.reciprocal %75 {approx = true} : vector<16x32xf32> -> vector<16x32xf32>
    %77 = arith.mulf %73, %76 : vector<16x32xf32>
    %c0_52 = arith.constant 0 : index
    %c0_53 = arith.constant 0 : index
    %78 = vector.load %arg8[%c0_52, %c0_53] : memref<32x768xf32, #tpu.memory_space<vmem>>, vector<32x768xf32>
    %cst_54 = arith.constant dense<0.000000e+00> : vector<16x768xf32>
    %79 = tpu.matmul %77, %78, %cst_54 {dimension_numbers = #tpu.dot_dimension_numbers<[1], [0], [0], [1], [0, 0, 1, 1], [], []>} : vector<16x32xf32>, vector<32x768xf32>, vector<16x768xf32> -> vector<16x768xf32>
    %cst_55 = arith.constant dense<0.000000e+00> : vector<16x16xf32>
    %80 = tpu.matmul %77, %77, %cst_55 {dimension_numbers = #tpu.dot_dimension_numbers<[1], [1], [0], [0], [0, 0, 1, 0], [], []>} : vector<16x32xf32>, vector<16x32xf32>, vector<16x16xf32> -> vector<16x16xf32>
    %cst_56 = arith.constant dense<0.000000e+00> : vector<16x768xf32>
    %81 = tpu.matmul %80, %68, %cst_56 {dimension_numbers = #tpu.dot_dimension_numbers<[1], [0], [0], [1], [0, 0, 1, 1], [], []>} : vector<16x16xf32>, vector<16x768xf32>, vector<16x768xf32> -> vector<16x768xf32>
    %82 = arith.mulf %68, %79 : vector<16x768xf32>
    %cst_57 = arith.constant 9.99999997E-7 : f32
    %83 = vector.broadcast %cst_57 : f32 to vector<16x768xf32>
    %84 = arith.addf %81, %83 : vector<16x768xf32>
    %85 = tpu.reciprocal %84 {approx = true} : vector<16x768xf32> -> vector<16x768xf32>
    %86 = arith.mulf %82, %85 : vector<16x768xf32>
    %c0_58 = arith.constant 0 : index
    %c0_59 = arith.constant 0 : index
    %87 = vector.load %arg8[%c0_58, %c0_59] : memref<32x768xf32, #tpu.memory_space<vmem>>, vector<32x768xf32>
    %cst_60 = arith.constant dense<0.000000e+00> : vector<16x32xf32>
    %88 = tpu.matmul %86, %87, %cst_60 {dimension_numbers = #tpu.dot_dimension_numbers<[1], [1], [0], [0], [0, 0, 1, 0], [], []>} : vector<16x768xf32>, vector<32x768xf32>, vector<16x32xf32> -> vector<16x32xf32>
    %cst_61 = arith.constant dense<0.000000e+00> : vector<16x16xf32>
    %89 = tpu.matmul %86, %86, %cst_61 {dimension_numbers = #tpu.dot_dimension_numbers<[1], [1], [0], [0], [0, 0, 1, 0], [], []>} : vector<16x768xf32>, vector<16x768xf32>, vector<16x16xf32> -> vector<16x16xf32>
    %cst_62 = arith.constant dense<0.000000e+00> : vector<16x32xf32>
    %90 = tpu.matmul %89, %77, %cst_62 {dimension_numbers = #tpu.dot_dimension_numbers<[1], [0], [0], [1], [0, 0, 1, 1], [], []>} : vector<16x16xf32>, vector<16x32xf32>, vector<16x32xf32> -> vector<16x32xf32>
    %91 = arith.mulf %77, %88 : vector<16x32xf32>
    %cst_63 = arith.constant 9.99999997E-7 : f32
    %92 = vector.broadcast %cst_63 : f32 to vector<16x32xf32>
    %93 = arith.addf %90, %92 : vector<16x32xf32>
    %94 = tpu.reciprocal %93 {approx = true} : vector<16x32xf32> -> vector<16x32xf32>
    %95 = arith.mulf %91, %94 : vector<16x32xf32>
    %c0_64 = arith.constant 0 : index
    %c0_65 = arith.constant 0 : index
    %96 = vector.load %arg8[%c0_64, %c0_65] : memref<32x768xf32, #tpu.memory_space<vmem>>, vector<32x768xf32>
    %cst_66 = arith.constant dense<0.000000e+00> : vector<16x768xf32>
    %97 = tpu.matmul %95, %96, %cst_66 {dimension_numbers = #tpu.dot_dimension_numbers<[1], [0], [0], [1], [0, 0, 1, 1], [], []>} : vector<16x32xf32>, vector<32x768xf32>, vector<16x768xf32> -> vector<16x768xf32>
    %cst_67 = arith.constant dense<0.000000e+00> : vector<16x16xf32>
    %98 = tpu.matmul %95, %95, %cst_67 {dimension_numbers = #tpu.dot_dimension_numbers<[1], [1], [0], [0], [0, 0, 1, 0], [], []>} : vector<16x32xf32>, vector<16x32xf32>, vector<16x16xf32> -> vector<16x16xf32>
    %cst_68 = arith.constant dense<0.000000e+00> : vector<16x768xf32>
    %99 = tpu.matmul %98, %86, %cst_68 {dimension_numbers = #tpu.dot_dimension_numbers<[1], [0], [0], [1], [0, 0, 1, 1], [], []>} : vector<16x16xf32>, vector<16x768xf32>, vector<16x768xf32> -> vector<16x768xf32>
    %100 = arith.mulf %86, %97 : vector<16x768xf32>
    %cst_69 = arith.constant 9.99999997E-7 : f32
    %101 = vector.broadcast %cst_69 : f32 to vector<16x768xf32>
    %102 = arith.addf %99, %101 : vector<16x768xf32>
    %103 = tpu.reciprocal %102 {approx = true} : vector<16x768xf32> -> vector<16x768xf32>
    %104 = arith.mulf %100, %103 : vector<16x768xf32>
    %c0_70 = arith.constant 0 : index
    %c0_71 = arith.constant 0 : index
    %105 = vector.load %arg8[%c0_70, %c0_71] : memref<32x768xf32, #tpu.memory_space<vmem>>, vector<32x768xf32>
    %cst_72 = arith.constant dense<0.000000e+00> : vector<16x32xf32>
    %106 = tpu.matmul %104, %105, %cst_72 {dimension_numbers = #tpu.dot_dimension_numbers<[1], [1], [0], [0], [0, 0, 1, 0], [], []>} : vector<16x768xf32>, vector<32x768xf32>, vector<16x32xf32> -> vector<16x32xf32>
    %cst_73 = arith.constant dense<0.000000e+00> : vector<16x16xf32>
    %107 = tpu.matmul %104, %104, %cst_73 {dimension_numbers = #tpu.dot_dimension_numbers<[1], [1], [0], [0], [0, 0, 1, 0], [], []>} : vector<16x768xf32>, vector<16x768xf32>, vector<16x16xf32> -> vector<16x16xf32>
    %cst_74 = arith.constant dense<0.000000e+00> : vector<16x32xf32>
    %108 = tpu.matmul %107, %95, %cst_74 {dimension_numbers = #tpu.dot_dimension_numbers<[1], [0], [0], [1], [0, 0, 1, 1], [], []>} : vector<16x16xf32>, vector<16x32xf32>, vector<16x32xf32> -> vector<16x32xf32>
    %109 = arith.mulf %95, %106 : vector<16x32xf32>
    %cst_75 = arith.constant 9.99999997E-7 : f32
    %110 = vector.broadcast %cst_75 : f32 to vector<16x32xf32>
    %111 = arith.addf %108, %110 : vector<16x32xf32>
    %112 = tpu.reciprocal %111 {approx = true} : vector<16x32xf32> -> vector<16x32xf32>
    %113 = arith.mulf %109, %112 : vector<16x32xf32>
    %c0_76 = arith.constant 0 : index
    %c0_77 = arith.constant 0 : index
    %114 = vector.load %arg8[%c0_76, %c0_77] : memref<32x768xf32, #tpu.memory_space<vmem>>, vector<32x768xf32>
    %cst_78 = arith.constant dense<0.000000e+00> : vector<16x768xf32>
    %115 = tpu.matmul %113, %114, %cst_78 {dimension_numbers = #tpu.dot_dimension_numbers<[1], [0], [0], [1], [0, 0, 1, 1], [], []>} : vector<16x32xf32>, vector<32x768xf32>, vector<16x768xf32> -> vector<16x768xf32>
    %cst_79 = arith.constant dense<0.000000e+00> : vector<16x16xf32>
    %116 = tpu.matmul %113, %113, %cst_79 {dimension_numbers = #tpu.dot_dimension_numbers<[1], [1], [0], [0], [0, 0, 1, 0], [], []>} : vector<16x32xf32>, vector<16x32xf32>, vector<16x16xf32> -> vector<16x16xf32>
    %cst_80 = arith.constant dense<0.000000e+00> : vector<16x768xf32>
    %117 = tpu.matmul %116, %104, %cst_80 {dimension_numbers = #tpu.dot_dimension_numbers<[1], [0], [0], [1], [0, 0, 1, 1], [], []>} : vector<16x16xf32>, vector<16x768xf32>, vector<16x768xf32> -> vector<16x768xf32>
    %118 = arith.mulf %104, %115 : vector<16x768xf32>
    %cst_81 = arith.constant 9.99999997E-7 : f32
    %119 = vector.broadcast %cst_81 : f32 to vector<16x768xf32>
    %120 = arith.addf %117, %119 : vector<16x768xf32>
    %121 = tpu.reciprocal %120 {approx = true} : vector<16x768xf32> -> vector<16x768xf32>
    %122 = arith.mulf %118, %121 : vector<16x768xf32>
    %c0_82 = arith.constant 0 : index
    %c0_83 = arith.constant 0 : index
    %123 = vector.load %arg8[%c0_82, %c0_83] : memref<32x768xf32, #tpu.memory_space<vmem>>, vector<32x768xf32>
    %cst_84 = arith.constant dense<0.000000e+00> : vector<16x32xf32>
    %124 = tpu.matmul %122, %123, %cst_84 {dimension_numbers = #tpu.dot_dimension_numbers<[1], [1], [0], [0], [0, 0, 1, 0], [], []>} : vector<16x768xf32>, vector<32x768xf32>, vector<16x32xf32> -> vector<16x32xf32>
    %cst_85 = arith.constant dense<0.000000e+00> : vector<16x16xf32>
    %125 = tpu.matmul %122, %122, %cst_85 {dimension_numbers = #tpu.dot_dimension_numbers<[1], [1], [0], [0], [0, 0, 1, 0], [], []>} : vector<16x768xf32>, vector<16x768xf32>, vector<16x16xf32> -> vector<16x16xf32>
    %cst_86 = arith.constant dense<0.000000e+00> : vector<16x32xf32>
    %126 = tpu.matmul %125, %113, %cst_86 {dimension_numbers = #tpu.dot_dimension_numbers<[1], [0], [0], [1], [0, 0, 1, 1], [], []>} : vector<16x16xf32>, vector<16x32xf32>, vector<16x32xf32> -> vector<16x32xf32>
    %127 = arith.mulf %113, %124 : vector<16x32xf32>
    %cst_87 = arith.constant 9.99999997E-7 : f32
    %128 = vector.broadcast %cst_87 : f32 to vector<16x32xf32>
    %129 = arith.addf %126, %128 : vector<16x32xf32>
    %130 = tpu.reciprocal %129 {approx = true} : vector<16x32xf32> -> vector<16x32xf32>
    %131 = arith.mulf %127, %130 : vector<16x32xf32>
    %c0_88 = arith.constant 0 : index
    %c0_89 = arith.constant 0 : index
    %132 = vector.load %arg8[%c0_88, %c0_89] : memref<32x768xf32, #tpu.memory_space<vmem>>, vector<32x768xf32>
    %cst_90 = arith.constant dense<0.000000e+00> : vector<16x768xf32>
    %133 = tpu.matmul %131, %132, %cst_90 {dimension_numbers = #tpu.dot_dimension_numbers<[1], [0], [0], [1], [0, 0, 1, 1], [], []>} : vector<16x32xf32>, vector<32x768xf32>, vector<16x768xf32> -> vector<16x768xf32>
    %cst_91 = arith.constant dense<0.000000e+00> : vector<16x16xf32>
    %134 = tpu.matmul %131, %131, %cst_91 {dimension_numbers = #tpu.dot_dimension_numbers<[1], [1], [0], [0], [0, 0, 1, 0], [], []>} : vector<16x32xf32>, vector<16x32xf32>, vector<16x16xf32> -> vector<16x16xf32>
    %cst_92 = arith.constant dense<0.000000e+00> : vector<16x768xf32>
    %135 = tpu.matmul %134, %122, %cst_92 {dimension_numbers = #tpu.dot_dimension_numbers<[1], [0], [0], [1], [0, 0, 1, 1], [], []>} : vector<16x16xf32>, vector<16x768xf32>, vector<16x768xf32> -> vector<16x768xf32>
    %136 = arith.mulf %122, %133 : vector<16x768xf32>
    %cst_93 = arith.constant 9.99999997E-7 : f32
    %137 = vector.broadcast %cst_93 : f32 to vector<16x768xf32>
    %138 = arith.addf %135, %137 : vector<16x768xf32>
    %139 = tpu.reciprocal %138 {approx = true} : vector<16x768xf32> -> vector<16x768xf32>
    %140 = arith.mulf %136, %139 : vector<16x768xf32>
    %c0_94 = arith.constant 0 : index
    %c0_95 = arith.constant 0 : index
    %141 = vector.load %arg8[%c0_94, %c0_95] : memref<32x768xf32, #tpu.memory_space<vmem>>, vector<32x768xf32>
    %cst_96 = arith.constant dense<0.000000e+00> : vector<16x32xf32>
    %142 = tpu.matmul %140, %141, %cst_96 {dimension_numbers = #tpu.dot_dimension_numbers<[1], [1], [0], [0], [0, 0, 1, 0], [], []>} : vector<16x768xf32>, vector<32x768xf32>, vector<16x32xf32> -> vector<16x32xf32>
    %cst_97 = arith.constant dense<0.000000e+00> : vector<16x16xf32>
    %143 = tpu.matmul %140, %140, %cst_97 {dimension_numbers = #tpu.dot_dimension_numbers<[1], [1], [0], [0], [0, 0, 1, 0], [], []>} : vector<16x768xf32>, vector<16x768xf32>, vector<16x16xf32> -> vector<16x16xf32>
    %cst_98 = arith.constant dense<0.000000e+00> : vector<16x32xf32>
    %144 = tpu.matmul %143, %131, %cst_98 {dimension_numbers = #tpu.dot_dimension_numbers<[1], [0], [0], [1], [0, 0, 1, 1], [], []>} : vector<16x16xf32>, vector<16x32xf32>, vector<16x32xf32> -> vector<16x32xf32>
    %145 = arith.mulf %131, %142 : vector<16x32xf32>
    %cst_99 = arith.constant 9.99999997E-7 : f32
    %146 = vector.broadcast %cst_99 : f32 to vector<16x32xf32>
    %147 = arith.addf %144, %146 : vector<16x32xf32>
    %148 = tpu.reciprocal %147 {approx = true} : vector<16x32xf32> -> vector<16x32xf32>
    %149 = arith.mulf %145, %148 : vector<16x32xf32>
    %c0_100 = arith.constant 0 : index
    %c0_101 = arith.constant 0 : index
    %150 = vector.load %arg8[%c0_100, %c0_101] : memref<32x768xf32, #tpu.memory_space<vmem>>, vector<32x768xf32>
    %cst_102 = arith.constant dense<0.000000e+00> : vector<16x768xf32>
    %151 = tpu.matmul %149, %150, %cst_102 {dimension_numbers = #tpu.dot_dimension_numbers<[1], [0], [0], [1], [0, 0, 1, 1], [], []>} : vector<16x32xf32>, vector<32x768xf32>, vector<16x768xf32> -> vector<16x768xf32>
    %cst_103 = arith.constant dense<0.000000e+00> : vector<16x16xf32>
    %152 = tpu.matmul %149, %149, %cst_103 {dimension_numbers = #tpu.dot_dimension_numbers<[1], [1], [0], [0], [0, 0, 1, 0], [], []>} : vector<16x32xf32>, vector<16x32xf32>, vector<16x16xf32> -> vector<16x16xf32>
    %cst_104 = arith.constant dense<0.000000e+00> : vector<16x768xf32>
    %153 = tpu.matmul %152, %140, %cst_104 {dimension_numbers = #tpu.dot_dimension_numbers<[1], [0], [0], [1], [0, 0, 1, 1], [], []>} : vector<16x16xf32>, vector<16x768xf32>, vector<16x768xf32> -> vector<16x768xf32>
    %154 = arith.mulf %140, %151 : vector<16x768xf32>
    %cst_105 = arith.constant 9.99999997E-7 : f32
    %155 = vector.broadcast %cst_105 : f32 to vector<16x768xf32>
    %156 = arith.addf %153, %155 : vector<16x768xf32>
    %157 = tpu.reciprocal %156 {approx = true} : vector<16x768xf32> -> vector<16x768xf32>
    %158 = arith.mulf %154, %157 : vector<16x768xf32>
    %159 = tpu.transpose %149, [1, 0] : vector<16x32xf32> -> vector<32x16xf32>
    %cst_106 = arith.constant dense<0.000000e+00> : vector<32x768xf32>
    %160 = tpu.matmul %159, %158, %cst_106 {dimension_numbers = #tpu.dot_dimension_numbers<[1], [0], [0], [1], [0, 0, 1, 1], [], []>} : vector<32x16xf32>, vector<16x768xf32>, vector<32x768xf32> -> vector<32x768xf32>
    %c0_107 = arith.constant 0 : index
    %c0_108 = arith.constant 0 : index
    %161 = vector.load %arg4[%c0_107, %c0_108] : memref<8x32xf32, #tpu.memory_space<vmem>>, vector<8x32xf32>
    %c0_109 = arith.constant 0 : index
    %c0_110 = arith.constant 0 : index
    %162 = vector.load %arg5[%c0_109, %c0_110] : memref<8x1xf32, #tpu.memory_space<vmem>>, vector<8x1xf32>
    %cst_111 = arith.constant dense<0.000000e+00> : vector<8x768xf32>
    %163 = tpu.matmul %161, %160, %cst_111 {dimension_numbers = #tpu.dot_dimension_numbers<[1], [0], [0], [1], [0, 0, 1, 1], [], []>} : vector<8x32xf32>, vector<32x768xf32>, vector<8x768xf32> -> vector<8x768xf32>
    %164 = vector.extract_strided_slice %163 {offsets = [0, 0], sizes = [8, 256], strides = [1, 1]} : vector<8x768xf32> to vector<8x256xf32>
    %165 = vector.broadcast %162 : vector<8x1xf32> to vector<8x256xf32>
    %166 = arith.addf %164, %165 : vector<8x256xf32>
    %c0_112 = arith.constant 0 : index
    %c0_113 = arith.constant 0 : index
    %c0_114 = arith.constant 0 : index
    %167 = vector.load %arg1[%c0_112, %c0_113, %c0_114] : memref<3x8x256xf32, #tpu.memory_space<vmem>>, vector<1x8x256xf32>
    %168 = vector.shape_cast %167 : vector<1x8x256xf32> to vector<8x256xf32>
    %169 = arith.addf %166, %168 : vector<8x256xf32>
    %cst_115 = arith.constant 0.000000e+00 : f32
    %170 = vector.broadcast %cst_115 : f32 to vector<8x256xf32>
    %171 = arith.maximumf %169, %170 : vector<8x256xf32>
    %c0_116 = arith.constant 0 : index
    %c0_117 = arith.constant 0 : index
    %c0_118 = arith.constant 0 : index
    %172 = vector.load %arg7[%c0_116, %c0_117, %c0_118] : memref<3x8x256xf32, #tpu.memory_space<vmem>>, vector<1x8x256xf32>
    %173 = vector.shape_cast %172 : vector<1x8x256xf32> to vector<8x256xf32>
    %174 = vector.shape_cast %171 : vector<8x256xf32> to vector<1x8x256xf32>
    tpu.vector_store %arg7[%c0_116, %c0_117, %c0_118], %174 {strides = array<i32>} : memref<3x8x256xf32, #tpu.memory_space<vmem>>, vector<1x8x256xf32>,
    %175 = vector.extract_strided_slice %163 {offsets = [0, 256], sizes = [8, 256], strides = [1, 1]} : vector<8x768xf32> to vector<8x256xf32>
    %176 = vector.broadcast %162 : vector<8x1xf32> to vector<8x256xf32>
    %177 = arith.addf %175, %176 : vector<8x256xf32>
    %c1_119 = arith.constant 1 : index
    %c0_120 = arith.constant 0 : index
    %c0_121 = arith.constant 0 : index
    %178 = vector.load %arg1[%c1_119, %c0_120, %c0_121] : memref<3x8x256xf32, #tpu.memory_space<vmem>>, vector<1x8x256xf32>
    %179 = vector.shape_cast %178 : vector<1x8x256xf32> to vector<8x256xf32>
    %180 = arith.addf %177, %179 : vector<8x256xf32>
    %cst_122 = arith.constant 0.000000e+00 : f32
    %181 = vector.broadcast %cst_122 : f32 to vector<8x256xf32>
    %182 = arith.maximumf %180, %181 : vector<8x256xf32>
    %c1_123 = arith.constant 1 : index
    %c0_124 = arith.constant 0 : index
    %c0_125 = arith.constant 0 : index
    %183 = vector.load %arg7[%c1_123, %c0_124, %c0_125] : memref<3x8x256xf32, #tpu.memory_space<vmem>>, vector<1x8x256xf32>
    %184 = vector.shape_cast %183 : vector<1x8x256xf32> to vector<8x256xf32>
    %185 = vector.shape_cast %182 : vector<8x256xf32> to vector<1x8x256xf32>
    tpu.vector_store %arg7[%c1_123, %c0_124, %c0_125], %185 {strides = array<i32>} : memref<3x8x256xf32, #tpu.memory_space<vmem>>, vector<1x8x256xf32>,
    %186 = vector.extract_strided_slice %163 {offsets = [0, 512], sizes = [8, 256], strides = [1, 1]} : vector<8x768xf32> to vector<8x256xf32>
    %187 = vector.broadcast %162 : vector<8x1xf32> to vector<8x256xf32>
    %188 = arith.addf %186, %187 : vector<8x256xf32>
    %c2_126 = arith.constant 2 : index
    %c0_127 = arith.constant 0 : index
    %c0_128 = arith.constant 0 : index
    %189 = vector.load %arg1[%c2_126, %c0_127, %c0_128] : memref<3x8x256xf32, #tpu.memory_space<vmem>>, vector<1x8x256xf32>
    %190 = vector.shape_cast %189 : vector<1x8x256xf32> to vector<8x256xf32>
    %191 = arith.addf %188, %190 : vector<8x256xf32>
    %cst_129 = arith.constant 0.000000e+00 : f32
    %192 = vector.broadcast %cst_129 : f32 to vector<8x256xf32>
    %193 = arith.maximumf %191, %192 : vector<8x256xf32>
    %c2_130 = arith.constant 2 : index
    %c0_131 = arith.constant 0 : index
    %c0_132 = arith.constant 0 : index
    %194 = vector.load %arg7[%c2_130, %c0_131, %c0_132] : memref<3x8x256xf32, #tpu.memory_space<vmem>>, vector<1x8x256xf32>
    %195 = vector.shape_cast %194 : vector<1x8x256xf32> to vector<8x256xf32>
    %196 = vector.shape_cast %193 : vector<8x256xf32> to vector<1x8x256xf32>
    tpu.vector_store %arg7[%c2_130, %c0_131, %c0_132], %196 {strides = array<i32>} : memref<3x8x256xf32, #tpu.memory_space<vmem>>, vector<1x8x256xf32>,
    return
  }
  func.func @transform_0(%arg0: i32) -> (i32, i32, i32) {
    %c0_i32 = arith.constant 0 : i32
    %c0_i32_0 = arith.constant 0 : i32
    %c0_i32_1 = arith.constant 0 : i32
    return %arg0, %c0_i32, %c0_i32_0 : i32, i32, i32
  }
  func.func @transform_1(%arg0: i32) -> (i32, i32) {
    %c0_i32 = arith.constant 0 : i32
    %c0_i32_0 = arith.constant 0 : i32
    %c0_i32_1 = arith.constant 0 : i32
    return %c0_i32, %c0_i32_0 : i32, i32
  }
  func.func @transform_2(%arg0: i32) -> (i32, i32) {
    %c0_i32 = arith.constant 0 : i32
    %c0_i32_0 = arith.constant 0 : i32
    %c0_i32_1 = arith.constant 0 : i32
    return %c0_i32, %c0_i32_0 : i32, i32
  }
  func.func @transform_3(%arg0: i32) -> (i32, i32) {
    %c0_i32 = arith.constant 0 : i32
    %c0_i32_0 = arith.constant 0 : i32
    %c0_i32_1 = arith.constant 0 : i32
    return %c0_i32, %c0_i32_0 : i32, i32
  }
  func.func @transform_4(%arg0: i32) -> (i32, i32) {
    %c0_i32 = arith.constant 0 : i32
    %c0_i32_0 = arith.constant 0 : i32
    %c0_i32_1 = arith.constant 0 : i32
    return %c0_i32, %c0_i32_0 : i32, i32
  }
  func.func @transform_5(%arg0: i32) -> (i32, i32, i32) {
    %c0_i32 = arith.constant 0 : i32
    %c0_i32_0 = arith.constant 0 : i32
    %c0_i32_1 = arith.constant 0 : i32
    return %arg0, %c0_i32, %c0_i32_0 : i32, i32, i32
  }
  func.func @transform_6(%arg0: i32) -> (i32, i32, i32) {
    %c0_i32 = arith.constant 0 : i32
    %c0_i32_0 = arith.constant 0 : i32
    %c0_i32_1 = arith.constant 0 : i32
    return %arg0, %c0_i32, %c0_i32_0 : i32, i32, i32
  }
}

</mosaic_0001>

<llo_original>
// kernel: hamburger_v1_forward.1
$region0: #{hamburger_v1_forward.1}
  #allocation0 [shape = 'u32[]', space=smem, size = 0x4, offset = 0x4, fixed_abs, tag = 'smem constant byte address 0x4 - core index']
  #allocation1 [shape = 'u32[144,128]{1,0:T(1,128)}', space=vmem, size = 0x12000, scoped, tag = 'internal scratch']
  #allocation2 [shape = 'f32[32,768]{1,0:T(8,128)}', space=vmem, size = 0x18000, scoped, tag = 'scratch operand']
  %s0 = inlined_call_operand.vmem [shape: f32[6,8,256], index: 0, kind: input, shape index: {}]
  %s1 = inlined_call_operand.vmem [shape: f32[32,8], index: 1, kind: input, shape index: {}]
  %s2 = inlined_call_operand.vmem [shape: f32[32,1], index: 2, kind: input, shape index: {}]
  %s3 = inlined_call_operand.vmem [shape: f32[8,32], index: 3, kind: input, shape index: {}]
  %s4 = inlined_call_operand.vmem [shape: f32[8,1], index: 4, kind: input, shape index: {}]
  %s5 = inlined_call_operand.vmem [shape: f32[2,16,32], index: 5, kind: input, shape index: {}]
  %s6 = inlined_call_operand.vmem [shape: f32[6,8,256], index: 6, kind: output, shape index: {}]
  %s7 = sld [smem:[#allocation0]]
  $region57: #{hamburger_v1_forward.1} parent=0
    _
  %s9 = ssub.s32 1, %s7
  %s10 = scalar_select 0, %s9, %s7
  loop: start=0, step=1, limit=4
  $region2: #{hamburger_v1_forward.1} parent=0 // loop_pre_header
    _
  $region3: #{hamburger_v1_forward.1} parent=0 // loop_header
    %s12 = sphi 0, %s16
    %p13 = scmp.ge.s32.totalorder %s12, 4
    %s22 = sphi 0, %s24
    %s25 = sphi 0, %s22
    %s26 = sphi 0, %s25
    %s42 = sphi 0, %s26
    %s46 = sphi 0, %s46
    %s48 = sphi 0, %s46
    %s49 = sphi 0, %s48
    %s63 = sphi 0, %s49
    %s67 = sphi 0, %s67
    %s69 = sphi 0, %s67
    %s70 = sphi 0, %s69
    %s84 = sphi 0, %s70
    %s88 = sphi 0, %s88
    %s90 = sphi 0, %s88
    %s91 = sphi 0, %s90
    %s105 = sphi 0, %s91
    %s109 = sphi 0, %s109
    %s111 = sphi 0, %s109
    %s112 = sphi 0, %s111
    %s126 = sphi 0, %s112
    %s132 = sphi 0, %s134
    %s135 = sphi 0, %s132
    %s136 = sphi 0, %s135
    %s152 = sphi 0, %s136
    %s158 = sphi 0, %s160
    %s161 = sphi 0, %s158
    %s162 = sphi 0, %s161
    %s178 = sphi 0, %s162
  $region4: #{hamburger_v1_forward.1} parent=0 // loop_header_branch
    %15 = sbr.rel (%p13) target = $region8
  $region5: #{hamburger_v1_forward.1} parent=0 // loop_body
    %s17 = ssub.s32 %s12, 1
    %s18 = ssub.s32 %s12, 2
    %s19 = sadd.s32 %s12, 1
    %s20 = ssub.s32 %s12, %s19
    %p21 = scmp.eq.s32.totalorder %s20, 0
    %s23 = sadd.s32 %s22, 1
    %s24 = scalar_select %p21, %s22, %s23
    %p27 = pneg %p21
    %p28 = scmp.eq.s32.totalorder %s12, 1
    %p29 = por %p27, %p28
    %p30 = scmp.ne.s32.totalorder %s22, %s25
    %p31 = scmp.eq.s32.totalorder %s12, 0
    %p32 = por %p30, %p31
    %p33 = scmp.ne.s32.totalorder %s22, %s25
    %p34 = scmp.eq.s32.totalorder %s17, 1
    %p35 = por %p33, %p34
    %p36 = scmp.ne.s32.totalorder %s25, %s26
    %p37 = scmp.eq.s32.totalorder %s17, 0
    %p38 = por %p36, %p37
    %p39 = scmp.ne.s32.totalorder %s25, %s26
    %p40 = scmp.eq.s32.totalorder %s18, 1
    %p41 = por %p39, %p40
    %p43 = scmp.ne.s32.totalorder %s26, %s42
    %p44 = scmp.eq.s32.totalorder %s18, 0
    %p45 = por %p43, %p44
    %s47 = sadd.s32 %s46, 1
    %p50 = scmp.eq.s32.totalorder %s12, 1
    %p51 = scmp.ne.s32.totalorder %s46, %s48
    %p52 = scmp.eq.s32.totalorder %s12, 0
    %p53 = por %p51, %p52
    %p54 = scmp.ne.s32.totalorder %s46, %s48
    %p55 = scmp.eq.s32.totalorder %s17, 1
    %p56 = por %p54, %p55
    %p57 = scmp.ne.s32.totalorder %s48, %s49
    %p58 = scmp.eq.s32.totalorder %s17, 0
    %p59 = por %p57, %p58
    %p60 = scmp.ne.s32.totalorder %s48, %s49
    %p61 = scmp.eq.s32.totalorder %s18, 1
    %p62 = por %p60, %p61
    %p64 = scmp.ne.s32.totalorder %s49, %s63
    %p65 = scmp.eq.s32.totalorder %s18, 0
    %p66 = por %p64, %p65
    %s68 = sadd.s32 %s67, 1
    %p71 = scmp.eq.s32.totalorder %s12, 1
    %p72 = scmp.ne.s32.totalorder %s67, %s69
    %p73 = scmp.eq.s32.totalorder %s12, 0
    %p74 = por %p72, %p73
    %p75 = scmp.ne.s32.totalorder %s67, %s69
    %p76 = scmp.eq.s32.totalorder %s17, 1
    %p77 = por %p75, %p76
    %p78 = scmp.ne.s32.totalorder %s69, %s70
    %p79 = scmp.eq.s32.totalorder %s17, 0
    %p80 = por %p78, %p79
    %p81 = scmp.ne.s32.totalorder %s69, %s70
    %p82 = scmp.eq.s32.totalorder %s18, 1
    %p83 = por %p81, %p82
    %p85 = scmp.ne.s32.totalorder %s70, %s84
    %p86 = scmp.eq.s32.totalorder %s18, 0
    %p87 = por %p85, %p86
    %s89 = sadd.s32 %s88, 1
    %p92 = scmp.eq.s32.totalorder %s12, 1
    %p93 = scmp.ne.s32.totalorder %s88, %s90
    %p94 = scmp.eq.s32.totalorder %s12, 0
    %p95 = por %p93, %p94
    %p96 = scmp.ne.s32.totalorder %s88, %s90
    %p97 = scmp.eq.s32.totalorder %s17, 1
    %p98 = por %p96, %p97
    %p99 = scmp.ne.s32.totalorder %s90, %s91
    %p100 = scmp.eq.s32.totalorder %s17, 0
    %p101 = por %p99, %p100
    %p102 = scmp.ne.s32.totalorder %s90, %s91
    %p103 = scmp.eq.s32.totalorder %s18, 1
    %p104 = por %p102, %p103
    %p106 = scmp.ne.s32.totalorder %s91, %s105
    %p107 = scmp.eq.s32.totalorder %s18, 0
    %p108 = por %p106, %p107
    %s110 = sadd.s32 %s109, 1
    %p113 = scmp.eq.s32.totalorder %s12, 1
    %p114 = scmp.ne.s32.totalorder %s109, %s111
    %p115 = scmp.eq.s32.totalorder %s12, 0
    %p116 = por %p114, %p115
    %p117 = scmp.ne.s32.totalorder %s109, %s111
    %p118 = scmp.eq.s32.totalorder %s17, 1
    %p119 = por %p117, %p118
    %p120 = scmp.ne.s32.totalorder %s111, %s112
    %p121 = scmp.eq.s32.totalorder %s17, 0
    %p122 = por %p120, %p121
    %p123 = scmp.ne.s32.totalorder %s111, %s112
    %p124 = scmp.eq.s32.totalorder %s18, 1
    %p125 = por %p123, %p124
    %p127 = scmp.ne.s32.totalorder %s112, %s126
    %p128 = scmp.eq.s32.totalorder %s18, 0
    %p129 = por %p127, %p128
    %s130 = ssub.s32 %s12, %s19
    %p131 = scmp.eq.s32.totalorder %s130, 0
    %s133 = sadd.s32 %s132, 1
    %s134 = scalar_select %p131, %s132, %s133
    %p137 = pneg %p131
    %p138 = scmp.eq.s32.totalorder %s12, 1
    %p139 = por %p137, %p138
    %p140 = scmp.ne.s32.totalorder %s132, %s135
    %p141 = scmp.eq.s32.totalorder %s12, 0
    %p142 = por %p140, %p141
    %p143 = scmp.ne.s32.totalorder %s132, %s135
    %p144 = scmp.eq.s32.totalorder %s17, 1
    %p145 = por %p143, %p144
    %p146 = scmp.ne.s32.totalorder %s135, %s136
    %p147 = scmp.eq.s32.totalorder %s17, 0
    %p148 = por %p146, %p147
    %p149 = scmp.ne.s32.totalorder %s135, %s136
    %p150 = scmp.eq.s32.totalorder %s18, 1
    %p151 = por %p149, %p150
    %p153 = scmp.ne.s32.totalorder %s136, %s152
    %p154 = scmp.eq.s32.totalorder %s18, 0
    %p155 = por %p153, %p154
    %s156 = ssub.s32 %s12, %s19
    %p157 = scmp.eq.s32.totalorder %s156, 0
    %s159 = sadd.s32 %s158, 1
    %s160 = scalar_select %p157, %s158, %s159
    %p163 = pneg %p157
    %p164 = scmp.eq.s32.totalorder %s12, 1
    %p165 = por %p163, %p164
    %p166 = scmp.ne.s32.totalorder %s158, %s161
    %p167 = scmp.eq.s32.totalorder %s12, 0
    %p168 = por %p166, %p167
    %p169 = scmp.ne.s32.totalorder %s158, %s161
    %p170 = scmp.eq.s32.totalorder %s17, 1
    %p171 = por %p169, %p170
    %p172 = scmp.ne.s32.totalorder %s161, %s162
    %p173 = scmp.eq.s32.totalorder %s17, 0
    %p174 = por %p172, %p173
    %p175 = scmp.ne.s32.totalorder %s161, %s162
    %p176 = scmp.eq.s32.totalorder %s18, 1
    %p177 = por %p175, %p176
    %p179 = scmp.ne.s32.totalorder %s162, %s178
    %p180 = scmp.eq.s32.totalorder %s18, 0
    %p181 = por %p179, %p180
    %p182 = scmp.le.s32.totalorder 1, %s12
    %p183 = scmp.lt.s32.totalorder %s12, 3
    %p184 = pnand %p182, %p183
    %p185 = pneg %p184
    // Predicated region
    $region9: #{hamburger_v1_forward.1} parent=5 // pred_check
      _
    $region10: #{hamburger_v1_forward.1} parent=5 // pred_check_branch
      %187 = sbr.rel (%p184) target = $region12
    $region11: #{hamburger_v1_forward.1} parent=5 // pred_region
      %s188 = ssub.s32 %s12, 1
      // Predicated region
      $region13: #{hamburger_v1_forward.1} parent=11 // pred_check
        %p189 = pneg %p59
      $region14: #{hamburger_v1_forward.1} parent=11 // pred_check_branch
        %191 = sbr.rel (%p189) target = $region16
      $region15: #{hamburger_v1_forward.1} parent=11 // pred_region
        _
      $region16: #{hamburger_v1_forward.1} parent=11 // pred_fallthru
        _
      // Predicated region
      $region17: #{hamburger_v1_forward.1} parent=11 // pred_check
        %p192 = pneg %p80
      $region18: #{hamburger_v1_forward.1} parent=11 // pred_check_branch
        %194 = sbr.rel (%p192) target = $region20
      $region19: #{hamburger_v1_forward.1} parent=11 // pred_region
        _
      $region20: #{hamburger_v1_forward.1} parent=11 // pred_fallthru
        _
      // Predicated region
      $region21: #{hamburger_v1_forward.1} parent=11 // pred_check
        %p195 = pneg %p101
      $region22: #{hamburger_v1_forward.1} parent=11 // pred_check_branch
        %197 = sbr.rel (%p195) target = $region24
      $region23: #{hamburger_v1_forward.1} parent=11 // pred_region
        _
      $region24: #{hamburger_v1_forward.1} parent=11 // pred_fallthru
        _
      // Predicated region
      $region25: #{hamburger_v1_forward.1} parent=11 // pred_check
        %p198 = pneg %p122
      $region26: #{hamburger_v1_forward.1} parent=11 // pred_check_branch
        %200 = sbr.rel (%p198) target = $region28
      $region27: #{hamburger_v1_forward.1} parent=11 // pred_region
        _
      $region28: #{hamburger_v1_forward.1} parent=11 // pred_fallthru
        _
    $region12: #{hamburger_v1_forward.1} parent=5 // pred_fallthru
      _
    %p201 = scmp.lt.s32.totalorder %s12, 2
    // Predicated region
    $region29: #{hamburger_v1_forward.1} parent=5 // pred_check
      %p202 = pneg %p201
    $region30: #{hamburger_v1_forward.1} parent=5 // pred_check_branch
      %204 = sbr.rel (%p202) target = $region32
    $region31: #{hamburger_v1_forward.1} parent=5 // pred_region
      // Predicated region
      $region33: #{hamburger_v1_forward.1} parent=31 // pred_check
        %p205 = pneg %p32
      $region34: #{hamburger_v1_forward.1} parent=31 // pred_check_branch
        %207 = sbr.rel (%p205) target = $region36
      $region35: #{hamburger_v1_forward.1} parent=31 // pred_region
        %s208 = smul.u32 3, %s12
        %p209 = scmp.lt.s32.totalorder %s208, 5
        %s210 = scalar_select %p209, %s208, 5
        %s211 = smul.addr %s210, 2
        %s212 = smul.addr %s211, 8
        %s213 = scalar_lea.vmem %s0, %s212
        %s214 = smul.u32 3, %s12
      $region36: #{hamburger_v1_forward.1} parent=31 // pred_fallthru
        _
      // Predicated region
      $region37: #{hamburger_v1_forward.1} parent=31 // pred_check
        %p215 = pneg %p142
      $region38: #{hamburger_v1_forward.1} parent=31 // pred_check_branch
        %217 = sbr.rel (%p215) target = $region40
      $region39: #{hamburger_v1_forward.1} parent=31 // pred_region
        %p218 = scmp.lt.s32.totalorder %s12, 1
        %s219 = scalar_select %p218, %s12, 1
        %s220 = smul.addr %s219, 2
        %s221 = smul.addr %s220, 8
        %s222 = scalar_lea.vmem %s5, %s221
      $region40: #{hamburger_v1_forward.1} parent=31 // pred_fallthru
        _
    $region32: #{hamburger_v1_forward.1} parent=5 // pred_fallthru
      _
    %p223 = scmp.le.s32.totalorder 1, %s12
    %p224 = scmp.lt.s32.totalorder %s12, 3
    %p225 = pnand %p223, %p224
    %p226 = pneg %p225
    // Predicated region
    $region41: #{hamburger_v1_forward.1} parent=5 // pred_check
      _
    $region42: #{hamburger_v1_forward.1} parent=5 // pred_check_branch
      %228 = sbr.rel (%p225) target = $region44
    $region43: #{hamburger_v1_forward.1} parent=5 // pred_region
      %s229 = ssub.s32 %s12, 1
      %s230 = smul.u32 3, %s17
      %p231 = scmp.lt.s32.totalorder %s230, 5
      %s232 = scalar_select %p231, %s230, 5
      %s233 = smul.addr %s232, 2
      %s234 = smul.addr %s233, 8
      %s235 = scalar_lea.vmem %s0, %s234
      %p236 = pneg %p38
      %p237 = pneg %p35
      %p238 = pneg %p59
      %p239 = pneg %p56
      %p240 = pneg %p80
      %p241 = pneg %p77
      %p242 = pneg %p101
      %p243 = pneg %p98
      %p244 = pneg %p122
      %p245 = pneg %p119
      %p246 = scmp.lt.s32.totalorder %s17, 1
      %s247 = scalar_select %p246, %s17, 1
      %s248 = smul.addr %s247, 2
      %s249 = smul.addr %s248, 8
      %s250 = scalar_lea.vmem %s5, %s249
      %p251 = pneg %p148
      %p252 = pneg %p145
      %p253 = pneg %p174
      %p254 = pneg %p171
      %s255 = smul.u32 3, %s17
      %p256 = scmp.lt.s32.totalorder %s255, 5
      %s257 = scalar_select %p256, %s255, 5
      %s258 = smul.addr %s257, 2
      %s259 = smul.addr %s258, 8
      %s260 = scalar_lea.vmem %s6, %s259
      %s261 = smul.u32 3, %s17
      %p262 = scmp.lt.s32.totalorder %s261, 5
      %s263 = scalar_select %p262, %s261, 5
      %s264 = smul.addr %s263, 2
      %s265 = smul.addr %s264, 8
      %s266 = scalar_lea.vmem %s0, %s265
      %s267 = smul.u32 3, %s17
      %p268 = scmp.lt.s32.totalorder %s17, 1
      %s269 = scalar_select %p268, %s17, 1
      %s270 = smul.addr %s269, 2
      %s271 = smul.addr %s270, 8
      %s272 = scalar_lea.vmem %s5, %s271
      %s273 = smul.u32 3, %s17
      %p274 = scmp.lt.s32.totalorder %s273, 5
      %s275 = scalar_select %p274, %s273, 5
      %s276 = smul.addr %s275, 2
      %s277 = smul.addr %s276, 8
      %s278 = scalar_lea.vmem %s6, %s277
      %s279 = smul.u32 3, %s17
      %v280 = vld [vmem:[%s1] sm:$0xff]
      %v281 = vld [vmem:[%s1 + $0x8] sm:$0xff]
      %v282 = vld [vmem:[%s1 + $0x10] sm:$0xff]
      %v283 = vld [vmem:[%s1 + $0x18] sm:$0xff]
      %v284 = vld [vmem:[%s2] sm:$0xff]
      %v285 = vld [vmem:[%s2 + $0x8] sm:$0xff]
      %v286 = vld [vmem:[%s2 + $0x10] sm:$0xff]
      %v287 = vld [vmem:[%s2 + $0x18] sm:$0xff]
      %v288 = vld [vmem:[%s266] sm:$0xff]
      %v289 = vld [vmem:[%s266 + $0x8] sm:$0xff]
      %291 = vset.pattern.permute.xlu0 0
      %292 = vperm.xlu0 %291, %v284
      %v293 = vpop.permute.xlu0 %292
      %296 = vset.pattern.permute.xlu0 0
      %297 = vperm.xlu0 %296, %v285
      %v298 = vpop.permute.xlu0 %297
      %301 = vset.pattern.permute.xlu0 0
      %302 = vperm.xlu0 %301, %v286
      %v303 = vpop.permute.xlu0 %302
      %306 = vset.pattern.permute.xlu0 0
      %307 = vperm.xlu0 %306, %v287
      %v308 = vpop.permute.xlu0 %307
      %vm310 = vcmask 64512
      %v312 = vsel %vm310, %v280, 0
      %v315 = vsel %vm310, %v281, 0
      %v318 = vsel %vm310, %v282, 0
      %v321 = vsel %vm310, %v283, 0
      %323 = vmatprep.subr.mxu0 %v289
      %324 = vmatpush1.msra.mxu0 %v288
      %325 = vmatprep.subr.mxu0 0.0
      %326 = vmatpush1.msra.mxu0 0.0
      %327 = vmatprep.subr.mxu0 0.0
      %328 = vmatpush1.msra.mxu0 0.0
      %329 = vmatprep.subr.mxu0 0.0
      %330 = vmatpush1.msra.mxu0 0.0
      %331 = vmatprep.subr.mxu0 0.0
      %332 = vmatpush1.msra.mxu0 0.0
      %333 = vmatprep.subr.mxu0 0.0
      %334 = vmatpush1.msra.mxu0 0.0
      %335 = vmatprep.subr.mxu0 0.0
      %336 = vmatpush1.msra.mxu0 0.0
      %337 = vmatprep.subr.mxu0 0.0
      %338 = vmatpush1.msra.mxu0 0.0
      %339 = vmatprep.subr.mxu0 0.0
      %340 = vmatpush1.msra.mxu0 0.0
      %341 = vmatprep.subr.mxu0 0.0
      %342 = vmatpush1.msra.mxu0 0.0
      %343 = vmatprep.subr.mxu0 0.0
      %344 = vmatpush1.msra.mxu0 0.0
      %345 = vmatprep.subr.mxu0 0.0
      %346 = vmatpush1.msra.mxu0 0.0
      %347 = vmatprep.subr.mxu0 0.0
      %348 = vmatpush1.msra.mxu0 0.0
      %349 = vmatprep.subr.mxu0 0.0
      %350 = vmatpush1.msra.mxu0 0.0
      %351 = vmatprep.subr.mxu0 0.0
      %352 = vmatpush1.msra.mxu0 0.0
      %353 = vmatprep.subr.mxu0 0.0
      %354 = vmatpush1.msra.mxu0 0.0
      %355 = vmatprep.subr.mxu0 0.0
      %356 = vmatpush1.msra.mxu0 0.0
      %357 = vmatprep.subr.mxu0 0.0
      %358 = vmatpush1.msra.mxu0 0.0
      %359 = vmatprep.subr.mxu0 0.0
      %360 = vmatpush1.msra.mxu0 0.0
      %361 = vmatprep.subr.mxu0 0.0
      %362 = vmatpush1.msra.mxu0 0.0
      %363 = vmatprep.subr.mxu0 0.0
      %364 = vmatpush1.msra.mxu0 0.0
      %365 = vmatprep.subr.mxu0 0.0
      %366 = vmatpush1.msra.mxu0 0.0
      %367 = vmatprep.subr.mxu0 0.0
      %368 = vmatpush1.msra.mxu0 0.0
      %369 = vmatprep.subr.mxu0 0.0
      %370 = vmatpush1.msra.mxu0 0.0
      %371 = vmatprep.subr.mxu0 0.0
      %372 = vmatpush1.msra.mxu0 0.0
      %373 = vmatprep.subr.mxu0 0.0
      %374 = vmatpush1.msra.mxu0 0.0
      %375 = vmatprep.subr.mxu0 0.0
      %376 = vmatpush1.msra.mxu0 0.0
      %377 = vmatprep.subr.mxu0 0.0
      %378 = vmatpush1.msra.mxu0 0.0
      %379 = vmatprep.subr.mxu0 0.0
      %380 = vmatpush1.msra.mxu0 0.0
      %381 = vmatprep.subr.mxu0 0.0
      %382 = vmatpush1.msra.mxu0 0.0
      %383 = vmatprep.subr.mxu0 0.0
      %384 = vmatpush1.msra.mxu0 0.0
      %385 = vmatprep.subr.mxu0 0.0
      %386 = vmatpush1.msra.mxu0 0.0
      %387 = vmatprep.mubr.f32.mxu0 0.0
      %388 = vmatmul.mubr.f32.gmra.mrb[0].mxu0 %v312
      %v389 = vpop.f32.mrb[0].mxu0
      %v390 = vadd.f32 %v293, %v389
      %v391 = vpop.f32.mrb[0].mxu0
      %v392 = vadd.f32 %v293, %v391
      %393 = vmatprep.mubr.f32.mxu0 0.0
      %394 = vmatmul.mubr.f32.gmra.mrb[0].mxu0 %v315
      %v395 = vpop.f32.mrb[0].mxu0
      %v396 = vadd.f32 %v298, %v395
      %v397 = vpop.f32.mrb[0].mxu0
      %v398 = vadd.f32 %v298, %v397
      %399 = vmatprep.mubr.f32.mxu0 0.0
      %400 = vmatmul.mubr.f32.gmra.mrb[0].mxu0 %v318
      %v401 = vpop.f32.mrb[0].mxu0
      %v402 = vadd.f32 %v303, %v401
      %v403 = vpop.f32.mrb[0].mxu0
      %v404 = vadd.f32 %v303, %v403
      %405 = vmatprep.mubr.f32.mxu0 0.0
      %406 = vmatmul.mubr.f32.gmra.mrb[0].mxu0 %v321
      %v407 = vpop.f32.mrb[0].mxu0
      %v408 = vadd.f32 %v308, %v407
      %v409 = vpop.f32.mrb[0].mxu0
      %v410 = vadd.f32 %v308, %v409
      %411 = vdwg.mxu0
      %v412 = vmax.f32 %v390, 0.0
      %v413 = vmax.f32 %v392, 0.0
      %v414 = vmax.f32 %v396, 0.0
      %v415 = vmax.f32 %v398, 0.0
      %v416 = vmax.f32 %v402, 0.0
      %v417 = vmax.f32 %v404, 0.0
      %v418 = vmax.f32 %v408, 0.0
      %v419 = vmax.f32 %v410, 0.0
      %420 = vst [vmem:[#allocation2] sm:$0xff] %v412
      %421 = vst [vmem:[#allocation2 + $0x8] sm:$0xff] %v413
      %422 = vst [vmem:[#allocation2 + $0x30] sm:$0xff] %v414
      %423 = vst [vmem:[#allocation2 + $0x38] sm:$0xff] %v415
      %424 = vst [vmem:[#allocation2 + $0x60] sm:$0xff] %v416
      %425 = vst [vmem:[#allocation2 + $0x68] sm:$0xff] %v417
      %426 = vst [vmem:[#allocation2 + $0x90] sm:$0xff] %v418
      %427 = vst [vmem:[#allocation2 + $0x98] sm:$0xff] %v419
      %s428 = scalar_lea.vmem %s266, 16
      %v429 = vld [vmem:[%s428] sm:$0xff]
      %v430 = vld [vmem:[%s428 + $0x8] sm:$0xff]
      %431 = vmatprep.subr.mxu0 %v430
      %432 = vmatpush1.msra.mxu0 %v429
      %433 = vmatprep.subr.mxu0 0.0
      %434 = vmatpush1.msra.mxu0 0.0
      %435 = vmatprep.subr.mxu0 0.0
      %436 = vmatpush1.msra.mxu0 0.0
      %437 = vmatprep.subr.mxu0 0.0
      %438 = vmatpush1.msra.mxu0 0.0
      %439 = vmatprep.subr.mxu0 0.0
      %440 = vmatpush1.msra.mxu0 0.0
      %441 = vmatprep.subr.mxu0 0.0
      %442 = vmatpush1.msra.mxu0 0.0
      %443 = vmatprep.subr.mxu0 0.0
      %444 = vmatpush1.msra.mxu0 0.0
      %445 = vmatprep.subr.mxu0 0.0
      %446 = vmatpush1.msra.mxu0 0.0
      %447 = vmatprep.subr.mxu0 0.0
      %448 = vmatpush1.msra.mxu0 0.0
      %449 = vmatprep.subr.mxu0 0.0
      %450 = vmatpush1.msra.mxu0 0.0
      %451 = vmatprep.subr.mxu0 0.0
      %452 = vmatpush1.msra.mxu0 0.0
      %453 = vmatprep.subr.mxu0 0.0
      %454 = vmatpush1.msra.mxu0 0.0
      %455 = vmatprep.subr.mxu0 0.0
      %456 = vmatpush1.msra.mxu0 0.0
      %457 = vmatprep.subr.mxu0 0.0
      %458 = vmatpush1.msra.mxu0 0.0
      %459 = vmatprep.subr.mxu0 0.0
      %460 = vmatpush1.msra.mxu0 0.0
      %461 = vmatprep.subr.mxu0 0.0
      %462 = vmatpush1.msra.mxu0 0.0
      %463 = vmatprep.subr.mxu0 0.0
      %464 = vmatpush1.msra.mxu0 0.0
      %465 = vmatprep.subr.mxu0 0.0
      %466 = vmatpush1.msra.mxu0 0.0
      %467 = vmatprep.subr.mxu0 0.0
      %468 = vmatpush1.msra.mxu0 0.0
      %469 = vmatprep.subr.mxu0 0.0
      %470 = vmatpush1.msra.mxu0 0.0
      %471 = vmatprep.subr.mxu0 0.0
      %472 = vmatpush1.msra.mxu0 0.0
      %473 = vmatprep.subr.mxu0 0.0
      %474 = vmatpush1.msra.mxu0 0.0
      %475 = vmatprep.subr.mxu0 0.0
      %476 = vmatpush1.msra.mxu0 0.0
      %477 = vmatprep.subr.mxu0 0.0
      %478 = vmatpush1.msra.mxu0 0.0
      %479 = vmatprep.subr.mxu0 0.0
      %480 = vmatpush1.msra.mxu0 0.0
      %481 = vmatprep.subr.mxu0 0.0
      %482 = vmatpush1.msra.mxu0 0.0
      %483 = vmatprep.subr.mxu0 0.0
      %484 = vmatpush1.msra.mxu0 0.0
      %485 = vmatprep.subr.mxu0 0.0
      %486 = vmatpush1.msra.mxu0 0.0
      %487 = vmatprep.subr.mxu0 0.0
      %488 = vmatpush1.msra.mxu0 0.0
      %489 = vmatprep.subr.mxu0 0.0
      %490 = vmatpush1.msra.mxu0 0.0
      %491 = vmatprep.subr.mxu0 0.0
      %492 = vmatpush1.msra.mxu0 0.0
      %493 = vmatprep.subr.mxu0 0.0
      %494 = vmatpush1.msra.mxu0 0.0
      %495 = vmatprep.mubr.f32.mxu0 0.0
      %496 = vmatmul.mubr.f32.gmra.mrb[0].mxu0 %v312
      %v497 = vpop.f32.mrb[0].mxu0
      %v498 = vadd.f32 %v293, %v497
      %v499 = vpop.f32.mrb[0].mxu0
      %v500 = vadd.f32 %v293, %v499
      %501 = vmatprep.mubr.f32.mxu0 0.0
      %502 = vmatmul.mubr.f32.gmra.mrb[0].mxu0 %v315
      %v503 = vpop.f32.mrb[0].mxu0
      %v504 = vadd.f32 %v298, %v503
      %v505 = vpop.f32.mrb[0].mxu0
      %v506 = vadd.f32 %v298, %v505
      %507 = vmatprep.mubr.f32.mxu0 0.0
      %508 = vmatmul.mubr.f32.gmra.mrb[0].mxu0 %v318
      %v509 = vpop.f32.mrb[0].mxu0
      %v510 = vadd.f32 %v303, %v509
      %v511 = vpop.f32.mrb[0].mxu0
      %v512 = vadd.f32 %v303, %v511
      %513 = vmatprep.mubr.f32.mxu0 0.0
      %514 = vmatmul.mubr.f32.gmra.mrb[0].mxu0 %v321
      %v515 = vpop.f32.mrb[0].mxu0
      %v516 = vadd.f32 %v308, %v515
      %v517 = vpop.f32.mrb[0].mxu0
      %v518 = vadd.f32 %v308, %v517
      %519 = vdwg.mxu0
      %v520 = vmax.f32 %v498, 0.0
      %v521 = vmax.f32 %v500, 0.0
      %v522 = vmax.f32 %v504, 0.0
      %v523 = vmax.f32 %v506, 0.0
      %v524 = vmax.f32 %v510, 0.0
      %v525 = vmax.f32 %v512, 0.0
      %v526 = vmax.f32 %v516, 0.0
      %v527 = vmax.f32 %v518, 0.0
      %528 = vst [vmem:[#allocation2 + $0x10] sm:$0xff] %v520
      %529 = vst [vmem:[#allocation2 + $0x18] sm:$0xff] %v521
      %530 = vst [vmem:[#allocation2 + $0x40] sm:$0xff] %v522
      %531 = vst [vmem:[#allocation2 + $0x48] sm:$0xff] %v523
      %532 = vst [vmem:[#allocation2 + $0x70] sm:$0xff] %v524
      %533 = vst [vmem:[#allocation2 + $0x78] sm:$0xff] %v525
      %534 = vst [vmem:[#allocation2 + $0xa0] sm:$0xff] %v526
      %535 = vst [vmem:[#allocation2 + $0xa8] sm:$0xff] %v527
      %s536 = scalar_lea.vmem %s266, 32
      %v537 = vld [vmem:[%s536] sm:$0xff]
      %v538 = vld [vmem:[%s536 + $0x8] sm:$0xff]
      %539 = vmatprep.subr.mxu0 %v538
      %540 = vmatpush1.msra.mxu0 %v537
      %541 = vmatprep.subr.mxu0 0.0
      %542 = vmatpush1.msra.mxu0 0.0
      %543 = vmatprep.subr.mxu0 0.0
      %544 = vmatpush1.msra.mxu0 0.0
      %545 = vmatprep.subr.mxu0 0.0
      %546 = vmatpush1.msra.mxu0 0.0
      %547 = vmatprep.subr.mxu0 0.0
      %548 = vmatpush1.msra.mxu0 0.0
      %549 = vmatprep.subr.mxu0 0.0
      %550 = vmatpush1.msra.mxu0 0.0
      %551 = vmatprep.subr.mxu0 0.0
      %552 = vmatpush1.msra.mxu0 0.0
      %553 = vmatprep.subr.mxu0 0.0
      %554 = vmatpush1.msra.mxu0 0.0
      %555 = vmatprep.subr.mxu0 0.0
      %556 = vmatpush1.msra.mxu0 0.0
      %557 = vmatprep.subr.mxu0 0.0
      %558 = vmatpush1.msra.mxu0 0.0
      %559 = vmatprep.subr.mxu0 0.0
      %560 = vmatpush1.msra.mxu0 0.0
      %561 = vmatprep.subr.mxu0 0.0
      %562 = vmatpush1.msra.mxu0 0.0
      %563 = vmatprep.subr.mxu0 0.0
      %564 = vmatpush1.msra.mxu0 0.0
      %565 = vmatprep.subr.mxu0 0.0
      %566 = vmatpush1.msra.mxu0 0.0
      %567 = vmatprep.subr.mxu0 0.0
      %568 = vmatpush1.msra.mxu0 0.0
      %569 = vmatprep.subr.mxu0 0.0
      %570 = vmatpush1.msra.mxu0 0.0
      %571 = vmatprep.subr.mxu0 0.0
      %572 = vmatpush1.msra.mxu0 0.0
      %573 = vmatprep.subr.mxu0 0.0
      %574 = vmatpush1.msra.mxu0 0.0
      %575 = vmatprep.subr.mxu0 0.0
      %576 = vmatpush1.msra.mxu0 0.0
      %577 = vmatprep.subr.mxu0 0.0
      %578 = vmatpush1.msra.mxu0 0.0
      %579 = vmatprep.subr.mxu0 0.0
      %580 = vmatpush1.msra.mxu0 0.0
      %581 = vmatprep.subr.mxu0 0.0
      %582 = vmatpush1.msra.mxu0 0.0
      %583 = vmatprep.subr.mxu0 0.0
      %584 = vmatpush1.msra.mxu0 0.0
      %585 = vmatprep.subr.mxu0 0.0
      %586 = vmatpush1.msra.mxu0 0.0
      %587 = vmatprep.subr.mxu0 0.0
      %588 = vmatpush1.msra.mxu0 0.0
      %589 = vmatprep.subr.mxu0 0.0
      %590 = vmatpush1.msra.mxu0 0.0
      %591 = vmatprep.subr.mxu0 0.0
      %592 = vmatpush1.msra.mxu0 0.0
      %593 = vmatprep.subr.mxu0 0.0
      %594 = vmatpush1.msra.mxu0 0.0
      %595 = vmatprep.subr.mxu0 0.0
      %596 = vmatpush1.msra.mxu0 0.0
      %597 = vmatprep.subr.mxu0 0.0
      %598 = vmatpush1.msra.mxu0 0.0
      %599 = vmatprep.subr.mxu0 0.0
      %600 = vmatpush1.msra.mxu0 0.0
      %601 = vmatprep.subr.mxu0 0.0
      %602 = vmatpush1.msra.mxu0 0.0
      %603 = vmatprep.mubr.f32.mxu0 0.0
      %604 = vmatmul.mubr.f32.gmra.mrb[0].mxu0 %v312
      %v605 = vpop.f32.mrb[0].mxu0
      %v606 = vadd.f32 %v293, %v605
      %v607 = vpop.f32.mrb[0].mxu0
      %v608 = vadd.f32 %v293, %v607
      %609 = vmatprep.mubr.f32.mxu0 0.0
      %610 = vmatmul.mubr.f32.gmra.mrb[0].mxu0 %v315
      %v611 = vpop.f32.mrb[0].mxu0
      %v612 = vadd.f32 %v298, %v611
      %v613 = vpop.f32.mrb[0].mxu0
      %v614 = vadd.f32 %v298, %v613
      %615 = vmatprep.mubr.f32.mxu0 0.0
      %616 = vmatmul.mubr.f32.gmra.mrb[0].mxu0 %v318
      %v617 = vpop.f32.mrb[0].mxu0
      %v618 = vadd.f32 %v303, %v617
      %v619 = vpop.f32.mrb[0].mxu0
      %v620 = vadd.f32 %v303, %v619
      %621 = vmatprep.mubr.f32.mxu0 0.0
      %622 = vmatmul.mubr.f32.gmra.mrb[0].mxu0 %v321
      %v623 = vpop.f32.mrb[0].mxu0
      %v624 = vadd.f32 %v308, %v623
      %v625 = vpop.f32.mrb[0].mxu0
      %v626 = vadd.f32 %v308, %v625
      %627 = vdwg.mxu0
      %v628 = vmax.f32 %v606, 0.0
      %v629 = vmax.f32 %v608, 0.0
      %v630 = vmax.f32 %v612, 0.0
      %v631 = vmax.f32 %v614, 0.0
      %v632 = vmax.f32 %v618, 0.0
      %v633 = vmax.f32 %v620, 0.0
      %v634 = vmax.f32 %v624, 0.0
      %v635 = vmax.f32 %v626, 0.0
      %636 = vst [vmem:[#allocation2 + $0x20] sm:$0xff] %v628
      %637 = vst [vmem:[#allocation2 + $0x28] sm:$0xff] %v629
      %638 = vst [vmem:[#allocation2 + $0x50] sm:$0xff] %v630
      %639 = vst [vmem:[#allocation2 + $0x58] sm:$0xff] %v631
      %640 = vst [vmem:[#allocation2 + $0x80] sm:$0xff] %v632
      %641 = vst [vmem:[#allocation2 + $0x88] sm:$0xff] %v633
      %642 = vst [vmem:[#allocation2 + $0xb0] sm:$0xff] %v634
      %643 = vst [vmem:[#allocation2 + $0xb8] sm:$0xff] %v635
      %v644 = vld [vmem:[%s272] sm:$0xff]
      %v645 = vld [vmem:[%s272 + $0x8] sm:$0xff]
      %v646 = vld [vmem:[#allocation2] sm:$0xff]
      %v647 = vld [vmem:[#allocation2 + $0x8] sm:$0xff]
      %v648 = vld [vmem:[#allocation2 + $0x10] sm:$0xff]
      %v649 = vld [vmem:[#allocation2 + $0x18] sm:$0xff]
      %v650 = vld [vmem:[#allocation2 + $0x20] sm:$0xff]
      %v651 = vld [vmem:[#allocation2 + $0x28] sm:$0xff]
      %v652 = vld [vmem:[#allocation2 + $0x30] sm:$0xff]
      %v653 = vld [vmem:[#allocation2 + $0x38] sm:$0xff]
      %v654 = vld [vmem:[#allocation2 + $0x40] sm:$0xff]
      %v655 = vld [vmem:[#allocation2 + $0x48] sm:$0xff]
      %v656 = vld [vmem:[#allocation2 + $0x50] sm:$0xff]
      %v657 = vld [vmem:[#allocation2 + $0x58] sm:$0xff]
      %v658 = vld [vmem:[#allocation2 + $0x60] sm:$0xff]
      %v659 = vld [vmem:[#allocation2 + $0x68] sm:$0xff]
      %v660 = vld [vmem:[#allocation2 + $0x70] sm:$0xff]
      %v661 = vld [vmem:[#allocation2 + $0x78] sm:$0xff]
      %v662 = vld [vmem:[#allocation2 + $0x80] sm:$0xff]
      %v663 = vld [vmem:[#allocation2 + $0x88] sm:$0xff]
      %v664 = vld [vmem:[#allocation2 + $0x90] sm:$0xff]
      %v665 = vld [vmem:[#allocation2 + $0x98] sm:$0xff]
      %v666 = vld [vmem:[#allocation2 + $0xa0] sm:$0xff]
      %v667 = vld [vmem:[#allocation2 + $0xa8] sm:$0xff]
      %v668 = vld [vmem:[#allocation2 + $0xb0] sm:$0xff]
      %v669 = vld [vmem:[#allocation2 + $0xb8] sm:$0xff]
      %vm670 = vcmask 261120
      %v672 = vsel %vm670, %v644, 0
      %v675 = vsel %vm670, %v645, 0
      %677 = vmatprep.subr.mxu0 %v647
      %678 = vmatpush1.msra.mxu0 %v646
      %679 = vmatprep.subr.mxu0 %v653
      %680 = vmatpush1.msra.mxu0 %v652
      %681 = vmatprep.subr.mxu0 %v659
      %682 = vmatpush1.msra.mxu0 %v658
      %683 = vmatprep.subr.mxu0 %v665
      %684 = vmatpush1.msra.mxu0 %v664
      %685 = vmatprep.subr.mxu0 0.0
      %686 = vmatpush1.msra.mxu0 0.0
      %687 = vmatprep.subr.mxu0 0.0
      %688 = vmatpush1.msra.mxu0 0.0
      %689 = vmatprep.subr.mxu0 0.0
      %690 = vmatpush1.msra.mxu0 0.0
      %691 = vmatprep.subr.mxu0 0.0
      %692 = vmatpush1.msra.mxu0 0.0
      %693 = vmatprep.subr.mxu0 0.0
      %694 = vmatpush1.msra.mxu0 0.0
      %695 = vmatprep.subr.mxu0 0.0
      %696 = vmatpush1.msra.mxu0 0.0
      %697 = vmatprep.subr.mxu0 0.0
      %698 = vmatpush1.msra.mxu0 0.0
      %699 = vmatprep.subr.mxu0 0.0
      %700 = vmatpush1.msra.mxu0 0.0
      %701 = vmatprep.subr.mxu0 0.0
      %702 = vmatpush1.msra.mxu0 0.0
      %703 = vmatprep.subr.mxu0 0.0
      %704 = vmatpush1.msra.mxu0 0.0
      %705 = vmatprep.subr.mxu0 0.0
      %706 = vmatpush1.msra.mxu0 0.0
      %707 = vmatprep.subr.mxu0 0.0
      %708 = vmatpush1.msra.mxu0 0.0
      %709 = vmatprep.subr.mxu0 0.0
      %710 = vmatpush1.msra.mxu0 0.0
      %711 = vmatprep.subr.mxu0 0.0
      %712 = vmatpush1.msra.mxu0 0.0
      %713 = vmatprep.subr.mxu0 0.0
      %714 = vmatpush1.msra.mxu0 0.0
      %715 = vmatprep.subr.mxu0 0.0
      %716 = vmatpush1.msra.mxu0 0.0
      %717 = vmatprep.subr.mxu0 0.0
      %718 = vmatpush1.msra.mxu0 0.0
      %719 = vmatprep.subr.mxu0 0.0
      %720 = vmatpush1.msra.mxu0 0.0
      %721 = vmatprep.subr.mxu0 0.0
      %722 = vmatpush1.msra.mxu0 0.0
      %723 = vmatprep.subr.mxu0 0.0
      %724 = vmatpush1.msra.mxu0 0.0
      %725 = vmatprep.subr.mxu0 0.0
      %726 = vmatpush1.msra.mxu0 0.0
      %727 = vmatprep.subr.mxu0 0.0
      %728 = vmatpush1.msra.mxu0 0.0
      %729 = vmatprep.subr.mxu0 0.0
      %730 = vmatpush1.msra.mxu0 0.0
      %731 = vmatprep.subr.mxu0 0.0
      %732 = vmatpush1.msra.mxu0 0.0
      %733 = vmatprep.subr.mxu0 0.0
      %734 = vmatpush1.msra.mxu0 0.0
      %735 = vmatprep.subr.mxu0 0.0
      %736 = vmatpush1.msra.mxu0 0.0
      %737 = vmatprep.subr.mxu0 0.0
      %738 = vmatpush1.msra.mxu0 0.0
      %739 = vmatprep.subr.mxu0 0.0
      %740 = vmatpush1.msra.mxu0 0.0
      %741 = vmatprep.mubr.f32.mxu0 0.0
      %742 = vmatmul.mubr.f32.gmra.mrb[0].mxu0 %v672
      %v743 = vpop.f32.mrb[0].mxu0
      %v744 = vadd.f32 0.0, %v743
      %v745 = vpop.f32.mrb[0].mxu0
      %v746 = vadd.f32 0.0, %v745
      %747 = vmatprep.mubr.f32.mxu0 0.0
      %748 = vmatmul.mubr.f32.gmra.mrb[0].mxu0 %v675
      %v749 = vpop.f32.mrb[0].mxu0
      %v750 = vadd.f32 0.0, %v749
      %v751 = vpop.f32.mrb[0].mxu0
      %v752 = vadd.f32 0.0, %v751
      %753 = vdwg.mxu0
      %754 = vmatprep.subr.mxu0 %v649
      %755 = vmatpush1.msra.mxu0 %v648
      %756 = vmatprep.subr.mxu0 %v655
      %757 = vmatpush1.msra.mxu0 %v654
      %758 = vmatprep.subr.mxu0 %v661
      %759 = vmatpush1.msra.mxu0 %v660
      %760 = vmatprep.subr.mxu0 %v667
      %761 = vmatpush1.msra.mxu0 %v666
      %762 = vmatprep.subr.mxu0 0.0
      %763 = vmatpush1.msra.mxu0 0.0
      %764 = vmatprep.subr.mxu0 0.0
      %765 = vmatpush1.msra.mxu0 0.0
      %766 = vmatprep.subr.mxu0 0.0
      %767 = vmatpush1.msra.mxu0 0.0
      %768 = vmatprep.subr.mxu0 0.0
      %769 = vmatpush1.msra.mxu0 0.0
      %770 = vmatprep.subr.mxu0 0.0
      %771 = vmatpush1.msra.mxu0 0.0
      %772 = vmatprep.subr.mxu0 0.0
      %773 = vmatpush1.msra.mxu0 0.0
      %774 = vmatprep.subr.mxu0 0.0
      %775 = vmatpush1.msra.mxu0 0.0
      %776 = vmatprep.subr.mxu0 0.0
      %777 = vmatpush1.msra.mxu0 0.0
      %778 = vmatprep.subr.mxu0 0.0
      %779 = vmatpush1.msra.mxu0 0.0
      %780 = vmatprep.subr.mxu0 0.0
      %781 = vmatpush1.msra.mxu0 0.0
      %782 = vmatprep.subr.mxu0 0.0
      %783 = vmatpush1.msra.mxu0 0.0
      %784 = vmatprep.subr.mxu0 0.0
      %785 = vmatpush1.msra.mxu0 0.0
      %786 = vmatprep.subr.mxu0 0.0
      %787 = vmatpush1.msra.mxu0 0.0
      %788 = vmatprep.subr.mxu0 0.0
      %789 = vmatpush1.msra.mxu0 0.0
      %790 = vmatprep.subr.mxu0 0.0
      %791 = vmatpush1.msra.mxu0 0.0
      %792 = vmatprep.subr.mxu0 0.0
      %793 = vmatpush1.msra.mxu0 0.0
      %794 = vmatprep.subr.mxu0 0.0
      %795 = vmatpush1.msra.mxu0 0.0
      %796 = vmatprep.subr.mxu0 0.0
      %797 = vmatpush1.msra.mxu0 0.0
      %798 = vmatprep.subr.mxu0 0.0
      %799 = vmatpush1.msra.mxu0 0.0
      %800 = vmatprep.subr.mxu0 0.0
      %801 = vmatpush1.msra.mxu0 0.0
      %802 = vmatprep.subr.mxu0 0.0
      %803 = vmatpush1.msra.mxu0 0.0
      %804 = vmatprep.subr.mxu0 0.0
      %805 = vmatpush1.msra.mxu0 0.0
      %806 = vmatprep.subr.mxu0 0.0
      %807 = vmatpush1.msra.mxu0 0.0
      %808 = vmatprep.subr.mxu0 0.0
      %809 = vmatpush1.msra.mxu0 0.0
      %810 = vmatprep.subr.mxu0 0.0
      %811 = vmatpush1.msra.mxu0 0.0
      %812 = vmatprep.subr.mxu0 0.0
      %813 = vmatpush1.msra.mxu0 0.0
      %814 = vmatprep.subr.mxu0 0.0
      %815 = vmatpush1.msra.mxu0 0.0
      %816 = vmatprep.subr.mxu0 0.0
      %817 = vmatpush1.msra.mxu0 0.0
      %818 = vmatprep.mubr.f32.mxu0 0.0
      %819 = vmatmul.mubr.f32.gmra.mrb[0].mxu0 %v672
      %v820 = vpop.f32.mrb[0].mxu0
      %v821 = vadd.f32 0.0, %v820
      %v822 = vpop.f32.mrb[0].mxu0
      %v823 = vadd.f32 0.0, %v822
      %824 = vmatprep.mubr.f32.mxu0 0.0
      %825 = vmatmul.mubr.f32.gmra.mrb[0].mxu0 %v675
      %v826 = vpop.f32.mrb[0].mxu0
      %v827 = vadd.f32 0.0, %v826
      %v828 = vpop.f32.mrb[0].mxu0
      %v829 = vadd.f32 0.0, %v828
      %830 = vdwg.mxu0
      %831 = vmatprep.subr.mxu0 %v651
      %832 = vmatpush1.msra.mxu0 %v650
      %833 = vmatprep.subr.mxu0 %v657
      %834 = vmatpush1.msra.mxu0 %v656
      %835 = vmatprep.subr.mxu0 %v663
      %836 = vmatpush1.msra.mxu0 %v662
      %837 = vmatprep.subr.mxu0 %v669
      %838 = vmatpush1.msra.mxu0 %v668
      %839 = vmatprep.subr.mxu0 0.0
      %840 = vmatpush1.msra.mxu0 0.0
      %841 = vmatprep.subr.mxu0 0.0
      %842 = vmatpush1.msra.mxu0 0.0
      %843 = vmatprep.subr.mxu0 0.0
      %844 = vmatpush1.msra.mxu0 0.0
      %845 = vmatprep.subr.mxu0 0.0
      %846 = vmatpush1.msra.mxu0 0.0
      %847 = vmatprep.subr.mxu0 0.0
      %848 = vmatpush1.msra.mxu0 0.0
      %849 = vmatprep.subr.mxu0 0.0
      %850 = vmatpush1.msra.mxu0 0.0
      %851 = vmatprep.subr.mxu0 0.0
      %852 = vmatpush1.msra.mxu0 0.0
      %853 = vmatprep.subr.mxu0 0.0
      %854 = vmatpush1.msra.mxu0 0.0
      %855 = vmatprep.subr.mxu0 0.0
      %856 = vmatpush1.msra.mxu0 0.0
      %857 = vmatprep.subr.mxu0 0.0
      %858 = vmatpush1.msra.mxu0 0.0
      %859 = vmatprep.subr.mxu0 0.0
      %860 = vmatpush1.msra.mxu0 0.0
      %861 = vmatprep.subr.mxu0 0.0
      %862 = vmatpush1.msra.mxu0 0.0
      %863 = vmatprep.subr.mxu0 0.0
      %864 = vmatpush1.msra.mxu0 0.0
      %865 = vmatprep.subr.mxu0 0.0
      %866 = vmatpush1.msra.mxu0 0.0
      %867 = vmatprep.subr.mxu0 0.0
      %868 = vmatpush1.msra.mxu0 0.0
      %869 = vmatprep.subr.mxu0 0.0
      %870 = vmatpush1.msra.mxu0 0.0
      %871 = vmatprep.subr.mxu0 0.0
      %872 = vmatpush1.msra.mxu0 0.0
      %873 = vmatprep.subr.mxu0 0.0
      %874 = vmatpush1.msra.mxu0 0.0
      %875 = vmatprep.subr.mxu0 0.0
      %876 = vmatpush1.msra.mxu0 0.0
      %877 = vmatprep.subr.mxu0 0.0
      %878 = vmatpush1.msra.mxu0 0.0
      %879 = vmatprep.subr.mxu0 0.0
      %880 = vmatpush1.msra.mxu0 0.0
      %881 = vmatprep.subr.mxu0 0.0
      %882 = vmatpush1.msra.mxu0 0.0
      %883 = vmatprep.subr.mxu0 0.0
      %884 = vmatpush1.msra.mxu0 0.0
      %885 = vmatprep.subr.mxu0 0.0
      %886 = vmatpush1.msra.mxu0 0.0
      %887 = vmatprep.subr.mxu0 0.0
      %888 = vmatpush1.msra.mxu0 0.0
      %889 = vmatprep.subr.mxu0 0.0
      %890 = vmatpush1.msra.mxu0 0.0
      %891 = vmatprep.subr.mxu0 0.0
      %892 = vmatpush1.msra.mxu0 0.0
      %893 = vmatprep.subr.mxu0 0.0
      %894 = vmatpush1.msra.mxu0 0.0
      %895 = vmatprep.mubr.f32.mxu0 0.0
      %896 = vmatmul.mubr.f32.gmra.mrb[0].mxu0 %v672
      %v897 = vpop.f32.mrb[0].mxu0
      %v898 = vadd.f32 0.0, %v897
      %v899 = vpop.f32.mrb[0].mxu0
      %v900 = vadd.f32 0.0, %v899
      %901 = vmatprep.mubr.f32.mxu0 0.0
      %902 = vmatmul.mubr.f32.gmra.mrb[0].mxu0 %v675
      %v903 = vpop.f32.mrb[0].mxu0
      %v904 = vadd.f32 0.0, %v903
      %v905 = vpop.f32.mrb[0].mxu0
      %v906 = vadd.f32 0.0, %v905
      %907 = vdwg.mxu0
      %v908 = vmax.f32 %v744, %v750
      %v909 = vrot.slane %v908, 4
      %v910 = vmax.f32 %v908, %v909
      %v911 = vrot.slane %v910, 2
      %v912 = vmax.f32 %v910, %v911
      %v913 = vrot.slane %v912, 1
      %v914 = vmax.f32 %v912, %v913
      %v915 = vmax.f32 %v746, %v752
      %v916 = vrot.slane %v915, 4
      %v917 = vmax.f32 %v915, %v916
      %v918 = vrot.slane %v917, 2
      %v919 = vmax.f32 %v917, %v918
      %v920 = vrot.slane %v919, 1
      %v921 = vmax.f32 %v919, %v920
      %v922 = vmax.f32 %v821, %v827
      %v923 = vrot.slane %v922, 4
      %v924 = vmax.f32 %v922, %v923
      %v925 = vrot.slane %v924, 2
      %v926 = vmax.f32 %v924, %v925
      %v927 = vrot.slane %v926, 1
      %v928 = vmax.f32 %v926, %v927
      %v929 = vmax.f32 %v823, %v829
      %v930 = vrot.slane %v929, 4
      %v931 = vmax.f32 %v929, %v930
      %v932 = vrot.slane %v931, 2
      %v933 = vmax.f32 %v931, %v932
      %v934 = vrot.slane %v933, 1
      %v935 = vmax.f32 %v933, %v934
      %v936 = vmax.f32 %v898, %v904
      %v937 = vrot.slane %v936, 4
      %v938 = vmax.f32 %v936, %v937
      %v939 = vrot.slane %v938, 2
      %v940 = vmax.f32 %v938, %v939
      %v941 = vrot.slane %v940, 1
      %v942 = vmax.f32 %v940, %v941
      %v943 = vmax.f32 %v900, %v906
      %v944 = vrot.slane %v943, 4
      %v945 = vmax.f32 %v943, %v944
      %v946 = vrot.slane %v945, 2
      %v947 = vmax.f32 %v945, %v946
      %v948 = vrot.slane %v947, 1
      %v949 = vmax.f32 %v947, %v948
      %v950 = vsub.f32 %v744, %v914
      %v951 = vsub.f32 %v746, %v921
      %v952 = vsub.f32 %v821, %v928
      %v953 = vsub.f32 %v823, %v935
      %v954 = vsub.f32 %v898, %v942
      %v955 = vsub.f32 %v900, %v949
      %v956 = vsub.f32 %v750, %v914
      %v957 = vsub.f32 %v752, %v921
      %v958 = vsub.f32 %v827, %v928
      %v959 = vsub.f32 %v829, %v935
      %v960 = vsub.f32 %v904, %v942
      %v961 = vsub.f32 %v906, %v949
      %v962 = vmul.f32 %v950, 1.442695
      %v963 = vpow.pop %v962
      %v964 = vmul.f32 %v951, 1.442695
      %v965 = vpow.pop %v964
      %v966 = vmul.f32 %v952, 1.442695
      %v967 = vpow.pop %v966
      %v968 = vmul.f32 %v953, 1.442695
      %v969 = vpow.pop %v968
      %v970 = vmul.f32 %v954, 1.442695
      %v971 = vpow.pop %v970
      %v972 = vmul.f32 %v955, 1.442695
      %v973 = vpow.pop %v972
      %v974 = vmul.f32 %v956, 1.442695
      %v975 = vpow.pop %v974
      %v976 = vmul.f32 %v957, 1.442695
      %v977 = vpow.pop %v976
      %v978 = vmul.f32 %v958, 1.442695
      %v979 = vpow.pop %v978
      %v980 = vmul.f32 %v959, 1.442695
      %v981 = vpow.pop %v980
      %v982 = vmul.f32 %v960, 1.442695
      %v983 = vpow.pop %v982
      %v984 = vmul.f32 %v961, 1.442695
      %v985 = vpow.pop %v984
      %v986 = vadd.f32 %v963, %v975
      %v987 = vrot.slane %v986, 4
      %v988 = vadd.f32 %v986, %v987
      %v989 = vrot.slane %v988, 2
      %v990 = vadd.f32 %v988, %v989
      %v991 = vrot.slane %v990, 1
      %v992 = vadd.f32 %v990, %v991
      %v993 = vadd.f32 %v965, %v977
      %v994 = vrot.slane %v993, 4
      %v995 = vadd.f32 %v993, %v994
      %v996 = vrot.slane %v995, 2
      %v997 = vadd.f32 %v995, %v996
      %v998 = vrot.slane %v997, 1
      %v999 = vadd.f32 %v997, %v998
      %v1000 = vadd.f32 %v967, %v979
      %v1001 = vrot.slane %v1000, 4
      %v1002 = vadd.f32 %v1000, %v1001
      %v1003 = vrot.slane %v1002, 2
      %v1004 = vadd.f32 %v1002, %v1003
      %v1005 = vrot.slane %v1004, 1
      %v1006 = vadd.f32 %v1004, %v1005
      %v1007 = vadd.f32 %v969, %v981
      %v1008 = vrot.slane %v1007, 4
      %v1009 = vadd.f32 %v1007, %v1008
      %v1010 = vrot.slane %v1009, 2
      %v1011 = vadd.f32 %v1009, %v1010
      %v1012 = vrot.slane %v1011, 1
      %v1013 = vadd.f32 %v1011, %v1012
      %v1014 = vadd.f32 %v971, %v983
      %v1015 = vrot.slane %v1014, 4
      %v1016 = vadd.f32 %v1014, %v1015
      %v1017 = vrot.slane %v1016, 2
      %v1018 = vadd.f32 %v1016, %v1017
      %v1019 = vrot.slane %v1018, 1
      %v1020 = vadd.f32 %v1018, %v1019
      %v1021 = vadd.f32 %v973, %v985
      %v1022 = vrot.slane %v1021, 4
      %v1023 = vadd.f32 %v1021, %v1022
      %v1024 = vrot.slane %v1023, 2
      %v1025 = vadd.f32 %v1023, %v1024
      %v1026 = vrot.slane %v1025, 1
      %v1027 = vadd.f32 %v1025, %v1026
      %v1028 = vrcp.pop %v992
      %v1029 = vrcp.pop %v999
      %v1030 = vrcp.pop %v1006
      %v1031 = vrcp.pop %v1013
      %v1032 = vrcp.pop %v1020
      %v1033 = vrcp.pop %v1027
      %v1034 = vmul.f32 %v963, %v1028
      %v1035 = vmul.f32 %v965, %v1029
      %v1036 = vmul.f32 %v967, %v1030
      %v1037 = vmul.f32 %v969, %v1031
      %v1038 = vmul.f32 %v971, %v1032
      %v1039 = vmul.f32 %v973, %v1033
      %v1040 = vmul.f32 %v975, %v1028
      %v1041 = vmul.f32 %v977, %v1029
      %v1042 = vmul.f32 %v979, %v1030
      %v1043 = vmul.f32 %v981, %v1031
      %v1044 = vmul.f32 %v983, %v1032
      %v1045 = vmul.f32 %v985, %v1033
      %1046 = vmatprep.subr.mxu0 0.0
      %1047 = vmatpush1.xpose.msra.mxu0 %v672
      %1048 = vmatprep.subr.mxu0 0.0
      %1049 = vmatpush1.xpose.msra.mxu0 %v675
      %1050 = vmatprep.subr.mxu0 0.0
      %1051 = vmatpush1.xpose.msra.mxu0 0.0
      %1052 = vmatprep.subr.mxu0 0.0
      %1053 = vmatpush1.xpose.msra.mxu0 0.0
      %1054 = vmatprep.subr.mxu0 0.0
      %1055 = vmatpush1.xpose.msra.mxu0 0.0
      %1056 = vmatprep.subr.mxu0 0.0
      %1057 = vmatpush1.xpose.msra.mxu0 0.0
      %1058 = vmatprep.subr.mxu0 0.0
      %1059 = vmatpush1.xpose.msra.mxu0 0.0
      %1060 = vmatprep.subr.mxu0 0.0
      %1061 = vmatpush1.xpose.msra.mxu0 0.0
      %1062 = vmatprep.subr.mxu0 0.0
      %1063 = vmatpush1.xpose.msra.mxu0 0.0
      %1064 = vmatprep.subr.mxu0 0.0
      %1065 = vmatpush1.xpose.msra.mxu0 0.0
      %1066 = vmatprep.subr.mxu0 0.0
      %1067 = vmatpush1.xpose.msra.mxu0 0.0
      %1068 = vmatprep.subr.mxu0 0.0
      %1069 = vmatpush1.xpose.msra.mxu0 0.0
      %1070 = vmatprep.subr.mxu0 0.0
      %1071 = vmatpush1.xpose.msra.mxu0 0.0
      %1072 = vmatprep.subr.mxu0 0.0
      %1073 = vmatpush1.xpose.msra.mxu0 0.0
      %1074 = vmatprep.subr.mxu0 0.0
      %1075 = vmatpush1.xpose.msra.mxu0 0.0
      %1076 = vmatprep.subr.mxu0 0.0
      %1077 = vmatpush1.xpose.msra.mxu0 0.0
      %1078 = vmatprep.subr.mxu0 0.0
      %1079 = vmatpush1.xpose.msra.mxu0 0.0
      %1080 = vmatprep.subr.mxu0 0.0
      %1081 = vmatpush1.xpose.msra.mxu0 0.0
      %1082 = vmatprep.subr.mxu0 0.0
      %1083 = vmatpush1.xpose.msra.mxu0 0.0
      %1084 = vmatprep.subr.mxu0 0.0
      %1085 = vmatpush1.xpose.msra.mxu0 0.0
      %1086 = vmatprep.subr.mxu0 0.0
      %1087 = vmatpush1.xpose.msra.mxu0 0.0
      %1088 = vmatprep.subr.mxu0 0.0
      %1089 = vmatpush1.xpose.msra.mxu0 0.0
      %1090 = vmatprep.subr.mxu0 0.0
      %1091 = vmatpush1.xpose.msra.mxu0 0.0
      %1092 = vmatprep.subr.mxu0 0.0
      %1093 = vmatpush1.xpose.msra.mxu0 0.0
      %1094 = vmatprep.subr.mxu0 0.0
      %1095 = vmatpush1.xpose.msra.mxu0 0.0
      %1096 = vmatprep.subr.mxu0 0.0
      %1097 = vmatpush1.xpose.msra.mxu0 0.0
      %1098 = vmatprep.subr.mxu0 0.0
      %1099 = vmatpush1.xpose.msra.mxu0 0.0
      %1100 = vmatprep.subr.mxu0 0.0
      %1101 = vmatpush1.xpose.msra.mxu0 0.0
      %1102 = vmatprep.subr.mxu0 0.0
      %1103 = vmatpush1.xpose.msra.mxu0 0.0
      %1104 = vmatprep.subr.mxu0 0.0
      %1105 = vmatpush1.xpose.msra.mxu0 0.0
      %1106 = vmatprep.subr.mxu0 0.0
      %1107 = vmatpush1.xpose.msra.mxu0 0.0
      %1108 = vmatprep.subr.mxu0 0.0
      %1109 = vmatpush1.xpose.msra.mxu0 0.0
      %1110 = vmatprep.mubr.f32.mxu0 0.0
      %1111 = vmatmul.mubr.f32.gmra.mrb[0].mxu0 %v672
      %v1112 = vpop.f32.mrb[0].mxu0
      %v1113 = vadd.f32 0.0, %v1112
      %v1114 = vpop.f32.mrb[0].mxu0
      %1115 = vmatprep.mubr.f32.mxu0 0.0
      %1116 = vmatmul.mubr.f32.gmra.mrb[0].mxu0 %v675
      %v1117 = vpop.f32.mrb[0].mxu0
      %v1118 = vadd.f32 0.0, %v1117
      %v1119 = vpop.f32.mrb[0].mxu0
      %1120 = vdwg.mxu0
      %v1121 = vmul.f32 %v1034, %v744
      %v1122 = vmul.f32 %v1035, %v746
      %v1123 = vmul.f32 %v1036, %v821
      %v1124 = vmul.f32 %v1037, %v823
      %v1125 = vmul.f32 %v1038, %v898
      %v1126 = vmul.f32 %v1039, %v900
      %v1127 = vmul.f32 %v1040, %v750
      %v1128 = vmul.f32 %v1041, %v752
      %v1129 = vmul.f32 %v1042, %v827
      %v1130 = vmul.f32 %v1043, %v829
      %v1131 = vmul.f32 %v1044, %v904
      %v1132 = vmul.f32 %v1045, %v906
      %vm1133 = vcmask 130048
      %v1135 = vsel %vm1133, %v1113, 0
      %v1138 = vsel %vm1133, %v1118, 0
      %1140 = vmatprep.subr.mxu0 %v1035
      %1141 = vmatpush1.msra.mxu0 %v1034
      %1142 = vmatprep.subr.mxu0 %v1041
      %1143 = vmatpush1.msra.mxu0 %v1040
      %1144 = vmatprep.subr.mxu0 0.0
      %1145 = vmatpush1.msra.mxu0 0.0
      %1146 = vmatprep.subr.mxu0 0.0
      %1147 = vmatpush1.msra.mxu0 0.0
      %1148 = vmatprep.subr.mxu0 0.0
      %1149 = vmatpush1.msra.mxu0 0.0
      %1150 = vmatprep.subr.mxu0 0.0
      %1151 = vmatpush1.msra.mxu0 0.0
      %1152 = vmatprep.subr.mxu0 0.0
      %1153 = vmatpush1.msra.mxu0 0.0
      %1154 = vmatprep.subr.mxu0 0.0
      %1155 = vmatpush1.msra.mxu0 0.0
      %1156 = vmatprep.subr.mxu0 0.0
      %1157 = vmatpush1.msra.mxu0 0.0
      %1158 = vmatprep.subr.mxu0 0.0
      %1159 = vmatpush1.msra.mxu0 0.0
      %1160 = vmatprep.subr.mxu0 0.0
      %1161 = vmatpush1.msra.mxu0 0.0
      %1162 = vmatprep.subr.mxu0 0.0
      %1163 = vmatpush1.msra.mxu0 0.0
      %1164 = vmatprep.subr.mxu0 0.0
      %1165 = vmatpush1.msra.mxu0 0.0
      %1166 = vmatprep.subr.mxu0 0.0
      %1167 = vmatpush1.msra.mxu0 0.0
      %1168 = vmatprep.subr.mxu0 0.0
      %1169 = vmatpush1.msra.mxu0 0.0
      %1170 = vmatprep.subr.mxu0 0.0
      %1171 = vmatpush1.msra.mxu0 0.0
      %1172 = vmatprep.subr.mxu0 0.0
      %1173 = vmatpush1.msra.mxu0 0.0
      %1174 = vmatprep.subr.mxu0 0.0
      %1175 = vmatpush1.msra.mxu0 0.0
      %1176 = vmatprep.subr.mxu0 0.0
      %1177 = vmatpush1.msra.mxu0 0.0
      %1178 = vmatprep.subr.mxu0 0.0
      %1179 = vmatpush1.msra.mxu0 0.0
      %1180 = vmatprep.subr.mxu0 0.0
      %1181 = vmatpush1.msra.mxu0 0.0
      %1182 = vmatprep.subr.mxu0 0.0
      %1183 = vmatpush1.msra.mxu0 0.0
      %1184 = vmatprep.subr.mxu0 0.0
      %1185 = vmatpush1.msra.mxu0 0.0
      %1186 = vmatprep.subr.mxu0 0.0
      %1187 = vmatpush1.msra.mxu0 0.0
      %1188 = vmatprep.subr.mxu0 0.0
      %1189 = vmatpush1.msra.mxu0 0.0
      %1190 = vmatprep.subr.mxu0 0.0
      %1191 = vmatpush1.msra.mxu0 0.0
      %1192 = vmatprep.subr.mxu0 0.0
      %1193 = vmatpush1.msra.mxu0 0.0
      %1194 = vmatprep.subr.mxu0 0.0
      %1195 = vmatpush1.msra.mxu0 0.0
      %1196 = vmatprep.subr.mxu0 0.0
      %1197 = vmatpush1.msra.mxu0 0.0
      %1198 = vmatprep.subr.mxu0 0.0
      %1199 = vmatpush1.msra.mxu0 0.0
      %1200 = vmatprep.subr.mxu0 0.0
      %1201 = vmatpush1.msra.mxu0 0.0
      %1202 = vmatprep.subr.mxu0 0.0
      %1203 = vmatpush1.msra.mxu0 0.0
      %1204 = vmatprep.mubr.f32.mxu0 0.0
      %1205 = vmatmul.mubr.f32.gmra.mrb[0].mxu0 %v1135
      %v1206 = vpop.f32.mrb[0].mxu0
      %v1207 = vadd.f32 1e-06, %v1206
      %v1208 = vpop.f32.mrb[0].mxu0
      %v1209 = vadd.f32 1e-06, %v1208
      %1210 = vmatprep.mubr.f32.mxu0 0.0
      %1211 = vmatmul.mubr.f32.gmra.mrb[0].mxu0 %v1138
      %v1212 = vpop.f32.mrb[0].mxu0
      %v1213 = vadd.f32 1e-06, %v1212
      %v1214 = vpop.f32.mrb[0].mxu0
      %v1215 = vadd.f32 1e-06, %v1214
      %1216 = vdwg.mxu0
      %1217 = vmatprep.subr.mxu0 %v1037
      %1218 = vmatpush1.msra.mxu0 %v1036
      %1219 = vmatprep.subr.mxu0 %v1043
      %1220 = vmatpush1.msra.mxu0 %v1042
      %1221 = vmatprep.subr.mxu0 0.0
      %1222 = vmatpush1.msra.mxu0 0.0
      %1223 = vmatprep.subr.mxu0 0.0
      %1224 = vmatpush1.msra.mxu0 0.0
      %1225 = vmatprep.subr.mxu0 0.0
      %1226 = vmatpush1.msra.mxu0 0.0
      %1227 = vmatprep.subr.mxu0 0.0
      %1228 = vmatpush1.msra.mxu0 0.0
      %1229 = vmatprep.subr.mxu0 0.0
      %1230 = vmatpush1.msra.mxu0 0.0
      %1231 = vmatprep.subr.mxu0 0.0
      %1232 = vmatpush1.msra.mxu0 0.0
      %1233 = vmatprep.subr.mxu0 0.0
      %1234 = vmatpush1.msra.mxu0 0.0
      %1235 = vmatprep.subr.mxu0 0.0
      %1236 = vmatpush1.msra.mxu0 0.0
      %1237 = vmatprep.subr.mxu0 0.0
      %1238 = vmatpush1.msra.mxu0 0.0
      %1239 = vmatprep.subr.mxu0 0.0
      %1240 = vmatpush1.msra.mxu0 0.0
      %1241 = vmatprep.subr.mxu0 0.0
      %1242 = vmatpush1.msra.mxu0 0.0
      %1243 = vmatprep.subr.mxu0 0.0
      %1244 = vmatpush1.msra.mxu0 0.0
      %1245 = vmatprep.subr.mxu0 0.0
      %1246 = vmatpush1.msra.mxu0 0.0
      %1247 = vmatprep.subr.mxu0 0.0
      %1248 = vmatpush1.msra.mxu0 0.0
      %1249 = vmatprep.subr.mxu0 0.0
      %1250 = vmatpush1.msra.mxu0 0.0
      %1251 = vmatprep.subr.mxu0 0.0
      %1252 = vmatpush1.msra.mxu0 0.0
      %1253 = vmatprep.subr.mxu0 0.0
      %1254 = vmatpush1.msra.mxu0 0.0
      %1255 = vmatprep.subr.mxu0 0.0
      %1256 = vmatpush1.msra.mxu0 0.0
      %1257 = vmatprep.subr.mxu0 0.0
      %1258 = vmatpush1.msra.mxu0 0.0
      %1259 = vmatprep.subr.mxu0 0.0
      %1260 = vmatpush1.msra.mxu0 0.0
      %1261 = vmatprep.subr.mxu0 0.0
      %1262 = vmatpush1.msra.mxu0 0.0
      %1263 = vmatprep.subr.mxu0 0.0
      %1264 = vmatpush1.msra.mxu0 0.0
      %1265 = vmatprep.subr.mxu0 0.0
      %1266 = vmatpush1.msra.mxu0 0.0
      %1267 = vmatprep.subr.mxu0 0.0
      %1268 = vmatpush1.msra.mxu0 0.0
      %1269 = vmatprep.subr.mxu0 0.0
      %1270 = vmatpush1.msra.mxu0 0.0
      %1271 = vmatprep.subr.mxu0 0.0
      %1272 = vmatpush1.msra.mxu0 0.0
      %1273 = vmatprep.subr.mxu0 0.0
      %1274 = vmatpush1.msra.mxu0 0.0
      %1275 = vmatprep.subr.mxu0 0.0
      %1276 = vmatpush1.msra.mxu0 0.0
      %1277 = vmatprep.subr.mxu0 0.0
      %1278 = vmatpush1.msra.mxu0 0.0
      %1279 = vmatprep.subr.mxu0 0.0
      %1280 = vmatpush1.msra.mxu0 0.0
      %1281 = vmatprep.mubr.f32.mxu0 0.0
      %1282 = vmatmul.mubr.f32.gmra.mrb[0].mxu0 %v1135
      %v1283 = vpop.f32.mrb[0].mxu0
      %v1284 = vadd.f32 1e-06, %v1283
      %v1285 = vpop.f32.mrb[0].mxu0
      %v1286 = vadd.f32 1e-06, %v1285
      %1287 = vmatprep.mubr.f32.mxu0 0.0
      %1288 = vmatmul.mubr.f32.gmra.mrb[0].mxu0 %v1138
      %v1289 = vpop.f32.mrb[0].mxu0
      %v1290 = vadd.f32 1e-06, %v1289
      %v1291 = vpop.f32.mrb[0].mxu0
      %v1292 = vadd.f32 1e-06, %v1291
      %1293 = vdwg.mxu0
      %1294 = vmatprep.subr.mxu0 %v1039
      %1295 = vmatpush1.msra.mxu0 %v1038
      %1296 = vmatprep.subr.mxu0 %v1045
      %1297 = vmatpush1.msra.mxu0 %v1044
      %1298 = vmatprep.subr.mxu0 0.0
      %1299 = vmatpush1.msra.mxu0 0.0
      %1300 = vmatprep.subr.mxu0 0.0
      %1301 = vmatpush1.msra.mxu0 0.0
      %1302 = vmatprep.subr.mxu0 0.0
      %1303 = vmatpush1.msra.mxu0 0.0
      %1304 = vmatprep.subr.mxu0 0.0
      %1305 = vmatpush1.msra.mxu0 0.0
      %1306 = vmatprep.subr.mxu0 0.0
      %1307 = vmatpush1.msra.mxu0 0.0
      %1308 = vmatprep.subr.mxu0 0.0
      %1309 = vmatpush1.msra.mxu0 0.0
      %1310 = vmatprep.subr.mxu0 0.0
      %1311 = vmatpush1.msra.mxu0 0.0
      %1312 = vmatprep.subr.mxu0 0.0
      %1313 = vmatpush1.msra.mxu0 0.0
      %1314 = vmatprep.subr.mxu0 0.0
      %1315 = vmatpush1.msra.mxu0 0.0
      %1316 = vmatprep.subr.mxu0 0.0
      %1317 = vmatpush1.msra.mxu0 0.0
      %1318 = vmatprep.subr.mxu0 0.0
      %1319 = vmatpush1.msra.mxu0 0.0
      %1320 = vmatprep.subr.mxu0 0.0
      %1321 = vmatpush1.msra.mxu0 0.0
      %1322 = vmatprep.subr.mxu0 0.0
      %1323 = vmatpush1.msra.mxu0 0.0
      %1324 = vmatprep.subr.mxu0 0.0
      %1325 = vmatpush1.msra.mxu0 0.0
      %1326 = vmatprep.subr.mxu0 0.0
      %1327 = vmatpush1.msra.mxu0 0.0
      %1328 = vmatprep.subr.mxu0 0.0
      %1329 = vmatpush1.msra.mxu0 0.0
      %1330 = vmatprep.subr.mxu0 0.0
      %1331 = vmatpush1.msra.mxu0 0.0
      %1332 = vmatprep.subr.mxu0 0.0
      %1333 = vmatpush1.msra.mxu0 0.0
      %1334 = vmatprep.subr.mxu0 0.0
      %1335 = vmatpush1.msra.mxu0 0.0
      %1336 = vmatprep.subr.mxu0 0.0
      %1337 = vmatpush1.msra.mxu0 0.0
      %1338 = vmatprep.subr.mxu0 0.0
      %1339 = vmatpush1.msra.mxu0 0.0
      %1340 = vmatprep.subr.mxu0 0.0
      %1341 = vmatpush1.msra.mxu0 0.0
      %1342 = vmatprep.subr.mxu0 0.0
      %1343 = vmatpush1.msra.mxu0 0.0
      %1344 = vmatprep.subr.mxu0 0.0
      %1345 = vmatpush1.msra.mxu0 0.0
      %1346 = vmatprep.subr.mxu0 0.0
      %1347 = vmatpush1.msra.mxu0 0.0
      %1348 = vmatprep.subr.mxu0 0.0
      %1349 = vmatpush1.msra.mxu0 0.0
      %1350 = vmatprep.subr.mxu0 0.0
      %1351 = vmatpush1.msra.mxu0 0.0
      %1352 = vmatprep.subr.mxu0 0.0
      %1353 = vmatpush1.msra.mxu0 0.0
      %1354 = vmatprep.subr.mxu0 0.0
      %1355 = vmatpush1.msra.mxu0 0.0
      %1356 = vmatprep.subr.mxu0 0.0
      %1357 = vmatpush1.msra.mxu0 0.0
      %1358 = vmatprep.mubr.f32.mxu0 0.0
      %1359 = vmatmul.mubr.f32.gmra.mrb[0].mxu0 %v1135
      %v1360 = vpop.f32.mrb[0].mxu0
      %v1361 = vadd.f32 1e-06, %v1360
      %v1362 = vpop.f32.mrb[0].mxu0
      %v1363 = vadd.f32 1e-06, %v1362
      %1364 = vmatprep.mubr.f32.mxu0 0.0
      %1365 = vmatmul.mubr.f32.gmra.mrb[0].mxu0 %v1138
      %v1366 = vpop.f32.mrb[0].mxu0
      %v1367 = vadd.f32 1e-06, %v1366
      %v1368 = vpop.f32.mrb[0].mxu0
      %v1369 = vadd.f32 1e-06, %v1368
      %1370 = vdwg.mxu0
      %v1371 = vrcp.pop %v1207
      %v1372 = vrcp.pop %v1209
      %v1373 = vrcp.pop %v1284
      %v1374 = vrcp.pop %v1286
      %v1375 = vrcp.pop %v1361
      %v1376 = vrcp.pop %v1363
      %v1377 = vrcp.pop %v1213
      %v1378 = vrcp.pop %v1215
      %v1379 = vrcp.pop %v1290
      %v1380 = vrcp.pop %v1292
      %v1381 = vrcp.pop %v1367
      %v1382 = vrcp.pop %v1369
      %v1383 = vmul.f32 %v1121, %v1371
      %v1384 = vmul.f32 %v1122, %v1372
      %v1385 = vmul.f32 %v1123, %v1373
      %v1386 = vmul.f32 %v1124, %v1374
      %v1387 = vmul.f32 %v1125, %v1375
      %v1388 = vmul.f32 %v1126, %v1376
      %v1389 = vmul.f32 %v1127, %v1377
      %v1390 = vmul.f32 %v1128, %v1378
      %v1391 = vmul.f32 %v1129, %v1379
      %v1392 = vmul.f32 %v1130, %v1380
      %v1393 = vmul.f32 %v1131, %v1381
      %v1394 = vmul.f32 %v1132, %v1382
      %1395 = vmatprep.subr.mxu0 %v647
      %1396 = vmatpush1.xpose.msra.mxu0 %v646
      %1397 = vmatprep.subr.mxu0 %v653
      %1398 = vmatpush1.xpose.msra.mxu0 %v652
      %1399 = vmatprep.subr.mxu0 %v659
      %1400 = vmatpush1.xpose.msra.mxu0 %v658
      %1401 = vmatprep.subr.mxu0 %v665
      %1402 = vmatpush1.xpose.msra.mxu0 %v664
      %1403 = vmatprep.subr.mxu0 0.0
      %1404 = vmatpush1.xpose.msra.mxu0 0.0
      %1405 = vmatprep.subr.mxu0 0.0
      %1406 = vmatpush1.xpose.msra.mxu0 0.0
      %1407 = vmatprep.subr.mxu0 0.0
      %1408 = vmatpush1.xpose.msra.mxu0 0.0
      %1409 = vmatprep.subr.mxu0 0.0
      %1410 = vmatpush1.xpose.msra.mxu0 0.0
      %1411 = vmatprep.subr.mxu0 0.0
      %1412 = vmatpush1.xpose.msra.mxu0 0.0
      %1413 = vmatprep.subr.mxu0 0.0
      %1414 = vmatpush1.xpose.msra.mxu0 0.0
      %1415 = vmatprep.subr.mxu0 0.0
      %1416 = vmatpush1.xpose.msra.mxu0 0.0
      %1417 = vmatprep.subr.mxu0 0.0
      %1418 = vmatpush1.xpose.msra.mxu0 0.0
      %1419 = vmatprep.subr.mxu0 0.0
      %1420 = vmatpush1.xpose.msra.mxu0 0.0
      %1421 = vmatprep.subr.mxu0 0.0
      %1422 = vmatpush1.xpose.msra.mxu0 0.0
      %1423 = vmatprep.subr.mxu0 0.0
      %1424 = vmatpush1.xpose.msra.mxu0 0.0
      %1425 = vmatprep.subr.mxu0 0.0
      %1426 = vmatpush1.xpose.msra.mxu0 0.0
      %1427 = vmatprep.subr.mxu0 0.0
      %1428 = vmatpush1.xpose.msra.mxu0 0.0
      %1429 = vmatprep.subr.mxu0 0.0
      %1430 = vmatpush1.xpose.msra.mxu0 0.0
      %1431 = vmatprep.subr.mxu0 0.0
      %1432 = vmatpush1.xpose.msra.mxu0 0.0
      %1433 = vmatprep.subr.mxu0 0.0
      %1434 = vmatpush1.xpose.msra.mxu0 0.0
      %1435 = vmatprep.subr.mxu0 0.0
      %1436 = vmatpush1.xpose.msra.mxu0 0.0
      %1437 = vmatprep.subr.mxu0 0.0
      %1438 = vmatpush1.xpose.msra.mxu0 0.0
      %1439 = vmatprep.subr.mxu0 0.0
      %1440 = vmatpush1.xpose.msra.mxu0 0.0
      %1441 = vmatprep.subr.mxu0 0.0
      %1442 = vmatpush1.xpose.msra.mxu0 0.0
      %1443 = vmatprep.subr.mxu0 0.0
      %1444 = vmatpush1.xpose.msra.mxu0 0.0
      %1445 = vmatprep.subr.mxu0 0.0
      %1446 = vmatpush1.xpose.msra.mxu0 0.0
      %1447 = vmatprep.subr.mxu0 0.0
      %1448 = vmatpush1.xpose.msra.mxu0 0.0
      %1449 = vmatprep.subr.mxu0 0.0
      %1450 = vmatpush1.xpose.msra.mxu0 0.0
      %1451 = vmatprep.subr.mxu0 0.0
      %1452 = vmatpush1.xpose.msra.mxu0 0.0
      %1453 = vmatprep.subr.mxu0 0.0
      %1454 = vmatpush1.xpose.msra.mxu0 0.0
      %1455 = vmatprep.subr.mxu0 0.0
      %1456 = vmatpush1.xpose.msra.mxu0 0.0
      %1457 = vmatprep.subr.mxu0 0.0
      %1458 = vmatpush1.xpose.msra.mxu0 0.0
      %1459 = vmatprep.mubr.f32.mxu0 %v1384
      %1460 = vmatmul.mubr.f32.gmra.mrb[0].mxu0 %v1383
      %v1461 = vpop.f32.mrb[0].mxu0
      %v1462 = vadd.f32 0.0, %v1461
      %v1463 = vpop.f32.mrb[0].mxu0
      %1464 = vmatprep.mubr.f32.mxu0 %v1390
      %1465 = vmatmul.mubr.f32.gmra.mrb[0].mxu0 %v1389
      %v1466 = vpop.f32.mrb[0].mxu0
      %v1467 = vadd.f32 0.0, %v1466
      %v1468 = vpop.f32.mrb[0].mxu0
      %1469 = vdwg.mxu0
      %1470 = vmatprep.subr.mxu0 %v649
      %1471 = vmatpush1.xpose.msra.mxu0 %v648
      %1472 = vmatprep.subr.mxu0 %v655
      %1473 = vmatpush1.xpose.msra.mxu0 %v654
      %1474 = vmatprep.subr.mxu0 %v661
      %1475 = vmatpush1.xpose.msra.mxu0 %v660
      %1476 = vmatprep.subr.mxu0 %v667
      %1477 = vmatpush1.xpose.msra.mxu0 %v666
      %1478 = vmatprep.subr.mxu0 0.0
      %1479 = vmatpush1.xpose.msra.mxu0 0.0
      %1480 = vmatprep.subr.mxu0 0.0
      %1481 = vmatpush1.xpose.msra.mxu0 0.0
      %1482 = vmatprep.subr.mxu0 0.0
      %1483 = vmatpush1.xpose.msra.mxu0 0.0
      %1484 = vmatprep.subr.mxu0 0.0
      %1485 = vmatpush1.xpose.msra.mxu0 0.0
      %1486 = vmatprep.subr.mxu0 0.0
      %1487 = vmatpush1.xpose.msra.mxu0 0.0
      %1488 = vmatprep.subr.mxu0 0.0
      %1489 = vmatpush1.xpose.msra.mxu0 0.0
      %1490 = vmatprep.subr.mxu0 0.0
      %1491 = vmatpush1.xpose.msra.mxu0 0.0
      %1492 = vmatprep.subr.mxu0 0.0
      %1493 = vmatpush1.xpose.msra.mxu0 0.0
      %1494 = vmatprep.subr.mxu0 0.0
      %1495 = vmatpush1.xpose.msra.mxu0 0.0
      %1496 = vmatprep.subr.mxu0 0.0
      %1497 = vmatpush1.xpose.msra.mxu0 0.0
      %1498 = vmatprep.subr.mxu0 0.0
      %1499 = vmatpush1.xpose.msra.mxu0 0.0
      %1500 = vmatprep.subr.mxu0 0.0
      %1501 = vmatpush1.xpose.msra.mxu0 0.0
      %1502 = vmatprep.subr.mxu0 0.0
      %1503 = vmatpush1.xpose.msra.mxu0 0.0
      %1504 = vmatprep.subr.mxu0 0.0
      %1505 = vmatpush1.xpose.msra.mxu0 0.0
      %1506 = vmatprep.subr.mxu0 0.0
      %1507 = vmatpush1.xpose.msra.mxu0 0.0
      %1508 = vmatprep.subr.mxu0 0.0
      %1509 = vmatpush1.xpose.msra.mxu0 0.0
      %1510 = vmatprep.subr.mxu0 0.0
      %1511 = vmatpush1.xpose.msra.mxu0 0.0
      %1512 = vmatprep.subr.mxu0 0.0
      %1513 = vmatpush1.xpose.msra.mxu0 0.0
      %1514 = vmatprep.subr.mxu0 0.0
      %1515 = vmatpush1.xpose.msra.mxu0 0.0
      %1516 = vmatprep.subr.mxu0 0.0
      %1517 = vmatpush1.xpose.msra.mxu0 0.0
      %1518 = vmatprep.subr.mxu0 0.0
      %1519 = vmatpush1.xpose.msra.mxu0 0.0
      %1520 = vmatprep.subr.mxu0 0.0
      %1521 = vmatpush1.xpose.msra.mxu0 0.0
      %1522 = vmatprep.subr.mxu0 0.0
      %1523 = vmatpush1.xpose.msra.mxu0 0.0
      %1524 = vmatprep.subr.mxu0 0.0
      %1525 = vmatpush1.xpose.msra.mxu0 0.0
      %1526 = vmatprep.subr.mxu0 0.0
      %1527 = vmatpush1.xpose.msra.mxu0 0.0
      %1528 = vmatprep.subr.mxu0 0.0
      %1529 = vmatpush1.xpose.msra.mxu0 0.0
      %1530 = vmatprep.subr.mxu0 0.0
      %1531 = vmatpush1.xpose.msra.mxu0 0.0
      %1532 = vmatprep.subr.mxu0 0.0
      %1533 = vmatpush1.xpose.msra.mxu0 0.0
      %1534 = vmatprep.mubr.f32.mxu0 %v1386
      %1535 = vmatmul.mubr.f32.gmra.mrb[0].mxu0 %v1385
      %v1536 = vpop.f32.mrb[0].mxu0
      %v1537 = vadd.f32 %v1462, %v1536
      %v1538 = vpop.f32.mrb[0].mxu0
      %1539 = vmatprep.mubr.f32.mxu0 %v1392
      %1540 = vmatmul.mubr.f32.gmra.mrb[0].mxu0 %v1391
      %v1541 = vpop.f32.mrb[0].mxu0
      %v1542 = vadd.f32 %v1467, %v1541
      %v1543 = vpop.f32.mrb[0].mxu0
      %1544 = vdwg.mxu0
      %1545 = vmatprep.subr.mxu0 %v651
      %1546 = vmatpush1.xpose.msra.mxu0 %v650
      %1547 = vmatprep.subr.mxu0 %v657
      %1548 = vmatpush1.xpose.msra.mxu0 %v656
      %1549 = vmatprep.subr.mxu0 %v663
      %1550 = vmatpush1.xpose.msra.mxu0 %v662
      %1551 = vmatprep.subr.mxu0 %v669
      %1552 = vmatpush1.xpose.msra.mxu0 %v668
      %1553 = vmatprep.subr.mxu0 0.0
      %1554 = vmatpush1.xpose.msra.mxu0 0.0
      %1555 = vmatprep.subr.mxu0 0.0
      %1556 = vmatpush1.xpose.msra.mxu0 0.0
      %1557 = vmatprep.subr.mxu0 0.0
      %1558 = vmatpush1.xpose.msra.mxu0 0.0
      %1559 = vmatprep.subr.mxu0 0.0
      %1560 = vmatpush1.xpose.msra.mxu0 0.0
      %1561 = vmatprep.subr.mxu0 0.0
      %1562 = vmatpush1.xpose.msra.mxu0 0.0
      %1563 = vmatprep.subr.mxu0 0.0
      %1564 = vmatpush1.xpose.msra.mxu0 0.0
      %1565 = vmatprep.subr.mxu0 0.0
      %1566 = vmatpush1.xpose.msra.mxu0 0.0
      %1567 = vmatprep.subr.mxu0 0.0
      %1568 = vmatpush1.xpose.msra.mxu0 0.0
      %1569 = vmatprep.subr.mxu0 0.0
      %1570 = vmatpush1.xpose.msra.mxu0 0.0
      %1571 = vmatprep.subr.mxu0 0.0
      %1572 = vmatpush1.xpose.msra.mxu0 0.0
      %1573 = vmatprep.subr.mxu0 0.0
      %1574 = vmatpush1.xpose.msra.mxu0 0.0
      %1575 = vmatprep.subr.mxu0 0.0
      %1576 = vmatpush1.xpose.msra.mxu0 0.0
      %1577 = vmatprep.subr.mxu0 0.0
      %1578 = vmatpush1.xpose.msra.mxu0 0.0
      %1579 = vmatprep.subr.mxu0 0.0
      %1580 = vmatpush1.xpose.msra.mxu0 0.0
      %1581 = vmatprep.subr.mxu0 0.0
      %1582 = vmatpush1.xpose.msra.mxu0 0.0
      %1583 = vmatprep.subr.mxu0 0.0
      %1584 = vmatpush1.xpose.msra.mxu0 0.0
      %1585 = vmatprep.subr.mxu0 0.0
      %1586 = vmatpush1.xpose.msra.mxu0 0.0
      %1587 = vmatprep.subr.mxu0 0.0
      %1588 = vmatpush1.xpose.msra.mxu0 0.0
      %1589 = vmatprep.subr.mxu0 0.0
      %1590 = vmatpush1.xpose.msra.mxu0 0.0
      %1591 = vmatprep.subr.mxu0 0.0
      %1592 = vmatpush1.xpose.msra.mxu0 0.0
      %1593 = vmatprep.subr.mxu0 0.0
      %1594 = vmatpush1.xpose.msra.mxu0 0.0
      %1595 = vmatprep.subr.mxu0 0.0
      %1596 = vmatpush1.xpose.msra.mxu0 0.0
      %1597 = vmatprep.subr.mxu0 0.0
      %1598 = vmatpush1.xpose.msra.mxu0 0.0
      %1599 = vmatprep.subr.mxu0 0.0
      %1600 = vmatpush1.xpose.msra.mxu0 0.0
      %1601 = vmatprep.subr.mxu0 0.0
      %1602 = vmatpush1.xpose.msra.mxu0 0.0
      %1603 = vmatprep.subr.mxu0 0.0
      %1604 = vmatpush1.xpose.msra.mxu0 0.0
      %1605 = vmatprep.subr.mxu0 0.0
      %1606 = vmatpush1.xpose.msra.mxu0 0.0
      %1607 = vmatprep.subr.mxu0 0.0
      %1608 = vmatpush1.xpose.msra.mxu0 0.0
      %1609 = vmatprep.mubr.f32.mxu0 %v1388
      %1610 = vmatmul.mubr.f32.gmra.mrb[0].mxu0 %v1387
      %v1611 = vpop.f32.mrb[0].mxu0
      %v1612 = vadd.f32 %v1537, %v1611
      %v1613 = vpop.f32.mrb[0].mxu0
      %1614 = vmatprep.mubr.f32.mxu0 %v1394
      %1615 = vmatmul.mubr.f32.gmra.mrb[0].mxu0 %v1393
      %v1616 = vpop.f32.mrb[0].mxu0
      %v1617 = vadd.f32 %v1542, %v1616
      %v1618 = vpop.f32.mrb[0].mxu0
      %1619 = vdwg.mxu0
      %1620 = vmatprep.subr.mxu0 %v1384
      %1621 = vmatpush1.xpose.msra.mxu0 %v1383
      %1622 = vmatprep.subr.mxu0 %v1390
      %1623 = vmatpush1.xpose.msra.mxu0 %v1389
      %1624 = vmatprep.subr.mxu0 0.0
      %1625 = vmatpush1.xpose.msra.mxu0 0.0
      %1626 = vmatprep.subr.mxu0 0.0
      %1627 = vmatpush1.xpose.msra.mxu0 0.0
      %1628 = vmatprep.subr.mxu0 0.0
      %1629 = vmatpush1.xpose.msra.mxu0 0.0
      %1630 = vmatprep.subr.mxu0 0.0
      %1631 = vmatpush1.xpose.msra.mxu0 0.0
      %1632 = vmatprep.subr.mxu0 0.0
      %1633 = vmatpush1.xpose.msra.mxu0 0.0
      %1634 = vmatprep.subr.mxu0 0.0
      %1635 = vmatpush1.xpose.msra.mxu0 0.0
      %1636 = vmatprep.subr.mxu0 0.0
      %1637 = vmatpush1.xpose.msra.mxu0 0.0
      %1638 = vmatprep.subr.mxu0 0.0
      %1639 = vmatpush1.xpose.msra.mxu0 0.0
      %1640 = vmatprep.subr.mxu0 0.0
      %1641 = vmatpush1.xpose.msra.mxu0 0.0
      %1642 = vmatprep.subr.mxu0 0.0
      %1643 = vmatpush1.xpose.msra.mxu0 0.0
      %1644 = vmatprep.subr.mxu0 0.0
      %1645 = vmatpush1.xpose.msra.mxu0 0.0
      %1646 = vmatprep.subr.mxu0 0.0
      %1647 = vmatpush1.xpose.msra.mxu0 0.0
      %1648 = vmatprep.subr.mxu0 0.0
      %1649 = vmatpush1.xpose.msra.mxu0 0.0
      %1650 = vmatprep.subr.mxu0 0.0
      %1651 = vmatpush1.xpose.msra.mxu0 0.0
      %1652 = vmatprep.subr.mxu0 0.0
      %1653 = vmatpush1.xpose.msra.mxu0 0.0
      %1654 = vmatprep.subr.mxu0 0.0
      %1655 = vmatpush1.xpose.msra.mxu0 0.0
      %1656 = vmatprep.subr.mxu0 0.0
      %1657 = vmatpush1.xpose.msra.mxu0 0.0
      %1658 = vmatprep.subr.mxu0 0.0
      %1659 = vmatpush1.xpose.msra.mxu0 0.0
      %1660 = vmatprep.subr.mxu0 0.0
      %1661 = vmatpush1.xpose.msra.mxu0 0.0
      %1662 = vmatprep.subr.mxu0 0.0
      %1663 = vmatpush1.xpose.msra.mxu0 0.0
      %1664 = vmatprep.subr.mxu0 0.0
      %1665 = vmatpush1.xpose.msra.mxu0 0.0
      %1666 = vmatprep.subr.mxu0 0.0
      %1667 = vmatpush1.xpose.msra.mxu0 0.0
      %1668 = vmatprep.subr.mxu0 0.0
      %1669 = vmatpush1.xpose.msra.mxu0 0.0
      %1670 = vmatprep.subr.mxu0 0.0
      %1671 = vmatpush1.xpose.msra.mxu0 0.0
      %1672 = vmatprep.subr.mxu0 0.0
      %1673 = vmatpush1.xpose.msra.mxu0 0.0
      %1674 = vmatprep.subr.mxu0 0.0
      %1675 = vmatpush1.xpose.msra.mxu0 0.0
      %1676 = vmatprep.subr.mxu0 0.0
      %1677 = vmatpush1.xpose.msra.mxu0 0.0
      %1678 = vmatprep.subr.mxu0 0.0
      %1679 = vmatpush1.xpose.msra.mxu0 0.0
      %1680 = vmatprep.subr.mxu0 0.0
      %1681 = vmatpush1.xpose.msra.mxu0 0.0
      %1682 = vmatprep.subr.mxu0 0.0
      %1683 = vmatpush1.xpose.msra.mxu0 0.0
      %1684 = vmatprep.mubr.f32.mxu0 %v1384
      %1685 = vmatmul.mubr.f32.gmra.mrb[0].mxu0 %v1383
      %v1686 = vpop.f32.mrb[0].mxu0
      %v1687 = vadd.f32 0.0, %v1686
      %v1688 = vpop.f32.mrb[0].mxu0
      %1689 = vmatprep.mubr.f32.mxu0 %v1390
      %1690 = vmatmul.mubr.f32.gmra.mrb[0].mxu0 %v1389
      %v1691 = vpop.f32.mrb[0].mxu0
      %v1692 = vadd.f32 0.0, %v1691
      %v1693 = vpop.f32.mrb[0].mxu0
      %1694 = vdwg.mxu0
      %1695 = vmatprep.subr.mxu0 %v1386
      %1696 = vmatpush1.xpose.msra.mxu0 %v1385
      %1697 = vmatprep.subr.mxu0 %v1392
      %1698 = vmatpush1.xpose.msra.mxu0 %v1391
      %1699 = vmatprep.subr.mxu0 0.0
      %1700 = vmatpush1.xpose.msra.mxu0 0.0
      %1701 = vmatprep.subr.mxu0 0.0
      %1702 = vmatpush1.xpose.msra.mxu0 0.0
      %1703 = vmatprep.subr.mxu0 0.0
      %1704 = vmatpush1.xpose.msra.mxu0 0.0
      %1705 = vmatprep.subr.mxu0 0.0
      %1706 = vmatpush1.xpose.msra.mxu0 0.0
      %1707 = vmatprep.subr.mxu0 0.0
      %1708 = vmatpush1.xpose.msra.mxu0 0.0
      %1709 = vmatprep.subr.mxu0 0.0
      %1710 = vmatpush1.xpose.msra.mxu0 0.0
      %1711 = vmatprep.subr.mxu0 0.0
      %1712 = vmatpush1.xpose.msra.mxu0 0.0
      %1713 = vmatprep.subr.mxu0 0.0
      %1714 = vmatpush1.xpose.msra.mxu0 0.0
      %1715 = vmatprep.subr.mxu0 0.0
      %1716 = vmatpush1.xpose.msra.mxu0 0.0
      %1717 = vmatprep.subr.mxu0 0.0
      %1718 = vmatpush1.xpose.msra.mxu0 0.0
      %1719 = vmatprep.subr.mxu0 0.0
      %1720 = vmatpush1.xpose.msra.mxu0 0.0
      %1721 = vmatprep.subr.mxu0 0.0
      %1722 = vmatpush1.xpose.msra.mxu0 0.0
      %1723 = vmatprep.subr.mxu0 0.0
      %1724 = vmatpush1.xpose.msra.mxu0 0.0
      %1725 = vmatprep.subr.mxu0 0.0
      %1726 = vmatpush1.xpose.msra.mxu0 0.0
      %1727 = vmatprep.subr.mxu0 0.0
      %1728 = vmatpush1.xpose.msra.mxu0 0.0
      %1729 = vmatprep.subr.mxu0 0.0
      %1730 = vmatpush1.xpose.msra.mxu0 0.0
      %1731 = vmatprep.subr.mxu0 0.0
      %1732 = vmatpush1.xpose.msra.mxu0 0.0
      %1733 = vmatprep.subr.mxu0 0.0
      %1734 = vmatpush1.xpose.msra.mxu0 0.0
      %1735 = vmatprep.subr.mxu0 0.0
      %1736 = vmatpush1.xpose.msra.mxu0 0.0
      %1737 = vmatprep.subr.mxu0 0.0
      %1738 = vmatpush1.xpose.msra.mxu0 0.0
      %1739 = vmatprep.subr.mxu0 0.0
      %1740 = vmatpush1.xpose.msra.mxu0 0.0
      %1741 = vmatprep.subr.mxu0 0.0
      %1742 = vmatpush1.xpose.msra.mxu0 0.0
      %1743 = vmatprep.subr.mxu0 0.0
      %1744 = vmatpush1.xpose.msra.mxu0 0.0
      %1745 = vmatprep.subr.mxu0 0.0
      %1746 = vmatpush1.xpose.msra.mxu0 0.0
      %1747 = vmatprep.subr.mxu0 0.0
      %1748 = vmatpush1.xpose.msra.mxu0 0.0
      %1749 = vmatprep.subr.mxu0 0.0
      %1750 = vmatpush1.xpose.msra.mxu0 0.0
      %1751 = vmatprep.subr.mxu0 0.0
      %1752 = vmatpush1.xpose.msra.mxu0 0.0
      %1753 = vmatprep.subr.mxu0 0.0
      %1754 = vmatpush1.xpose.msra.mxu0 0.0
      %1755 = vmatprep.subr.mxu0 0.0
      %1756 = vmatpush1.xpose.msra.mxu0 0.0
      %1757 = vmatprep.subr.mxu0 0.0
      %1758 = vmatpush1.xpose.msra.mxu0 0.0
      %1759 = vmatprep.mubr.f32.mxu0 %v1386
      %1760 = vmatmul.mubr.f32.gmra.mrb[0].mxu0 %v1385
      %v1761 = vpop.f32.mrb[0].mxu0
      %v1762 = vadd.f32 %v1687, %v1761
      %v1763 = vpop.f32.mrb[0].mxu0
      %1764 = vmatprep.mubr.f32.mxu0 %v1392
      %1765 = vmatmul.mubr.f32.gmra.mrb[0].mxu0 %v1391
      %v1766 = vpop.f32.mrb[0].mxu0
      %v1767 = vadd.f32 %v1692, %v1766
      %v1768 = vpop.f32.mrb[0].mxu0
      %1769 = vdwg.mxu0
      %1770 = vmatprep.subr.mxu0 %v1388
      %1771 = vmatpush1.xpose.msra.mxu0 %v1387
      %1772 = vmatprep.subr.mxu0 %v1394
      %1773 = vmatpush1.xpose.msra.mxu0 %v1393
      %1774 = vmatprep.subr.mxu0 0.0
      %1775 = vmatpush1.xpose.msra.mxu0 0.0
      %1776 = vmatprep.subr.mxu0 0.0
      %1777 = vmatpush1.xpose.msra.mxu0 0.0
      %1778 = vmatprep.subr.mxu0 0.0
      %1779 = vmatpush1.xpose.msra.mxu0 0.0
      %1780 = vmatprep.subr.mxu0 0.0
      %1781 = vmatpush1.xpose.msra.mxu0 0.0
      %1782 = vmatprep.subr.mxu0 0.0
      %1783 = vmatpush1.xpose.msra.mxu0 0.0
      %1784 = vmatprep.subr.mxu0 0.0
      %1785 = vmatpush1.xpose.msra.mxu0 0.0
      %1786 = vmatprep.subr.mxu0 0.0
      %1787 = vmatpush1.xpose.msra.mxu0 0.0
      %1788 = vmatprep.subr.mxu0 0.0
      %1789 = vmatpush1.xpose.msra.mxu0 0.0
      %1790 = vmatprep.subr.mxu0 0.0
      %1791 = vmatpush1.xpose.msra.mxu0 0.0
      %1792 = vmatprep.subr.mxu0 0.0
      %1793 = vmatpush1.xpose.msra.mxu0 0.0
      %1794 = vmatprep.subr.mxu0 0.0
      %1795 = vmatpush1.xpose.msra.mxu0 0.0
      %1796 = vmatprep.subr.mxu0 0.0
      %1797 = vmatpush1.xpose.msra.mxu0 0.0
      %1798 = vmatprep.subr.mxu0 0.0
      %1799 = vmatpush1.xpose.msra.mxu0 0.0
      %1800 = vmatprep.subr.mxu0 0.0
      %1801 = vmatpush1.xpose.msra.mxu0 0.0
      %1802 = vmatprep.subr.mxu0 0.0
      %1803 = vmatpush1.xpose.msra.mxu0 0.0
      %1804 = vmatprep.subr.mxu0 0.0
      %1805 = vmatpush1.xpose.msra.mxu0 0.0
      %1806 = vmatprep.subr.mxu0 0.0
      %1807 = vmatpush1.xpose.msra.mxu0 0.0
      %1808 = vmatprep.subr.mxu0 0.0
      %1809 = vmatpush1.xpose.msra.mxu0 0.0
      %1810 = vmatprep.subr.mxu0 0.0
      %1811 = vmatpush1.xpose.msra.mxu0 0.0
      %1812 = vmatprep.subr.mxu0 0.0
      %1813 = vmatpush1.xpose.msra.mxu0 0.0
      %1814 = vmatprep.subr.mxu0 0.0
      %1815 = vmatpush1.xpose.msra.mxu0 0.0
      %1816 = vmatprep.subr.mxu0 0.0
      %1817 = vmatpush1.xpose.msra.mxu0 0.0
      %1818 = vmatprep.subr.mxu0 0.0
      %1819 = vmatpush1.xpose.msra.mxu0 0.0
      %1820 = vmatprep.subr.mxu0 0.0
      %1821 = vmatpush1.xpose.msra.mxu0 0.0
      %1822 = vmatprep.subr.mxu0 0.0
      %1823 = vmatpush1.xpose.msra.mxu0 0.0
      %1824 = vmatprep.subr.mxu0 0.0
      %1825 = vmatpush1.xpose.msra.mxu0 0.0
      %1826 = vmatprep.subr.mxu0 0.0
      %1827 = vmatpush1.xpose.msra.mxu0 0.0
      %1828 = vmatprep.subr.mxu0 0.0
      %1829 = vmatpush1.xpose.msra.mxu0 0.0
      %1830 = vmatprep.subr.mxu0 0.0
      %1831 = vmatpush1.xpose.msra.mxu0 0.0
      %1832 = vmatprep.subr.mxu0 0.0
      %1833 = vmatpush1.xpose.msra.mxu0 0.0
      %1834 = vmatprep.mubr.f32.mxu0 %v1388
      %1835 = vmatmul.mubr.f32.gmra.mrb[0].mxu0 %v1387
      %v1836 = vpop.f32.mrb[0].mxu0
      %v1837 = vadd.f32 %v1762, %v1836
      %v1838 = vpop.f32.mrb[0].mxu0
      %1839 = vmatprep.mubr.f32.mxu0 %v1394
      %1840 = vmatmul.mubr.f32.gmra.mrb[0].mxu0 %v1393
      %v1841 = vpop.f32.mrb[0].mxu0
      %v1842 = vadd.f32 %v1767, %v1841
      %v1843 = vpop.f32.mrb[0].mxu0
      %1844 = vdwg.mxu0
      %v1845 = vmul.f32 %v644, %v1612
      %v1846 = vmul.f32 %v645, %v1617
      %v1848 = vsel %vm1133, %v1837, 0
      %v1851 = vsel %vm1133, %v1842, 0
      %1853 = vmatprep.subr.mxu0 0.0
      %1854 = vmatpush1.msra.mxu0 %v644
      %1855 = vmatprep.subr.mxu0 0.0
      %1856 = vmatpush1.msra.mxu0 %v645
      %1857 = vmatprep.subr.mxu0 0.0
      %1858 = vmatpush1.msra.mxu0 0.0
      %1859 = vmatprep.subr.mxu0 0.0
      %1860 = vmatpush1.msra.mxu0 0.0
      %1861 = vmatprep.subr.mxu0 0.0
      %1862 = vmatpush1.msra.mxu0 0.0
      %1863 = vmatprep.subr.mxu0 0.0
      %1864 = vmatpush1.msra.mxu0 0.0
      %1865 = vmatprep.subr.mxu0 0.0
      %1866 = vmatpush1.msra.mxu0 0.0
      %1867 = vmatprep.subr.mxu0 0.0
      %1868 = vmatpush1.msra.mxu0 0.0
      %1869 = vmatprep.subr.mxu0 0.0
      %1870 = vmatpush1.msra.mxu0 0.0
      %1871 = vmatprep.subr.mxu0 0.0
      %1872 = vmatpush1.msra.mxu0 0.0
      %1873 = vmatprep.subr.mxu0 0.0
      %1874 = vmatpush1.msra.mxu0 0.0
      %1875 = vmatprep.subr.mxu0 0.0
      %1876 = vmatpush1.msra.mxu0 0.0
      %1877 = vmatprep.subr.mxu0 0.0
      %1878 = vmatpush1.msra.mxu0 0.0
      %1879 = vmatprep.subr.mxu0 0.0
      %1880 = vmatpush1.msra.mxu0 0.0
      %1881 = vmatprep.subr.mxu0 0.0
      %1882 = vmatpush1.msra.mxu0 0.0
      %1883 = vmatprep.subr.mxu0 0.0
      %1884 = vmatpush1.msra.mxu0 0.0
      %1885 = vmatprep.subr.mxu0 0.0
      %1886 = vmatpush1.msra.mxu0 0.0
      %1887 = vmatprep.subr.mxu0 0.0
      %1888 = vmatpush1.msra.mxu0 0.0
      %1889 = vmatprep.subr.mxu0 0.0
      %1890 = vmatpush1.msra.mxu0 0.0
      %1891 = vmatprep.subr.mxu0 0.0
      %1892 = vmatpush1.msra.mxu0 0.0
      %1893 = vmatprep.subr.mxu0 0.0
      %1894 = vmatpush1.msra.mxu0 0.0
      %1895 = vmatprep.subr.mxu0 0.0
      %1896 = vmatpush1.msra.mxu0 0.0
      %1897 = vmatprep.subr.mxu0 0.0
      %1898 = vmatpush1.msra.mxu0 0.0
      %1899 = vmatprep.subr.mxu0 0.0
      %1900 = vmatpush1.msra.mxu0 0.0
      %1901 = vmatprep.subr.mxu0 0.0
      %1902 = vmatpush1.msra.mxu0 0.0
      %1903 = vmatprep.subr.mxu0 0.0
      %1904 = vmatpush1.msra.mxu0 0.0
      %1905 = vmatprep.subr.mxu0 0.0
      %1906 = vmatpush1.msra.mxu0 0.0
      %1907 = vmatprep.subr.mxu0 0.0
      %1908 = vmatpush1.msra.mxu0 0.0
      %1909 = vmatprep.subr.mxu0 0.0
      %1910 = vmatpush1.msra.mxu0 0.0
      %1911 = vmatprep.subr.mxu0 0.0
      %1912 = vmatpush1.msra.mxu0 0.0
      %1913 = vmatprep.subr.mxu0 0.0
      %1914 = vmatpush1.msra.mxu0 0.0
      %1915 = vmatprep.subr.mxu0 0.0
      %1916 = vmatpush1.msra.mxu0 0.0
      %1917 = vmatprep.mubr.f32.mxu0 0.0
      %1918 = vmatmul.mubr.f32.gmra.mrb[0].mxu0 %v1848
      %v1919 = vpop.f32.mrb[0].mxu0
      %v1920 = vadd.f32 1e-06, %v1919
      %v1921 = vpop.f32.mrb[0].mxu0
      %1922 = vmatprep.mubr.f32.mxu0 0.0
      %1923 = vmatmul.mubr.f32.gmra.mrb[0].mxu0 %v1851
      %v1924 = vpop.f32.mrb[0].mxu0
      %v1925 = vadd.f32 1e-06, %v1924
      %v1926 = vpop.f32.mrb[0].mxu0
      %1927 = vdwg.mxu0
      %v1928 = vrcp.pop %v1920
      %v1929 = vrcp.pop %v1925
      %v1930 = vmul.f32 %v1845, %v1928
      %v1931 = vmul.f32 %v1846, %v1929
      %v1933 = vsel %vm670, %v1930, 0
      %v1936 = vsel %vm670, %v1931, 0
      %1938 = vmatprep.subr.mxu0 %v647
      %1939 = vmatpush1.msra.mxu0 %v646
      %1940 = vmatprep.subr.mxu0 %v653
      %1941 = vmatpush1.msra.mxu0 %v652
      %1942 = vmatprep.subr.mxu0 %v659
      %1943 = vmatpush1.msra.mxu0 %v658
      %1944 = vmatprep.subr.mxu0 %v665
      %1945 = vmatpush1.msra.mxu0 %v664
      %1946 = vmatprep.subr.mxu0 0.0
      %1947 = vmatpush1.msra.mxu0 0.0
      %1948 = vmatprep.subr.mxu0 0.0
      %1949 = vmatpush1.msra.mxu0 0.0
      %1950 = vmatprep.subr.mxu0 0.0
      %1951 = vmatpush1.msra.mxu0 0.0
      %1952 = vmatprep.subr.mxu0 0.0
      %1953 = vmatpush1.msra.mxu0 0.0
      %1954 = vmatprep.subr.mxu0 0.0
      %1955 = vmatpush1.msra.mxu0 0.0
      %1956 = vmatprep.subr.mxu0 0.0
      %1957 = vmatpush1.msra.mxu0 0.0
      %1958 = vmatprep.subr.mxu0 0.0
      %1959 = vmatpush1.msra.mxu0 0.0
      %1960 = vmatprep.subr.mxu0 0.0
      %1961 = vmatpush1.msra.mxu0 0.0
      %1962 = vmatprep.subr.mxu0 0.0
      %1963 = vmatpush1.msra.mxu0 0.0
      %1964 = vmatprep.subr.mxu0 0.0
      %1965 = vmatpush1.msra.mxu0 0.0
      %1966 = vmatprep.subr.mxu0 0.0
      %1967 = vmatpush1.msra.mxu0 0.0
      %1968 = vmatprep.subr.mxu0 0.0
      %1969 = vmatpush1.msra.mxu0 0.0
      %1970 = vmatprep.subr.mxu0 0.0
      %1971 = vmatpush1.msra.mxu0 0.0
      %1972 = vmatprep.subr.mxu0 0.0
      %1973 = vmatpush1.msra.mxu0 0.0
      %1974 = vmatprep.subr.mxu0 0.0
      %1975 = vmatpush1.msra.mxu0 0.0
      %1976 = vmatprep.subr.mxu0 0.0
      %1977 = vmatpush1.msra.mxu0 0.0
      %1978 = vmatprep.subr.mxu0 0.0
      %1979 = vmatpush1.msra.mxu0 0.0
      %1980 = vmatprep.subr.mxu0 0.0
      %1981 = vmatpush1.msra.mxu0 0.0
      %1982 = vmatprep.subr.mxu0 0.0
      %1983 = vmatpush1.msra.mxu0 0.0
      %1984 = vmatprep.subr.mxu0 0.0
      %1985 = vmatpush1.msra.mxu0 0.0
      %1986 = vmatprep.subr.mxu0 0.0
      %1987 = vmatpush1.msra.mxu0 0.0
      %1988 = vmatprep.subr.mxu0 0.0
      %1989 = vmatpush1.msra.mxu0 0.0
      %1990 = vmatprep.subr.mxu0 0.0
      %1991 = vmatpush1.msra.mxu0 0.0
      %1992 = vmatprep.subr.mxu0 0.0
      %1993 = vmatpush1.msra.mxu0 0.0
      %1994 = vmatprep.subr.mxu0 0.0
      %1995 = vmatpush1.msra.mxu0 0.0
      %1996 = vmatprep.subr.mxu0 0.0
      %1997 = vmatpush1.msra.mxu0 0.0
      %1998 = vmatprep.subr.mxu0 0.0
      %1999 = vmatpush1.msra.mxu0 0.0
      %2000 = vmatprep.subr.mxu0 0.0
      %2001 = vmatpush1.msra.mxu0 0.0
      %2002 = vmatprep.mubr.f32.mxu0 0.0
      %2003 = vmatmul.mubr.f32.gmra.mrb[0].mxu0 %v1933
      %v2004 = vpop.f32.mrb[0].mxu0
      %v2005 = vadd.f32 0.0, %v2004
      %v2006 = vpop.f32.mrb[0].mxu0
      %v2007 = vadd.f32 0.0, %v2006
      %2008 = vmatprep.mubr.f32.mxu0 0.0
      %2009 = vmatmul.mubr.f32.gmra.mrb[0].mxu0 %v1936
      %v2010 = vpop.f32.mrb[0].mxu0
      %v2011 = vadd.f32 0.0, %v2010
      %v2012 = vpop.f32.mrb[0].mxu0
      %v2013 = vadd.f32 0.0, %v2012
      %2014 = vdwg.mxu0
      %2015 = vmatprep.subr.mxu0 %v649
      %2016 = vmatpush1.msra.mxu0 %v648
      %2017 = vmatprep.subr.mxu0 %v655
      %2018 = vmatpush1.msra.mxu0 %v654
      %2019 = vmatprep.subr.mxu0 %v661
      %2020 = vmatpush1.msra.mxu0 %v660
      %2021 = vmatprep.subr.mxu0 %v667
      %2022 = vmatpush1.msra.mxu0 %v666
      %2023 = vmatprep.subr.mxu0 0.0
      %2024 = vmatpush1.msra.mxu0 0.0
      %2025 = vmatprep.subr.mxu0 0.0
      %2026 = vmatpush1.msra.mxu0 0.0
      %2027 = vmatprep.subr.mxu0 0.0
      %2028 = vmatpush1.msra.mxu0 0.0
      %2029 = vmatprep.subr.mxu0 0.0
      %2030 = vmatpush1.msra.mxu0 0.0
      %2031 = vmatprep.subr.mxu0 0.0
      %2032 = vmatpush1.msra.mxu0 0.0
      %2033 = vmatprep.subr.mxu0 0.0
      %2034 = vmatpush1.msra.mxu0 0.0
      %2035 = vmatprep.subr.mxu0 0.0
      %2036 = vmatpush1.msra.mxu0 0.0
      %2037 = vmatprep.subr.mxu0 0.0
      %2038 = vmatpush1.msra.mxu0 0.0
      %2039 = vmatprep.subr.mxu0 0.0
      %2040 = vmatpush1.msra.mxu0 0.0
      %2041 = vmatprep.subr.mxu0 0.0
      %2042 = vmatpush1.msra.mxu0 0.0
      %2043 = vmatprep.subr.mxu0 0.0
      %2044 = vmatpush1.msra.mxu0 0.0
      %2045 = vmatprep.subr.mxu0 0.0
      %2046 = vmatpush1.msra.mxu0 0.0
      %2047 = vmatprep.subr.mxu0 0.0
      %2048 = vmatpush1.msra.mxu0 0.0
      %2049 = vmatprep.subr.mxu0 0.0
      %2050 = vmatpush1.msra.mxu0 0.0
      %2051 = vmatprep.subr.mxu0 0.0
      %2052 = vmatpush1.msra.mxu0 0.0
      %2053 = vmatprep.subr.mxu0 0.0
      %2054 = vmatpush1.msra.mxu0 0.0
      %2055 = vmatprep.subr.mxu0 0.0
      %2056 = vmatpush1.msra.mxu0 0.0
      %2057 = vmatprep.subr.mxu0 0.0
      %2058 = vmatpush1.msra.mxu0 0.0
      %2059 = vmatprep.subr.mxu0 0.0
      %2060 = vmatpush1.msra.mxu0 0.0
      %2061 = vmatprep.subr.mxu0 0.0
      %2062 = vmatpush1.msra.mxu0 0.0
      %2063 = vmatprep.subr.mxu0 0.0
      %2064 = vmatpush1.msra.mxu0 0.0
      %2065 = vmatprep.subr.mxu0 0.0
      %2066 = vmatpush1.msra.mxu0 0.0
      %2067 = vmatprep.subr.mxu0 0.0
      %2068 = vmatpush1.msra.mxu0 0.0
      %2069 = vmatprep.subr.mxu0 0.0
      %2070 = vmatpush1.msra.mxu0 0.0
      %2071 = vmatprep.subr.mxu0 0.0
      %2072 = vmatpush1.msra.mxu0 0.0
      %2073 = vmatprep.subr.mxu0 0.0
      %2074 = vmatpush1.msra.mxu0 0.0
      %2075 = vmatprep.subr.mxu0 0.0
      %2076 = vmatpush1.msra.mxu0 0.0
      %2077 = vmatprep.subr.mxu0 0.0
      %2078 = vmatpush1.msra.mxu0 0.0
      %2079 = vmatprep.mubr.f32.mxu0 0.0
      %2080 = vmatmul.mubr.f32.gmra.mrb[0].mxu0 %v1933
      %v2081 = vpop.f32.mrb[0].mxu0
      %v2082 = vadd.f32 0.0, %v2081
      %v2083 = vpop.f32.mrb[0].mxu0
      %v2084 = vadd.f32 0.0, %v2083
      %2085 = vmatprep.mubr.f32.mxu0 0.0
      %2086 = vmatmul.mubr.f32.gmra.mrb[0].mxu0 %v1936
      %v2087 = vpop.f32.mrb[0].mxu0
      %v2088 = vadd.f32 0.0, %v2087
      %v2089 = vpop.f32.mrb[0].mxu0
      %v2090 = vadd.f32 0.0, %v2089
      %2091 = vdwg.mxu0
      %2092 = vmatprep.subr.mxu0 %v651
      %2093 = vmatpush1.msra.mxu0 %v650
      %2094 = vmatprep.subr.mxu0 %v657
      %2095 = vmatpush1.msra.mxu0 %v656
      %2096 = vmatprep.subr.mxu0 %v663
      %2097 = vmatpush1.msra.mxu0 %v662
      %2098 = vmatprep.subr.mxu0 %v669
      %2099 = vmatpush1.msra.mxu0 %v668
      %2100 = vmatprep.subr.mxu0 0.0
      %2101 = vmatpush1.msra.mxu0 0.0
      %2102 = vmatprep.subr.mxu0 0.0
      %2103 = vmatpush1.msra.mxu0 0.0
      %2104 = vmatprep.subr.mxu0 0.0
      %2105 = vmatpush1.msra.mxu0 0.0
      %2106 = vmatprep.subr.mxu0 0.0
      %2107 = vmatpush1.msra.mxu0 0.0
      %2108 = vmatprep.subr.mxu0 0.0
      %2109 = vmatpush1.msra.mxu0 0.0
      %2110 = vmatprep.subr.mxu0 0.0
      %2111 = vmatpush1.msra.mxu0 0.0
      %2112 = vmatprep.subr.mxu0 0.0
      %2113 = vmatpush1.msra.mxu0 0.0
      %2114 = vmatprep.subr.mxu0 0.0
      %2115 = vmatpush1.msra.mxu0 0.0
      %2116 = vmatprep.subr.mxu0 0.0
      %2117 = vmatpush1.msra.mxu0 0.0
      %2118 = vmatprep.subr.mxu0 0.0
      %2119 = vmatpush1.msra.mxu0 0.0
      %2120 = vmatprep.subr.mxu0 0.0
      %2121 = vmatpush1.msra.mxu0 0.0
      %2122 = vmatprep.subr.mxu0 0.0
      %2123 = vmatpush1.msra.mxu0 0.0
      %2124 = vmatprep.subr.mxu0 0.0
      %2125 = vmatpush1.msra.mxu0 0.0
      %2126 = vmatprep.subr.mxu0 0.0
      %2127 = vmatpush1.msra.mxu0 0.0
      %2128 = vmatprep.subr.mxu0 0.0
      %2129 = vmatpush1.msra.mxu0 0.0
      %2130 = vmatprep.subr.mxu0 0.0
      %2131 = vmatpush1.msra.mxu0 0.0
      %2132 = vmatprep.subr.mxu0 0.0
      %2133 = vmatpush1.msra.mxu0 0.0
      %2134 = vmatprep.subr.mxu0 0.0
      %2135 = vmatpush1.msra.mxu0 0.0
      %2136 = vmatprep.subr.mxu0 0.0
      %2137 = vmatpush1.msra.mxu0 0.0
      %2138 = vmatprep.subr.mxu0 0.0
      %2139 = vmatpush1.msra.mxu0 0.0
      %2140 = vmatprep.subr.mxu0 0.0
      %2141 = vmatpush1.msra.mxu0 0.0
      %2142 = vmatprep.subr.mxu0 0.0
      %2143 = vmatpush1.msra.mxu0 0.0
      %2144 = vmatprep.subr.mxu0 0.0
      %2145 = vmatpush1.msra.mxu0 0.0
      %2146 = vmatprep.subr.mxu0 0.0
      %2147 = vmatpush1.msra.mxu0 0.0
      %2148 = vmatprep.subr.mxu0 0.0
      %2149 = vmatpush1.msra.mxu0 0.0
      %2150 = vmatprep.subr.mxu0 0.0
      %2151 = vmatpush1.msra.mxu0 0.0
      %2152 = vmatprep.subr.mxu0 0.0
      %2153 = vmatpush1.msra.mxu0 0.0
      %2154 = vmatprep.subr.mxu0 0.0
      %2155 = vmatpush1.msra.mxu0 0.0
      %2156 = vmatprep.mubr.f32.mxu0 0.0
      %2157 = vmatmul.mubr.f32.gmra.mrb[0].mxu0 %v1933
      %v2158 = vpop.f32.mrb[0].mxu0
      %v2159 = vadd.f32 0.0, %v2158
      %v2160 = vpop.f32.mrb[0].mxu0
      %v2161 = vadd.f32 0.0, %v2160
      %2162 = vmatprep.mubr.f32.mxu0 0.0
      %2163 = vmatmul.mubr.f32.gmra.mrb[0].mxu0 %v1936
      %v2164 = vpop.f32.mrb[0].mxu0
      %v2165 = vadd.f32 0.0, %v2164
      %v2166 = vpop.f32.mrb[0].mxu0
      %v2167 = vadd.f32 0.0, %v2166
      %2168 = vdwg.mxu0
      %2169 = vmatprep.subr.mxu0 0.0
      %2170 = vmatpush1.xpose.msra.mxu0 %v1933
      %2171 = vmatprep.subr.mxu0 0.0
      %2172 = vmatpush1.xpose.msra.mxu0 %v1936
      %2173 = vmatprep.subr.mxu0 0.0
      %2174 = vmatpush1.xpose.msra.mxu0 0.0
      %2175 = vmatprep.subr.mxu0 0.0
      %2176 = vmatpush1.xpose.msra.mxu0 0.0
      %2177 = vmatprep.subr.mxu0 0.0
      %2178 = vmatpush1.xpose.msra.mxu0 0.0
      %2179 = vmatprep.subr.mxu0 0.0
      %2180 = vmatpush1.xpose.msra.mxu0 0.0
      %2181 = vmatprep.subr.mxu0 0.0
      %2182 = vmatpush1.xpose.msra.mxu0 0.0
      %2183 = vmatprep.subr.mxu0 0.0
      %2184 = vmatpush1.xpose.msra.mxu0 0.0
      %2185 = vmatprep.subr.mxu0 0.0
      %2186 = vmatpush1.xpose.msra.mxu0 0.0
      %2187 = vmatprep.subr.mxu0 0.0
      %2188 = vmatpush1.xpose.msra.mxu0 0.0
      %2189 = vmatprep.subr.mxu0 0.0
      %2190 = vmatpush1.xpose.msra.mxu0 0.0
      %2191 = vmatprep.subr.mxu0 0.0
      %2192 = vmatpush1.xpose.msra.mxu0 0.0
      %2193 = vmatprep.subr.mxu0 0.0
      %2194 = vmatpush1.xpose.msra.mxu0 0.0
      %2195 = vmatprep.subr.mxu0 0.0
      %2196 = vmatpush1.xpose.msra.mxu0 0.0
      %2197 = vmatprep.subr.mxu0 0.0
      %2198 = vmatpush1.xpose.msra.mxu0 0.0
      %2199 = vmatprep.subr.mxu0 0.0
      %2200 = vmatpush1.xpose.msra.mxu0 0.0
      %2201 = vmatprep.subr.mxu0 0.0
      %2202 = vmatpush1.xpose.msra.mxu0 0.0
      %2203 = vmatprep.subr.mxu0 0.0
      %2204 = vmatpush1.xpose.msra.mxu0 0.0
      %2205 = vmatprep.subr.mxu0 0.0
      %2206 = vmatpush1.xpose.msra.mxu0 0.0
      %2207 = vmatprep.subr.mxu0 0.0
      %2208 = vmatpush1.xpose.msra.mxu0 0.0
      %2209 = vmatprep.subr.mxu0 0.0
      %2210 = vmatpush1.xpose.msra.mxu0 0.0
      %2211 = vmatprep.subr.mxu0 0.0
      %2212 = vmatpush1.xpose.msra.mxu0 0.0
      %2213 = vmatprep.subr.mxu0 0.0
      %2214 = vmatpush1.xpose.msra.mxu0 0.0
      %2215 = vmatprep.subr.mxu0 0.0
      %2216 = vmatpush1.xpose.msra.mxu0 0.0
      %2217 = vmatprep.subr.mxu0 0.0
      %2218 = vmatpush1.xpose.msra.mxu0 0.0
      %2219 = vmatprep.subr.mxu0 0.0
      %2220 = vmatpush1.xpose.msra.mxu0 0.0
      %2221 = vmatprep.subr.mxu0 0.0
      %2222 = vmatpush1.xpose.msra.mxu0 0.0
      %2223 = vmatprep.subr.mxu0 0.0
      %2224 = vmatpush1.xpose.msra.mxu0 0.0
      %2225 = vmatprep.subr.mxu0 0.0
      %2226 = vmatpush1.xpose.msra.mxu0 0.0
      %2227 = vmatprep.subr.mxu0 0.0
      %2228 = vmatpush1.xpose.msra.mxu0 0.0
      %2229 = vmatprep.subr.mxu0 0.0
      %2230 = vmatpush1.xpose.msra.mxu0 0.0
      %2231 = vmatprep.subr.mxu0 0.0
      %2232 = vmatpush1.xpose.msra.mxu0 0.0
      %2233 = vmatprep.mubr.f32.mxu0 0.0
      %2234 = vmatmul.mubr.f32.gmra.mrb[0].mxu0 %v1933
      %v2235 = vpop.f32.mrb[0].mxu0
      %v2236 = vadd.f32 0.0, %v2235
      %v2237 = vpop.f32.mrb[0].mxu0
      %2238 = vmatprep.mubr.f32.mxu0 0.0
      %2239 = vmatmul.mubr.f32.gmra.mrb[0].mxu0 %v1936
      %v2240 = vpop.f32.mrb[0].mxu0
      %v2241 = vadd.f32 0.0, %v2240
      %v2242 = vpop.f32.mrb[0].mxu0
      %2243 = vdwg.mxu0
      %v2244 = vmul.f32 %v1383, %v2005
      %v2245 = vmul.f32 %v1384, %v2007
      %v2246 = vmul.f32 %v1385, %v2082
      %v2247 = vmul.f32 %v1386, %v2084
      %v2248 = vmul.f32 %v1387, %v2159
      %v2249 = vmul.f32 %v1388, %v2161
      %v2250 = vmul.f32 %v1389, %v2011
      %v2251 = vmul.f32 %v1390, %v2013
      %v2252 = vmul.f32 %v1391, %v2088
      %v2253 = vmul.f32 %v1392, %v2090
      %v2254 = vmul.f32 %v1393, %v2165
      %v2255 = vmul.f32 %v1394, %v2167
      %v2257 = vsel %vm1133, %v2236, 0
      %v2260 = vsel %vm1133, %v2241, 0
      %2262 = vmatprep.subr.mxu0 %v1384
      %2263 = vmatpush1.msra.mxu0 %v1383
      %2264 = vmatprep.subr.mxu0 %v1390
      %2265 = vmatpush1.msra.mxu0 %v1389
      %2266 = vmatprep.subr.mxu0 0.0
      %2267 = vmatpush1.msra.mxu0 0.0
      %2268 = vmatprep.subr.mxu0 0.0
      %2269 = vmatpush1.msra.mxu0 0.0
      %2270 = vmatprep.subr.mxu0 0.0
      %2271 = vmatpush1.msra.mxu0 0.0
      %2272 = vmatprep.subr.mxu0 0.0
      %2273 = vmatpush1.msra.mxu0 0.0
      %2274 = vmatprep.subr.mxu0 0.0
      %2275 = vmatpush1.msra.mxu0 0.0
      %2276 = vmatprep.subr.mxu0 0.0
      %2277 = vmatpush1.msra.mxu0 0.0
      %2278 = vmatprep.subr.mxu0 0.0
      %2279 = vmatpush1.msra.mxu0 0.0
      %2280 = vmatprep.subr.mxu0 0.0
      %2281 = vmatpush1.msra.mxu0 0.0
      %2282 = vmatprep.subr.mxu0 0.0
      %2283 = vmatpush1.msra.mxu0 0.0
      %2284 = vmatprep.subr.mxu0 0.0
      %2285 = vmatpush1.msra.mxu0 0.0
      %2286 = vmatprep.subr.mxu0 0.0
      %2287 = vmatpush1.msra.mxu0 0.0
      %2288 = vmatprep.subr.mxu0 0.0
      %2289 = vmatpush1.msra.mxu0 0.0
      %2290 = vmatprep.subr.mxu0 0.0
      %2291 = vmatpush1.msra.mxu0 0.0
      %2292 = vmatprep.subr.mxu0 0.0
      %2293 = vmatpush1.msra.mxu0 0.0
      %2294 = vmatprep.subr.mxu0 0.0
      %2295 = vmatpush1.msra.mxu0 0.0
      %2296 = vmatprep.subr.mxu0 0.0
      %2297 = vmatpush1.msra.mxu0 0.0
      %2298 = vmatprep.subr.mxu0 0.0
      %2299 = vmatpush1.msra.mxu0 0.0
      %2300 = vmatprep.subr.mxu0 0.0
      %2301 = vmatpush1.msra.mxu0 0.0
      %2302 = vmatprep.subr.mxu0 0.0
      %2303 = vmatpush1.msra.mxu0 0.0
      %2304 = vmatprep.subr.mxu0 0.0
      %2305 = vmatpush1.msra.mxu0 0.0
      %2306 = vmatprep.subr.mxu0 0.0
      %2307 = vmatpush1.msra.mxu0 0.0
      %2308 = vmatprep.subr.mxu0 0.0
      %2309 = vmatpush1.msra.mxu0 0.0
      %2310 = vmatprep.subr.mxu0 0.0
      %2311 = vmatpush1.msra.mxu0 0.0
      %2312 = vmatprep.subr.mxu0 0.0
      %2313 = vmatpush1.msra.mxu0 0.0
      %2314 = vmatprep.subr.mxu0 0.0
      %2315 = vmatpush1.msra.mxu0 0.0
      %2316 = vmatprep.subr.mxu0 0.0
      %2317 = vmatpush1.msra.mxu0 0.0
      %2318 = vmatprep.subr.mxu0 0.0
      %2319 = vmatpush1.msra.mxu0 0.0
      %2320 = vmatprep.subr.mxu0 0.0
      %2321 = vmatpush1.msra.mxu0 0.0
      %2322 = vmatprep.subr.mxu0 0.0
      %2323 = vmatpush1.msra.mxu0 0.0
      %2324 = vmatprep.subr.mxu0 0.0
      %2325 = vmatpush1.msra.mxu0 0.0
      %2326 = vmatprep.mubr.f32.mxu0 0.0
      %2327 = vmatmul.mubr.f32.gmra.mrb[0].mxu0 %v2257
      %v2328 = vpop.f32.mrb[0].mxu0
      %v2329 = vadd.f32 1e-06, %v2328
      %v2330 = vpop.f32.mrb[0].mxu0
      %v2331 = vadd.f32 1e-06, %v2330
      %2332 = vmatprep.mubr.f32.mxu0 0.0
      %2333 = vmatmul.mubr.f32.gmra.mrb[0].mxu0 %v2260
      %v2334 = vpop.f32.mrb[0].mxu0
      %v2335 = vadd.f32 1e-06, %v2334
      %v2336 = vpop.f32.mrb[0].mxu0
      %v2337 = vadd.f32 1e-06, %v2336
      %2338 = vdwg.mxu0
      %2339 = vmatprep.subr.mxu0 %v1386
      %2340 = vmatpush1.msra.mxu0 %v1385
      %2341 = vmatprep.subr.mxu0 %v1392
      %2342 = vmatpush1.msra.mxu0 %v1391
      %2343 = vmatprep.subr.mxu0 0.0
      %2344 = vmatpush1.msra.mxu0 0.0
      %2345 = vmatprep.subr.mxu0 0.0
      %2346 = vmatpush1.msra.mxu0 0.0
      %2347 = vmatprep.subr.mxu0 0.0
      %2348 = vmatpush1.msra.mxu0 0.0
      %2349 = vmatprep.subr.mxu0 0.0
      %2350 = vmatpush1.msra.mxu0 0.0
      %2351 = vmatprep.subr.mxu0 0.0
      %2352 = vmatpush1.msra.mxu0 0.0
      %2353 = vmatprep.subr.mxu0 0.0
      %2354 = vmatpush1.msra.mxu0 0.0
      %2355 = vmatprep.subr.mxu0 0.0
      %2356 = vmatpush1.msra.mxu0 0.0
      %2357 = vmatprep.subr.mxu0 0.0
      %2358 = vmatpush1.msra.mxu0 0.0
      %2359 = vmatprep.subr.mxu0 0.0
      %2360 = vmatpush1.msra.mxu0 0.0
      %2361 = vmatprep.subr.mxu0 0.0
      %2362 = vmatpush1.msra.mxu0 0.0
      %2363 = vmatprep.subr.mxu0 0.0
      %2364 = vmatpush1.msra.mxu0 0.0
      %2365 = vmatprep.subr.mxu0 0.0
      %2366 = vmatpush1.msra.mxu0 0.0
      %2367 = vmatprep.subr.mxu0 0.0
      %2368 = vmatpush1.msra.mxu0 0.0
      %2369 = vmatprep.subr.mxu0 0.0
      %2370 = vmatpush1.msra.mxu0 0.0
      %2371 = vmatprep.subr.mxu0 0.0
      %2372 = vmatpush1.msra.mxu0 0.0
      %2373 = vmatprep.subr.mxu0 0.0
      %2374 = vmatpush1.msra.mxu0 0.0
      %2375 = vmatprep.subr.mxu0 0.0
      %2376 = vmatpush1.msra.mxu0 0.0
      %2377 = vmatprep.subr.mxu0 0.0
      %2378 = vmatpush1.msra.mxu0 0.0
      %2379 = vmatprep.subr.mxu0 0.0
      %2380 = vmatpush1.msra.mxu0 0.0
      %2381 = vmatprep.subr.mxu0 0.0
      %2382 = vmatpush1.msra.mxu0 0.0
      %2383 = vmatprep.subr.mxu0 0.0
      %2384 = vmatpush1.msra.mxu0 0.0
      %2385 = vmatprep.subr.mxu0 0.0
      %2386 = vmatpush1.msra.mxu0 0.0
      %2387 = vmatprep.subr.mxu0 0.0
      %2388 = vmatpush1.msra.mxu0 0.0
      %2389 = vmatprep.subr.mxu0 0.0
      %2390 = vmatpush1.msra.mxu0 0.0
      %2391 = vmatprep.subr.mxu0 0.0
      %2392 = vmatpush1.msra.mxu0 0.0
      %2393 = vmatprep.subr.mxu0 0.0
      %2394 = vmatpush1.msra.mxu0 0.0
      %2395 = vmatprep.subr.mxu0 0.0
      %2396 = vmatpush1.msra.mxu0 0.0
      %2397 = vmatprep.subr.mxu0 0.0
      %2398 = vmatpush1.msra.mxu0 0.0
      %2399 = vmatprep.subr.mxu0 0.0
      %2400 = vmatpush1.msra.mxu0 0.0
      %2401 = vmatprep.subr.mxu0 0.0
      %2402 = vmatpush1.msra.mxu0 0.0
      %2403 = vmatprep.mubr.f32.mxu0 0.0
      %2404 = vmatmul.mubr.f32.gmra.mrb[0].mxu0 %v2257
      %v2405 = vpop.f32.mrb[0].mxu0
      %v2406 = vadd.f32 1e-06, %v2405
      %v2407 = vpop.f32.mrb[0].mxu0
      %v2408 = vadd.f32 1e-06, %v2407
      %2409 = vmatprep.mubr.f32.mxu0 0.0
      %2410 = vmatmul.mubr.f32.gmra.mrb[0].mxu0 %v2260
      %v2411 = vpop.f32.mrb[0].mxu0
      %v2412 = vadd.f32 1e-06, %v2411
      %v2413 = vpop.f32.mrb[0].mxu0
      %v2414 = vadd.f32 1e-06, %v2413
      %2415 = vdwg.mxu0
      %2416 = vmatprep.subr.mxu0 %v1388
      %2417 = vmatpush1.msra.mxu0 %v1387
      %2418 = vmatprep.subr.mxu0 %v1394
      %2419 = vmatpush1.msra.mxu0 %v1393
      %2420 = vmatprep.subr.mxu0 0.0
      %2421 = vmatpush1.msra.mxu0 0.0
      %2422 = vmatprep.subr.mxu0 0.0
      %2423 = vmatpush1.msra.mxu0 0.0
      %2424 = vmatprep.subr.mxu0 0.0
      %2425 = vmatpush1.msra.mxu0 0.0
      %2426 = vmatprep.subr.mxu0 0.0
      %2427 = vmatpush1.msra.mxu0 0.0
      %2428 = vmatprep.subr.mxu0 0.0
      %2429 = vmatpush1.msra.mxu0 0.0
      %2430 = vmatprep.subr.mxu0 0.0
      %2431 = vmatpush1.msra.mxu0 0.0
      %2432 = vmatprep.subr.mxu0 0.0
      %2433 = vmatpush1.msra.mxu0 0.0
      %2434 = vmatprep.subr.mxu0 0.0
      %2435 = vmatpush1.msra.mxu0 0.0
      %2436 = vmatprep.subr.mxu0 0.0
      %2437 = vmatpush1.msra.mxu0 0.0
      %2438 = vmatprep.subr.mxu0 0.0
      %2439 = vmatpush1.msra.mxu0 0.0
      %2440 = vmatprep.subr.mxu0 0.0
      %2441 = vmatpush1.msra.mxu0 0.0
      %2442 = vmatprep.subr.mxu0 0.0
      %2443 = vmatpush1.msra.mxu0 0.0
      %2444 = vmatprep.subr.mxu0 0.0
      %2445 = vmatpush1.msra.mxu0 0.0
      %2446 = vmatprep.subr.mxu0 0.0
      %2447 = vmatpush1.msra.mxu0 0.0
      %2448 = vmatprep.subr.mxu0 0.0
      %2449 = vmatpush1.msra.mxu0 0.0
      %2450 = vmatprep.subr.mxu0 0.0
      %2451 = vmatpush1.msra.mxu0 0.0
      %2452 = vmatprep.subr.mxu0 0.0
      %2453 = vmatpush1.msra.mxu0 0.0
      %2454 = vmatprep.subr.mxu0 0.0
      %2455 = vmatpush1.msra.mxu0 0.0
      %2456 = vmatprep.subr.mxu0 0.0
      %2457 = vmatpush1.msra.mxu0 0.0
      %2458 = vmatprep.subr.mxu0 0.0
      %2459 = vmatpush1.msra.mxu0 0.0
      %2460 = vmatprep.subr.mxu0 0.0
      %2461 = vmatpush1.msra.mxu0 0.0
      %2462 = vmatprep.subr.mxu0 0.0
      %2463 = vmatpush1.msra.mxu0 0.0
      %2464 = vmatprep.subr.mxu0 0.0
      %2465 = vmatpush1.msra.mxu0 0.0
      %2466 = vmatprep.subr.mxu0 0.0
      %2467 = vmatpush1.msra.mxu0 0.0
      %2468 = vmatprep.subr.mxu0 0.0
      %2469 = vmatpush1.msra.mxu0 0.0
      %2470 = vmatprep.subr.mxu0 0.0
      %2471 = vmatpush1.msra.mxu0 0.0
      %2472 = vmatprep.subr.mxu0 0.0
      %2473 = vmatpush1.msra.mxu0 0.0
      %2474 = vmatprep.subr.mxu0 0.0
      %2475 = vmatpush1.msra.mxu0 0.0
      %2476 = vmatprep.subr.mxu0 0.0
      %2477 = vmatpush1.msra.mxu0 0.0
      %2478 = vmatprep.subr.mxu0 0.0
      %2479 = vmatpush1.msra.mxu0 0.0
      %2480 = vmatprep.mubr.f32.mxu0 0.0
      %2481 = vmatmul.mubr.f32.gmra.mrb[0].mxu0 %v2257
      %v2482 = vpop.f32.mrb[0].mxu0
      %v2483 = vadd.f32 1e-06, %v2482
      %v2484 = vpop.f32.mrb[0].mxu0
      %v2485 = vadd.f32 1e-06, %v2484
      %2486 = vmatprep.mubr.f32.mxu0 0.0
      %2487 = vmatmul.mubr.f32.gmra.mrb[0].mxu0 %v2260
      %v2488 = vpop.f32.mrb[0].mxu0
      %v2489 = vadd.f32 1e-06, %v2488
      %v2490 = vpop.f32.mrb[0].mxu0
      %v2491 = vadd.f32 1e-06, %v2490
      %2492 = vdwg.mxu0
      %v2493 = vrcp.pop %v2329
      %v2494 = vrcp.pop %v2331
      %v2495 = vrcp.pop %v2406
      %v2496 = vrcp.pop %v2408
      %v2497 = vrcp.pop %v2483
      %v2498 = vrcp.pop %v2485
      %v2499 = vrcp.pop %v2335
      %v2500 = vrcp.pop %v2337
      %v2501 = vrcp.pop %v2412
      %v2502 = vrcp.pop %v2414
      %v2503 = vrcp.pop %v2489
      %v2504 = vrcp.pop %v2491
      %v2505 = vmul.f32 %v2244, %v2493
      %v2506 = vmul.f32 %v2245, %v2494
      %v2507 = vmul.f32 %v2246, %v2495
      %v2508 = vmul.f32 %v2247, %v2496
      %v2509 = vmul.f32 %v2248, %v2497
      %v2510 = vmul.f32 %v2249, %v2498
      %v2511 = vmul.f32 %v2250, %v2499
      %v2512 = vmul.f32 %v2251, %v2500
      %v2513 = vmul.f32 %v2252, %v2501
      %v2514 = vmul.f32 %v2253, %v2502
      %v2515 = vmul.f32 %v2254, %v2503
      %v2516 = vmul.f32 %v2255, %v2504
      %2517 = vmatprep.subr.mxu0 %v647
      %2518 = vmatpush1.xpose.msra.mxu0 %v646
      %2519 = vmatprep.subr.mxu0 %v653
      %2520 = vmatpush1.xpose.msra.mxu0 %v652
      %2521 = vmatprep.subr.mxu0 %v659
      %2522 = vmatpush1.xpose.msra.mxu0 %v658
      %2523 = vmatprep.subr.mxu0 %v665
      %2524 = vmatpush1.xpose.msra.mxu0 %v664
      %2525 = vmatprep.subr.mxu0 0.0
      %2526 = vmatpush1.xpose.msra.mxu0 0.0
      %2527 = vmatprep.subr.mxu0 0.0
      %2528 = vmatpush1.xpose.msra.mxu0 0.0
      %2529 = vmatprep.subr.mxu0 0.0
      %2530 = vmatpush1.xpose.msra.mxu0 0.0
      %2531 = vmatprep.subr.mxu0 0.0
      %2532 = vmatpush1.xpose.msra.mxu0 0.0
      %2533 = vmatprep.subr.mxu0 0.0
      %2534 = vmatpush1.xpose.msra.mxu0 0.0
      %2535 = vmatprep.subr.mxu0 0.0
      %2536 = vmatpush1.xpose.msra.mxu0 0.0
      %2537 = vmatprep.subr.mxu0 0.0
      %2538 = vmatpush1.xpose.msra.mxu0 0.0
      %2539 = vmatprep.subr.mxu0 0.0
      %2540 = vmatpush1.xpose.msra.mxu0 0.0
      %2541 = vmatprep.subr.mxu0 0.0
      %2542 = vmatpush1.xpose.msra.mxu0 0.0
      %2543 = vmatprep.subr.mxu0 0.0
      %2544 = vmatpush1.xpose.msra.mxu0 0.0
      %2545 = vmatprep.subr.mxu0 0.0
      %2546 = vmatpush1.xpose.msra.mxu0 0.0
      %2547 = vmatprep.subr.mxu0 0.0
      %2548 = vmatpush1.xpose.msra.mxu0 0.0
      %2549 = vmatprep.subr.mxu0 0.0
      %2550 = vmatpush1.xpose.msra.mxu0 0.0
      %2551 = vmatprep.subr.mxu0 0.0
      %2552 = vmatpush1.xpose.msra.mxu0 0.0
      %2553 = vmatprep.subr.mxu0 0.0
      %2554 = vmatpush1.xpose.msra.mxu0 0.0
      %2555 = vmatprep.subr.mxu0 0.0
      %2556 = vmatpush1.xpose.msra.mxu0 0.0
      %2557 = vmatprep.subr.mxu0 0.0
      %2558 = vmatpush1.xpose.msra.mxu0 0.0
      %2559 = vmatprep.subr.mxu0 0.0
      %2560 = vmatpush1.xpose.msra.mxu0 0.0
      %2561 = vmatprep.subr.mxu0 0.0
      %2562 = vmatpush1.xpose.msra.mxu0 0.0
      %2563 = vmatprep.subr.mxu0 0.0
      %2564 = vmatpush1.xpose.msra.mxu0 0.0
      %2565 = vmatprep.subr.mxu0 0.0
      %2566 = vmatpush1.xpose.msra.mxu0 0.0
      %2567 = vmatprep.subr.mxu0 0.0
      %2568 = vmatpush1.xpose.msra.mxu0 0.0
      %2569 = vmatprep.subr.mxu0 0.0
      %2570 = vmatpush1.xpose.msra.mxu0 0.0
      %2571 = vmatprep.subr.mxu0 0.0
      %2572 = vmatpush1.xpose.msra.mxu0 0.0
      %2573 = vmatprep.subr.mxu0 0.0
      %2574 = vmatpush1.xpose.msra.mxu0 0.0
      %2575 = vmatprep.subr.mxu0 0.0
      %2576 = vmatpush1.xpose.msra.mxu0 0.0
      %2577 = vmatprep.subr.mxu0 0.0
      %2578 = vmatpush1.xpose.msra.mxu0 0.0
      %2579 = vmatprep.subr.mxu0 0.0
      %2580 = vmatpush1.xpose.msra.mxu0 0.0
      %2581 = vmatprep.mubr.f32.mxu0 %v2506
      %2582 = vmatmul.mubr.f32.gmra.mrb[0].mxu0 %v2505
      %v2583 = vpop.f32.mrb[0].mxu0
      %v2584 = vadd.f32 0.0, %v2583
      %v2585 = vpop.f32.mrb[0].mxu0
      %2586 = vmatprep.mubr.f32.mxu0 %v2512
      %2587 = vmatmul.mubr.f32.gmra.mrb[0].mxu0 %v2511
      %v2588 = vpop.f32.mrb[0].mxu0
      %v2589 = vadd.f32 0.0, %v2588
      %v2590 = vpop.f32.mrb[0].mxu0
      %2591 = vdwg.mxu0
      %2592 = vmatprep.subr.mxu0 %v649
      %2593 = vmatpush1.xpose.msra.mxu0 %v648
      %2594 = vmatprep.subr.mxu0 %v655
      %2595 = vmatpush1.xpose.msra.mxu0 %v654
      %2596 = vmatprep.subr.mxu0 %v661
      %2597 = vmatpush1.xpose.msra.mxu0 %v660
      %2598 = vmatprep.subr.mxu0 %v667
      %2599 = vmatpush1.xpose.msra.mxu0 %v666
      %2600 = vmatprep.subr.mxu0 0.0
      %2601 = vmatpush1.xpose.msra.mxu0 0.0
      %2602 = vmatprep.subr.mxu0 0.0
      %2603 = vmatpush1.xpose.msra.mxu0 0.0
      %2604 = vmatprep.subr.mxu0 0.0
      %2605 = vmatpush1.xpose.msra.mxu0 0.0
      %2606 = vmatprep.subr.mxu0 0.0
      %2607 = vmatpush1.xpose.msra.mxu0 0.0
      %2608 = vmatprep.subr.mxu0 0.0
      %2609 = vmatpush1.xpose.msra.mxu0 0.0
      %2610 = vmatprep.subr.mxu0 0.0
      %2611 = vmatpush1.xpose.msra.mxu0 0.0
      %2612 = vmatprep.subr.mxu0 0.0
      %2613 = vmatpush1.xpose.msra.mxu0 0.0
      %2614 = vmatprep.subr.mxu0 0.0
      %2615 = vmatpush1.xpose.msra.mxu0 0.0
      %2616 = vmatprep.subr.mxu0 0.0
      %2617 = vmatpush1.xpose.msra.mxu0 0.0
      %2618 = vmatprep.subr.mxu0 0.0
      %2619 = vmatpush1.xpose.msra.mxu0 0.0
      %2620 = vmatprep.subr.mxu0 0.0
      %2621 = vmatpush1.xpose.msra.mxu0 0.0
      %2622 = vmatprep.subr.mxu0 0.0
      %2623 = vmatpush1.xpose.msra.mxu0 0.0
      %2624 = vmatprep.subr.mxu0 0.0
      %2625 = vmatpush1.xpose.msra.mxu0 0.0
      %2626 = vmatprep.subr.mxu0 0.0
      %2627 = vmatpush1.xpose.msra.mxu0 0.0
      %2628 = vmatprep.subr.mxu0 0.0
      %2629 = vmatpush1.xpose.msra.mxu0 0.0
      %2630 = vmatprep.subr.mxu0 0.0
      %2631 = vmatpush1.xpose.msra.mxu0 0.0
      %2632 = vmatprep.subr.mxu0 0.0
      %2633 = vmatpush1.xpose.msra.mxu0 0.0
      %2634 = vmatprep.subr.mxu0 0.0
      %2635 = vmatpush1.xpose.msra.mxu0 0.0
      %2636 = vmatprep.subr.mxu0 0.0
      %2637 = vmatpush1.xpose.msra.mxu0 0.0
      %2638 = vmatprep.subr.mxu0 0.0
      %2639 = vmatpush1.xpose.msra.mxu0 0.0
      %2640 = vmatprep.subr.mxu0 0.0
      %2641 = vmatpush1.xpose.msra.mxu0 0.0
      %2642 = vmatprep.subr.mxu0 0.0
      %2643 = vmatpush1.xpose.msra.mxu0 0.0
      %2644 = vmatprep.subr.mxu0 0.0
      %2645 = vmatpush1.xpose.msra.mxu0 0.0
      %2646 = vmatprep.subr.mxu0 0.0
      %2647 = vmatpush1.xpose.msra.mxu0 0.0
      %2648 = vmatprep.subr.mxu0 0.0
      %2649 = vmatpush1.xpose.msra.mxu0 0.0
      %2650 = vmatprep.subr.mxu0 0.0
      %2651 = vmatpush1.xpose.msra.mxu0 0.0
      %2652 = vmatprep.subr.mxu0 0.0
      %2653 = vmatpush1.xpose.msra.mxu0 0.0
      %2654 = vmatprep.subr.mxu0 0.0
      %2655 = vmatpush1.xpose.msra.mxu0 0.0
      %2656 = vmatprep.mubr.f32.mxu0 %v2508
      %2657 = vmatmul.mubr.f32.gmra.mrb[0].mxu0 %v2507
      %v2658 = vpop.f32.mrb[0].mxu0
      %v2659 = vadd.f32 %v2584, %v2658
      %v2660 = vpop.f32.mrb[0].mxu0
      %2661 = vmatprep.mubr.f32.mxu0 %v2514
      %2662 = vmatmul.mubr.f32.gmra.mrb[0].mxu0 %v2513
      %v2663 = vpop.f32.mrb[0].mxu0
      %v2664 = vadd.f32 %v2589, %v2663
      %v2665 = vpop.f32.mrb[0].mxu0
      %2666 = vdwg.mxu0
      %2667 = vmatprep.subr.mxu0 %v651
      %2668 = vmatpush1.xpose.msra.mxu0 %v650
      %2669 = vmatprep.subr.mxu0 %v657
      %2670 = vmatpush1.xpose.msra.mxu0 %v656
      %2671 = vmatprep.subr.mxu0 %v663
      %2672 = vmatpush1.xpose.msra.mxu0 %v662
      %2673 = vmatprep.subr.mxu0 %v669
      %2674 = vmatpush1.xpose.msra.mxu0 %v668
      %2675 = vmatprep.subr.mxu0 0.0
      %2676 = vmatpush1.xpose.msra.mxu0 0.0
      %2677 = vmatprep.subr.mxu0 0.0
      %2678 = vmatpush1.xpose.msra.mxu0 0.0
      %2679 = vmatprep.subr.mxu0 0.0
      %2680 = vmatpush1.xpose.msra.mxu0 0.0
      %2681 = vmatprep.subr.mxu0 0.0
      %2682 = vmatpush1.xpose.msra.mxu0 0.0
      %2683 = vmatprep.subr.mxu0 0.0
      %2684 = vmatpush1.xpose.msra.mxu0 0.0
      %2685 = vmatprep.subr.mxu0 0.0
      %2686 = vmatpush1.xpose.msra.mxu0 0.0
      %2687 = vmatprep.subr.mxu0 0.0
      %2688 = vmatpush1.xpose.msra.mxu0 0.0
      %2689 = vmatprep.subr.mxu0 0.0
      %2690 = vmatpush1.xpose.msra.mxu0 0.0
      %2691 = vmatprep.subr.mxu0 0.0
      %2692 = vmatpush1.xpose.msra.mxu0 0.0
      %2693 = vmatprep.subr.mxu0 0.0
      %2694 = vmatpush1.xpose.msra.mxu0 0.0
      %2695 = vmatprep.subr.mxu0 0.0
      %2696 = vmatpush1.xpose.msra.mxu0 0.0
      %2697 = vmatprep.subr.mxu0 0.0
      %2698 = vmatpush1.xpose.msra.mxu0 0.0
      %2699 = vmatprep.subr.mxu0 0.0
      %2700 = vmatpush1.xpose.msra.mxu0 0.0
      %2701 = vmatprep.subr.mxu0 0.0
      %2702 = vmatpush1.xpose.msra.mxu0 0.0
      %2703 = vmatprep.subr.mxu0 0.0
      %2704 = vmatpush1.xpose.msra.mxu0 0.0
      %2705 = vmatprep.subr.mxu0 0.0
      %2706 = vmatpush1.xpose.msra.mxu0 0.0
      %2707 = vmatprep.subr.mxu0 0.0
      %2708 = vmatpush1.xpose.msra.mxu0 0.0
      %2709 = vmatprep.subr.mxu0 0.0
      %2710 = vmatpush1.xpose.msra.mxu0 0.0
      %2711 = vmatprep.subr.mxu0 0.0
      %2712 = vmatpush1.xpose.msra.mxu0 0.0
      %2713 = vmatprep.subr.mxu0 0.0
      %2714 = vmatpush1.xpose.msra.mxu0 0.0
      %2715 = vmatprep.subr.mxu0 0.0
      %2716 = vmatpush1.xpose.msra.mxu0 0.0
      %2717 = vmatprep.subr.mxu0 0.0
      %2718 = vmatpush1.xpose.msra.mxu0 0.0
      %2719 = vmatprep.subr.mxu0 0.0
      %2720 = vmatpush1.xpose.msra.mxu0 0.0
      %2721 = vmatprep.subr.mxu0 0.0
      %2722 = vmatpush1.xpose.msra.mxu0 0.0
      %2723 = vmatprep.subr.mxu0 0.0
      %2724 = vmatpush1.xpose.msra.mxu0 0.0
      %2725 = vmatprep.subr.mxu0 0.0
      %2726 = vmatpush1.xpose.msra.mxu0 0.0
      %2727 = vmatprep.subr.mxu0 0.0
      %2728 = vmatpush1.xpose.msra.mxu0 0.0
      %2729 = vmatprep.subr.mxu0 0.0
      %2730 = vmatpush1.xpose.msra.mxu0 0.0
      %2731 = vmatprep.mubr.f32.mxu0 %v2510
      %2732 = vmatmul.mubr.f32.gmra.mrb[0].mxu0 %v2509
      %v2733 = vpop.f32.mrb[0].mxu0
      %v2734 = vadd.f32 %v2659, %v2733
      %v2735 = vpop.f32.mrb[0].mxu0
      %2736 = vmatprep.mubr.f32.mxu0 %v2516
      %2737 = vmatmul.mubr.f32.gmra.mrb[0].mxu0 %v2515
      %v2738 = vpop.f32.mrb[0].mxu0
      %v2739 = vadd.f32 %v2664, %v2738
      %v2740 = vpop.f32.mrb[0].mxu0
      %2741 = vdwg.mxu0
      %2742 = vmatprep.subr.mxu0 %v2506
      %2743 = vmatpush1.xpose.msra.mxu0 %v2505
      %2744 = vmatprep.subr.mxu0 %v2512
      %2745 = vmatpush1.xpose.msra.mxu0 %v2511
      %2746 = vmatprep.subr.mxu0 0.0
      %2747 = vmatpush1.xpose.msra.mxu0 0.0
      %2748 = vmatprep.subr.mxu0 0.0
      %2749 = vmatpush1.xpose.msra.mxu0 0.0
      %2750 = vmatprep.subr.mxu0 0.0
      %2751 = vmatpush1.xpose.msra.mxu0 0.0
      %2752 = vmatprep.subr.mxu0 0.0
      %2753 = vmatpush1.xpose.msra.mxu0 0.0
      %2754 = vmatprep.subr.mxu0 0.0
      %2755 = vmatpush1.xpose.msra.mxu0 0.0
      %2756 = vmatprep.subr.mxu0 0.0
      %2757 = vmatpush1.xpose.msra.mxu0 0.0
      %2758 = vmatprep.subr.mxu0 0.0
      %2759 = vmatpush1.xpose.msra.mxu0 0.0
      %2760 = vmatprep.subr.mxu0 0.0
      %2761 = vmatpush1.xpose.msra.mxu0 0.0
      %2762 = vmatprep.subr.mxu0 0.0
      %2763 = vmatpush1.xpose.msra.mxu0 0.0
      %2764 = vmatprep.subr.mxu0 0.0
      %2765 = vmatpush1.xpose.msra.mxu0 0.0
      %2766 = vmatprep.subr.mxu0 0.0
      %2767 = vmatpush1.xpose.msra.mxu0 0.0
      %2768 = vmatprep.subr.mxu0 0.0
      %2769 = vmatpush1.xpose.msra.mxu0 0.0
      %2770 = vmatprep.subr.mxu0 0.0
      %2771 = vmatpush1.xpose.msra.mxu0 0.0
      %2772 = vmatprep.subr.mxu0 0.0
      %2773 = vmatpush1.xpose.msra.mxu0 0.0
      %2774 = vmatprep.subr.mxu0 0.0
      %2775 = vmatpush1.xpose.msra.mxu0 0.0
      %2776 = vmatprep.subr.mxu0 0.0
      %2777 = vmatpush1.xpose.msra.mxu0 0.0
      %2778 = vmatprep.subr.mxu0 0.0
      %2779 = vmatpush1.xpose.msra.mxu0 0.0
      %2780 = vmatprep.subr.mxu0 0.0
      %2781 = vmatpush1.xpose.msra.mxu0 0.0
      %2782 = vmatprep.subr.mxu0 0.0
      %2783 = vmatpush1.xpose.msra.mxu0 0.0
      %2784 = vmatprep.subr.mxu0 0.0
      %2785 = vmatpush1.xpose.msra.mxu0 0.0
      %2786 = vmatprep.subr.mxu0 0.0
      %2787 = vmatpush1.xpose.msra.mxu0 0.0
      %2788 = vmatprep.subr.mxu0 0.0
      %2789 = vmatpush1.xpose.msra.mxu0 0.0
      %2790 = vmatprep.subr.mxu0 0.0
      %2791 = vmatpush1.xpose.msra.mxu0 0.0
      %2792 = vmatprep.subr.mxu0 0.0
      %2793 = vmatpush1.xpose.msra.mxu0 0.0
      %2794 = vmatprep.subr.mxu0 0.0
      %2795 = vmatpush1.xpose.msra.mxu0 0.0
      %2796 = vmatprep.subr.mxu0 0.0
      %2797 = vmatpush1.xpose.msra.mxu0 0.0
      %2798 = vmatprep.subr.mxu0 0.0
      %2799 = vmatpush1.xpose.msra.mxu0 0.0
      %2800 = vmatprep.subr.mxu0 0.0
      %2801 = vmatpush1.xpose.msra.mxu0 0.0
      %2802 = vmatprep.subr.mxu0 0.0
      %2803 = vmatpush1.xpose.msra.mxu0 0.0
      %2804 = vmatprep.subr.mxu0 0.0
      %2805 = vmatpush1.xpose.msra.mxu0 0.0
      %2806 = vmatprep.mubr.f32.mxu0 %v2506
      %2807 = vmatmul.mubr.f32.gmra.mrb[0].mxu0 %v2505
      %v2808 = vpop.f32.mrb[0].mxu0
      %v2809 = vadd.f32 0.0, %v2808
      %v2810 = vpop.f32.mrb[0].mxu0
      %2811 = vmatprep.mubr.f32.mxu0 %v2512
      %2812 = vmatmul.mubr.f32.gmra.mrb[0].mxu0 %v2511
      %v2813 = vpop.f32.mrb[0].mxu0
      %v2814 = vadd.f32 0.0, %v2813
      %v2815 = vpop.f32.mrb[0].mxu0
      %2816 = vdwg.mxu0
      %2817 = vmatprep.subr.mxu0 %v2508
      %2818 = vmatpush1.xpose.msra.mxu0 %v2507
      %2819 = vmatprep.subr.mxu0 %v2514
      %2820 = vmatpush1.xpose.msra.mxu0 %v2513
      %2821 = vmatprep.subr.mxu0 0.0
      %2822 = vmatpush1.xpose.msra.mxu0 0.0
      %2823 = vmatprep.subr.mxu0 0.0
      %2824 = vmatpush1.xpose.msra.mxu0 0.0
      %2825 = vmatprep.subr.mxu0 0.0
      %2826 = vmatpush1.xpose.msra.mxu0 0.0
      %2827 = vmatprep.subr.mxu0 0.0
      %2828 = vmatpush1.xpose.msra.mxu0 0.0
      %2829 = vmatprep.subr.mxu0 0.0
      %2830 = vmatpush1.xpose.msra.mxu0 0.0
      %2831 = vmatprep.subr.mxu0 0.0
      %2832 = vmatpush1.xpose.msra.mxu0 0.0
      %2833 = vmatprep.subr.mxu0 0.0
      %2834 = vmatpush1.xpose.msra.mxu0 0.0
      %2835 = vmatprep.subr.mxu0 0.0
      %2836 = vmatpush1.xpose.msra.mxu0 0.0
      %2837 = vmatprep.subr.mxu0 0.0
      %2838 = vmatpush1.xpose.msra.mxu0 0.0
      %2839 = vmatprep.subr.mxu0 0.0
      %2840 = vmatpush1.xpose.msra.mxu0 0.0
      %2841 = vmatprep.subr.mxu0 0.0
      %2842 = vmatpush1.xpose.msra.mxu0 0.0
      %2843 = vmatprep.subr.mxu0 0.0
      %2844 = vmatpush1.xpose.msra.mxu0 0.0
      %2845 = vmatprep.subr.mxu0 0.0
      %2846 = vmatpush1.xpose.msra.mxu0 0.0
      %2847 = vmatprep.subr.mxu0 0.0
      %2848 = vmatpush1.xpose.msra.mxu0 0.0
      %2849 = vmatprep.subr.mxu0 0.0
      %2850 = vmatpush1.xpose.msra.mxu0 0.0
      %2851 = vmatprep.subr.mxu0 0.0
      %2852 = vmatpush1.xpose.msra.mxu0 0.0
      %2853 = vmatprep.subr.mxu0 0.0
      %2854 = vmatpush1.xpose.msra.mxu0 0.0
      %2855 = vmatprep.subr.mxu0 0.0
      %2856 = vmatpush1.xpose.msra.mxu0 0.0
      %2857 = vmatprep.subr.mxu0 0.0
      %2858 = vmatpush1.xpose.msra.mxu0 0.0
      %2859 = vmatprep.subr.mxu0 0.0
      %2860 = vmatpush1.xpose.msra.mxu0 0.0
      %2861 = vmatprep.subr.mxu0 0.0
      %2862 = vmatpush1.xpose.msra.mxu0 0.0
      %2863 = vmatprep.subr.mxu0 0.0
      %2864 = vmatpush1.xpose.msra.mxu0 0.0
      %2865 = vmatprep.subr.mxu0 0.0
      %2866 = vmatpush1.xpose.msra.mxu0 0.0
      %2867 = vmatprep.subr.mxu0 0.0
      %2868 = vmatpush1.xpose.msra.mxu0 0.0
      %2869 = vmatprep.subr.mxu0 0.0
      %2870 = vmatpush1.xpose.msra.mxu0 0.0
      %2871 = vmatprep.subr.mxu0 0.0
      %2872 = vmatpush1.xpose.msra.mxu0 0.0
      %2873 = vmatprep.subr.mxu0 0.0
      %2874 = vmatpush1.xpose.msra.mxu0 0.0
      %2875 = vmatprep.subr.mxu0 0.0
      %2876 = vmatpush1.xpose.msra.mxu0 0.0
      %2877 = vmatprep.subr.mxu0 0.0
      %2878 = vmatpush1.xpose.msra.mxu0 0.0
      %2879 = vmatprep.subr.mxu0 0.0
      %2880 = vmatpush1.xpose.msra.mxu0 0.0
      %2881 = vmatprep.mubr.f32.mxu0 %v2508
      %2882 = vmatmul.mubr.f32.gmra.mrb[0].mxu0 %v2507
      %v2883 = vpop.f32.mrb[0].mxu0
      %v2884 = vadd.f32 %v2809, %v2883
      %v2885 = vpop.f32.mrb[0].mxu0
      %2886 = vmatprep.mubr.f32.mxu0 %v2514
      %2887 = vmatmul.mubr.f32.gmra.mrb[0].mxu0 %v2513
      %v2888 = vpop.f32.mrb[0].mxu0
      %v2889 = vadd.f32 %v2814, %v2888
      %v2890 = vpop.f32.mrb[0].mxu0
      %2891 = vdwg.mxu0
      %2892 = vmatprep.subr.mxu0 %v2510
      %2893 = vmatpush1.xpose.msra.mxu0 %v2509
      %2894 = vmatprep.subr.mxu0 %v2516
      %2895 = vmatpush1.xpose.msra.mxu0 %v2515
      %2896 = vmatprep.subr.mxu0 0.0
      %2897 = vmatpush1.xpose.msra.mxu0 0.0
      %2898 = vmatprep.subr.mxu0 0.0
      %2899 = vmatpush1.xpose.msra.mxu0 0.0
      %2900 = vmatprep.subr.mxu0 0.0
      %2901 = vmatpush1.xpose.msra.mxu0 0.0
      %2902 = vmatprep.subr.mxu0 0.0
      %2903 = vmatpush1.xpose.msra.mxu0 0.0
      %2904 = vmatprep.subr.mxu0 0.0
      %2905 = vmatpush1.xpose.msra.mxu0 0.0
      %2906 = vmatprep.subr.mxu0 0.0
      %2907 = vmatpush1.xpose.msra.mxu0 0.0
      %2908 = vmatprep.subr.mxu0 0.0
      %2909 = vmatpush1.xpose.msra.mxu0 0.0
      %2910 = vmatprep.subr.mxu0 0.0
      %2911 = vmatpush1.xpose.msra.mxu0 0.0
      %2912 = vmatprep.subr.mxu0 0.0
      %2913 = vmatpush1.xpose.msra.mxu0 0.0
      %2914 = vmatprep.subr.mxu0 0.0
      %2915 = vmatpush1.xpose.msra.mxu0 0.0
      %2916 = vmatprep.subr.mxu0 0.0
      %2917 = vmatpush1.xpose.msra.mxu0 0.0
      %2918 = vmatprep.subr.mxu0 0.0
      %2919 = vmatpush1.xpose.msra.mxu0 0.0
      %2920 = vmatprep.subr.mxu0 0.0
      %2921 = vmatpush1.xpose.msra.mxu0 0.0
      %2922 = vmatprep.subr.mxu0 0.0
      %2923 = vmatpush1.xpose.msra.mxu0 0.0
      %2924 = vmatprep.subr.mxu0 0.0
      %2925 = vmatpush1.xpose.msra.mxu0 0.0
      %2926 = vmatprep.subr.mxu0 0.0
      %2927 = vmatpush1.xpose.msra.mxu0 0.0
      %2928 = vmatprep.subr.mxu0 0.0
      %2929 = vmatpush1.xpose.msra.mxu0 0.0
      %2930 = vmatprep.subr.mxu0 0.0
      %2931 = vmatpush1.xpose.msra.mxu0 0.0
      %2932 = vmatprep.subr.mxu0 0.0
      %2933 = vmatpush1.xpose.msra.mxu0 0.0
      %2934 = vmatprep.subr.mxu0 0.0
      %2935 = vmatpush1.xpose.msra.mxu0 0.0
      %2936 = vmatprep.subr.mxu0 0.0
      %2937 = vmatpush1.xpose.msra.mxu0 0.0
      %2938 = vmatprep.subr.mxu0 0.0
      %2939 = vmatpush1.xpose.msra.mxu0 0.0
      %2940 = vmatprep.subr.mxu0 0.0
      %2941 = vmatpush1.xpose.msra.mxu0 0.0
      %2942 = vmatprep.subr.mxu0 0.0
      %2943 = vmatpush1.xpose.msra.mxu0 0.0
      %2944 = vmatprep.subr.mxu0 0.0
      %2945 = vmatpush1.xpose.msra.mxu0 0.0
      %2946 = vmatprep.subr.mxu0 0.0
      %2947 = vmatpush1.xpose.msra.mxu0 0.0
      %2948 = vmatprep.subr.mxu0 0.0
      %2949 = vmatpush1.xpose.msra.mxu0 0.0
      %2950 = vmatprep.subr.mxu0 0.0
      %2951 = vmatpush1.xpose.msra.mxu0 0.0
      %2952 = vmatprep.subr.mxu0 0.0
      %2953 = vmatpush1.xpose.msra.mxu0 0.0
      %2954 = vmatprep.subr.mxu0 0.0
      %2955 = vmatpush1.xpose.msra.mxu0 0.0
      %2956 = vmatprep.mubr.f32.mxu0 %v2510
      %2957 = vmatmul.mubr.f32.gmra.mrb[0].mxu0 %v2509
      %v2958 = vpop.f32.mrb[0].mxu0
      %v2959 = vadd.f32 %v2884, %v2958
      %v2960 = vpop.f32.mrb[0].mxu0
      %2961 = vmatprep.mubr.f32.mxu0 %v2516
      %2962 = vmatmul.mubr.f32.gmra.mrb[0].mxu0 %v2515
      %v2963 = vpop.f32.mrb[0].mxu0
      %v2964 = vadd.f32 %v2889, %v2963
      %v2965 = vpop.f32.mrb[0].mxu0
      %2966 = vdwg.mxu0
      %v2967 = vmul.f32 %v1930, %v2734
      %v2968 = vmul.f32 %v1931, %v2739
      %v2970 = vsel %vm1133, %v2959, 0
      %v2973 = vsel %vm1133, %v2964, 0
      %2975 = vmatprep.subr.mxu0 0.0
      %2976 = vmatpush1.msra.mxu0 %v1930
      %2977 = vmatprep.subr.mxu0 0.0
      %2978 = vmatpush1.msra.mxu0 %v1931
      %2979 = vmatprep.subr.mxu0 0.0
      %2980 = vmatpush1.msra.mxu0 0.0
      %2981 = vmatprep.subr.mxu0 0.0
      %2982 = vmatpush1.msra.mxu0 0.0
      %2983 = vmatprep.subr.mxu0 0.0
      %2984 = vmatpush1.msra.mxu0 0.0
      %2985 = vmatprep.subr.mxu0 0.0
      %2986 = vmatpush1.msra.mxu0 0.0
      %2987 = vmatprep.subr.mxu0 0.0
      %2988 = vmatpush1.msra.mxu0 0.0
      %2989 = vmatprep.subr.mxu0 0.0
      %2990 = vmatpush1.msra.mxu0 0.0
      %2991 = vmatprep.subr.mxu0 0.0
      %2992 = vmatpush1.msra.mxu0 0.0
      %2993 = vmatprep.subr.mxu0 0.0
      %2994 = vmatpush1.msra.mxu0 0.0
      %2995 = vmatprep.subr.mxu0 0.0
      %2996 = vmatpush1.msra.mxu0 0.0
      %2997 = vmatprep.subr.mxu0 0.0
      %2998 = vmatpush1.msra.mxu0 0.0
      %2999 = vmatprep.subr.mxu0 0.0
      %3000 = vmatpush1.msra.mxu0 0.0
      %3001 = vmatprep.subr.mxu0 0.0
      %3002 = vmatpush1.msra.mxu0 0.0
      %3003 = vmatprep.subr.mxu0 0.0
      %3004 = vmatpush1.msra.mxu0 0.0
      %3005 = vmatprep.subr.mxu0 0.0
      %3006 = vmatpush1.msra.mxu0 0.0
      %3007 = vmatprep.subr.mxu0 0.0
      %3008 = vmatpush1.msra.mxu0 0.0
      %3009 = vmatprep.subr.mxu0 0.0
      %3010 = vmatpush1.msra.mxu0 0.0
      %3011 = vmatprep.subr.mxu0 0.0
      %3012 = vmatpush1.msra.mxu0 0.0
      %3013 = vmatprep.subr.mxu0 0.0
      %3014 = vmatpush1.msra.mxu0 0.0
      %3015 = vmatprep.subr.mxu0 0.0
      %3016 = vmatpush1.msra.mxu0 0.0
      %3017 = vmatprep.subr.mxu0 0.0
      %3018 = vmatpush1.msra.mxu0 0.0
      %3019 = vmatprep.subr.mxu0 0.0
      %3020 = vmatpush1.msra.mxu0 0.0
      %3021 = vmatprep.subr.mxu0 0.0
      %3022 = vmatpush1.msra.mxu0 0.0
      %3023 = vmatprep.subr.mxu0 0.0
      %3024 = vmatpush1.msra.mxu0 0.0
      %3025 = vmatprep.subr.mxu0 0.0
      %3026 = vmatpush1.msra.mxu0 0.0
      %3027 = vmatprep.subr.mxu0 0.0
      %3028 = vmatpush1.msra.mxu0 0.0
      %3029 = vmatprep.subr.mxu0 0.0
      %3030 = vmatpush1.msra.mxu0 0.0
      %3031 = vmatprep.subr.mxu0 0.0
      %3032 = vmatpush1.msra.mxu0 0.0
      %3033 = vmatprep.subr.mxu0 0.0
      %3034 = vmatpush1.msra.mxu0 0.0
      %3035 = vmatprep.subr.mxu0 0.0
      %3036 = vmatpush1.msra.mxu0 0.0
      %3037 = vmatprep.subr.mxu0 0.0
      %3038 = vmatpush1.msra.mxu0 0.0
      %3039 = vmatprep.mubr.f32.mxu0 0.0
      %3040 = vmatmul.mubr.f32.gmra.mrb[0].mxu0 %v2970
      %v3041 = vpop.f32.mrb[0].mxu0
      %v3042 = vadd.f32 1e-06, %v3041
      %v3043 = vpop.f32.mrb[0].mxu0
      %3044 = vmatprep.mubr.f32.mxu0 0.0
      %3045 = vmatmul.mubr.f32.gmra.mrb[0].mxu0 %v2973
      %v3046 = vpop.f32.mrb[0].mxu0
      %v3047 = vadd.f32 1e-06, %v3046
      %v3048 = vpop.f32.mrb[0].mxu0
      %3049 = vdwg.mxu0
      %v3050 = vrcp.pop %v3042
      %v3051 = vrcp.pop %v3047
      %v3052 = vmul.f32 %v2967, %v3050
      %v3053 = vmul.f32 %v2968, %v3051
      %v3055 = vsel %vm670, %v3052, 0
      %v3058 = vsel %vm670, %v3053, 0
      %3060 = vmatprep.subr.mxu0 %v647
      %3061 = vmatpush1.msra.mxu0 %v646
      %3062 = vmatprep.subr.mxu0 %v653
      %3063 = vmatpush1.msra.mxu0 %v652
      %3064 = vmatprep.subr.mxu0 %v659
      %3065 = vmatpush1.msra.mxu0 %v658
      %3066 = vmatprep.subr.mxu0 %v665
      %3067 = vmatpush1.msra.mxu0 %v664
      %3068 = vmatprep.subr.mxu0 0.0
      %3069 = vmatpush1.msra.mxu0 0.0
      %3070 = vmatprep.subr.mxu0 0.0
      %3071 = vmatpush1.msra.mxu0 0.0
      %3072 = vmatprep.subr.mxu0 0.0
      %3073 = vmatpush1.msra.mxu0 0.0
      %3074 = vmatprep.subr.mxu0 0.0
      %3075 = vmatpush1.msra.mxu0 0.0
      %3076 = vmatprep.subr.mxu0 0.0
      %3077 = vmatpush1.msra.mxu0 0.0
      %3078 = vmatprep.subr.mxu0 0.0
      %3079 = vmatpush1.msra.mxu0 0.0
      %3080 = vmatprep.subr.mxu0 0.0
      %3081 = vmatpush1.msra.mxu0 0.0
      %3082 = vmatprep.subr.mxu0 0.0
      %3083 = vmatpush1.msra.mxu0 0.0
      %3084 = vmatprep.subr.mxu0 0.0
      %3085 = vmatpush1.msra.mxu0 0.0
      %3086 = vmatprep.subr.mxu0 0.0
      %3087 = vmatpush1.msra.mxu0 0.0
      %3088 = vmatprep.subr.mxu0 0.0
      %3089 = vmatpush1.msra.mxu0 0.0
      %3090 = vmatprep.subr.mxu0 0.0
      %3091 = vmatpush1.msra.mxu0 0.0
      %3092 = vmatprep.subr.mxu0 0.0
      %3093 = vmatpush1.msra.mxu0 0.0
      %3094 = vmatprep.subr.mxu0 0.0
      %3095 = vmatpush1.msra.mxu0 0.0
      %3096 = vmatprep.subr.mxu0 0.0
      %3097 = vmatpush1.msra.mxu0 0.0
      %3098 = vmatprep.subr.mxu0 0.0
      %3099 = vmatpush1.msra.mxu0 0.0
      %3100 = vmatprep.subr.mxu0 0.0
      %3101 = vmatpush1.msra.mxu0 0.0
      %3102 = vmatprep.subr.mxu0 0.0
      %3103 = vmatpush1.msra.mxu0 0.0
      %3104 = vmatprep.subr.mxu0 0.0
      %3105 = vmatpush1.msra.mxu0 0.0
      %3106 = vmatprep.subr.mxu0 0.0
      %3107 = vmatpush1.msra.mxu0 0.0
      %3108 = vmatprep.subr.mxu0 0.0
      %3109 = vmatpush1.msra.mxu0 0.0
      %3110 = vmatprep.subr.mxu0 0.0
      %3111 = vmatpush1.msra.mxu0 0.0
      %3112 = vmatprep.subr.mxu0 0.0
      %3113 = vmatpush1.msra.mxu0 0.0
      %3114 = vmatprep.subr.mxu0 0.0
      %3115 = vmatpush1.msra.mxu0 0.0
      %3116 = vmatprep.subr.mxu0 0.0
      %3117 = vmatpush1.msra.mxu0 0.0
      %3118 = vmatprep.subr.mxu0 0.0
      %3119 = vmatpush1.msra.mxu0 0.0
      %3120 = vmatprep.subr.mxu0 0.0
      %3121 = vmatpush1.msra.mxu0 0.0
      %3122 = vmatprep.subr.mxu0 0.0
      %3123 = vmatpush1.msra.mxu0 0.0
      %3124 = vmatprep.mubr.f32.mxu0 0.0
      %3125 = vmatmul.mubr.f32.gmra.mrb[0].mxu0 %v3055
      %v3126 = vpop.f32.mrb[0].mxu0
      %v3127 = vadd.f32 0.0, %v3126
      %v3128 = vpop.f32.mrb[0].mxu0
      %v3129 = vadd.f32 0.0, %v3128
      %3130 = vmatprep.mubr.f32.mxu0 0.0
      %3131 = vmatmul.mubr.f32.gmra.mrb[0].mxu0 %v3058
      %v3132 = vpop.f32.mrb[0].mxu0
      %v3133 = vadd.f32 0.0, %v3132
      %v3134 = vpop.f32.mrb[0].mxu0
      %v3135 = vadd.f32 0.0, %v3134
      %3136 = vdwg.mxu0
      %3137 = vmatprep.subr.mxu0 %v649
      %3138 = vmatpush1.msra.mxu0 %v648
      %3139 = vmatprep.subr.mxu0 %v655
      %3140 = vmatpush1.msra.mxu0 %v654
      %3141 = vmatprep.subr.mxu0 %v661
      %3142 = vmatpush1.msra.mxu0 %v660
      %3143 = vmatprep.subr.mxu0 %v667
      %3144 = vmatpush1.msra.mxu0 %v666
      %3145 = vmatprep.subr.mxu0 0.0
      %3146 = vmatpush1.msra.mxu0 0.0
      %3147 = vmatprep.subr.mxu0 0.0
      %3148 = vmatpush1.msra.mxu0 0.0
      %3149 = vmatprep.subr.mxu0 0.0
      %3150 = vmatpush1.msra.mxu0 0.0
      %3151 = vmatprep.subr.mxu0 0.0
      %3152 = vmatpush1.msra.mxu0 0.0
      %3153 = vmatprep.subr.mxu0 0.0
      %3154 = vmatpush1.msra.mxu0 0.0
      %3155 = vmatprep.subr.mxu0 0.0
      %3156 = vmatpush1.msra.mxu0 0.0
      %3157 = vmatprep.subr.mxu0 0.0
      %3158 = vmatpush1.msra.mxu0 0.0
      %3159 = vmatprep.subr.mxu0 0.0
      %3160 = vmatpush1.msra.mxu0 0.0
      %3161 = vmatprep.subr.mxu0 0.0
      %3162 = vmatpush1.msra.mxu0 0.0
      %3163 = vmatprep.subr.mxu0 0.0
      %3164 = vmatpush1.msra.mxu0 0.0
      %3165 = vmatprep.subr.mxu0 0.0
      %3166 = vmatpush1.msra.mxu0 0.0
      %3167 = vmatprep.subr.mxu0 0.0
      %3168 = vmatpush1.msra.mxu0 0.0
      %3169 = vmatprep.subr.mxu0 0.0
      %3170 = vmatpush1.msra.mxu0 0.0
      %3171 = vmatprep.subr.mxu0 0.0
      %3172 = vmatpush1.msra.mxu0 0.0
      %3173 = vmatprep.subr.mxu0 0.0
      %3174 = vmatpush1.msra.mxu0 0.0
      %3175 = vmatprep.subr.mxu0 0.0
      %3176 = vmatpush1.msra.mxu0 0.0
      %3177 = vmatprep.subr.mxu0 0.0
      %3178 = vmatpush1.msra.mxu0 0.0
      %3179 = vmatprep.subr.mxu0 0.0
      %3180 = vmatpush1.msra.mxu0 0.0
      %3181 = vmatprep.subr.mxu0 0.0
      %3182 = vmatpush1.msra.mxu0 0.0
      %3183 = vmatprep.subr.mxu0 0.0
      %3184 = vmatpush1.msra.mxu0 0.0
      %3185 = vmatprep.subr.mxu0 0.0
      %3186 = vmatpush1.msra.mxu0 0.0
      %3187 = vmatprep.subr.mxu0 0.0
      %3188 = vmatpush1.msra.mxu0 0.0
      %3189 = vmatprep.subr.mxu0 0.0
      %3190 = vmatpush1.msra.mxu0 0.0
      %3191 = vmatprep.subr.mxu0 0.0
      %3192 = vmatpush1.msra.mxu0 0.0
      %3193 = vmatprep.subr.mxu0 0.0
      %3194 = vmatpush1.msra.mxu0 0.0
      %3195 = vmatprep.subr.mxu0 0.0
      %3196 = vmatpush1.msra.mxu0 0.0
      %3197 = vmatprep.subr.mxu0 0.0
      %3198 = vmatpush1.msra.mxu0 0.0
      %3199 = vmatprep.subr.mxu0 0.0
      %3200 = vmatpush1.msra.mxu0 0.0
      %3201 = vmatprep.mubr.f32.mxu0 0.0
      %3202 = vmatmul.mubr.f32.gmra.mrb[0].mxu0 %v3055
      %v3203 = vpop.f32.mrb[0].mxu0
      %v3204 = vadd.f32 0.0, %v3203
      %v3205 = vpop.f32.mrb[0].mxu0
      %v3206 = vadd.f32 0.0, %v3205
      %3207 = vmatprep.mubr.f32.mxu0 0.0
      %3208 = vmatmul.mubr.f32.gmra.mrb[0].mxu0 %v3058
      %v3209 = vpop.f32.mrb[0].mxu0
      %v3210 = vadd.f32 0.0, %v3209
      %v3211 = vpop.f32.mrb[0].mxu0
      %v3212 = vadd.f32 0.0, %v3211
      %3213 = vdwg.mxu0
      %3214 = vmatprep.subr.mxu0 %v651
      %3215 = vmatpush1.msra.mxu0 %v650
      %3216 = vmatprep.subr.mxu0 %v657
      %3217 = vmatpush1.msra.mxu0 %v656
      %3218 = vmatprep.subr.mxu0 %v663
      %3219 = vmatpush1.msra.mxu0 %v662
      %3220 = vmatprep.subr.mxu0 %v669
      %3221 = vmatpush1.msra.mxu0 %v668
      %3222 = vmatprep.subr.mxu0 0.0
      %3223 = vmatpush1.msra.mxu0 0.0
      %3224 = vmatprep.subr.mxu0 0.0
      %3225 = vmatpush1.msra.mxu0 0.0
      %3226 = vmatprep.subr.mxu0 0.0
      %3227 = vmatpush1.msra.mxu0 0.0
      %3228 = vmatprep.subr.mxu0 0.0
      %3229 = vmatpush1.msra.mxu0 0.0
      %3230 = vmatprep.subr.mxu0 0.0
      %3231 = vmatpush1.msra.mxu0 0.0
      %3232 = vmatprep.subr.mxu0 0.0
      %3233 = vmatpush1.msra.mxu0 0.0
      %3234 = vmatprep.subr.mxu0 0.0
      %3235 = vmatpush1.msra.mxu0 0.0
      %3236 = vmatprep.subr.mxu0 0.0
      %3237 = vmatpush1.msra.mxu0 0.0
      %3238 = vmatprep.subr.mxu0 0.0
      %3239 = vmatpush1.msra.mxu0 0.0
      %3240 = vmatprep.subr.mxu0 0.0
      %3241 = vmatpush1.msra.mxu0 0.0
      %3242 = vmatprep.subr.mxu0 0.0
      %3243 = vmatpush1.msra.mxu0 0.0
      %3244 = vmatprep.subr.mxu0 0.0
      %3245 = vmatpush1.msra.mxu0 0.0
      %3246 = vmatprep.subr.mxu0 0.0
      %3247 = vmatpush1.msra.mxu0 0.0
      %3248 = vmatprep.subr.mxu0 0.0
      %3249 = vmatpush1.msra.mxu0 0.0
      %3250 = vmatprep.subr.mxu0 0.0
      %3251 = vmatpush1.msra.mxu0 0.0
      %3252 = vmatprep.subr.mxu0 0.0
      %3253 = vmatpush1.msra.mxu0 0.0
      %3254 = vmatprep.subr.mxu0 0.0
      %3255 = vmatpush1.msra.mxu0 0.0
      %3256 = vmatprep.subr.mxu0 0.0
      %3257 = vmatpush1.msra.mxu0 0.0
      %3258 = vmatprep.subr.mxu0 0.0
      %3259 = vmatpush1.msra.mxu0 0.0
      %3260 = vmatprep.subr.mxu0 0.0
      %3261 = vmatpush1.msra.mxu0 0.0
      %3262 = vmatprep.subr.mxu0 0.0
      %3263 = vmatpush1.msra.mxu0 0.0
      %3264 = vmatprep.subr.mxu0 0.0
      %3265 = vmatpush1.msra.mxu0 0.0
      %3266 = vmatprep.subr.mxu0 0.0
      %3267 = vmatpush1.msra.mxu0 0.0
      %3268 = vmatprep.subr.mxu0 0.0
      %3269 = vmatpush1.msra.mxu0 0.0
      %3270 = vmatprep.subr.mxu0 0.0
      %3271 = vmatpush1.msra.mxu0 0.0
      %3272 = vmatprep.subr.mxu0 0.0
      %3273 = vmatpush1.msra.mxu0 0.0
      %3274 = vmatprep.subr.mxu0 0.0
      %3275 = vmatpush1.msra.mxu0 0.0
      %3276 = vmatprep.subr.mxu0 0.0
      %3277 = vmatpush1.msra.mxu0 0.0
      %3278 = vmatprep.mubr.f32.mxu0 0.0
      %3279 = vmatmul.mubr.f32.gmra.mrb[0].mxu0 %v3055
      %v3280 = vpop.f32.mrb[0].mxu0
      %v3281 = vadd.f32 0.0, %v3280
      %v3282 = vpop.f32.mrb[0].mxu0
      %v3283 = vadd.f32 0.0, %v3282
      %3284 = vmatprep.mubr.f32.mxu0 0.0
      %3285 = vmatmul.mubr.f32.gmra.mrb[0].mxu0 %v3058
      %v3286 = vpop.f32.mrb[0].mxu0
      %v3287 = vadd.f32 0.0, %v3286
      %v3288 = vpop.f32.mrb[0].mxu0
      %v3289 = vadd.f32 0.0, %v3288
      %3290 = vdwg.mxu0
      %3291 = vmatprep.subr.mxu0 0.0
      %3292 = vmatpush1.xpose.msra.mxu0 %v3055
      %3293 = vmatprep.subr.mxu0 0.0
      %3294 = vmatpush1.xpose.msra.mxu0 %v3058
      %3295 = vmatprep.subr.mxu0 0.0
      %3296 = vmatpush1.xpose.msra.mxu0 0.0
      %3297 = vmatprep.subr.mxu0 0.0
      %3298 = vmatpush1.xpose.msra.mxu0 0.0
      %3299 = vmatprep.subr.mxu0 0.0
      %3300 = vmatpush1.xpose.msra.mxu0 0.0
      %3301 = vmatprep.subr.mxu0 0.0
      %3302 = vmatpush1.xpose.msra.mxu0 0.0
      %3303 = vmatprep.subr.mxu0 0.0
      %3304 = vmatpush1.xpose.msra.mxu0 0.0
      %3305 = vmatprep.subr.mxu0 0.0
      %3306 = vmatpush1.xpose.msra.mxu0 0.0
      %3307 = vmatprep.subr.mxu0 0.0
      %3308 = vmatpush1.xpose.msra.mxu0 0.0
      %3309 = vmatprep.subr.mxu0 0.0
      %3310 = vmatpush1.xpose.msra.mxu0 0.0
      %3311 = vmatprep.subr.mxu0 0.0
      %3312 = vmatpush1.xpose.msra.mxu0 0.0
      %3313 = vmatprep.subr.mxu0 0.0
      %3314 = vmatpush1.xpose.msra.mxu0 0.0
      %3315 = vmatprep.subr.mxu0 0.0
      %3316 = vmatpush1.xpose.msra.mxu0 0.0
      %3317 = vmatprep.subr.mxu0 0.0
      %3318 = vmatpush1.xpose.msra.mxu0 0.0
      %3319 = vmatprep.subr.mxu0 0.0
      %3320 = vmatpush1.xpose.msra.mxu0 0.0
      %3321 = vmatprep.subr.mxu0 0.0
      %3322 = vmatpush1.xpose.msra.mxu0 0.0
      %3323 = vmatprep.subr.mxu0 0.0
      %3324 = vmatpush1.xpose.msra.mxu0 0.0
      %3325 = vmatprep.subr.mxu0 0.0
      %3326 = vmatpush1.xpose.msra.mxu0 0.0
      %3327 = vmatprep.subr.mxu0 0.0
      %3328 = vmatpush1.xpose.msra.mxu0 0.0
      %3329 = vmatprep.subr.mxu0 0.0
      %3330 = vmatpush1.xpose.msra.mxu0 0.0
      %3331 = vmatprep.subr.mxu0 0.0
      %3332 = vmatpush1.xpose.msra.mxu0 0.0
      %3333 = vmatprep.subr.mxu0 0.0
      %3334 = vmatpush1.xpose.msra.mxu0 0.0
      %3335 = vmatprep.subr.mxu0 0.0
      %3336 = vmatpush1.xpose.msra.mxu0 0.0
      %3337 = vmatprep.subr.mxu0 0.0
      %3338 = vmatpush1.xpose.msra.mxu0 0.0
      %3339 = vmatprep.subr.mxu0 0.0
      %3340 = vmatpush1.xpose.msra.mxu0 0.0
      %3341 = vmatprep.subr.mxu0 0.0
      %3342 = vmatpush1.xpose.msra.mxu0 0.0
      %3343 = vmatprep.subr.mxu0 0.0
      %3344 = vmatpush1.xpose.msra.mxu0 0.0
      %3345 = vmatprep.subr.mxu0 0.0
      %3346 = vmatpush1.xpose.msra.mxu0 0.0
      %3347 = vmatprep.subr.mxu0 0.0
      %3348 = vmatpush1.xpose.msra.mxu0 0.0
      %3349 = vmatprep.subr.mxu0 0.0
      %3350 = vmatpush1.xpose.msra.mxu0 0.0
      %3351 = vmatprep.subr.mxu0 0.0
      %3352 = vmatpush1.xpose.msra.mxu0 0.0
      %3353 = vmatprep.subr.mxu0 0.0
      %3354 = vmatpush1.xpose.msra.mxu0 0.0
      %3355 = vmatprep.mubr.f32.mxu0 0.0
      %3356 = vmatmul.mubr.f32.gmra.mrb[0].mxu0 %v3055
      %v3357 = vpop.f32.mrb[0].mxu0
      %v3358 = vadd.f32 0.0, %v3357
      %v3359 = vpop.f32.mrb[0].mxu0
      %3360 = vmatprep.mubr.f32.mxu0 0.0
      %3361 = vmatmul.mubr.f32.gmra.mrb[0].mxu0 %v3058
      %v3362 = vpop.f32.mrb[0].mxu0
      %v3363 = vadd.f32 0.0, %v3362
      %v3364 = vpop.f32.mrb[0].mxu0
      %3365 = vdwg.mxu0
      %v3366 = vmul.f32 %v2505, %v3127
      %v3367 = vmul.f32 %v2506, %v3129
      %v3368 = vmul.f32 %v2507, %v3204
      %v3369 = vmul.f32 %v2508, %v3206
      %v3370 = vmul.f32 %v2509, %v3281
      %v3371 = vmul.f32 %v2510, %v3283
      %v3372 = vmul.f32 %v2511, %v3133
      %v3373 = vmul.f32 %v2512, %v3135
      %v3374 = vmul.f32 %v2513, %v3210
      %v3375 = vmul.f32 %v2514, %v3212
      %v3376 = vmul.f32 %v2515, %v3287
      %v3377 = vmul.f32 %v2516, %v3289
      %v3379 = vsel %vm1133, %v3358, 0
      %v3382 = vsel %vm1133, %v3363, 0
      %3384 = vmatprep.subr.mxu0 %v2506
      %3385 = vmatpush1.msra.mxu0 %v2505
      %3386 = vmatprep.subr.mxu0 %v2512
      %3387 = vmatpush1.msra.mxu0 %v2511
      %3388 = vmatprep.subr.mxu0 0.0
      %3389 = vmatpush1.msra.mxu0 0.0
      %3390 = vmatprep.subr.mxu0 0.0
      %3391 = vmatpush1.msra.mxu0 0.0
      %3392 = vmatprep.subr.mxu0 0.0
      %3393 = vmatpush1.msra.mxu0 0.0
      %3394 = vmatprep.subr.mxu0 0.0
      %3395 = vmatpush1.msra.mxu0 0.0
      %3396 = vmatprep.subr.mxu0 0.0
      %3397 = vmatpush1.msra.mxu0 0.0
      %3398 = vmatprep.subr.mxu0 0.0
      %3399 = vmatpush1.msra.mxu0 0.0
      %3400 = vmatprep.subr.mxu0 0.0
      %3401 = vmatpush1.msra.mxu0 0.0
      %3402 = vmatprep.subr.mxu0 0.0
      %3403 = vmatpush1.msra.mxu0 0.0
      %3404 = vmatprep.subr.mxu0 0.0
      %3405 = vmatpush1.msra.mxu0 0.0
      %3406 = vmatprep.subr.mxu0 0.0
      %3407 = vmatpush1.msra.mxu0 0.0
      %3408 = vmatprep.subr.mxu0 0.0
      %3409 = vmatpush1.msra.mxu0 0.0
      %3410 = vmatprep.subr.mxu0 0.0
      %3411 = vmatpush1.msra.mxu0 0.0
      %3412 = vmatprep.subr.mxu0 0.0
      %3413 = vmatpush1.msra.mxu0 0.0
      %3414 = vmatprep.subr.mxu0 0.0
      %3415 = vmatpush1.msra.mxu0 0.0
      %3416 = vmatprep.subr.mxu0 0.0
      %3417 = vmatpush1.msra.mxu0 0.0
      %3418 = vmatprep.subr.mxu0 0.0
      %3419 = vmatpush1.msra.mxu0 0.0
      %3420 = vmatprep.subr.mxu0 0.0
      %3421 = vmatpush1.msra.mxu0 0.0
      %3422 = vmatprep.subr.mxu0 0.0
      %3423 = vmatpush1.msra.mxu0 0.0
      %3424 = vmatprep.subr.mxu0 0.0
      %3425 = vmatpush1.msra.mxu0 0.0
      %3426 = vmatprep.subr.mxu0 0.0
      %3427 = vmatpush1.msra.mxu0 0.0
      %3428 = vmatprep.subr.mxu0 0.0
      %3429 = vmatpush1.msra.mxu0 0.0
      %3430 = vmatprep.subr.mxu0 0.0
      %3431 = vmatpush1.msra.mxu0 0.0
      %3432 = vmatprep.subr.mxu0 0.0
      %3433 = vmatpush1.msra.mxu0 0.0
      %3434 = vmatprep.subr.mxu0 0.0
      %3435 = vmatpush1.msra.mxu0 0.0
      %3436 = vmatprep.subr.mxu0 0.0
      %3437 = vmatpush1.msra.mxu0 0.0
      %3438 = vmatprep.subr.mxu0 0.0
      %3439 = vmatpush1.msra.mxu0 0.0
      %3440 = vmatprep.subr.mxu0 0.0
      %3441 = vmatpush1.msra.mxu0 0.0
      %3442 = vmatprep.subr.mxu0 0.0
      %3443 = vmatpush1.msra.mxu0 0.0
      %3444 = vmatprep.subr.mxu0 0.0
      %3445 = vmatpush1.msra.mxu0 0.0
      %3446 = vmatprep.subr.mxu0 0.0
      %3447 = vmatpush1.msra.mxu0 0.0
      %3448 = vmatprep.mubr.f32.mxu0 0.0
      %3449 = vmatmul.mubr.f32.gmra.mrb[0].mxu0 %v3379
      %v3450 = vpop.f32.mrb[0].mxu0
      %v3451 = vadd.f32 1e-06, %v3450
      %v3452 = vpop.f32.mrb[0].mxu0
      %v3453 = vadd.f32 1e-06, %v3452
      %3454 = vmatprep.mubr.f32.mxu0 0.0
      %3455 = vmatmul.mubr.f32.gmra.mrb[0].mxu0 %v3382
      %v3456 = vpop.f32.mrb[0].mxu0
      %v3457 = vadd.f32 1e-06, %v3456
      %v3458 = vpop.f32.mrb[0].mxu0
      %v3459 = vadd.f32 1e-06, %v3458
      %3460 = vdwg.mxu0
      %3461 = vmatprep.subr.mxu0 %v2508
      %3462 = vmatpush1.msra.mxu0 %v2507
      %3463 = vmatprep.subr.mxu0 %v2514
      %3464 = vmatpush1.msra.mxu0 %v2513
      %3465 = vmatprep.subr.mxu0 0.0
      %3466 = vmatpush1.msra.mxu0 0.0
      %3467 = vmatprep.subr.mxu0 0.0
      %3468 = vmatpush1.msra.mxu0 0.0
      %3469 = vmatprep.subr.mxu0 0.0
      %3470 = vmatpush1.msra.mxu0 0.0
      %3471 = vmatprep.subr.mxu0 0.0
      %3472 = vmatpush1.msra.mxu0 0.0
      %3473 = vmatprep.subr.mxu0 0.0
      %3474 = vmatpush1.msra.mxu0 0.0
      %3475 = vmatprep.subr.mxu0 0.0
      %3476 = vmatpush1.msra.mxu0 0.0
      %3477 = vmatprep.subr.mxu0 0.0
      %3478 = vmatpush1.msra.mxu0 0.0
      %3479 = vmatprep.subr.mxu0 0.0
      %3480 = vmatpush1.msra.mxu0 0.0
      %3481 = vmatprep.subr.mxu0 0.0
      %3482 = vmatpush1.msra.mxu0 0.0
      %3483 = vmatprep.subr.mxu0 0.0
      %3484 = vmatpush1.msra.mxu0 0.0
      %3485 = vmatprep.subr.mxu0 0.0
      %3486 = vmatpush1.msra.mxu0 0.0
      %3487 = vmatprep.subr.mxu0 0.0
      %3488 = vmatpush1.msra.mxu0 0.0
      %3489 = vmatprep.subr.mxu0 0.0
      %3490 = vmatpush1.msra.mxu0 0.0
      %3491 = vmatprep.subr.mxu0 0.0
      %3492 = vmatpush1.msra.mxu0 0.0
      %3493 = vmatprep.subr.mxu0 0.0
      %3494 = vmatpush1.msra.mxu0 0.0
      %3495 = vmatprep.subr.mxu0 0.0
      %3496 = vmatpush1.msra.mxu0 0.0
      %3497 = vmatprep.subr.mxu0 0.0
      %3498 = vmatpush1.msra.mxu0 0.0
      %3499 = vmatprep.subr.mxu0 0.0
      %3500 = vmatpush1.msra.mxu0 0.0
      %3501 = vmatprep.subr.mxu0 0.0
      %3502 = vmatpush1.msra.mxu0 0.0
      %3503 = vmatprep.subr.mxu0 0.0
      %3504 = vmatpush1.msra.mxu0 0.0
      %3505 = vmatprep.subr.mxu0 0.0
      %3506 = vmatpush1.msra.mxu0 0.0
      %3507 = vmatprep.subr.mxu0 0.0
      %3508 = vmatpush1.msra.mxu0 0.0
      %3509 = vmatprep.subr.mxu0 0.0
      %3510 = vmatpush1.msra.mxu0 0.0
      %3511 = vmatprep.subr.mxu0 0.0
      %3512 = vmatpush1.msra.mxu0 0.0
      %3513 = vmatprep.subr.mxu0 0.0
      %3514 = vmatpush1.msra.mxu0 0.0
      %3515 = vmatprep.subr.mxu0 0.0
      %3516 = vmatpush1.msra.mxu0 0.0
      %3517 = vmatprep.subr.mxu0 0.0
      %3518 = vmatpush1.msra.mxu0 0.0
      %3519 = vmatprep.subr.mxu0 0.0
      %3520 = vmatpush1.msra.mxu0 0.0
      %3521 = vmatprep.subr.mxu0 0.0
      %3522 = vmatpush1.msra.mxu0 0.0
      %3523 = vmatprep.subr.mxu0 0.0
      %3524 = vmatpush1.msra.mxu0 0.0
      %3525 = vmatprep.mubr.f32.mxu0 0.0
      %3526 = vmatmul.mubr.f32.gmra.mrb[0].mxu0 %v3379
      %v3527 = vpop.f32.mrb[0].mxu0
      %v3528 = vadd.f32 1e-06, %v3527
      %v3529 = vpop.f32.mrb[0].mxu0
      %v3530 = vadd.f32 1e-06, %v3529
      %3531 = vmatprep.mubr.f32.mxu0 0.0
      %3532 = vmatmul.mubr.f32.gmra.mrb[0].mxu0 %v3382
      %v3533 = vpop.f32.mrb[0].mxu0
      %v3534 = vadd.f32 1e-06, %v3533
      %v3535 = vpop.f32.mrb[0].mxu0
      %v3536 = vadd.f32 1e-06, %v3535
      %3537 = vdwg.mxu0
      %3538 = vmatprep.subr.mxu0 %v2510
      %3539 = vmatpush1.msra.mxu0 %v2509
      %3540 = vmatprep.subr.mxu0 %v2516
      %3541 = vmatpush1.msra.mxu0 %v2515
      %3542 = vmatprep.subr.mxu0 0.0
      %3543 = vmatpush1.msra.mxu0 0.0
      %3544 = vmatprep.subr.mxu0 0.0
      %3545 = vmatpush1.msra.mxu0 0.0
      %3546 = vmatprep.subr.mxu0 0.0
      %3547 = vmatpush1.msra.mxu0 0.0
      %3548 = vmatprep.subr.mxu0 0.0
      %3549 = vmatpush1.msra.mxu0 0.0
      %3550 = vmatprep.subr.mxu0 0.0
      %3551 = vmatpush1.msra.mxu0 0.0
      %3552 = vmatprep.subr.mxu0 0.0
      %3553 = vmatpush1.msra.mxu0 0.0
      %3554 = vmatprep.subr.mxu0 0.0
      %3555 = vmatpush1.msra.mxu0 0.0
      %3556 = vmatprep.subr.mxu0 0.0
      %3557 = vmatpush1.msra.mxu0 0.0
      %3558 = vmatprep.subr.mxu0 0.0
      %3559 = vmatpush1.msra.mxu0 0.0
      %3560 = vmatprep.subr.mxu0 0.0
      %3561 = vmatpush1.msra.mxu0 0.0
      %3562 = vmatprep.subr.mxu0 0.0
      %3563 = vmatpush1.msra.mxu0 0.0
      %3564 = vmatprep.subr.mxu0 0.0
      %3565 = vmatpush1.msra.mxu0 0.0
      %3566 = vmatprep.subr.mxu0 0.0
      %3567 = vmatpush1.msra.mxu0 0.0
      %3568 = vmatprep.subr.mxu0 0.0
      %3569 = vmatpush1.msra.mxu0 0.0
      %3570 = vmatprep.subr.mxu0 0.0
      %3571 = vmatpush1.msra.mxu0 0.0
      %3572 = vmatprep.subr.mxu0 0.0
      %3573 = vmatpush1.msra.mxu0 0.0
      %3574 = vmatprep.subr.mxu0 0.0
      %3575 = vmatpush1.msra.mxu0 0.0
      %3576 = vmatprep.subr.mxu0 0.0
      %3577 = vmatpush1.msra.mxu0 0.0
      %3578 = vmatprep.subr.mxu0 0.0
      %3579 = vmatpush1.msra.mxu0 0.0
      %3580 = vmatprep.subr.mxu0 0.0
      %3581 = vmatpush1.msra.mxu0 0.0
      %3582 = vmatprep.subr.mxu0 0.0
      %3583 = vmatpush1.msra.mxu0 0.0
      %3584 = vmatprep.subr.mxu0 0.0
      %3585 = vmatpush1.msra.mxu0 0.0
      %3586 = vmatprep.subr.mxu0 0.0
      %3587 = vmatpush1.msra.mxu0 0.0
      %3588 = vmatprep.subr.mxu0 0.0
      %3589 = vmatpush1.msra.mxu0 0.0
      %3590 = vmatprep.subr.mxu0 0.0
      %3591 = vmatpush1.msra.mxu0 0.0
      %3592 = vmatprep.subr.mxu0 0.0
      %3593 = vmatpush1.msra.mxu0 0.0
      %3594 = vmatprep.subr.mxu0 0.0
      %3595 = vmatpush1.msra.mxu0 0.0
      %3596 = vmatprep.subr.mxu0 0.0
      %3597 = vmatpush1.msra.mxu0 0.0
      %3598 = vmatprep.subr.mxu0 0.0
      %3599 = vmatpush1.msra.mxu0 0.0
      %3600 = vmatprep.subr.mxu0 0.0
      %3601 = vmatpush1.msra.mxu0 0.0
      %3602 = vmatprep.mubr.f32.mxu0 0.0
      %3603 = vmatmul.mubr.f32.gmra.mrb[0].mxu0 %v3379
      %v3604 = vpop.f32.mrb[0].mxu0
      %v3605 = vadd.f32 1e-06, %v3604
      %v3606 = vpop.f32.mrb[0].mxu0
      %v3607 = vadd.f32 1e-06, %v3606
      %3608 = vmatprep.mubr.f32.mxu0 0.0
      %3609 = vmatmul.mubr.f32.gmra.mrb[0].mxu0 %v3382
      %v3610 = vpop.f32.mrb[0].mxu0
      %v3611 = vadd.f32 1e-06, %v3610
      %v3612 = vpop.f32.mrb[0].mxu0
      %v3613 = vadd.f32 1e-06, %v3612
      %3614 = vdwg.mxu0
      %v3615 = vrcp.pop %v3451
      %v3616 = vrcp.pop %v3453
      %v3617 = vrcp.pop %v3528
      %v3618 = vrcp.pop %v3530
      %v3619 = vrcp.pop %v3605
      %v3620 = vrcp.pop %v3607
      %v3621 = vrcp.pop %v3457
      %v3622 = vrcp.pop %v3459
      %v3623 = vrcp.pop %v3534
      %v3624 = vrcp.pop %v3536
      %v3625 = vrcp.pop %v3611
      %v3626 = vrcp.pop %v3613
      %v3627 = vmul.f32 %v3366, %v3615
      %v3628 = vmul.f32 %v3367, %v3616
      %v3629 = vmul.f32 %v3368, %v3617
      %v3630 = vmul.f32 %v3369, %v3618
      %v3631 = vmul.f32 %v3370, %v3619
      %v3632 = vmul.f32 %v3371, %v3620
      %v3633 = vmul.f32 %v3372, %v3621
      %v3634 = vmul.f32 %v3373, %v3622
      %v3635 = vmul.f32 %v3374, %v3623
      %v3636 = vmul.f32 %v3375, %v3624
      %v3637 = vmul.f32 %v3376, %v3625
      %v3638 = vmul.f32 %v3377, %v3626
      %3639 = vmatprep.subr.mxu0 %v647
      %3640 = vmatpush1.xpose.msra.mxu0 %v646
      %3641 = vmatprep.subr.mxu0 %v653
      %3642 = vmatpush1.xpose.msra.mxu0 %v652
      %3643 = vmatprep.subr.mxu0 %v659
      %3644 = vmatpush1.xpose.msra.mxu0 %v658
      %3645 = vmatprep.subr.mxu0 %v665
      %3646 = vmatpush1.xpose.msra.mxu0 %v664
      %3647 = vmatprep.subr.mxu0 0.0
      %3648 = vmatpush1.xpose.msra.mxu0 0.0
      %3649 = vmatprep.subr.mxu0 0.0
      %3650 = vmatpush1.xpose.msra.mxu0 0.0
      %3651 = vmatprep.subr.mxu0 0.0
      %3652 = vmatpush1.xpose.msra.mxu0 0.0
      %3653 = vmatprep.subr.mxu0 0.0
      %3654 = vmatpush1.xpose.msra.mxu0 0.0
      %3655 = vmatprep.subr.mxu0 0.0
      %3656 = vmatpush1.xpose.msra.mxu0 0.0
      %3657 = vmatprep.subr.mxu0 0.0
      %3658 = vmatpush1.xpose.msra.mxu0 0.0
      %3659 = vmatprep.subr.mxu0 0.0
      %3660 = vmatpush1.xpose.msra.mxu0 0.0
      %3661 = vmatprep.subr.mxu0 0.0
      %3662 = vmatpush1.xpose.msra.mxu0 0.0
      %3663 = vmatprep.subr.mxu0 0.0
      %3664 = vmatpush1.xpose.msra.mxu0 0.0
      %3665 = vmatprep.subr.mxu0 0.0
      %3666 = vmatpush1.xpose.msra.mxu0 0.0
      %3667 = vmatprep.subr.mxu0 0.0
      %3668 = vmatpush1.xpose.msra.mxu0 0.0
      %3669 = vmatprep.subr.mxu0 0.0
      %3670 = vmatpush1.xpose.msra.mxu0 0.0
      %3671 = vmatprep.subr.mxu0 0.0
      %3672 = vmatpush1.xpose.msra.mxu0 0.0
      %3673 = vmatprep.subr.mxu0 0.0
      %3674 = vmatpush1.xpose.msra.mxu0 0.0
      %3675 = vmatprep.subr.mxu0 0.0
      %3676 = vmatpush1.xpose.msra.mxu0 0.0
      %3677 = vmatprep.subr.mxu0 0.0
      %3678 = vmatpush1.xpose.msra.mxu0 0.0
      %3679 = vmatprep.subr.mxu0 0.0
      %3680 = vmatpush1.xpose.msra.mxu0 0.0
      %3681 = vmatprep.subr.mxu0 0.0
      %3682 = vmatpush1.xpose.msra.mxu0 0.0
      %3683 = vmatprep.subr.mxu0 0.0
      %3684 = vmatpush1.xpose.msra.mxu0 0.0
      %3685 = vmatprep.subr.mxu0 0.0
      %3686 = vmatpush1.xpose.msra.mxu0 0.0
      %3687 = vmatprep.subr.mxu0 0.0
      %3688 = vmatpush1.xpose.msra.mxu0 0.0
      %3689 = vmatprep.subr.mxu0 0.0
      %3690 = vmatpush1.xpose.msra.mxu0 0.0
      %3691 = vmatprep.subr.mxu0 0.0
      %3692 = vmatpush1.xpose.msra.mxu0 0.0
      %3693 = vmatprep.subr.mxu0 0.0
      %3694 = vmatpush1.xpose.msra.mxu0 0.0
      %3695 = vmatprep.subr.mxu0 0.0
      %3696 = vmatpush1.xpose.msra.mxu0 0.0
      %3697 = vmatprep.subr.mxu0 0.0
      %3698 = vmatpush1.xpose.msra.mxu0 0.0
      %3699 = vmatprep.subr.mxu0 0.0
      %3700 = vmatpush1.xpose.msra.mxu0 0.0
      %3701 = vmatprep.subr.mxu0 0.0
      %3702 = vmatpush1.xpose.msra.mxu0 0.0
      %3703 = vmatprep.mubr.f32.mxu0 %v3628
      %3704 = vmatmul.mubr.f32.gmra.mrb[0].mxu0 %v3627
      %v3705 = vpop.f32.mrb[0].mxu0
      %v3706 = vadd.f32 0.0, %v3705
      %v3707 = vpop.f32.mrb[0].mxu0
      %3708 = vmatprep.mubr.f32.mxu0 %v3634
      %3709 = vmatmul.mubr.f32.gmra.mrb[0].mxu0 %v3633
      %v3710 = vpop.f32.mrb[0].mxu0
      %v3711 = vadd.f32 0.0, %v3710
      %v3712 = vpop.f32.mrb[0].mxu0
      %3713 = vdwg.mxu0
      %3714 = vmatprep.subr.mxu0 %v649
      %3715 = vmatpush1.xpose.msra.mxu0 %v648
      %3716 = vmatprep.subr.mxu0 %v655
      %3717 = vmatpush1.xpose.msra.mxu0 %v654
      %3718 = vmatprep.subr.mxu0 %v661
      %3719 = vmatpush1.xpose.msra.mxu0 %v660
      %3720 = vmatprep.subr.mxu0 %v667
      %3721 = vmatpush1.xpose.msra.mxu0 %v666
      %3722 = vmatprep.subr.mxu0 0.0
      %3723 = vmatpush1.xpose.msra.mxu0 0.0
      %3724 = vmatprep.subr.mxu0 0.0
      %3725 = vmatpush1.xpose.msra.mxu0 0.0
      %3726 = vmatprep.subr.mxu0 0.0
      %3727 = vmatpush1.xpose.msra.mxu0 0.0
      %3728 = vmatprep.subr.mxu0 0.0
      %3729 = vmatpush1.xpose.msra.mxu0 0.0
      %3730 = vmatprep.subr.mxu0 0.0
      %3731 = vmatpush1.xpose.msra.mxu0 0.0
      %3732 = vmatprep.subr.mxu0 0.0
      %3733 = vmatpush1.xpose.msra.mxu0 0.0
      %3734 = vmatprep.subr.mxu0 0.0
      %3735 = vmatpush1.xpose.msra.mxu0 0.0
      %3736 = vmatprep.subr.mxu0 0.0
      %3737 = vmatpush1.xpose.msra.mxu0 0.0
      %3738 = vmatprep.subr.mxu0 0.0
      %3739 = vmatpush1.xpose.msra.mxu0 0.0
      %3740 = vmatprep.subr.mxu0 0.0
      %3741 = vmatpush1.xpose.msra.mxu0 0.0
      %3742 = vmatprep.subr.mxu0 0.0
      %3743 = vmatpush1.xpose.msra.mxu0 0.0
      %3744 = vmatprep.subr.mxu0 0.0
      %3745 = vmatpush1.xpose.msra.mxu0 0.0
      %3746 = vmatprep.subr.mxu0 0.0
      %3747 = vmatpush1.xpose.msra.mxu0 0.0
      %3748 = vmatprep.subr.mxu0 0.0
      %3749 = vmatpush1.xpose.msra.mxu0 0.0
      %3750 = vmatprep.subr.mxu0 0.0
      %3751 = vmatpush1.xpose.msra.mxu0 0.0
      %3752 = vmatprep.subr.mxu0 0.0
      %3753 = vmatpush1.xpose.msra.mxu0 0.0
      %3754 = vmatprep.subr.mxu0 0.0
      %3755 = vmatpush1.xpose.msra.mxu0 0.0
      %3756 = vmatprep.subr.mxu0 0.0
      %3757 = vmatpush1.xpose.msra.mxu0 0.0
      %3758 = vmatprep.subr.mxu0 0.0
      %3759 = vmatpush1.xpose.msra.mxu0 0.0
      %3760 = vmatprep.subr.mxu0 0.0
      %3761 = vmatpush1.xpose.msra.mxu0 0.0
      %3762 = vmatprep.subr.mxu0 0.0
      %3763 = vmatpush1.xpose.msra.mxu0 0.0
      %3764 = vmatprep.subr.mxu0 0.0
      %3765 = vmatpush1.xpose.msra.mxu0 0.0
      %3766 = vmatprep.subr.mxu0 0.0
      %3767 = vmatpush1.xpose.msra.mxu0 0.0
      %3768 = vmatprep.subr.mxu0 0.0
      %3769 = vmatpush1.xpose.msra.mxu0 0.0
      %3770 = vmatprep.subr.mxu0 0.0
      %3771 = vmatpush1.xpose.msra.mxu0 0.0
      %3772 = vmatprep.subr.mxu0 0.0
      %3773 = vmatpush1.xpose.msra.mxu0 0.0
      %3774 = vmatprep.subr.mxu0 0.0
      %3775 = vmatpush1.xpose.msra.mxu0 0.0
      %3776 = vmatprep.subr.mxu0 0.0
      %3777 = vmatpush1.xpose.msra.mxu0 0.0
      %3778 = vmatprep.mubr.f32.mxu0 %v3630
      %3779 = vmatmul.mubr.f32.gmra.mrb[0].mxu0 %v3629
      %v3780 = vpop.f32.mrb[0].mxu0
      %v3781 = vadd.f32 %v3706, %v3780
      %v3782 = vpop.f32.mrb[0].mxu0
      %3783 = vmatprep.mubr.f32.mxu0 %v3636
      %3784 = vmatmul.mubr.f32.gmra.mrb[0].mxu0 %v3635
      %v3785 = vpop.f32.mrb[0].mxu0
      %v3786 = vadd.f32 %v3711, %v3785
      %v3787 = vpop.f32.mrb[0].mxu0
      %3788 = vdwg.mxu0
      %3789 = vmatprep.subr.mxu0 %v651
      %3790 = vmatpush1.xpose.msra.mxu0 %v650
      %3791 = vmatprep.subr.mxu0 %v657
      %3792 = vmatpush1.xpose.msra.mxu0 %v656
      %3793 = vmatprep.subr.mxu0 %v663
      %3794 = vmatpush1.xpose.msra.mxu0 %v662
      %3795 = vmatprep.subr.mxu0 %v669
      %3796 = vmatpush1.xpose.msra.mxu0 %v668
      %3797 = vmatprep.subr.mxu0 0.0
      %3798 = vmatpush1.xpose.msra.mxu0 0.0
      %3799 = vmatprep.subr.mxu0 0.0
      %3800 = vmatpush1.xpose.msra.mxu0 0.0
      %3801 = vmatprep.subr.mxu0 0.0
      %3802 = vmatpush1.xpose.msra.mxu0 0.0
      %3803 = vmatprep.subr.mxu0 0.0
      %3804 = vmatpush1.xpose.msra.mxu0 0.0
      %3805 = vmatprep.subr.mxu0 0.0
      %3806 = vmatpush1.xpose.msra.mxu0 0.0
      %3807 = vmatprep.subr.mxu0 0.0
      %3808 = vmatpush1.xpose.msra.mxu0 0.0
      %3809 = vmatprep.subr.mxu0 0.0
      %3810 = vmatpush1.xpose.msra.mxu0 0.0
      %3811 = vmatprep.subr.mxu0 0.0
      %3812 = vmatpush1.xpose.msra.mxu0 0.0
      %3813 = vmatprep.subr.mxu0 0.0
      %3814 = vmatpush1.xpose.msra.mxu0 0.0
      %3815 = vmatprep.subr.mxu0 0.0
      %3816 = vmatpush1.xpose.msra.mxu0 0.0
      %3817 = vmatprep.subr.mxu0 0.0
      %3818 = vmatpush1.xpose.msra.mxu0 0.0
      %3819 = vmatprep.subr.mxu0 0.0
      %3820 = vmatpush1.xpose.msra.mxu0 0.0
      %3821 = vmatprep.subr.mxu0 0.0
      %3822 = vmatpush1.xpose.msra.mxu0 0.0
      %3823 = vmatprep.subr.mxu0 0.0
      %3824 = vmatpush1.xpose.msra.mxu0 0.0
      %3825 = vmatprep.subr.mxu0 0.0
      %3826 = vmatpush1.xpose.msra.mxu0 0.0
      %3827 = vmatprep.subr.mxu0 0.0
      %3828 = vmatpush1.xpose.msra.mxu0 0.0
      %3829 = vmatprep.subr.mxu0 0.0
      %3830 = vmatpush1.xpose.msra.mxu0 0.0
      %3831 = vmatprep.subr.mxu0 0.0
      %3832 = vmatpush1.xpose.msra.mxu0 0.0
      %3833 = vmatprep.subr.mxu0 0.0
      %3834 = vmatpush1.xpose.msra.mxu0 0.0
      %3835 = vmatprep.subr.mxu0 0.0
      %3836 = vmatpush1.xpose.msra.mxu0 0.0
      %3837 = vmatprep.subr.mxu0 0.0
      %3838 = vmatpush1.xpose.msra.mxu0 0.0
      %3839 = vmatprep.subr.mxu0 0.0
      %3840 = vmatpush1.xpose.msra.mxu0 0.0
      %3841 = vmatprep.subr.mxu0 0.0
      %3842 = vmatpush1.xpose.msra.mxu0 0.0
      %3843 = vmatprep.subr.mxu0 0.0
      %3844 = vmatpush1.xpose.msra.mxu0 0.0
      %3845 = vmatprep.subr.mxu0 0.0
      %3846 = vmatpush1.xpose.msra.mxu0 0.0
      %3847 = vmatprep.subr.mxu0 0.0
      %3848 = vmatpush1.xpose.msra.mxu0 0.0
      %3849 = vmatprep.subr.mxu0 0.0
      %3850 = vmatpush1.xpose.msra.mxu0 0.0
      %3851 = vmatprep.subr.mxu0 0.0
      %3852 = vmatpush1.xpose.msra.mxu0 0.0
      %3853 = vmatprep.mubr.f32.mxu0 %v3632
      %3854 = vmatmul.mubr.f32.gmra.mrb[0].mxu0 %v3631
      %v3855 = vpop.f32.mrb[0].mxu0
      %v3856 = vadd.f32 %v3781, %v3855
      %v3857 = vpop.f32.mrb[0].mxu0
      %3858 = vmatprep.mubr.f32.mxu0 %v3638
      %3859 = vmatmul.mubr.f32.gmra.mrb[0].mxu0 %v3637
      %v3860 = vpop.f32.mrb[0].mxu0
      %v3861 = vadd.f32 %v3786, %v3860
      %v3862 = vpop.f32.mrb[0].mxu0
      %3863 = vdwg.mxu0
      %3864 = vmatprep.subr.mxu0 %v3628
      %3865 = vmatpush1.xpose.msra.mxu0 %v3627
      %3866 = vmatprep.subr.mxu0 %v3634
      %3867 = vmatpush1.xpose.msra.mxu0 %v3633
      %3868 = vmatprep.subr.mxu0 0.0
      %3869 = vmatpush1.xpose.msra.mxu0 0.0
      %3870 = vmatprep.subr.mxu0 0.0
      %3871 = vmatpush1.xpose.msra.mxu0 0.0
      %3872 = vmatprep.subr.mxu0 0.0
      %3873 = vmatpush1.xpose.msra.mxu0 0.0
      %3874 = vmatprep.subr.mxu0 0.0
      %3875 = vmatpush1.xpose.msra.mxu0 0.0
      %3876 = vmatprep.subr.mxu0 0.0
      %3877 = vmatpush1.xpose.msra.mxu0 0.0
      %3878 = vmatprep.subr.mxu0 0.0
      %3879 = vmatpush1.xpose.msra.mxu0 0.0
      %3880 = vmatprep.subr.mxu0 0.0
      %3881 = vmatpush1.xpose.msra.mxu0 0.0
      %3882 = vmatprep.subr.mxu0 0.0
      %3883 = vmatpush1.xpose.msra.mxu0 0.0
      %3884 = vmatprep.subr.mxu0 0.0
      %3885 = vmatpush1.xpose.msra.mxu0 0.0
      %3886 = vmatprep.subr.mxu0 0.0
      %3887 = vmatpush1.xpose.msra.mxu0 0.0
      %3888 = vmatprep.subr.mxu0 0.0
      %3889 = vmatpush1.xpose.msra.mxu0 0.0
      %3890 = vmatprep.subr.mxu0 0.0
      %3891 = vmatpush1.xpose.msra.mxu0 0.0
      %3892 = vmatprep.subr.mxu0 0.0
      %3893 = vmatpush1.xpose.msra.mxu0 0.0
      %3894 = vmatprep.subr.mxu0 0.0
      %3895 = vmatpush1.xpose.msra.mxu0 0.0
      %3896 = vmatprep.subr.mxu0 0.0
      %3897 = vmatpush1.xpose.msra.mxu0 0.0
      %3898 = vmatprep.subr.mxu0 0.0
      %3899 = vmatpush1.xpose.msra.mxu0 0.0
      %3900 = vmatprep.subr.mxu0 0.0
      %3901 = vmatpush1.xpose.msra.mxu0 0.0
      %3902 = vmatprep.subr.mxu0 0.0
      %3903 = vmatpush1.xpose.msra.mxu0 0.0
      %3904 = vmatprep.subr.mxu0 0.0
      %3905 = vmatpush1.xpose.msra.mxu0 0.0
      %3906 = vmatprep.subr.mxu0 0.0
      %3907 = vmatpush1.xpose.msra.mxu0 0.0
      %3908 = vmatprep.subr.mxu0 0.0
      %3909 = vmatpush1.xpose.msra.mxu0 0.0
      %3910 = vmatprep.subr.mxu0 0.0
      %3911 = vmatpush1.xpose.msra.mxu0 0.0
      %3912 = vmatprep.subr.mxu0 0.0
      %3913 = vmatpush1.xpose.msra.mxu0 0.0
      %3914 = vmatprep.subr.mxu0 0.0
      %3915 = vmatpush1.xpose.msra.mxu0 0.0
      %3916 = vmatprep.subr.mxu0 0.0
      %3917 = vmatpush1.xpose.msra.mxu0 0.0
      %3918 = vmatprep.subr.mxu0 0.0
      %3919 = vmatpush1.xpose.msra.mxu0 0.0
      %3920 = vmatprep.subr.mxu0 0.0
      %3921 = vmatpush1.xpose.msra.mxu0 0.0
      %3922 = vmatprep.subr.mxu0 0.0
      %3923 = vmatpush1.xpose.msra.mxu0 0.0
      %3924 = vmatprep.subr.mxu0 0.0
      %3925 = vmatpush1.xpose.msra.mxu0 0.0
      %3926 = vmatprep.subr.mxu0 0.0
      %3927 = vmatpush1.xpose.msra.mxu0 0.0
      %3928 = vmatprep.mubr.f32.mxu0 %v3628
      %3929 = vmatmul.mubr.f32.gmra.mrb[0].mxu0 %v3627
      %v3930 = vpop.f32.mrb[0].mxu0
      %v3931 = vadd.f32 0.0, %v3930
      %v3932 = vpop.f32.mrb[0].mxu0
      %3933 = vmatprep.mubr.f32.mxu0 %v3634
      %3934 = vmatmul.mubr.f32.gmra.mrb[0].mxu0 %v3633
      %v3935 = vpop.f32.mrb[0].mxu0
      %v3936 = vadd.f32 0.0, %v3935
      %v3937 = vpop.f32.mrb[0].mxu0
      %3938 = vdwg.mxu0
      %3939 = vmatprep.subr.mxu0 %v3630
      %3940 = vmatpush1.xpose.msra.mxu0 %v3629
      %3941 = vmatprep.subr.mxu0 %v3636
      %3942 = vmatpush1.xpose.msra.mxu0 %v3635
      %3943 = vmatprep.subr.mxu0 0.0
      %3944 = vmatpush1.xpose.msra.mxu0 0.0
      %3945 = vmatprep.subr.mxu0 0.0
      %3946 = vmatpush1.xpose.msra.mxu0 0.0
      %3947 = vmatprep.subr.mxu0 0.0
      %3948 = vmatpush1.xpose.msra.mxu0 0.0
      %3949 = vmatprep.subr.mxu0 0.0
      %3950 = vmatpush1.xpose.msra.mxu0 0.0
      %3951 = vmatprep.subr.mxu0 0.0
      %3952 = vmatpush1.xpose.msra.mxu0 0.0
      %3953 = vmatprep.subr.mxu0 0.0
      %3954 = vmatpush1.xpose.msra.mxu0 0.0
      %3955 = vmatprep.subr.mxu0 0.0
      %3956 = vmatpush1.xpose.msra.mxu0 0.0
      %3957 = vmatprep.subr.mxu0 0.0
      %3958 = vmatpush1.xpose.msra.mxu0 0.0
      %3959 = vmatprep.subr.mxu0 0.0
      %3960 = vmatpush1.xpose.msra.mxu0 0.0
      %3961 = vmatprep.subr.mxu0 0.0
      %3962 = vmatpush1.xpose.msra.mxu0 0.0
      %3963 = vmatprep.subr.mxu0 0.0
      %3964 = vmatpush1.xpose.msra.mxu0 0.0
      %3965 = vmatprep.subr.mxu0 0.0
      %3966 = vmatpush1.xpose.msra.mxu0 0.0
      %3967 = vmatprep.subr.mxu0 0.0
      %3968 = vmatpush1.xpose.msra.mxu0 0.0
      %3969 = vmatprep.subr.mxu0 0.0
      %3970 = vmatpush1.xpose.msra.mxu0 0.0
      %3971 = vmatprep.subr.mxu0 0.0
      %3972 = vmatpush1.xpose.msra.mxu0 0.0
      %3973 = vmatprep.subr.mxu0 0.0
      %3974 = vmatpush1.xpose.msra.mxu0 0.0
      %3975 = vmatprep.subr.mxu0 0.0
      %3976 = vmatpush1.xpose.msra.mxu0 0.0
      %3977 = vmatprep.subr.mxu0 0.0
      %3978 = vmatpush1.xpose.msra.mxu0 0.0
      %3979 = vmatprep.subr.mxu0 0.0
      %3980 = vmatpush1.xpose.msra.mxu0 0.0
      %3981 = vmatprep.subr.mxu0 0.0
      %3982 = vmatpush1.xpose.msra.mxu0 0.0
      %3983 = vmatprep.subr.mxu0 0.0
      %3984 = vmatpush1.xpose.msra.mxu0 0.0
      %3985 = vmatprep.subr.mxu0 0.0
      %3986 = vmatpush1.xpose.msra.mxu0 0.0
      %3987 = vmatprep.subr.mxu0 0.0
      %3988 = vmatpush1.xpose.msra.mxu0 0.0
      %3989 = vmatprep.subr.mxu0 0.0
      %3990 = vmatpush1.xpose.msra.mxu0 0.0
      %3991 = vmatprep.subr.mxu0 0.0
      %3992 = vmatpush1.xpose.msra.mxu0 0.0
      %3993 = vmatprep.subr.mxu0 0.0
      %3994 = vmatpush1.xpose.msra.mxu0 0.0
      %3995 = vmatprep.subr.mxu0 0.0
      %3996 = vmatpush1.xpose.msra.mxu0 0.0
      %3997 = vmatprep.subr.mxu0 0.0
      %3998 = vmatpush1.xpose.msra.mxu0 0.0
      %3999 = vmatprep.subr.mxu0 0.0
      %4000 = vmatpush1.xpose.msra.mxu0 0.0
      %4001 = vmatprep.subr.mxu0 0.0
      %4002 = vmatpush1.xpose.msra.mxu0 0.0
      %4003 = vmatprep.mubr.f32.mxu0 %v3630
      %4004 = vmatmul.mubr.f32.gmra.mrb[0].mxu0 %v3629
      %v4005 = vpop.f32.mrb[0].mxu0
      %v4006 = vadd.f32 %v3931, %v4005
      %v4007 = vpop.f32.mrb[0].mxu0
      %4008 = vmatprep.mubr.f32.mxu0 %v3636
      %4009 = vmatmul.mubr.f32.gmra.mrb[0].mxu0 %v3635
      %v4010 = vpop.f32.mrb[0].mxu0
      %v4011 = vadd.f32 %v3936, %v4010
      %v4012 = vpop.f32.mrb[0].mxu0
      %4013 = vdwg.mxu0
      %4014 = vmatprep.subr.mxu0 %v3632
      %4015 = vmatpush1.xpose.msra.mxu0 %v3631
      %4016 = vmatprep.subr.mxu0 %v3638
      %4017 = vmatpush1.xpose.msra.mxu0 %v3637
      %4018 = vmatprep.subr.mxu0 0.0
      %4019 = vmatpush1.xpose.msra.mxu0 0.0
      %4020 = vmatprep.subr.mxu0 0.0
      %4021 = vmatpush1.xpose.msra.mxu0 0.0
      %4022 = vmatprep.subr.mxu0 0.0
      %4023 = vmatpush1.xpose.msra.mxu0 0.0
      %4024 = vmatprep.subr.mxu0 0.0
      %4025 = vmatpush1.xpose.msra.mxu0 0.0
      %4026 = vmatprep.subr.mxu0 0.0
      %4027 = vmatpush1.xpose.msra.mxu0 0.0
      %4028 = vmatprep.subr.mxu0 0.0
      %4029 = vmatpush1.xpose.msra.mxu0 0.0
      %4030 = vmatprep.subr.mxu0 0.0
      %4031 = vmatpush1.xpose.msra.mxu0 0.0
      %4032 = vmatprep.subr.mxu0 0.0
      %4033 = vmatpush1.xpose.msra.mxu0 0.0
      %4034 = vmatprep.subr.mxu0 0.0
      %4035 = vmatpush1.xpose.msra.mxu0 0.0
      %4036 = vmatprep.subr.mxu0 0.0
      %4037 = vmatpush1.xpose.msra.mxu0 0.0
      %4038 = vmatprep.subr.mxu0 0.0
      %4039 = vmatpush1.xpose.msra.mxu0 0.0
      %4040 = vmatprep.subr.mxu0 0.0
      %4041 = vmatpush1.xpose.msra.mxu0 0.0
      %4042 = vmatprep.subr.mxu0 0.0
      %4043 = vmatpush1.xpose.msra.mxu0 0.0
      %4044 = vmatprep.subr.mxu0 0.0
      %4045 = vmatpush1.xpose.msra.mxu0 0.0
      %4046 = vmatprep.subr.mxu0 0.0
      %4047 = vmatpush1.xpose.msra.mxu0 0.0
      %4048 = vmatprep.subr.mxu0 0.0
      %4049 = vmatpush1.xpose.msra.mxu0 0.0
      %4050 = vmatprep.subr.mxu0 0.0
      %4051 = vmatpush1.xpose.msra.mxu0 0.0
      %4052 = vmatprep.subr.mxu0 0.0
      %4053 = vmatpush1.xpose.msra.mxu0 0.0
      %4054 = vmatprep.subr.mxu0 0.0
      %4055 = vmatpush1.xpose.msra.mxu0 0.0
      %4056 = vmatprep.subr.mxu0 0.0
      %4057 = vmatpush1.xpose.msra.mxu0 0.0
      %4058 = vmatprep.subr.mxu0 0.0
      %4059 = vmatpush1.xpose.msra.mxu0 0.0
      %4060 = vmatprep.subr.mxu0 0.0
      %4061 = vmatpush1.xpose.msra.mxu0 0.0
      %4062 = vmatprep.subr.mxu0 0.0
      %4063 = vmatpush1.xpose.msra.mxu0 0.0
      %4064 = vmatprep.subr.mxu0 0.0
      %4065 = vmatpush1.xpose.msra.mxu0 0.0
      %4066 = vmatprep.subr.mxu0 0.0
      %4067 = vmatpush1.xpose.msra.mxu0 0.0
      %4068 = vmatprep.subr.mxu0 0.0
      %4069 = vmatpush1.xpose.msra.mxu0 0.0
      %4070 = vmatprep.subr.mxu0 0.0
      %4071 = vmatpush1.xpose.msra.mxu0 0.0
      %4072 = vmatprep.subr.mxu0 0.0
      %4073 = vmatpush1.xpose.msra.mxu0 0.0
      %4074 = vmatprep.subr.mxu0 0.0
      %4075 = vmatpush1.xpose.msra.mxu0 0.0
      %4076 = vmatprep.subr.mxu0 0.0
      %4077 = vmatpush1.xpose.msra.mxu0 0.0
      %4078 = vmatprep.mubr.f32.mxu0 %v3632
      %4079 = vmatmul.mubr.f32.gmra.mrb[0].mxu0 %v3631
      %v4080 = vpop.f32.mrb[0].mxu0
      %v4081 = vadd.f32 %v4006, %v4080
      %v4082 = vpop.f32.mrb[0].mxu0
      %4083 = vmatprep.mubr.f32.mxu0 %v3638
      %4084 = vmatmul.mubr.f32.gmra.mrb[0].mxu0 %v3637
      %v4085 = vpop.f32.mrb[0].mxu0
      %v4086 = vadd.f32 %v4011, %v4085
      %v4087 = vpop.f32.mrb[0].mxu0
      %4088 = vdwg.mxu0
      %v4089 = vmul.f32 %v3052, %v3856
      %v4090 = vmul.f32 %v3053, %v3861
      %v4092 = vsel %vm1133, %v4081, 0
      %v4095 = vsel %vm1133, %v4086, 0
      %4097 = vmatprep.subr.mxu0 0.0
      %4098 = vmatpush1.msra.mxu0 %v3052
      %4099 = vmatprep.subr.mxu0 0.0
      %4100 = vmatpush1.msra.mxu0 %v3053
      %4101 = vmatprep.subr.mxu0 0.0
      %4102 = vmatpush1.msra.mxu0 0.0
      %4103 = vmatprep.subr.mxu0 0.0
      %4104 = vmatpush1.msra.mxu0 0.0
      %4105 = vmatprep.subr.mxu0 0.0
      %4106 = vmatpush1.msra.mxu0 0.0
      %4107 = vmatprep.subr.mxu0 0.0
      %4108 = vmatpush1.msra.mxu0 0.0
      %4109 = vmatprep.subr.mxu0 0.0
      %4110 = vmatpush1.msra.mxu0 0.0
      %4111 = vmatprep.subr.mxu0 0.0
      %4112 = vmatpush1.msra.mxu0 0.0
      %4113 = vmatprep.subr.mxu0 0.0
      %4114 = vmatpush1.msra.mxu0 0.0
      %4115 = vmatprep.subr.mxu0 0.0
      %4116 = vmatpush1.msra.mxu0 0.0
      %4117 = vmatprep.subr.mxu0 0.0
      %4118 = vmatpush1.msra.mxu0 0.0
      %4119 = vmatprep.subr.mxu0 0.0
      %4120 = vmatpush1.msra.mxu0 0.0
      %4121 = vmatprep.subr.mxu0 0.0
      %4122 = vmatpush1.msra.mxu0 0.0
      %4123 = vmatprep.subr.mxu0 0.0
      %4124 = vmatpush1.msra.mxu0 0.0
      %4125 = vmatprep.subr.mxu0 0.0
      %4126 = vmatpush1.msra.mxu0 0.0
      %4127 = vmatprep.subr.mxu0 0.0
      %4128 = vmatpush1.msra.mxu0 0.0
      %4129 = vmatprep.subr.mxu0 0.0
      %4130 = vmatpush1.msra.mxu0 0.0
      %4131 = vmatprep.subr.mxu0 0.0
      %4132 = vmatpush1.msra.mxu0 0.0
      %4133 = vmatprep.subr.mxu0 0.0
      %4134 = vmatpush1.msra.mxu0 0.0
      %4135 = vmatprep.subr.mxu0 0.0
      %4136 = vmatpush1.msra.mxu0 0.0
      %4137 = vmatprep.subr.mxu0 0.0
      %4138 = vmatpush1.msra.mxu0 0.0
      %4139 = vmatprep.subr.mxu0 0.0
      %4140 = vmatpush1.msra.mxu0 0.0
      %4141 = vmatprep.subr.mxu0 0.0
      %4142 = vmatpush1.msra.mxu0 0.0
      %4143 = vmatprep.subr.mxu0 0.0
      %4144 = vmatpush1.msra.mxu0 0.0
      %4145 = vmatprep.subr.mxu0 0.0
      %4146 = vmatpush1.msra.mxu0 0.0
      %4147 = vmatprep.subr.mxu0 0.0
      %4148 = vmatpush1.msra.mxu0 0.0
      %4149 = vmatprep.subr.mxu0 0.0
      %4150 = vmatpush1.msra.mxu0 0.0
      %4151 = vmatprep.subr.mxu0 0.0
      %4152 = vmatpush1.msra.mxu0 0.0
      %4153 = vmatprep.subr.mxu0 0.0
      %4154 = vmatpush1.msra.mxu0 0.0
      %4155 = vmatprep.subr.mxu0 0.0
      %4156 = vmatpush1.msra.mxu0 0.0
      %4157 = vmatprep.subr.mxu0 0.0
      %4158 = vmatpush1.msra.mxu0 0.0
      %4159 = vmatprep.subr.mxu0 0.0
      %4160 = vmatpush1.msra.mxu0 0.0
      %4161 = vmatprep.mubr.f32.mxu0 0.0
      %4162 = vmatmul.mubr.f32.gmra.mrb[0].mxu0 %v4092
      %v4163 = vpop.f32.mrb[0].mxu0
      %v4164 = vadd.f32 1e-06, %v4163
      %v4165 = vpop.f32.mrb[0].mxu0
      %4166 = vmatprep.mubr.f32.mxu0 0.0
      %4167 = vmatmul.mubr.f32.gmra.mrb[0].mxu0 %v4095
      %v4168 = vpop.f32.mrb[0].mxu0
      %v4169 = vadd.f32 1e-06, %v4168
      %v4170 = vpop.f32.mrb[0].mxu0
      %4171 = vdwg.mxu0
      %v4172 = vrcp.pop %v4164
      %v4173 = vrcp.pop %v4169
      %v4174 = vmul.f32 %v4089, %v4172
      %v4175 = vmul.f32 %v4090, %v4173
      %v4177 = vsel %vm670, %v4174, 0
      %v4180 = vsel %vm670, %v4175, 0
      %4182 = vmatprep.subr.mxu0 %v647
      %4183 = vmatpush1.msra.mxu0 %v646
      %4184 = vmatprep.subr.mxu0 %v653
      %4185 = vmatpush1.msra.mxu0 %v652
      %4186 = vmatprep.subr.mxu0 %v659
      %4187 = vmatpush1.msra.mxu0 %v658
      %4188 = vmatprep.subr.mxu0 %v665
      %4189 = vmatpush1.msra.mxu0 %v664
      %4190 = vmatprep.subr.mxu0 0.0
      %4191 = vmatpush1.msra.mxu0 0.0
      %4192 = vmatprep.subr.mxu0 0.0
      %4193 = vmatpush1.msra.mxu0 0.0
      %4194 = vmatprep.subr.mxu0 0.0
      %4195 = vmatpush1.msra.mxu0 0.0
      %4196 = vmatprep.subr.mxu0 0.0
      %4197 = vmatpush1.msra.mxu0 0.0
      %4198 = vmatprep.subr.mxu0 0.0
      %4199 = vmatpush1.msra.mxu0 0.0
      %4200 = vmatprep.subr.mxu0 0.0
      %4201 = vmatpush1.msra.mxu0 0.0
      %4202 = vmatprep.subr.mxu0 0.0
      %4203 = vmatpush1.msra.mxu0 0.0
      %4204 = vmatprep.subr.mxu0 0.0
      %4205 = vmatpush1.msra.mxu0 0.0
      %4206 = vmatprep.subr.mxu0 0.0
      %4207 = vmatpush1.msra.mxu0 0.0
      %4208 = vmatprep.subr.mxu0 0.0
      %4209 = vmatpush1.msra.mxu0 0.0
      %4210 = vmatprep.subr.mxu0 0.0
      %4211 = vmatpush1.msra.mxu0 0.0
      %4212 = vmatprep.subr.mxu0 0.0
      %4213 = vmatpush1.msra.mxu0 0.0
      %4214 = vmatprep.subr.mxu0 0.0
      %4215 = vmatpush1.msra.mxu0 0.0
      %4216 = vmatprep.subr.mxu0 0.0
      %4217 = vmatpush1.msra.mxu0 0.0
      %4218 = vmatprep.subr.mxu0 0.0
      %4219 = vmatpush1.msra.mxu0 0.0
      %4220 = vmatprep.subr.mxu0 0.0
      %4221 = vmatpush1.msra.mxu0 0.0
      %4222 = vmatprep.subr.mxu0 0.0
      %4223 = vmatpush1.msra.mxu0 0.0
      %4224 = vmatprep.subr.mxu0 0.0
      %4225 = vmatpush1.msra.mxu0 0.0
      %4226 = vmatprep.subr.mxu0 0.0
      %4227 = vmatpush1.msra.mxu0 0.0
      %4228 = vmatprep.subr.mxu0 0.0
      %4229 = vmatpush1.msra.mxu0 0.0
      %4230 = vmatprep.subr.mxu0 0.0
      %4231 = vmatpush1.msra.mxu0 0.0
      %4232 = vmatprep.subr.mxu0 0.0
      %4233 = vmatpush1.msra.mxu0 0.0
      %4234 = vmatprep.subr.mxu0 0.0
      %4235 = vmatpush1.msra.mxu0 0.0
      %4236 = vmatprep.subr.mxu0 0.0
      %4237 = vmatpush1.msra.mxu0 0.0
      %4238 = vmatprep.subr.mxu0 0.0
      %4239 = vmatpush1.msra.mxu0 0.0
      %4240 = vmatprep.subr.mxu0 0.0
      %4241 = vmatpush1.msra.mxu0 0.0
      %4242 = vmatprep.subr.mxu0 0.0
      %4243 = vmatpush1.msra.mxu0 0.0
      %4244 = vmatprep.subr.mxu0 0.0
      %4245 = vmatpush1.msra.mxu0 0.0
      %4246 = vmatprep.mubr.f32.mxu0 0.0
      %4247 = vmatmul.mubr.f32.gmra.mrb[0].mxu0 %v4177
      %v4248 = vpop.f32.mrb[0].mxu0
      %v4249 = vadd.f32 0.0, %v4248
      %v4250 = vpop.f32.mrb[0].mxu0
      %v4251 = vadd.f32 0.0, %v4250
      %4252 = vmatprep.mubr.f32.mxu0 0.0
      %4253 = vmatmul.mubr.f32.gmra.mrb[0].mxu0 %v4180
      %v4254 = vpop.f32.mrb[0].mxu0
      %v4255 = vadd.f32 0.0, %v4254
      %v4256 = vpop.f32.mrb[0].mxu0
      %v4257 = vadd.f32 0.0, %v4256
      %4258 = vdwg.mxu0
      %4259 = vmatprep.subr.mxu0 %v649
      %4260 = vmatpush1.msra.mxu0 %v648
      %4261 = vmatprep.subr.mxu0 %v655
      %4262 = vmatpush1.msra.mxu0 %v654
      %4263 = vmatprep.subr.mxu0 %v661
      %4264 = vmatpush1.msra.mxu0 %v660
      %4265 = vmatprep.subr.mxu0 %v667
      %4266 = vmatpush1.msra.mxu0 %v666
      %4267 = vmatprep.subr.mxu0 0.0
      %4268 = vmatpush1.msra.mxu0 0.0
      %4269 = vmatprep.subr.mxu0 0.0
      %4270 = vmatpush1.msra.mxu0 0.0
      %4271 = vmatprep.subr.mxu0 0.0
      %4272 = vmatpush1.msra.mxu0 0.0
      %4273 = vmatprep.subr.mxu0 0.0
      %4274 = vmatpush1.msra.mxu0 0.0
      %4275 = vmatprep.subr.mxu0 0.0
      %4276 = vmatpush1.msra.mxu0 0.0
      %4277 = vmatprep.subr.mxu0 0.0
      %4278 = vmatpush1.msra.mxu0 0.0
      %4279 = vmatprep.subr.mxu0 0.0
      %4280 = vmatpush1.msra.mxu0 0.0
      %4281 = vmatprep.subr.mxu0 0.0
      %4282 = vmatpush1.msra.mxu0 0.0
      %4283 = vmatprep.subr.mxu0 0.0
      %4284 = vmatpush1.msra.mxu0 0.0
      %4285 = vmatprep.subr.mxu0 0.0
      %4286 = vmatpush1.msra.mxu0 0.0
      %4287 = vmatprep.subr.mxu0 0.0
      %4288 = vmatpush1.msra.mxu0 0.0
      %4289 = vmatprep.subr.mxu0 0.0
      %4290 = vmatpush1.msra.mxu0 0.0
      %4291 = vmatprep.subr.mxu0 0.0
      %4292 = vmatpush1.msra.mxu0 0.0
      %4293 = vmatprep.subr.mxu0 0.0
      %4294 = vmatpush1.msra.mxu0 0.0
      %4295 = vmatprep.subr.mxu0 0.0
      %4296 = vmatpush1.msra.mxu0 0.0
      %4297 = vmatprep.subr.mxu0 0.0
      %4298 = vmatpush1.msra.mxu0 0.0
      %4299 = vmatprep.subr.mxu0 0.0
      %4300 = vmatpush1.msra.mxu0 0.0
      %4301 = vmatprep.subr.mxu0 0.0
      %4302 = vmatpush1.msra.mxu0 0.0
      %4303 = vmatprep.subr.mxu0 0.0
      %4304 = vmatpush1.msra.mxu0 0.0
      %4305 = vmatprep.subr.mxu0 0.0
      %4306 = vmatpush1.msra.mxu0 0.0
      %4307 = vmatprep.subr.mxu0 0.0
      %4308 = vmatpush1.msra.mxu0 0.0
      %4309 = vmatprep.subr.mxu0 0.0
      %4310 = vmatpush1.msra.mxu0 0.0
      %4311 = vmatprep.subr.mxu0 0.0
      %4312 = vmatpush1.msra.mxu0 0.0
      %4313 = vmatprep.subr.mxu0 0.0
      %4314 = vmatpush1.msra.mxu0 0.0
      %4315 = vmatprep.subr.mxu0 0.0
      %4316 = vmatpush1.msra.mxu0 0.0
      %4317 = vmatprep.subr.mxu0 0.0
      %4318 = vmatpush1.msra.mxu0 0.0
      %4319 = vmatprep.subr.mxu0 0.0
      %4320 = vmatpush1.msra.mxu0 0.0
      %4321 = vmatprep.subr.mxu0 0.0
      %4322 = vmatpush1.msra.mxu0 0.0
      %4323 = vmatprep.mubr.f32.mxu0 0.0
      %4324 = vmatmul.mubr.f32.gmra.mrb[0].mxu0 %v4177
      %v4325 = vpop.f32.mrb[0].mxu0
      %v4326 = vadd.f32 0.0, %v4325
      %v4327 = vpop.f32.mrb[0].mxu0
      %v4328 = vadd.f32 0.0, %v4327
      %4329 = vmatprep.mubr.f32.mxu0 0.0
      %4330 = vmatmul.mubr.f32.gmra.mrb[0].mxu0 %v4180
      %v4331 = vpop.f32.mrb[0].mxu0
      %v4332 = vadd.f32 0.0, %v4331
      %v4333 = vpop.f32.mrb[0].mxu0
      %v4334 = vadd.f32 0.0, %v4333
      %4335 = vdwg.mxu0
      %4336 = vmatprep.subr.mxu0 %v651
      %4337 = vmatpush1.msra.mxu0 %v650
      %4338 = vmatprep.subr.mxu0 %v657
      %4339 = vmatpush1.msra.mxu0 %v656
      %4340 = vmatprep.subr.mxu0 %v663
      %4341 = vmatpush1.msra.mxu0 %v662
      %4342 = vmatprep.subr.mxu0 %v669
      %4343 = vmatpush1.msra.mxu0 %v668
      %4344 = vmatprep.subr.mxu0 0.0
      %4345 = vmatpush1.msra.mxu0 0.0
      %4346 = vmatprep.subr.mxu0 0.0
      %4347 = vmatpush1.msra.mxu0 0.0
      %4348 = vmatprep.subr.mxu0 0.0
      %4349 = vmatpush1.msra.mxu0 0.0
      %4350 = vmatprep.subr.mxu0 0.0
      %4351 = vmatpush1.msra.mxu0 0.0
      %4352 = vmatprep.subr.mxu0 0.0
      %4353 = vmatpush1.msra.mxu0 0.0
      %4354 = vmatprep.subr.mxu0 0.0
      %4355 = vmatpush1.msra.mxu0 0.0
      %4356 = vmatprep.subr.mxu0 0.0
      %4357 = vmatpush1.msra.mxu0 0.0
      %4358 = vmatprep.subr.mxu0 0.0
      %4359 = vmatpush1.msra.mxu0 0.0
      %4360 = vmatprep.subr.mxu0 0.0
      %4361 = vmatpush1.msra.mxu0 0.0
      %4362 = vmatprep.subr.mxu0 0.0
      %4363 = vmatpush1.msra.mxu0 0.0
      %4364 = vmatprep.subr.mxu0 0.0
      %4365 = vmatpush1.msra.mxu0 0.0
      %4366 = vmatprep.subr.mxu0 0.0
      %4367 = vmatpush1.msra.mxu0 0.0
      %4368 = vmatprep.subr.mxu0 0.0
      %4369 = vmatpush1.msra.mxu0 0.0
      %4370 = vmatprep.subr.mxu0 0.0
      %4371 = vmatpush1.msra.mxu0 0.0
      %4372 = vmatprep.subr.mxu0 0.0
      %4373 = vmatpush1.msra.mxu0 0.0
      %4374 = vmatprep.subr.mxu0 0.0
      %4375 = vmatpush1.msra.mxu0 0.0
      %4376 = vmatprep.subr.mxu0 0.0
      %4377 = vmatpush1.msra.mxu0 0.0
      %4378 = vmatprep.subr.mxu0 0.0
      %4379 = vmatpush1.msra.mxu0 0.0
      %4380 = vmatprep.subr.mxu0 0.0
      %4381 = vmatpush1.msra.mxu0 0.0
      %4382 = vmatprep.subr.mxu0 0.0
      %4383 = vmatpush1.msra.mxu0 0.0
      %4384 = vmatprep.subr.mxu0 0.0
      %4385 = vmatpush1.msra.mxu0 0.0
      %4386 = vmatprep.subr.mxu0 0.0
      %4387 = vmatpush1.msra.mxu0 0.0
      %4388 = vmatprep.subr.mxu0 0.0
      %4389 = vmatpush1.msra.mxu0 0.0
      %4390 = vmatprep.subr.mxu0 0.0
      %4391 = vmatpush1.msra.mxu0 0.0
      %4392 = vmatprep.subr.mxu0 0.0
      %4393 = vmatpush1.msra.mxu0 0.0
      %4394 = vmatprep.subr.mxu0 0.0
      %4395 = vmatpush1.msra.mxu0 0.0
      %4396 = vmatprep.subr.mxu0 0.0
      %4397 = vmatpush1.msra.mxu0 0.0
      %4398 = vmatprep.subr.mxu0 0.0
      %4399 = vmatpush1.msra.mxu0 0.0
      %4400 = vmatprep.mubr.f32.mxu0 0.0
      %4401 = vmatmul.mubr.f32.gmra.mrb[0].mxu0 %v4177
      %v4402 = vpop.f32.mrb[0].mxu0
      %v4403 = vadd.f32 0.0, %v4402
      %v4404 = vpop.f32.mrb[0].mxu0
      %v4405 = vadd.f32 0.0, %v4404
      %4406 = vmatprep.mubr.f32.mxu0 0.0
      %4407 = vmatmul.mubr.f32.gmra.mrb[0].mxu0 %v4180
      %v4408 = vpop.f32.mrb[0].mxu0
      %v4409 = vadd.f32 0.0, %v4408
      %v4410 = vpop.f32.mrb[0].mxu0
      %v4411 = vadd.f32 0.0, %v4410
      %4412 = vdwg.mxu0
      %4413 = vmatprep.subr.mxu0 0.0
      %4414 = vmatpush1.xpose.msra.mxu0 %v4177
      %4415 = vmatprep.subr.mxu0 0.0
      %4416 = vmatpush1.xpose.msra.mxu0 %v4180
      %4417 = vmatprep.subr.mxu0 0.0
      %4418 = vmatpush1.xpose.msra.mxu0 0.0
      %4419 = vmatprep.subr.mxu0 0.0
      %4420 = vmatpush1.xpose.msra.mxu0 0.0
      %4421 = vmatprep.subr.mxu0 0.0
      %4422 = vmatpush1.xpose.msra.mxu0 0.0
      %4423 = vmatprep.subr.mxu0 0.0
      %4424 = vmatpush1.xpose.msra.mxu0 0.0
      %4425 = vmatprep.subr.mxu0 0.0
      %4426 = vmatpush1.xpose.msra.mxu0 0.0
      %4427 = vmatprep.subr.mxu0 0.0
      %4428 = vmatpush1.xpose.msra.mxu0 0.0
      %4429 = vmatprep.subr.mxu0 0.0
      %4430 = vmatpush1.xpose.msra.mxu0 0.0
      %4431 = vmatprep.subr.mxu0 0.0
      %4432 = vmatpush1.xpose.msra.mxu0 0.0
      %4433 = vmatprep.subr.mxu0 0.0
      %4434 = vmatpush1.xpose.msra.mxu0 0.0
      %4435 = vmatprep.subr.mxu0 0.0
      %4436 = vmatpush1.xpose.msra.mxu0 0.0
      %4437 = vmatprep.subr.mxu0 0.0
      %4438 = vmatpush1.xpose.msra.mxu0 0.0
      %4439 = vmatprep.subr.mxu0 0.0
      %4440 = vmatpush1.xpose.msra.mxu0 0.0
      %4441 = vmatprep.subr.mxu0 0.0
      %4442 = vmatpush1.xpose.msra.mxu0 0.0
      %4443 = vmatprep.subr.mxu0 0.0
      %4444 = vmatpush1.xpose.msra.mxu0 0.0
      %4445 = vmatprep.subr.mxu0 0.0
      %4446 = vmatpush1.xpose.msra.mxu0 0.0
      %4447 = vmatprep.subr.mxu0 0.0
      %4448 = vmatpush1.xpose.msra.mxu0 0.0
      %4449 = vmatprep.subr.mxu0 0.0
      %4450 = vmatpush1.xpose.msra.mxu0 0.0
      %4451 = vmatprep.subr.mxu0 0.0
      %4452 = vmatpush1.xpose.msra.mxu0 0.0
      %4453 = vmatprep.subr.mxu0 0.0
      %4454 = vmatpush1.xpose.msra.mxu0 0.0
      %4455 = vmatprep.subr.mxu0 0.0
      %4456 = vmatpush1.xpose.msra.mxu0 0.0
      %4457 = vmatprep.subr.mxu0 0.0
      %4458 = vmatpush1.xpose.msra.mxu0 0.0
      %4459 = vmatprep.subr.mxu0 0.0
      %4460 = vmatpush1.xpose.msra.mxu0 0.0
      %4461 = vmatprep.subr.mxu0 0.0
      %4462 = vmatpush1.xpose.msra.mxu0 0.0
      %4463 = vmatprep.subr.mxu0 0.0
      %4464 = vmatpush1.xpose.msra.mxu0 0.0
      %4465 = vmatprep.subr.mxu0 0.0
      %4466 = vmatpush1.xpose.msra.mxu0 0.0
      %4467 = vmatprep.subr.mxu0 0.0
      %4468 = vmatpush1.xpose.msra.mxu0 0.0
      %4469 = vmatprep.subr.mxu0 0.0
      %4470 = vmatpush1.xpose.msra.mxu0 0.0
      %4471 = vmatprep.subr.mxu0 0.0
      %4472 = vmatpush1.xpose.msra.mxu0 0.0
      %4473 = vmatprep.subr.mxu0 0.0
      %4474 = vmatpush1.xpose.msra.mxu0 0.0
      %4475 = vmatprep.subr.mxu0 0.0
      %4476 = vmatpush1.xpose.msra.mxu0 0.0
      %4477 = vmatprep.mubr.f32.mxu0 0.0
      %4478 = vmatmul.mubr.f32.gmra.mrb[0].mxu0 %v4177
      %v4479 = vpop.f32.mrb[0].mxu0
      %v4480 = vadd.f32 0.0, %v4479
      %v4481 = vpop.f32.mrb[0].mxu0
      %4482 = vmatprep.mubr.f32.mxu0 0.0
      %4483 = vmatmul.mubr.f32.gmra.mrb[0].mxu0 %v4180
      %v4484 = vpop.f32.mrb[0].mxu0
      %v4485 = vadd.f32 0.0, %v4484
      %v4486 = vpop.f32.mrb[0].mxu0
      %4487 = vdwg.mxu0
      %v4488 = vmul.f32 %v3627, %v4249
      %v4489 = vmul.f32 %v3628, %v4251
      %v4490 = vmul.f32 %v3629, %v4326
      %v4491 = vmul.f32 %v3630, %v4328
      %v4492 = vmul.f32 %v3631, %v4403
      %v4493 = vmul.f32 %v3632, %v4405
      %v4494 = vmul.f32 %v3633, %v4255
      %v4495 = vmul.f32 %v3634, %v4257
      %v4496 = vmul.f32 %v3635, %v4332
      %v4497 = vmul.f32 %v3636, %v4334
      %v4498 = vmul.f32 %v3637, %v4409
      %v4499 = vmul.f32 %v3638, %v4411
      %v4501 = vsel %vm1133, %v4480, 0
      %v4504 = vsel %vm1133, %v4485, 0
      %4506 = vmatprep.subr.mxu0 %v3628
      %4507 = vmatpush1.msra.mxu0 %v3627
      %4508 = vmatprep.subr.mxu0 %v3634
      %4509 = vmatpush1.msra.mxu0 %v3633
      %4510 = vmatprep.subr.mxu0 0.0
      %4511 = vmatpush1.msra.mxu0 0.0
      %4512 = vmatprep.subr.mxu0 0.0
      %4513 = vmatpush1.msra.mxu0 0.0
      %4514 = vmatprep.subr.mxu0 0.0
      %4515 = vmatpush1.msra.mxu0 0.0
      %4516 = vmatprep.subr.mxu0 0.0
      %4517 = vmatpush1.msra.mxu0 0.0
      %4518 = vmatprep.subr.mxu0 0.0
      %4519 = vmatpush1.msra.mxu0 0.0
      %4520 = vmatprep.subr.mxu0 0.0
      %4521 = vmatpush1.msra.mxu0 0.0
      %4522 = vmatprep.subr.mxu0 0.0
      %4523 = vmatpush1.msra.mxu0 0.0
      %4524 = vmatprep.subr.mxu0 0.0
      %4525 = vmatpush1.msra.mxu0 0.0
      %4526 = vmatprep.subr.mxu0 0.0
      %4527 = vmatpush1.msra.mxu0 0.0
      %4528 = vmatprep.subr.mxu0 0.0
      %4529 = vmatpush1.msra.mxu0 0.0
      %4530 = vmatprep.subr.mxu0 0.0
      %4531 = vmatpush1.msra.mxu0 0.0
      %4532 = vmatprep.subr.mxu0 0.0
      %4533 = vmatpush1.msra.mxu0 0.0
      %4534 = vmatprep.subr.mxu0 0.0
      %4535 = vmatpush1.msra.mxu0 0.0
      %4536 = vmatprep.subr.mxu0 0.0
      %4537 = vmatpush1.msra.mxu0 0.0
      %4538 = vmatprep.subr.mxu0 0.0
      %4539 = vmatpush1.msra.mxu0 0.0
      %4540 = vmatprep.subr.mxu0 0.0
      %4541 = vmatpush1.msra.mxu0 0.0
      %4542 = vmatprep.subr.mxu0 0.0
      %4543 = vmatpush1.msra.mxu0 0.0
      %4544 = vmatprep.subr.mxu0 0.0
      %4545 = vmatpush1.msra.mxu0 0.0
      %4546 = vmatprep.subr.mxu0 0.0
      %4547 = vmatpush1.msra.mxu0 0.0
      %4548 = vmatprep.subr.mxu0 0.0
      %4549 = vmatpush1.msra.mxu0 0.0
      %4550 = vmatprep.subr.mxu0 0.0
      %4551 = vmatpush1.msra.mxu0 0.0
      %4552 = vmatprep.subr.mxu0 0.0
      %4553 = vmatpush1.msra.mxu0 0.0
      %4554 = vmatprep.subr.mxu0 0.0
      %4555 = vmatpush1.msra.mxu0 0.0
      %4556 = vmatprep.subr.mxu0 0.0
      %4557 = vmatpush1.msra.mxu0 0.0
      %4558 = vmatprep.subr.mxu0 0.0
      %4559 = vmatpush1.msra.mxu0 0.0
      %4560 = vmatprep.subr.mxu0 0.0
      %4561 = vmatpush1.msra.mxu0 0.0
      %4562 = vmatprep.subr.mxu0 0.0
      %4563 = vmatpush1.msra.mxu0 0.0
      %4564 = vmatprep.subr.mxu0 0.0
      %4565 = vmatpush1.msra.mxu0 0.0
      %4566 = vmatprep.subr.mxu0 0.0
      %4567 = vmatpush1.msra.mxu0 0.0
      %4568 = vmatprep.subr.mxu0 0.0
      %4569 = vmatpush1.msra.mxu0 0.0
      %4570 = vmatprep.mubr.f32.mxu0 0.0
      %4571 = vmatmul.mubr.f32.gmra.mrb[0].mxu0 %v4501
      %v4572 = vpop.f32.mrb[0].mxu0
      %v4573 = vadd.f32 1e-06, %v4572
      %v4574 = vpop.f32.mrb[0].mxu0
      %v4575 = vadd.f32 1e-06, %v4574
      %4576 = vmatprep.mubr.f32.mxu0 0.0
      %4577 = vmatmul.mubr.f32.gmra.mrb[0].mxu0 %v4504
      %v4578 = vpop.f32.mrb[0].mxu0
      %v4579 = vadd.f32 1e-06, %v4578
      %v4580 = vpop.f32.mrb[0].mxu0
      %v4581 = vadd.f32 1e-06, %v4580
      %4582 = vdwg.mxu0
      %4583 = vmatprep.subr.mxu0 %v3630
      %4584 = vmatpush1.msra.mxu0 %v3629
      %4585 = vmatprep.subr.mxu0 %v3636
      %4586 = vmatpush1.msra.mxu0 %v3635
      %4587 = vmatprep.subr.mxu0 0.0
      %4588 = vmatpush1.msra.mxu0 0.0
      %4589 = vmatprep.subr.mxu0 0.0
      %4590 = vmatpush1.msra.mxu0 0.0
      %4591 = vmatprep.subr.mxu0 0.0
      %4592 = vmatpush1.msra.mxu0 0.0
      %4593 = vmatprep.subr.mxu0 0.0
      %4594 = vmatpush1.msra.mxu0 0.0
      %4595 = vmatprep.subr.mxu0 0.0
      %4596 = vmatpush1.msra.mxu0 0.0
      %4597 = vmatprep.subr.mxu0 0.0
      %4598 = vmatpush1.msra.mxu0 0.0
      %4599 = vmatprep.subr.mxu0 0.0
      %4600 = vmatpush1.msra.mxu0 0.0
      %4601 = vmatprep.subr.mxu0 0.0
      %4602 = vmatpush1.msra.mxu0 0.0
      %4603 = vmatprep.subr.mxu0 0.0
      %4604 = vmatpush1.msra.mxu0 0.0
      %4605 = vmatprep.subr.mxu0 0.0
      %4606 = vmatpush1.msra.mxu0 0.0
      %4607 = vmatprep.subr.mxu0 0.0
      %4608 = vmatpush1.msra.mxu0 0.0
      %4609 = vmatprep.subr.mxu0 0.0
      %4610 = vmatpush1.msra.mxu0 0.0
      %4611 = vmatprep.subr.mxu0 0.0
      %4612 = vmatpush1.msra.mxu0 0.0
      %4613 = vmatprep.subr.mxu0 0.0
      %4614 = vmatpush1.msra.mxu0 0.0
      %4615 = vmatprep.subr.mxu0 0.0
      %4616 = vmatpush1.msra.mxu0 0.0
      %4617 = vmatprep.subr.mxu0 0.0
      %4618 = vmatpush1.msra.mxu0 0.0
      %4619 = vmatprep.subr.mxu0 0.0
      %4620 = vmatpush1.msra.mxu0 0.0
      %4621 = vmatprep.subr.mxu0 0.0
      %4622 = vmatpush1.msra.mxu0 0.0
      %4623 = vmatprep.subr.mxu0 0.0
      %4624 = vmatpush1.msra.mxu0 0.0
      %4625 = vmatprep.subr.mxu0 0.0
      %4626 = vmatpush1.msra.mxu0 0.0
      %4627 = vmatprep.subr.mxu0 0.0
      %4628 = vmatpush1.msra.mxu0 0.0
      %4629 = vmatprep.subr.mxu0 0.0
      %4630 = vmatpush1.msra.mxu0 0.0
      %4631 = vmatprep.subr.mxu0 0.0
      %4632 = vmatpush1.msra.mxu0 0.0
      %4633 = vmatprep.subr.mxu0 0.0
      %4634 = vmatpush1.msra.mxu0 0.0
      %4635 = vmatprep.subr.mxu0 0.0
      %4636 = vmatpush1.msra.mxu0 0.0
      %4637 = vmatprep.subr.mxu0 0.0
      %4638 = vmatpush1.msra.mxu0 0.0
      %4639 = vmatprep.subr.mxu0 0.0
      %4640 = vmatpush1.msra.mxu0 0.0
      %4641 = vmatprep.subr.mxu0 0.0
      %4642 = vmatpush1.msra.mxu0 0.0
      %4643 = vmatprep.subr.mxu0 0.0
      %4644 = vmatpush1.msra.mxu0 0.0
      %4645 = vmatprep.subr.mxu0 0.0
      %4646 = vmatpush1.msra.mxu0 0.0
      %4647 = vmatprep.mubr.f32.mxu0 0.0
      %4648 = vmatmul.mubr.f32.gmra.mrb[0].mxu0 %v4501
      %v4649 = vpop.f32.mrb[0].mxu0
      %v4650 = vadd.f32 1e-06, %v4649
      %v4651 = vpop.f32.mrb[0].mxu0
      %v4652 = vadd.f32 1e-06, %v4651
      %4653 = vmatprep.mubr.f32.mxu0 0.0
      %4654 = vmatmul.mubr.f32.gmra.mrb[0].mxu0 %v4504
      %v4655 = vpop.f32.mrb[0].mxu0
      %v4656 = vadd.f32 1e-06, %v4655
      %v4657 = vpop.f32.mrb[0].mxu0
      %v4658 = vadd.f32 1e-06, %v4657
      %4659 = vdwg.mxu0
      %4660 = vmatprep.subr.mxu0 %v3632
      %4661 = vmatpush1.msra.mxu0 %v3631
      %4662 = vmatprep.subr.mxu0 %v3638
      %4663 = vmatpush1.msra.mxu0 %v3637
      %4664 = vmatprep.subr.mxu0 0.0
      %4665 = vmatpush1.msra.mxu0 0.0
      %4666 = vmatprep.subr.mxu0 0.0
      %4667 = vmatpush1.msra.mxu0 0.0
      %4668 = vmatprep.subr.mxu0 0.0
      %4669 = vmatpush1.msra.mxu0 0.0
      %4670 = vmatprep.subr.mxu0 0.0
      %4671 = vmatpush1.msra.mxu0 0.0
      %4672 = vmatprep.subr.mxu0 0.0
      %4673 = vmatpush1.msra.mxu0 0.0
      %4674 = vmatprep.subr.mxu0 0.0
      %4675 = vmatpush1.msra.mxu0 0.0
      %4676 = vmatprep.subr.mxu0 0.0
      %4677 = vmatpush1.msra.mxu0 0.0
      %4678 = vmatprep.subr.mxu0 0.0
      %4679 = vmatpush1.msra.mxu0 0.0
      %4680 = vmatprep.subr.mxu0 0.0
      %4681 = vmatpush1.msra.mxu0 0.0
      %4682 = vmatprep.subr.mxu0 0.0
      %4683 = vmatpush1.msra.mxu0 0.0
      %4684 = vmatprep.subr.mxu0 0.0
      %4685 = vmatpush1.msra.mxu0 0.0
      %4686 = vmatprep.subr.mxu0 0.0
      %4687 = vmatpush1.msra.mxu0 0.0
      %4688 = vmatprep.subr.mxu0 0.0
      %4689 = vmatpush1.msra.mxu0 0.0
      %4690 = vmatprep.subr.mxu0 0.0
      %4691 = vmatpush1.msra.mxu0 0.0
      %4692 = vmatprep.subr.mxu0 0.0
      %4693 = vmatpush1.msra.mxu0 0.0
      %4694 = vmatprep.subr.mxu0 0.0
      %4695 = vmatpush1.msra.mxu0 0.0
      %4696 = vmatprep.subr.mxu0 0.0
      %4697 = vmatpush1.msra.mxu0 0.0
      %4698 = vmatprep.subr.mxu0 0.0
      %4699 = vmatpush1.msra.mxu0 0.0
      %4700 = vmatprep.subr.mxu0 0.0
      %4701 = vmatpush1.msra.mxu0 0.0
      %4702 = vmatprep.subr.mxu0 0.0
      %4703 = vmatpush1.msra.mxu0 0.0
      %4704 = vmatprep.subr.mxu0 0.0
      %4705 = vmatpush1.msra.mxu0 0.0
      %4706 = vmatprep.subr.mxu0 0.0
      %4707 = vmatpush1.msra.mxu0 0.0
      %4708 = vmatprep.subr.mxu0 0.0
      %4709 = vmatpush1.msra.mxu0 0.0
      %4710 = vmatprep.subr.mxu0 0.0
      %4711 = vmatpush1.msra.mxu0 0.0
      %4712 = vmatprep.subr.mxu0 0.0
      %4713 = vmatpush1.msra.mxu0 0.0
      %4714 = vmatprep.subr.mxu0 0.0
      %4715 = vmatpush1.msra.mxu0 0.0
      %4716 = vmatprep.subr.mxu0 0.0
      %4717 = vmatpush1.msra.mxu0 0.0
      %4718 = vmatprep.subr.mxu0 0.0
      %4719 = vmatpush1.msra.mxu0 0.0
      %4720 = vmatprep.subr.mxu0 0.0
      %4721 = vmatpush1.msra.mxu0 0.0
      %4722 = vmatprep.subr.mxu0 0.0
      %4723 = vmatpush1.msra.mxu0 0.0
      %4724 = vmatprep.mubr.f32.mxu0 0.0
      %4725 = vmatmul.mubr.f32.gmra.mrb[0].mxu0 %v4501
      %v4726 = vpop.f32.mrb[0].mxu0
      %v4727 = vadd.f32 1e-06, %v4726
      %v4728 = vpop.f32.mrb[0].mxu0
      %v4729 = vadd.f32 1e-06, %v4728
      %4730 = vmatprep.mubr.f32.mxu0 0.0
      %4731 = vmatmul.mubr.f32.gmra.mrb[0].mxu0 %v4504
      %v4732 = vpop.f32.mrb[0].mxu0
      %v4733 = vadd.f32 1e-06, %v4732
      %v4734 = vpop.f32.mrb[0].mxu0
      %v4735 = vadd.f32 1e-06, %v4734
      %4736 = vdwg.mxu0
      %v4737 = vrcp.pop %v4573
      %v4738 = vrcp.pop %v4575
      %v4739 = vrcp.pop %v4650
      %v4740 = vrcp.pop %v4652
      %v4741 = vrcp.pop %v4727
      %v4742 = vrcp.pop %v4729
      %v4743 = vrcp.pop %v4579
      %v4744 = vrcp.pop %v4581
      %v4745 = vrcp.pop %v4656
      %v4746 = vrcp.pop %v4658
      %v4747 = vrcp.pop %v4733
      %v4748 = vrcp.pop %v4735
      %v4749 = vmul.f32 %v4488, %v4737
      %v4750 = vmul.f32 %v4489, %v4738
      %v4751 = vmul.f32 %v4490, %v4739
      %v4752 = vmul.f32 %v4491, %v4740
      %v4753 = vmul.f32 %v4492, %v4741
      %v4754 = vmul.f32 %v4493, %v4742
      %v4755 = vmul.f32 %v4494, %v4743
      %v4756 = vmul.f32 %v4495, %v4744
      %v4757 = vmul.f32 %v4496, %v4745
      %v4758 = vmul.f32 %v4497, %v4746
      %v4759 = vmul.f32 %v4498, %v4747
      %v4760 = vmul.f32 %v4499, %v4748
      %4761 = vmatprep.subr.mxu0 %v647
      %4762 = vmatpush1.xpose.msra.mxu0 %v646
      %4763 = vmatprep.subr.mxu0 %v653
      %4764 = vmatpush1.xpose.msra.mxu0 %v652
      %4765 = vmatprep.subr.mxu0 %v659
      %4766 = vmatpush1.xpose.msra.mxu0 %v658
      %4767 = vmatprep.subr.mxu0 %v665
      %4768 = vmatpush1.xpose.msra.mxu0 %v664
      %4769 = vmatprep.subr.mxu0 0.0
      %4770 = vmatpush1.xpose.msra.mxu0 0.0
      %4771 = vmatprep.subr.mxu0 0.0
      %4772 = vmatpush1.xpose.msra.mxu0 0.0
      %4773 = vmatprep.subr.mxu0 0.0
      %4774 = vmatpush1.xpose.msra.mxu0 0.0
      %4775 = vmatprep.subr.mxu0 0.0
      %4776 = vmatpush1.xpose.msra.mxu0 0.0
      %4777 = vmatprep.subr.mxu0 0.0
      %4778 = vmatpush1.xpose.msra.mxu0 0.0
      %4779 = vmatprep.subr.mxu0 0.0
      %4780 = vmatpush1.xpose.msra.mxu0 0.0
      %4781 = vmatprep.subr.mxu0 0.0
      %4782 = vmatpush1.xpose.msra.mxu0 0.0
      %4783 = vmatprep.subr.mxu0 0.0
      %4784 = vmatpush1.xpose.msra.mxu0 0.0
      %4785 = vmatprep.subr.mxu0 0.0
      %4786 = vmatpush1.xpose.msra.mxu0 0.0
      %4787 = vmatprep.subr.mxu0 0.0
      %4788 = vmatpush1.xpose.msra.mxu0 0.0
      %4789 = vmatprep.subr.mxu0 0.0
      %4790 = vmatpush1.xpose.msra.mxu0 0.0
      %4791 = vmatprep.subr.mxu0 0.0
      %4792 = vmatpush1.xpose.msra.mxu0 0.0
      %4793 = vmatprep.subr.mxu0 0.0
      %4794 = vmatpush1.xpose.msra.mxu0 0.0
      %4795 = vmatprep.subr.mxu0 0.0
      %4796 = vmatpush1.xpose.msra.mxu0 0.0
      %4797 = vmatprep.subr.mxu0 0.0
      %4798 = vmatpush1.xpose.msra.mxu0 0.0
      %4799 = vmatprep.subr.mxu0 0.0
      %4800 = vmatpush1.xpose.msra.mxu0 0.0
      %4801 = vmatprep.subr.mxu0 0.0
      %4802 = vmatpush1.xpose.msra.mxu0 0.0
      %4803 = vmatprep.subr.mxu0 0.0
      %4804 = vmatpush1.xpose.msra.mxu0 0.0
      %4805 = vmatprep.subr.mxu0 0.0
      %4806 = vmatpush1.xpose.msra.mxu0 0.0
      %4807 = vmatprep.subr.mxu0 0.0
      %4808 = vmatpush1.xpose.msra.mxu0 0.0
      %4809 = vmatprep.subr.mxu0 0.0
      %4810 = vmatpush1.xpose.msra.mxu0 0.0
      %4811 = vmatprep.subr.mxu0 0.0
      %4812 = vmatpush1.xpose.msra.mxu0 0.0
      %4813 = vmatprep.subr.mxu0 0.0
      %4814 = vmatpush1.xpose.msra.mxu0 0.0
      %4815 = vmatprep.subr.mxu0 0.0
      %4816 = vmatpush1.xpose.msra.mxu0 0.0
      %4817 = vmatprep.subr.mxu0 0.0
      %4818 = vmatpush1.xpose.msra.mxu0 0.0
      %4819 = vmatprep.subr.mxu0 0.0
      %4820 = vmatpush1.xpose.msra.mxu0 0.0
      %4821 = vmatprep.subr.mxu0 0.0
      %4822 = vmatpush1.xpose.msra.mxu0 0.0
      %4823 = vmatprep.subr.mxu0 0.0
      %4824 = vmatpush1.xpose.msra.mxu0 0.0
      %4825 = vmatprep.mubr.f32.mxu0 %v4750
      %4826 = vmatmul.mubr.f32.gmra.mrb[0].mxu0 %v4749
      %v4827 = vpop.f32.mrb[0].mxu0
      %v4828 = vadd.f32 0.0, %v4827
      %v4829 = vpop.f32.mrb[0].mxu0
      %4830 = vmatprep.mubr.f32.mxu0 %v4756
      %4831 = vmatmul.mubr.f32.gmra.mrb[0].mxu0 %v4755
      %v4832 = vpop.f32.mrb[0].mxu0
      %v4833 = vadd.f32 0.0, %v4832
      %v4834 = vpop.f32.mrb[0].mxu0
      %4835 = vdwg.mxu0
      %4836 = vmatprep.subr.mxu0 %v649
      %4837 = vmatpush1.xpose.msra.mxu0 %v648
      %4838 = vmatprep.subr.mxu0 %v655
      %4839 = vmatpush1.xpose.msra.mxu0 %v654
      %4840 = vmatprep.subr.mxu0 %v661
      %4841 = vmatpush1.xpose.msra.mxu0 %v660
      %4842 = vmatprep.subr.mxu0 %v667
      %4843 = vmatpush1.xpose.msra.mxu0 %v666
      %4844 = vmatprep.subr.mxu0 0.0
      %4845 = vmatpush1.xpose.msra.mxu0 0.0
      %4846 = vmatprep.subr.mxu0 0.0
      %4847 = vmatpush1.xpose.msra.mxu0 0.0
      %4848 = vmatprep.subr.mxu0 0.0
      %4849 = vmatpush1.xpose.msra.mxu0 0.0
      %4850 = vmatprep.subr.mxu0 0.0
      %4851 = vmatpush1.xpose.msra.mxu0 0.0
      %4852 = vmatprep.subr.mxu0 0.0
      %4853 = vmatpush1.xpose.msra.mxu0 0.0
      %4854 = vmatprep.subr.mxu0 0.0
      %4855 = vmatpush1.xpose.msra.mxu0 0.0
      %4856 = vmatprep.subr.mxu0 0.0
      %4857 = vmatpush1.xpose.msra.mxu0 0.0
      %4858 = vmatprep.subr.mxu0 0.0
      %4859 = vmatpush1.xpose.msra.mxu0 0.0
      %4860 = vmatprep.subr.mxu0 0.0
      %4861 = vmatpush1.xpose.msra.mxu0 0.0
      %4862 = vmatprep.subr.mxu0 0.0
      %4863 = vmatpush1.xpose.msra.mxu0 0.0
      %4864 = vmatprep.subr.mxu0 0.0
      %4865 = vmatpush1.xpose.msra.mxu0 0.0
      %4866 = vmatprep.subr.mxu0 0.0
      %4867 = vmatpush1.xpose.msra.mxu0 0.0
      %4868 = vmatprep.subr.mxu0 0.0
      %4869 = vmatpush1.xpose.msra.mxu0 0.0
      %4870 = vmatprep.subr.mxu0 0.0
      %4871 = vmatpush1.xpose.msra.mxu0 0.0
      %4872 = vmatprep.subr.mxu0 0.0
      %4873 = vmatpush1.xpose.msra.mxu0 0.0
      %4874 = vmatprep.subr.mxu0 0.0
      %4875 = vmatpush1.xpose.msra.mxu0 0.0
      %4876 = vmatprep.subr.mxu0 0.0
      %4877 = vmatpush1.xpose.msra.mxu0 0.0
      %4878 = vmatprep.subr.mxu0 0.0
      %4879 = vmatpush1.xpose.msra.mxu0 0.0
      %4880 = vmatprep.subr.mxu0 0.0
      %4881 = vmatpush1.xpose.msra.mxu0 0.0
      %4882 = vmatprep.subr.mxu0 0.0
      %4883 = vmatpush1.xpose.msra.mxu0 0.0
      %4884 = vmatprep.subr.mxu0 0.0
      %4885 = vmatpush1.xpose.msra.mxu0 0.0
      %4886 = vmatprep.subr.mxu0 0.0
      %4887 = vmatpush1.xpose.msra.mxu0 0.0
      %4888 = vmatprep.subr.mxu0 0.0
      %4889 = vmatpush1.xpose.msra.mxu0 0.0
      %4890 = vmatprep.subr.mxu0 0.0
      %4891 = vmatpush1.xpose.msra.mxu0 0.0
      %4892 = vmatprep.subr.mxu0 0.0
      %4893 = vmatpush1.xpose.msra.mxu0 0.0
      %4894 = vmatprep.subr.mxu0 0.0
      %4895 = vmatpush1.xpose.msra.mxu0 0.0
      %4896 = vmatprep.subr.mxu0 0.0
      %4897 = vmatpush1.xpose.msra.mxu0 0.0
      %4898 = vmatprep.subr.mxu0 0.0
      %4899 = vmatpush1.xpose.msra.mxu0 0.0
      %4900 = vmatprep.mubr.f32.mxu0 %v4752
      %4901 = vmatmul.mubr.f32.gmra.mrb[0].mxu0 %v4751
      %v4902 = vpop.f32.mrb[0].mxu0
      %v4903 = vadd.f32 %v4828, %v4902
      %v4904 = vpop.f32.mrb[0].mxu0
      %4905 = vmatprep.mubr.f32.mxu0 %v4758
      %4906 = vmatmul.mubr.f32.gmra.mrb[0].mxu0 %v4757
      %v4907 = vpop.f32.mrb[0].mxu0
      %v4908 = vadd.f32 %v4833, %v4907
      %v4909 = vpop.f32.mrb[0].mxu0
      %4910 = vdwg.mxu0
      %4911 = vmatprep.subr.mxu0 %v651
      %4912 = vmatpush1.xpose.msra.mxu0 %v650
      %4913 = vmatprep.subr.mxu0 %v657
      %4914 = vmatpush1.xpose.msra.mxu0 %v656
      %4915 = vmatprep.subr.mxu0 %v663
      %4916 = vmatpush1.xpose.msra.mxu0 %v662
      %4917 = vmatprep.subr.mxu0 %v669
      %4918 = vmatpush1.xpose.msra.mxu0 %v668
      %4919 = vmatprep.subr.mxu0 0.0
      %4920 = vmatpush1.xpose.msra.mxu0 0.0
      %4921 = vmatprep.subr.mxu0 0.0
      %4922 = vmatpush1.xpose.msra.mxu0 0.0
      %4923 = vmatprep.subr.mxu0 0.0
      %4924 = vmatpush1.xpose.msra.mxu0 0.0
      %4925 = vmatprep.subr.mxu0 0.0
      %4926 = vmatpush1.xpose.msra.mxu0 0.0
      %4927 = vmatprep.subr.mxu0 0.0
      %4928 = vmatpush1.xpose.msra.mxu0 0.0
      %4929 = vmatprep.subr.mxu0 0.0
      %4930 = vmatpush1.xpose.msra.mxu0 0.0
      %4931 = vmatprep.subr.mxu0 0.0
      %4932 = vmatpush1.xpose.msra.mxu0 0.0
      %4933 = vmatprep.subr.mxu0 0.0
      %4934 = vmatpush1.xpose.msra.mxu0 0.0
      %4935 = vmatprep.subr.mxu0 0.0
      %4936 = vmatpush1.xpose.msra.mxu0 0.0
      %4937 = vmatprep.subr.mxu0 0.0
      %4938 = vmatpush1.xpose.msra.mxu0 0.0
      %4939 = vmatprep.subr.mxu0 0.0
      %4940 = vmatpush1.xpose.msra.mxu0 0.0
      %4941 = vmatprep.subr.mxu0 0.0
      %4942 = vmatpush1.xpose.msra.mxu0 0.0
      %4943 = vmatprep.subr.mxu0 0.0
      %4944 = vmatpush1.xpose.msra.mxu0 0.0
      %4945 = vmatprep.subr.mxu0 0.0
      %4946 = vmatpush1.xpose.msra.mxu0 0.0
      %4947 = vmatprep.subr.mxu0 0.0
      %4948 = vmatpush1.xpose.msra.mxu0 0.0
      %4949 = vmatprep.subr.mxu0 0.0
      %4950 = vmatpush1.xpose.msra.mxu0 0.0
      %4951 = vmatprep.subr.mxu0 0.0
      %4952 = vmatpush1.xpose.msra.mxu0 0.0
      %4953 = vmatprep.subr.mxu0 0.0
      %4954 = vmatpush1.xpose.msra.mxu0 0.0
      %4955 = vmatprep.subr.mxu0 0.0
      %4956 = vmatpush1.xpose.msra.mxu0 0.0
      %4957 = vmatprep.subr.mxu0 0.0
      %4958 = vmatpush1.xpose.msra.mxu0 0.0
      %4959 = vmatprep.subr.mxu0 0.0
      %4960 = vmatpush1.xpose.msra.mxu0 0.0
      %4961 = vmatprep.subr.mxu0 0.0
      %4962 = vmatpush1.xpose.msra.mxu0 0.0
      %4963 = vmatprep.subr.mxu0 0.0
      %4964 = vmatpush1.xpose.msra.mxu0 0.0
      %4965 = vmatprep.subr.mxu0 0.0
      %4966 = vmatpush1.xpose.msra.mxu0 0.0
      %4967 = vmatprep.subr.mxu0 0.0
      %4968 = vmatpush1.xpose.msra.mxu0 0.0
      %4969 = vmatprep.subr.mxu0 0.0
      %4970 = vmatpush1.xpose.msra.mxu0 0.0
      %4971 = vmatprep.subr.mxu0 0.0
      %4972 = vmatpush1.xpose.msra.mxu0 0.0
      %4973 = vmatprep.subr.mxu0 0.0
      %4974 = vmatpush1.xpose.msra.mxu0 0.0
      %4975 = vmatprep.mubr.f32.mxu0 %v4754
      %4976 = vmatmul.mubr.f32.gmra.mrb[0].mxu0 %v4753
      %v4977 = vpop.f32.mrb[0].mxu0
      %v4978 = vadd.f32 %v4903, %v4977
      %v4979 = vpop.f32.mrb[0].mxu0
      %4980 = vmatprep.mubr.f32.mxu0 %v4760
      %4981 = vmatmul.mubr.f32.gmra.mrb[0].mxu0 %v4759
      %v4982 = vpop.f32.mrb[0].mxu0
      %v4983 = vadd.f32 %v4908, %v4982
      %v4984 = vpop.f32.mrb[0].mxu0
      %4985 = vdwg.mxu0
      %4986 = vmatprep.subr.mxu0 %v4750
      %4987 = vmatpush1.xpose.msra.mxu0 %v4749
      %4988 = vmatprep.subr.mxu0 %v4756
      %4989 = vmatpush1.xpose.msra.mxu0 %v4755
      %4990 = vmatprep.subr.mxu0 0.0
      %4991 = vmatpush1.xpose.msra.mxu0 0.0
      %4992 = vmatprep.subr.mxu0 0.0
      %4993 = vmatpush1.xpose.msra.mxu0 0.0
      %4994 = vmatprep.subr.mxu0 0.0
      %4995 = vmatpush1.xpose.msra.mxu0 0.0
      %4996 = vmatprep.subr.mxu0 0.0
      %4997 = vmatpush1.xpose.msra.mxu0 0.0
      %4998 = vmatprep.subr.mxu0 0.0
      %4999 = vmatpush1.xpose.msra.mxu0 0.0
      %5000 = vmatprep.subr.mxu0 0.0
      %5001 = vmatpush1.xpose.msra.mxu0 0.0
      %5002 = vmatprep.subr.mxu0 0.0
      %5003 = vmatpush1.xpose.msra.mxu0 0.0
      %5004 = vmatprep.subr.mxu0 0.0
      %5005 = vmatpush1.xpose.msra.mxu0 0.0
      %5006 = vmatprep.subr.mxu0 0.0
      %5007 = vmatpush1.xpose.msra.mxu0 0.0
      %5008 = vmatprep.subr.mxu0 0.0
      %5009 = vmatpush1.xpose.msra.mxu0 0.0
      %5010 = vmatprep.subr.mxu0 0.0
      %5011 = vmatpush1.xpose.msra.mxu0 0.0
      %5012 = vmatprep.subr.mxu0 0.0
      %5013 = vmatpush1.xpose.msra.mxu0 0.0
      %5014 = vmatprep.subr.mxu0 0.0
      %5015 = vmatpush1.xpose.msra.mxu0 0.0
      %5016 = vmatprep.subr.mxu0 0.0
      %5017 = vmatpush1.xpose.msra.mxu0 0.0
      %5018 = vmatprep.subr.mxu0 0.0
      %5019 = vmatpush1.xpose.msra.mxu0 0.0
      %5020 = vmatprep.subr.mxu0 0.0
      %5021 = vmatpush1.xpose.msra.mxu0 0.0
      %5022 = vmatprep.subr.mxu0 0.0
      %5023 = vmatpush1.xpose.msra.mxu0 0.0
      %5024 = vmatprep.subr.mxu0 0.0
      %5025 = vmatpush1.xpose.msra.mxu0 0.0
      %5026 = vmatprep.subr.mxu0 0.0
      %5027 = vmatpush1.xpose.msra.mxu0 0.0
      %5028 = vmatprep.subr.mxu0 0.0
      %5029 = vmatpush1.xpose.msra.mxu0 0.0
      %5030 = vmatprep.subr.mxu0 0.0
      %5031 = vmatpush1.xpose.msra.mxu0 0.0
      %5032 = vmatprep.subr.mxu0 0.0
      %5033 = vmatpush1.xpose.msra.mxu0 0.0
      %5034 = vmatprep.subr.mxu0 0.0
      %5035 = vmatpush1.xpose.msra.mxu0 0.0
      %5036 = vmatprep.subr.mxu0 0.0
      %5037 = vmatpush1.xpose.msra.mxu0 0.0
      %5038 = vmatprep.subr.mxu0 0.0
      %5039 = vmatpush1.xpose.msra.mxu0 0.0
      %5040 = vmatprep.subr.mxu0 0.0
      %5041 = vmatpush1.xpose.msra.mxu0 0.0
      %5042 = vmatprep.subr.mxu0 0.0
      %5043 = vmatpush1.xpose.msra.mxu0 0.0
      %5044 = vmatprep.subr.mxu0 0.0
      %5045 = vmatpush1.xpose.msra.mxu0 0.0
      %5046 = vmatprep.subr.mxu0 0.0
      %5047 = vmatpush1.xpose.msra.mxu0 0.0
      %5048 = vmatprep.subr.mxu0 0.0
      %5049 = vmatpush1.xpose.msra.mxu0 0.0
      %5050 = vmatprep.mubr.f32.mxu0 %v4750
      %5051 = vmatmul.mubr.f32.gmra.mrb[0].mxu0 %v4749
      %v5052 = vpop.f32.mrb[0].mxu0
      %v5053 = vadd.f32 0.0, %v5052
      %v5054 = vpop.f32.mrb[0].mxu0
      %5055 = vmatprep.mubr.f32.mxu0 %v4756
      %5056 = vmatmul.mubr.f32.gmra.mrb[0].mxu0 %v4755
      %v5057 = vpop.f32.mrb[0].mxu0
      %v5058 = vadd.f32 0.0, %v5057
      %v5059 = vpop.f32.mrb[0].mxu0
      %5060 = vdwg.mxu0
      %5061 = vmatprep.subr.mxu0 %v4752
      %5062 = vmatpush1.xpose.msra.mxu0 %v4751
      %5063 = vmatprep.subr.mxu0 %v4758
      %5064 = vmatpush1.xpose.msra.mxu0 %v4757
      %5065 = vmatprep.subr.mxu0 0.0
      %5066 = vmatpush1.xpose.msra.mxu0 0.0
      %5067 = vmatprep.subr.mxu0 0.0
      %5068 = vmatpush1.xpose.msra.mxu0 0.0
      %5069 = vmatprep.subr.mxu0 0.0
      %5070 = vmatpush1.xpose.msra.mxu0 0.0
      %5071 = vmatprep.subr.mxu0 0.0
      %5072 = vmatpush1.xpose.msra.mxu0 0.0
      %5073 = vmatprep.subr.mxu0 0.0
      %5074 = vmatpush1.xpose.msra.mxu0 0.0
      %5075 = vmatprep.subr.mxu0 0.0
      %5076 = vmatpush1.xpose.msra.mxu0 0.0
      %5077 = vmatprep.subr.mxu0 0.0
      %5078 = vmatpush1.xpose.msra.mxu0 0.0
      %5079 = vmatprep.subr.mxu0 0.0
      %5080 = vmatpush1.xpose.msra.mxu0 0.0
      %5081 = vmatprep.subr.mxu0 0.0
      %5082 = vmatpush1.xpose.msra.mxu0 0.0
      %5083 = vmatprep.subr.mxu0 0.0
      %5084 = vmatpush1.xpose.msra.mxu0 0.0
      %5085 = vmatprep.subr.mxu0 0.0
      %5086 = vmatpush1.xpose.msra.mxu0 0.0
      %5087 = vmatprep.subr.mxu0 0.0
      %5088 = vmatpush1.xpose.msra.mxu0 0.0
      %5089 = vmatprep.subr.mxu0 0.0
      %5090 = vmatpush1.xpose.msra.mxu0 0.0
      %5091 = vmatprep.subr.mxu0 0.0
      %5092 = vmatpush1.xpose.msra.mxu0 0.0
      %5093 = vmatprep.subr.mxu0 0.0
      %5094 = vmatpush1.xpose.msra.mxu0 0.0
      %5095 = vmatprep.subr.mxu0 0.0
      %5096 = vmatpush1.xpose.msra.mxu0 0.0
      %5097 = vmatprep.subr.mxu0 0.0
      %5098 = vmatpush1.xpose.msra.mxu0 0.0
      %5099 = vmatprep.subr.mxu0 0.0
      %5100 = vmatpush1.xpose.msra.mxu0 0.0
      %5101 = vmatprep.subr.mxu0 0.0
      %5102 = vmatpush1.xpose.msra.mxu0 0.0
      %5103 = vmatprep.subr.mxu0 0.0
      %5104 = vmatpush1.xpose.msra.mxu0 0.0
      %5105 = vmatprep.subr.mxu0 0.0
      %5106 = vmatpush1.xpose.msra.mxu0 0.0
      %5107 = vmatprep.subr.mxu0 0.0
      %5108 = vmatpush1.xpose.msra.mxu0 0.0
      %5109 = vmatprep.subr.mxu0 0.0
      %5110 = vmatpush1.xpose.msra.mxu0 0.0
      %5111 = vmatprep.subr.mxu0 0.0
      %5112 = vmatpush1.xpose.msra.mxu0 0.0
      %5113 = vmatprep.subr.mxu0 0.0
      %5114 = vmatpush1.xpose.msra.mxu0 0.0
      %5115 = vmatprep.subr.mxu0 0.0
      %5116 = vmatpush1.xpose.msra.mxu0 0.0
      %5117 = vmatprep.subr.mxu0 0.0
      %5118 = vmatpush1.xpose.msra.mxu0 0.0
      %5119 = vmatprep.subr.mxu0 0.0
      %5120 = vmatpush1.xpose.msra.mxu0 0.0
      %5121 = vmatprep.subr.mxu0 0.0
      %5122 = vmatpush1.xpose.msra.mxu0 0.0
      %5123 = vmatprep.subr.mxu0 0.0
      %5124 = vmatpush1.xpose.msra.mxu0 0.0
      %5125 = vmatprep.mubr.f32.mxu0 %v4752
      %5126 = vmatmul.mubr.f32.gmra.mrb[0].mxu0 %v4751
      %v5127 = vpop.f32.mrb[0].mxu0
      %v5128 = vadd.f32 %v5053, %v5127
      %v5129 = vpop.f32.mrb[0].mxu0
      %5130 = vmatprep.mubr.f32.mxu0 %v4758
      %5131 = vmatmul.mubr.f32.gmra.mrb[0].mxu0 %v4757
      %v5132 = vpop.f32.mrb[0].mxu0
      %v5133 = vadd.f32 %v5058, %v5132
      %v5134 = vpop.f32.mrb[0].mxu0
      %5135 = vdwg.mxu0
      %5136 = vmatprep.subr.mxu0 %v4754
      %5137 = vmatpush1.xpose.msra.mxu0 %v4753
      %5138 = vmatprep.subr.mxu0 %v4760
      %5139 = vmatpush1.xpose.msra.mxu0 %v4759
      %5140 = vmatprep.subr.mxu0 0.0
      %5141 = vmatpush1.xpose.msra.mxu0 0.0
      %5142 = vmatprep.subr.mxu0 0.0
      %5143 = vmatpush1.xpose.msra.mxu0 0.0
      %5144 = vmatprep.subr.mxu0 0.0
      %5145 = vmatpush1.xpose.msra.mxu0 0.0
      %5146 = vmatprep.subr.mxu0 0.0
      %5147 = vmatpush1.xpose.msra.mxu0 0.0
      %5148 = vmatprep.subr.mxu0 0.0
      %5149 = vmatpush1.xpose.msra.mxu0 0.0
      %5150 = vmatprep.subr.mxu0 0.0
      %5151 = vmatpush1.xpose.msra.mxu0 0.0
      %5152 = vmatprep.subr.mxu0 0.0
      %5153 = vmatpush1.xpose.msra.mxu0 0.0
      %5154 = vmatprep.subr.mxu0 0.0
      %5155 = vmatpush1.xpose.msra.mxu0 0.0
      %5156 = vmatprep.subr.mxu0 0.0
      %5157 = vmatpush1.xpose.msra.mxu0 0.0
      %5158 = vmatprep.subr.mxu0 0.0
      %5159 = vmatpush1.xpose.msra.mxu0 0.0
      %5160 = vmatprep.subr.mxu0 0.0
      %5161 = vmatpush1.xpose.msra.mxu0 0.0
      %5162 = vmatprep.subr.mxu0 0.0
      %5163 = vmatpush1.xpose.msra.mxu0 0.0
      %5164 = vmatprep.subr.mxu0 0.0
      %5165 = vmatpush1.xpose.msra.mxu0 0.0
      %5166 = vmatprep.subr.mxu0 0.0
      %5167 = vmatpush1.xpose.msra.mxu0 0.0
      %5168 = vmatprep.subr.mxu0 0.0
      %5169 = vmatpush1.xpose.msra.mxu0 0.0
      %5170 = vmatprep.subr.mxu0 0.0
      %5171 = vmatpush1.xpose.msra.mxu0 0.0
      %5172 = vmatprep.subr.mxu0 0.0
      %5173 = vmatpush1.xpose.msra.mxu0 0.0
      %5174 = vmatprep.subr.mxu0 0.0
      %5175 = vmatpush1.xpose.msra.mxu0 0.0
      %5176 = vmatprep.subr.mxu0 0.0
      %5177 = vmatpush1.xpose.msra.mxu0 0.0
      %5178 = vmatprep.subr.mxu0 0.0
      %5179 = vmatpush1.xpose.msra.mxu0 0.0
      %5180 = vmatprep.subr.mxu0 0.0
      %5181 = vmatpush1.xpose.msra.mxu0 0.0
      %5182 = vmatprep.subr.mxu0 0.0
      %5183 = vmatpush1.xpose.msra.mxu0 0.0
      %5184 = vmatprep.subr.mxu0 0.0
      %5185 = vmatpush1.xpose.msra.mxu0 0.0
      %5186 = vmatprep.subr.mxu0 0.0
      %5187 = vmatpush1.xpose.msra.mxu0 0.0
      %5188 = vmatprep.subr.mxu0 0.0
      %5189 = vmatpush1.xpose.msra.mxu0 0.0
      %5190 = vmatprep.subr.mxu0 0.0
      %5191 = vmatpush1.xpose.msra.mxu0 0.0
      %5192 = vmatprep.subr.mxu0 0.0
      %5193 = vmatpush1.xpose.msra.mxu0 0.0
      %5194 = vmatprep.subr.mxu0 0.0
      %5195 = vmatpush1.xpose.msra.mxu0 0.0
      %5196 = vmatprep.subr.mxu0 0.0
      %5197 = vmatpush1.xpose.msra.mxu0 0.0
      %5198 = vmatprep.subr.mxu0 0.0
      %5199 = vmatpush1.xpose.msra.mxu0 0.0
      %5200 = vmatprep.mubr.f32.mxu0 %v4754
      %5201 = vmatmul.mubr.f32.gmra.mrb[0].mxu0 %v4753
      %v5202 = vpop.f32.mrb[0].mxu0
      %v5203 = vadd.f32 %v5128, %v5202
      %v5204 = vpop.f32.mrb[0].mxu0
      %5205 = vmatprep.mubr.f32.mxu0 %v4760
      %5206 = vmatmul.mubr.f32.gmra.mrb[0].mxu0 %v4759
      %v5207 = vpop.f32.mrb[0].mxu0
      %v5208 = vadd.f32 %v5133, %v5207
      %v5209 = vpop.f32.mrb[0].mxu0
      %5210 = vdwg.mxu0
      %v5211 = vmul.f32 %v4174, %v4978
      %v5212 = vmul.f32 %v4175, %v4983
      %v5214 = vsel %vm1133, %v5203, 0
      %v5217 = vsel %vm1133, %v5208, 0
      %5219 = vmatprep.subr.mxu0 0.0
      %5220 = vmatpush1.msra.mxu0 %v4174
      %5221 = vmatprep.subr.mxu0 0.0
      %5222 = vmatpush1.msra.mxu0 %v4175
      %5223 = vmatprep.subr.mxu0 0.0
      %5224 = vmatpush1.msra.mxu0 0.0
      %5225 = vmatprep.subr.mxu0 0.0
      %5226 = vmatpush1.msra.mxu0 0.0
      %5227 = vmatprep.subr.mxu0 0.0
      %5228 = vmatpush1.msra.mxu0 0.0
      %5229 = vmatprep.subr.mxu0 0.0
      %5230 = vmatpush1.msra.mxu0 0.0
      %5231 = vmatprep.subr.mxu0 0.0
      %5232 = vmatpush1.msra.mxu0 0.0
      %5233 = vmatprep.subr.mxu0 0.0
      %5234 = vmatpush1.msra.mxu0 0.0
      %5235 = vmatprep.subr.mxu0 0.0
      %5236 = vmatpush1.msra.mxu0 0.0
      %5237 = vmatprep.subr.mxu0 0.0
      %5238 = vmatpush1.msra.mxu0 0.0
      %5239 = vmatprep.subr.mxu0 0.0
      %5240 = vmatpush1.msra.mxu0 0.0
      %5241 = vmatprep.subr.mxu0 0.0
      %5242 = vmatpush1.msra.mxu0 0.0
      %5243 = vmatprep.subr.mxu0 0.0
      %5244 = vmatpush1.msra.mxu0 0.0
      %5245 = vmatprep.subr.mxu0 0.0
      %5246 = vmatpush1.msra.mxu0 0.0
      %5247 = vmatprep.subr.mxu0 0.0
      %5248 = vmatpush1.msra.mxu0 0.0
      %5249 = vmatprep.subr.mxu0 0.0
      %5250 = vmatpush1.msra.mxu0 0.0
      %5251 = vmatprep.subr.mxu0 0.0
      %5252 = vmatpush1.msra.mxu0 0.0
      %5253 = vmatprep.subr.mxu0 0.0
      %5254 = vmatpush1.msra.mxu0 0.0
      %5255 = vmatprep.subr.mxu0 0.0
      %5256 = vmatpush1.msra.mxu0 0.0
      %5257 = vmatprep.subr.mxu0 0.0
      %5258 = vmatpush1.msra.mxu0 0.0
      %5259 = vmatprep.subr.mxu0 0.0
      %5260 = vmatpush1.msra.mxu0 0.0
      %5261 = vmatprep.subr.mxu0 0.0
      %5262 = vmatpush1.msra.mxu0 0.0
      %5263 = vmatprep.subr.mxu0 0.0
      %5264 = vmatpush1.msra.mxu0 0.0
      %5265 = vmatprep.subr.mxu0 0.0
      %5266 = vmatpush1.msra.mxu0 0.0
      %5267 = vmatprep.subr.mxu0 0.0
      %5268 = vmatpush1.msra.mxu0 0.0
      %5269 = vmatprep.subr.mxu0 0.0
      %5270 = vmatpush1.msra.mxu0 0.0
      %5271 = vmatprep.subr.mxu0 0.0
      %5272 = vmatpush1.msra.mxu0 0.0
      %5273 = vmatprep.subr.mxu0 0.0
      %5274 = vmatpush1.msra.mxu0 0.0
      %5275 = vmatprep.subr.mxu0 0.0
      %5276 = vmatpush1.msra.mxu0 0.0
      %5277 = vmatprep.subr.mxu0 0.0
      %5278 = vmatpush1.msra.mxu0 0.0
      %5279 = vmatprep.subr.mxu0 0.0
      %5280 = vmatpush1.msra.mxu0 0.0
      %5281 = vmatprep.subr.mxu0 0.0
      %5282 = vmatpush1.msra.mxu0 0.0
      %5283 = vmatprep.mubr.f32.mxu0 0.0
      %5284 = vmatmul.mubr.f32.gmra.mrb[0].mxu0 %v5214
      %v5285 = vpop.f32.mrb[0].mxu0
      %v5286 = vadd.f32 1e-06, %v5285
      %v5287 = vpop.f32.mrb[0].mxu0
      %5288 = vmatprep.mubr.f32.mxu0 0.0
      %5289 = vmatmul.mubr.f32.gmra.mrb[0].mxu0 %v5217
      %v5290 = vpop.f32.mrb[0].mxu0
      %v5291 = vadd.f32 1e-06, %v5290
      %v5292 = vpop.f32.mrb[0].mxu0
      %5293 = vdwg.mxu0
      %v5294 = vrcp.pop %v5286
      %v5295 = vrcp.pop %v5291
      %v5296 = vmul.f32 %v5211, %v5294
      %v5297 = vmul.f32 %v5212, %v5295
      %v5299 = vsel %vm670, %v5296, 0
      %v5302 = vsel %vm670, %v5297, 0
      %5304 = vmatprep.subr.mxu0 %v647
      %5305 = vmatpush1.msra.mxu0 %v646
      %5306 = vmatprep.subr.mxu0 %v653
      %5307 = vmatpush1.msra.mxu0 %v652
      %5308 = vmatprep.subr.mxu0 %v659
      %5309 = vmatpush1.msra.mxu0 %v658
      %5310 = vmatprep.subr.mxu0 %v665
      %5311 = vmatpush1.msra.mxu0 %v664
      %5312 = vmatprep.subr.mxu0 0.0
      %5313 = vmatpush1.msra.mxu0 0.0
      %5314 = vmatprep.subr.mxu0 0.0
      %5315 = vmatpush1.msra.mxu0 0.0
      %5316 = vmatprep.subr.mxu0 0.0
      %5317 = vmatpush1.msra.mxu0 0.0
      %5318 = vmatprep.subr.mxu0 0.0
      %5319 = vmatpush1.msra.mxu0 0.0
      %5320 = vmatprep.subr.mxu0 0.0
      %5321 = vmatpush1.msra.mxu0 0.0
      %5322 = vmatprep.subr.mxu0 0.0
      %5323 = vmatpush1.msra.mxu0 0.0
      %5324 = vmatprep.subr.mxu0 0.0
      %5325 = vmatpush1.msra.mxu0 0.0
      %5326 = vmatprep.subr.mxu0 0.0
      %5327 = vmatpush1.msra.mxu0 0.0
      %5328 = vmatprep.subr.mxu0 0.0
      %5329 = vmatpush1.msra.mxu0 0.0
      %5330 = vmatprep.subr.mxu0 0.0
      %5331 = vmatpush1.msra.mxu0 0.0
      %5332 = vmatprep.subr.mxu0 0.0
      %5333 = vmatpush1.msra.mxu0 0.0
      %5334 = vmatprep.subr.mxu0 0.0
      %5335 = vmatpush1.msra.mxu0 0.0
      %5336 = vmatprep.subr.mxu0 0.0
      %5337 = vmatpush1.msra.mxu0 0.0
      %5338 = vmatprep.subr.mxu0 0.0
      %5339 = vmatpush1.msra.mxu0 0.0
      %5340 = vmatprep.subr.mxu0 0.0
      %5341 = vmatpush1.msra.mxu0 0.0
      %5342 = vmatprep.subr.mxu0 0.0
      %5343 = vmatpush1.msra.mxu0 0.0
      %5344 = vmatprep.subr.mxu0 0.0
      %5345 = vmatpush1.msra.mxu0 0.0
      %5346 = vmatprep.subr.mxu0 0.0
      %5347 = vmatpush1.msra.mxu0 0.0
      %5348 = vmatprep.subr.mxu0 0.0
      %5349 = vmatpush1.msra.mxu0 0.0
      %5350 = vmatprep.subr.mxu0 0.0
      %5351 = vmatpush1.msra.mxu0 0.0
      %5352 = vmatprep.subr.mxu0 0.0
      %5353 = vmatpush1.msra.mxu0 0.0
      %5354 = vmatprep.subr.mxu0 0.0
      %5355 = vmatpush1.msra.mxu0 0.0
      %5356 = vmatprep.subr.mxu0 0.0
      %5357 = vmatpush1.msra.mxu0 0.0
      %5358 = vmatprep.subr.mxu0 0.0
      %5359 = vmatpush1.msra.mxu0 0.0
      %5360 = vmatprep.subr.mxu0 0.0
      %5361 = vmatpush1.msra.mxu0 0.0
      %5362 = vmatprep.subr.mxu0 0.0
      %5363 = vmatpush1.msra.mxu0 0.0
      %5364 = vmatprep.subr.mxu0 0.0
      %5365 = vmatpush1.msra.mxu0 0.0
      %5366 = vmatprep.subr.mxu0 0.0
      %5367 = vmatpush1.msra.mxu0 0.0
      %5368 = vmatprep.mubr.f32.mxu0 0.0
      %5369 = vmatmul.mubr.f32.gmra.mrb[0].mxu0 %v5299
      %v5370 = vpop.f32.mrb[0].mxu0
      %v5371 = vadd.f32 0.0, %v5370
      %v5372 = vpop.f32.mrb[0].mxu0
      %v5373 = vadd.f32 0.0, %v5372
      %5374 = vmatprep.mubr.f32.mxu0 0.0
      %5375 = vmatmul.mubr.f32.gmra.mrb[0].mxu0 %v5302
      %v5376 = vpop.f32.mrb[0].mxu0
      %v5377 = vadd.f32 0.0, %v5376
      %v5378 = vpop.f32.mrb[0].mxu0
      %v5379 = vadd.f32 0.0, %v5378
      %5380 = vdwg.mxu0
      %5381 = vmatprep.subr.mxu0 %v649
      %5382 = vmatpush1.msra.mxu0 %v648
      %5383 = vmatprep.subr.mxu0 %v655
      %5384 = vmatpush1.msra.mxu0 %v654
      %5385 = vmatprep.subr.mxu0 %v661
      %5386 = vmatpush1.msra.mxu0 %v660
      %5387 = vmatprep.subr.mxu0 %v667
      %5388 = vmatpush1.msra.mxu0 %v666
      %5389 = vmatprep.subr.mxu0 0.0
      %5390 = vmatpush1.msra.mxu0 0.0
      %5391 = vmatprep.subr.mxu0 0.0
      %5392 = vmatpush1.msra.mxu0 0.0
      %5393 = vmatprep.subr.mxu0 0.0
      %5394 = vmatpush1.msra.mxu0 0.0
      %5395 = vmatprep.subr.mxu0 0.0
      %5396 = vmatpush1.msra.mxu0 0.0
      %5397 = vmatprep.subr.mxu0 0.0
      %5398 = vmatpush1.msra.mxu0 0.0
      %5399 = vmatprep.subr.mxu0 0.0
      %5400 = vmatpush1.msra.mxu0 0.0
      %5401 = vmatprep.subr.mxu0 0.0
      %5402 = vmatpush1.msra.mxu0 0.0
      %5403 = vmatprep.subr.mxu0 0.0
      %5404 = vmatpush1.msra.mxu0 0.0
      %5405 = vmatprep.subr.mxu0 0.0
      %5406 = vmatpush1.msra.mxu0 0.0
      %5407 = vmatprep.subr.mxu0 0.0
      %5408 = vmatpush1.msra.mxu0 0.0
      %5409 = vmatprep.subr.mxu0 0.0
      %5410 = vmatpush1.msra.mxu0 0.0
      %5411 = vmatprep.subr.mxu0 0.0
      %5412 = vmatpush1.msra.mxu0 0.0
      %5413 = vmatprep.subr.mxu0 0.0
      %5414 = vmatpush1.msra.mxu0 0.0
      %5415 = vmatprep.subr.mxu0 0.0
      %5416 = vmatpush1.msra.mxu0 0.0
      %5417 = vmatprep.subr.mxu0 0.0
      %5418 = vmatpush1.msra.mxu0 0.0
      %5419 = vmatprep.subr.mxu0 0.0
      %5420 = vmatpush1.msra.mxu0 0.0
      %5421 = vmatprep.subr.mxu0 0.0
      %5422 = vmatpush1.msra.mxu0 0.0
      %5423 = vmatprep.subr.mxu0 0.0
      %5424 = vmatpush1.msra.mxu0 0.0
      %5425 = vmatprep.subr.mxu0 0.0
      %5426 = vmatpush1.msra.mxu0 0.0
      %5427 = vmatprep.subr.mxu0 0.0
      %5428 = vmatpush1.msra.mxu0 0.0
      %5429 = vmatprep.subr.mxu0 0.0
      %5430 = vmatpush1.msra.mxu0 0.0
      %5431 = vmatprep.subr.mxu0 0.0
      %5432 = vmatpush1.msra.mxu0 0.0
      %5433 = vmatprep.subr.mxu0 0.0
      %5434 = vmatpush1.msra.mxu0 0.0
      %5435 = vmatprep.subr.mxu0 0.0
      %5436 = vmatpush1.msra.mxu0 0.0
      %5437 = vmatprep.subr.mxu0 0.0
      %5438 = vmatpush1.msra.mxu0 0.0
      %5439 = vmatprep.subr.mxu0 0.0
      %5440 = vmatpush1.msra.mxu0 0.0
      %5441 = vmatprep.subr.mxu0 0.0
      %5442 = vmatpush1.msra.mxu0 0.0
      %5443 = vmatprep.subr.mxu0 0.0
      %5444 = vmatpush1.msra.mxu0 0.0
      %5445 = vmatprep.mubr.f32.mxu0 0.0
      %5446 = vmatmul.mubr.f32.gmra.mrb[0].mxu0 %v5299
      %v5447 = vpop.f32.mrb[0].mxu0
      %v5448 = vadd.f32 0.0, %v5447
      %v5449 = vpop.f32.mrb[0].mxu0
      %v5450 = vadd.f32 0.0, %v5449
      %5451 = vmatprep.mubr.f32.mxu0 0.0
      %5452 = vmatmul.mubr.f32.gmra.mrb[0].mxu0 %v5302
      %v5453 = vpop.f32.mrb[0].mxu0
      %v5454 = vadd.f32 0.0, %v5453
      %v5455 = vpop.f32.mrb[0].mxu0
      %v5456 = vadd.f32 0.0, %v5455
      %5457 = vdwg.mxu0
      %5458 = vmatprep.subr.mxu0 %v651
      %5459 = vmatpush1.msra.mxu0 %v650
      %5460 = vmatprep.subr.mxu0 %v657
      %5461 = vmatpush1.msra.mxu0 %v656
      %5462 = vmatprep.subr.mxu0 %v663
      %5463 = vmatpush1.msra.mxu0 %v662
      %5464 = vmatprep.subr.mxu0 %v669
      %5465 = vmatpush1.msra.mxu0 %v668
      %5466 = vmatprep.subr.mxu0 0.0
      %5467 = vmatpush1.msra.mxu0 0.0
      %5468 = vmatprep.subr.mxu0 0.0
      %5469 = vmatpush1.msra.mxu0 0.0
      %5470 = vmatprep.subr.mxu0 0.0
      %5471 = vmatpush1.msra.mxu0 0.0
      %5472 = vmatprep.subr.mxu0 0.0
      %5473 = vmatpush1.msra.mxu0 0.0
      %5474 = vmatprep.subr.mxu0 0.0
      %5475 = vmatpush1.msra.mxu0 0.0
      %5476 = vmatprep.subr.mxu0 0.0
      %5477 = vmatpush1.msra.mxu0 0.0
      %5478 = vmatprep.subr.mxu0 0.0
      %5479 = vmatpush1.msra.mxu0 0.0
      %5480 = vmatprep.subr.mxu0 0.0
      %5481 = vmatpush1.msra.mxu0 0.0
      %5482 = vmatprep.subr.mxu0 0.0
      %5483 = vmatpush1.msra.mxu0 0.0
      %5484 = vmatprep.subr.mxu0 0.0
      %5485 = vmatpush1.msra.mxu0 0.0
      %5486 = vmatprep.subr.mxu0 0.0
      %5487 = vmatpush1.msra.mxu0 0.0
      %5488 = vmatprep.subr.mxu0 0.0
      %5489 = vmatpush1.msra.mxu0 0.0
      %5490 = vmatprep.subr.mxu0 0.0
      %5491 = vmatpush1.msra.mxu0 0.0
      %5492 = vmatprep.subr.mxu0 0.0
      %5493 = vmatpush1.msra.mxu0 0.0
      %5494 = vmatprep.subr.mxu0 0.0
      %5495 = vmatpush1.msra.mxu0 0.0
      %5496 = vmatprep.subr.mxu0 0.0
      %5497 = vmatpush1.msra.mxu0 0.0
      %5498 = vmatprep.subr.mxu0 0.0
      %5499 = vmatpush1.msra.mxu0 0.0
      %5500 = vmatprep.subr.mxu0 0.0
      %5501 = vmatpush1.msra.mxu0 0.0
      %5502 = vmatprep.subr.mxu0 0.0
      %5503 = vmatpush1.msra.mxu0 0.0
      %5504 = vmatprep.subr.mxu0 0.0
      %5505 = vmatpush1.msra.mxu0 0.0
      %5506 = vmatprep.subr.mxu0 0.0
      %5507 = vmatpush1.msra.mxu0 0.0
      %5508 = vmatprep.subr.mxu0 0.0
      %5509 = vmatpush1.msra.mxu0 0.0
      %5510 = vmatprep.subr.mxu0 0.0
      %5511 = vmatpush1.msra.mxu0 0.0
      %5512 = vmatprep.subr.mxu0 0.0
      %5513 = vmatpush1.msra.mxu0 0.0
      %5514 = vmatprep.subr.mxu0 0.0
      %5515 = vmatpush1.msra.mxu0 0.0
      %5516 = vmatprep.subr.mxu0 0.0
      %5517 = vmatpush1.msra.mxu0 0.0
      %5518 = vmatprep.subr.mxu0 0.0
      %5519 = vmatpush1.msra.mxu0 0.0
      %5520 = vmatprep.subr.mxu0 0.0
      %5521 = vmatpush1.msra.mxu0 0.0
      %5522 = vmatprep.mubr.f32.mxu0 0.0
      %5523 = vmatmul.mubr.f32.gmra.mrb[0].mxu0 %v5299
      %v5524 = vpop.f32.mrb[0].mxu0
      %v5525 = vadd.f32 0.0, %v5524
      %v5526 = vpop.f32.mrb[0].mxu0
      %v5527 = vadd.f32 0.0, %v5526
      %5528 = vmatprep.mubr.f32.mxu0 0.0
      %5529 = vmatmul.mubr.f32.gmra.mrb[0].mxu0 %v5302
      %v5530 = vpop.f32.mrb[0].mxu0
      %v5531 = vadd.f32 0.0, %v5530
      %v5532 = vpop.f32.mrb[0].mxu0
      %v5533 = vadd.f32 0.0, %v5532
      %5534 = vdwg.mxu0
      %5535 = vmatprep.subr.mxu0 0.0
      %5536 = vmatpush1.xpose.msra.mxu0 %v5299
      %5537 = vmatprep.subr.mxu0 0.0
      %5538 = vmatpush1.xpose.msra.mxu0 %v5302
      %5539 = vmatprep.subr.mxu0 0.0
      %5540 = vmatpush1.xpose.msra.mxu0 0.0
      %5541 = vmatprep.subr.mxu0 0.0
      %5542 = vmatpush1.xpose.msra.mxu0 0.0
      %5543 = vmatprep.subr.mxu0 0.0
      %5544 = vmatpush1.xpose.msra.mxu0 0.0
      %5545 = vmatprep.subr.mxu0 0.0
      %5546 = vmatpush1.xpose.msra.mxu0 0.0
      %5547 = vmatprep.subr.mxu0 0.0
      %5548 = vmatpush1.xpose.msra.mxu0 0.0
      %5549 = vmatprep.subr.mxu0 0.0
      %5550 = vmatpush1.xpose.msra.mxu0 0.0
      %5551 = vmatprep.subr.mxu0 0.0
      %5552 = vmatpush1.xpose.msra.mxu0 0.0
      %5553 = vmatprep.subr.mxu0 0.0
      %5554 = vmatpush1.xpose.msra.mxu0 0.0
      %5555 = vmatprep.subr.mxu0 0.0
      %5556 = vmatpush1.xpose.msra.mxu0 0.0
      %5557 = vmatprep.subr.mxu0 0.0
      %5558 = vmatpush1.xpose.msra.mxu0 0.0
      %5559 = vmatprep.subr.mxu0 0.0
      %5560 = vmatpush1.xpose.msra.mxu0 0.0
      %5561 = vmatprep.subr.mxu0 0.0
      %5562 = vmatpush1.xpose.msra.mxu0 0.0
      %5563 = vmatprep.subr.mxu0 0.0
      %5564 = vmatpush1.xpose.msra.mxu0 0.0
      %5565 = vmatprep.subr.mxu0 0.0
      %5566 = vmatpush1.xpose.msra.mxu0 0.0
      %5567 = vmatprep.subr.mxu0 0.0
      %5568 = vmatpush1.xpose.msra.mxu0 0.0
      %5569 = vmatprep.subr.mxu0 0.0
      %5570 = vmatpush1.xpose.msra.mxu0 0.0
      %5571 = vmatprep.subr.mxu0 0.0
      %5572 = vmatpush1.xpose.msra.mxu0 0.0
      %5573 = vmatprep.subr.mxu0 0.0
      %5574 = vmatpush1.xpose.msra.mxu0 0.0
      %5575 = vmatprep.subr.mxu0 0.0
      %5576 = vmatpush1.xpose.msra.mxu0 0.0
      %5577 = vmatprep.subr.mxu0 0.0
      %5578 = vmatpush1.xpose.msra.mxu0 0.0
      %5579 = vmatprep.subr.mxu0 0.0
      %5580 = vmatpush1.xpose.msra.mxu0 0.0
      %5581 = vmatprep.subr.mxu0 0.0
      %5582 = vmatpush1.xpose.msra.mxu0 0.0
      %5583 = vmatprep.subr.mxu0 0.0
      %5584 = vmatpush1.xpose.msra.mxu0 0.0
      %5585 = vmatprep.subr.mxu0 0.0
      %5586 = vmatpush1.xpose.msra.mxu0 0.0
      %5587 = vmatprep.subr.mxu0 0.0
      %5588 = vmatpush1.xpose.msra.mxu0 0.0
      %5589 = vmatprep.subr.mxu0 0.0
      %5590 = vmatpush1.xpose.msra.mxu0 0.0
      %5591 = vmatprep.subr.mxu0 0.0
      %5592 = vmatpush1.xpose.msra.mxu0 0.0
      %5593 = vmatprep.subr.mxu0 0.0
      %5594 = vmatpush1.xpose.msra.mxu0 0.0
      %5595 = vmatprep.subr.mxu0 0.0
      %5596 = vmatpush1.xpose.msra.mxu0 0.0
      %5597 = vmatprep.subr.mxu0 0.0
      %5598 = vmatpush1.xpose.msra.mxu0 0.0
      %5599 = vmatprep.mubr.f32.mxu0 0.0
      %5600 = vmatmul.mubr.f32.gmra.mrb[0].mxu0 %v5299
      %v5601 = vpop.f32.mrb[0].mxu0
      %v5602 = vadd.f32 0.0, %v5601
      %v5603 = vpop.f32.mrb[0].mxu0
      %5604 = vmatprep.mubr.f32.mxu0 0.0
      %5605 = vmatmul.mubr.f32.gmra.mrb[0].mxu0 %v5302
      %v5606 = vpop.f32.mrb[0].mxu0
      %v5607 = vadd.f32 0.0, %v5606
      %v5608 = vpop.f32.mrb[0].mxu0
      %5609 = vdwg.mxu0
      %v5610 = vmul.f32 %v4749, %v5371
      %v5611 = vmul.f32 %v4750, %v5373
      %v5612 = vmul.f32 %v4751, %v5448
      %v5613 = vmul.f32 %v4752, %v5450
      %v5614 = vmul.f32 %v4753, %v5525
      %v5615 = vmul.f32 %v4754, %v5527
      %v5616 = vmul.f32 %v4755, %v5377
      %v5617 = vmul.f32 %v4756, %v5379
      %v5618 = vmul.f32 %v4757, %v5454
      %v5619 = vmul.f32 %v4758, %v5456
      %v5620 = vmul.f32 %v4759, %v5531
      %v5621 = vmul.f32 %v4760, %v5533
      %v5623 = vsel %vm1133, %v5602, 0
      %v5626 = vsel %vm1133, %v5607, 0
      %5628 = vmatprep.subr.mxu0 %v4750
      %5629 = vmatpush1.msra.mxu0 %v4749
      %5630 = vmatprep.subr.mxu0 %v4756
      %5631 = vmatpush1.msra.mxu0 %v4755
      %5632 = vmatprep.subr.mxu0 0.0
      %5633 = vmatpush1.msra.mxu0 0.0
      %5634 = vmatprep.subr.mxu0 0.0
      %5635 = vmatpush1.msra.mxu0 0.0
      %5636 = vmatprep.subr.mxu0 0.0
      %5637 = vmatpush1.msra.mxu0 0.0
      %5638 = vmatprep.subr.mxu0 0.0
      %5639 = vmatpush1.msra.mxu0 0.0
      %5640 = vmatprep.subr.mxu0 0.0
      %5641 = vmatpush1.msra.mxu0 0.0
      %5642 = vmatprep.subr.mxu0 0.0
      %5643 = vmatpush1.msra.mxu0 0.0
      %5644 = vmatprep.subr.mxu0 0.0
      %5645 = vmatpush1.msra.mxu0 0.0
      %5646 = vmatprep.subr.mxu0 0.0
      %5647 = vmatpush1.msra.mxu0 0.0
      %5648 = vmatprep.subr.mxu0 0.0
      %5649 = vmatpush1.msra.mxu0 0.0
      %5650 = vmatprep.subr.mxu0 0.0
      %5651 = vmatpush1.msra.mxu0 0.0
      %5652 = vmatprep.subr.mxu0 0.0
      %5653 = vmatpush1.msra.mxu0 0.0
      %5654 = vmatprep.subr.mxu0 0.0
      %5655 = vmatpush1.msra.mxu0 0.0
      %5656 = vmatprep.subr.mxu0 0.0
      %5657 = vmatpush1.msra.mxu0 0.0
      %5658 = vmatprep.subr.mxu0 0.0
      %5659 = vmatpush1.msra.mxu0 0.0
      %5660 = vmatprep.subr.mxu0 0.0
      %5661 = vmatpush1.msra.mxu0 0.0
      %5662 = vmatprep.subr.mxu0 0.0
      %5663 = vmatpush1.msra.mxu0 0.0
      %5664 = vmatprep.subr.mxu0 0.0
      %5665 = vmatpush1.msra.mxu0 0.0
      %5666 = vmatprep.subr.mxu0 0.0
      %5667 = vmatpush1.msra.mxu0 0.0
      %5668 = vmatprep.subr.mxu0 0.0
      %5669 = vmatpush1.msra.mxu0 0.0
      %5670 = vmatprep.subr.mxu0 0.0
      %5671 = vmatpush1.msra.mxu0 0.0
      %5672 = vmatprep.subr.mxu0 0.0
      %5673 = vmatpush1.msra.mxu0 0.0
      %5674 = vmatprep.subr.mxu0 0.0
      %5675 = vmatpush1.msra.mxu0 0.0
      %5676 = vmatprep.subr.mxu0 0.0
      %5677 = vmatpush1.msra.mxu0 0.0
      %5678 = vmatprep.subr.mxu0 0.0
      %5679 = vmatpush1.msra.mxu0 0.0
      %5680 = vmatprep.subr.mxu0 0.0
      %5681 = vmatpush1.msra.mxu0 0.0
      %5682 = vmatprep.subr.mxu0 0.0
      %5683 = vmatpush1.msra.mxu0 0.0
      %5684 = vmatprep.subr.mxu0 0.0
      %5685 = vmatpush1.msra.mxu0 0.0
      %5686 = vmatprep.subr.mxu0 0.0
      %5687 = vmatpush1.msra.mxu0 0.0
      %5688 = vmatprep.subr.mxu0 0.0
      %5689 = vmatpush1.msra.mxu0 0.0
      %5690 = vmatprep.subr.mxu0 0.0
      %5691 = vmatpush1.msra.mxu0 0.0
      %5692 = vmatprep.mubr.f32.mxu0 0.0
      %5693 = vmatmul.mubr.f32.gmra.mrb[0].mxu0 %v5623
      %v5694 = vpop.f32.mrb[0].mxu0
      %v5695 = vadd.f32 1e-06, %v5694
      %v5696 = vpop.f32.mrb[0].mxu0
      %v5697 = vadd.f32 1e-06, %v5696
      %5698 = vmatprep.mubr.f32.mxu0 0.0
      %5699 = vmatmul.mubr.f32.gmra.mrb[0].mxu0 %v5626
      %v5700 = vpop.f32.mrb[0].mxu0
      %v5701 = vadd.f32 1e-06, %v5700
      %v5702 = vpop.f32.mrb[0].mxu0
      %v5703 = vadd.f32 1e-06, %v5702
      %5704 = vdwg.mxu0
      %5705 = vmatprep.subr.mxu0 %v4752
      %5706 = vmatpush1.msra.mxu0 %v4751
      %5707 = vmatprep.subr.mxu0 %v4758
      %5708 = vmatpush1.msra.mxu0 %v4757
      %5709 = vmatprep.subr.mxu0 0.0
      %5710 = vmatpush1.msra.mxu0 0.0
      %5711 = vmatprep.subr.mxu0 0.0
      %5712 = vmatpush1.msra.mxu0 0.0
      %5713 = vmatprep.subr.mxu0 0.0
      %5714 = vmatpush1.msra.mxu0 0.0
      %5715 = vmatprep.subr.mxu0 0.0
      %5716 = vmatpush1.msra.mxu0 0.0
      %5717 = vmatprep.subr.mxu0 0.0
      %5718 = vmatpush1.msra.mxu0 0.0
      %5719 = vmatprep.subr.mxu0 0.0
      %5720 = vmatpush1.msra.mxu0 0.0
      %5721 = vmatprep.subr.mxu0 0.0
      %5722 = vmatpush1.msra.mxu0 0.0
      %5723 = vmatprep.subr.mxu0 0.0
      %5724 = vmatpush1.msra.mxu0 0.0
      %5725 = vmatprep.subr.mxu0 0.0
      %5726 = vmatpush1.msra.mxu0 0.0
      %5727 = vmatprep.subr.mxu0 0.0
      %5728 = vmatpush1.msra.mxu0 0.0
      %5729 = vmatprep.subr.mxu0 0.0
      %5730 = vmatpush1.msra.mxu0 0.0
      %5731 = vmatprep.subr.mxu0 0.0
      %5732 = vmatpush1.msra.mxu0 0.0
      %5733 = vmatprep.subr.mxu0 0.0
      %5734 = vmatpush1.msra.mxu0 0.0
      %5735 = vmatprep.subr.mxu0 0.0
      %5736 = vmatpush1.msra.mxu0 0.0
      %5737 = vmatprep.subr.mxu0 0.0
      %5738 = vmatpush1.msra.mxu0 0.0
      %5739 = vmatprep.subr.mxu0 0.0
      %5740 = vmatpush1.msra.mxu0 0.0
      %5741 = vmatprep.subr.mxu0 0.0
      %5742 = vmatpush1.msra.mxu0 0.0
      %5743 = vmatprep.subr.mxu0 0.0
      %5744 = vmatpush1.msra.mxu0 0.0
      %5745 = vmatprep.subr.mxu0 0.0
      %5746 = vmatpush1.msra.mxu0 0.0
      %5747 = vmatprep.subr.mxu0 0.0
      %5748 = vmatpush1.msra.mxu0 0.0
      %5749 = vmatprep.subr.mxu0 0.0
      %5750 = vmatpush1.msra.mxu0 0.0
      %5751 = vmatprep.subr.mxu0 0.0
      %5752 = vmatpush1.msra.mxu0 0.0
      %5753 = vmatprep.subr.mxu0 0.0
      %5754 = vmatpush1.msra.mxu0 0.0
      %5755 = vmatprep.subr.mxu0 0.0
      %5756 = vmatpush1.msra.mxu0 0.0
      %5757 = vmatprep.subr.mxu0 0.0
      %5758 = vmatpush1.msra.mxu0 0.0
      %5759 = vmatprep.subr.mxu0 0.0
      %5760 = vmatpush1.msra.mxu0 0.0
      %5761 = vmatprep.subr.mxu0 0.0
      %5762 = vmatpush1.msra.mxu0 0.0
      %5763 = vmatprep.subr.mxu0 0.0
      %5764 = vmatpush1.msra.mxu0 0.0
      %5765 = vmatprep.subr.mxu0 0.0
      %5766 = vmatpush1.msra.mxu0 0.0
      %5767 = vmatprep.subr.mxu0 0.0
      %5768 = vmatpush1.msra.mxu0 0.0
      %5769 = vmatprep.mubr.f32.mxu0 0.0
      %5770 = vmatmul.mubr.f32.gmra.mrb[0].mxu0 %v5623
      %v5771 = vpop.f32.mrb[0].mxu0
      %v5772 = vadd.f32 1e-06, %v5771
      %v5773 = vpop.f32.mrb[0].mxu0
      %v5774 = vadd.f32 1e-06, %v5773
      %5775 = vmatprep.mubr.f32.mxu0 0.0
      %5776 = vmatmul.mubr.f32.gmra.mrb[0].mxu0 %v5626
      %v5777 = vpop.f32.mrb[0].mxu0
      %v5778 = vadd.f32 1e-06, %v5777
      %v5779 = vpop.f32.mrb[0].mxu0
      %v5780 = vadd.f32 1e-06, %v5779
      %5781 = vdwg.mxu0
      %5782 = vmatprep.subr.mxu0 %v4754
      %5783 = vmatpush1.msra.mxu0 %v4753
      %5784 = vmatprep.subr.mxu0 %v4760
      %5785 = vmatpush1.msra.mxu0 %v4759
      %5786 = vmatprep.subr.mxu0 0.0
      %5787 = vmatpush1.msra.mxu0 0.0
      %5788 = vmatprep.subr.mxu0 0.0
      %5789 = vmatpush1.msra.mxu0 0.0
      %5790 = vmatprep.subr.mxu0 0.0
      %5791 = vmatpush1.msra.mxu0 0.0
      %5792 = vmatprep.subr.mxu0 0.0
      %5793 = vmatpush1.msra.mxu0 0.0
      %5794 = vmatprep.subr.mxu0 0.0
      %5795 = vmatpush1.msra.mxu0 0.0
      %5796 = vmatprep.subr.mxu0 0.0
      %5797 = vmatpush1.msra.mxu0 0.0
      %5798 = vmatprep.subr.mxu0 0.0
      %5799 = vmatpush1.msra.mxu0 0.0
      %5800 = vmatprep.subr.mxu0 0.0
      %5801 = vmatpush1.msra.mxu0 0.0
      %5802 = vmatprep.subr.mxu0 0.0
      %5803 = vmatpush1.msra.mxu0 0.0
      %5804 = vmatprep.subr.mxu0 0.0
      %5805 = vmatpush1.msra.mxu0 0.0
      %5806 = vmatprep.subr.mxu0 0.0
      %5807 = vmatpush1.msra.mxu0 0.0
      %5808 = vmatprep.subr.mxu0 0.0
      %5809 = vmatpush1.msra.mxu0 0.0
      %5810 = vmatprep.subr.mxu0 0.0
      %5811 = vmatpush1.msra.mxu0 0.0
      %5812 = vmatprep.subr.mxu0 0.0
      %5813 = vmatpush1.msra.mxu0 0.0
      %5814 = vmatprep.subr.mxu0 0.0
      %5815 = vmatpush1.msra.mxu0 0.0
      %5816 = vmatprep.subr.mxu0 0.0
      %5817 = vmatpush1.msra.mxu0 0.0
      %5818 = vmatprep.subr.mxu0 0.0
      %5819 = vmatpush1.msra.mxu0 0.0
      %5820 = vmatprep.subr.mxu0 0.0
      %5821 = vmatpush1.msra.mxu0 0.0
      %5822 = vmatprep.subr.mxu0 0.0
      %5823 = vmatpush1.msra.mxu0 0.0
      %5824 = vmatprep.subr.mxu0 0.0
      %5825 = vmatpush1.msra.mxu0 0.0
      %5826 = vmatprep.subr.mxu0 0.0
      %5827 = vmatpush1.msra.mxu0 0.0
      %5828 = vmatprep.subr.mxu0 0.0
      %5829 = vmatpush1.msra.mxu0 0.0
      %5830 = vmatprep.subr.mxu0 0.0
      %5831 = vmatpush1.msra.mxu0 0.0
      %5832 = vmatprep.subr.mxu0 0.0
      %5833 = vmatpush1.msra.mxu0 0.0
      %5834 = vmatprep.subr.mxu0 0.0
      %5835 = vmatpush1.msra.mxu0 0.0
      %5836 = vmatprep.subr.mxu0 0.0
      %5837 = vmatpush1.msra.mxu0 0.0
      %5838 = vmatprep.subr.mxu0 0.0
      %5839 = vmatpush1.msra.mxu0 0.0
      %5840 = vmatprep.subr.mxu0 0.0
      %5841 = vmatpush1.msra.mxu0 0.0
      %5842 = vmatprep.subr.mxu0 0.0
      %5843 = vmatpush1.msra.mxu0 0.0
      %5844 = vmatprep.subr.mxu0 0.0
      %5845 = vmatpush1.msra.mxu0 0.0
      %5846 = vmatprep.mubr.f32.mxu0 0.0
      %5847 = vmatmul.mubr.f32.gmra.mrb[0].mxu0 %v5623
      %v5848 = vpop.f32.mrb[0].mxu0
      %v5849 = vadd.f32 1e-06, %v5848
      %v5850 = vpop.f32.mrb[0].mxu0
      %v5851 = vadd.f32 1e-06, %v5850
      %5852 = vmatprep.mubr.f32.mxu0 0.0
      %5853 = vmatmul.mubr.f32.gmra.mrb[0].mxu0 %v5626
      %v5854 = vpop.f32.mrb[0].mxu0
      %v5855 = vadd.f32 1e-06, %v5854
      %v5856 = vpop.f32.mrb[0].mxu0
      %v5857 = vadd.f32 1e-06, %v5856
      %5858 = vdwg.mxu0
      %v5859 = vrcp.pop %v5695
      %v5860 = vrcp.pop %v5697
      %v5861 = vrcp.pop %v5772
      %v5862 = vrcp.pop %v5774
      %v5863 = vrcp.pop %v5849
      %v5864 = vrcp.pop %v5851
      %v5865 = vrcp.pop %v5701
      %v5866 = vrcp.pop %v5703
      %v5867 = vrcp.pop %v5778
      %v5868 = vrcp.pop %v5780
      %v5869 = vrcp.pop %v5855
      %v5870 = vrcp.pop %v5857
      %v5871 = vmul.f32 %v5610, %v5859
      %v5872 = vmul.f32 %v5611, %v5860
      %v5873 = vmul.f32 %v5612, %v5861
      %v5874 = vmul.f32 %v5613, %v5862
      %v5875 = vmul.f32 %v5614, %v5863
      %v5876 = vmul.f32 %v5615, %v5864
      %v5877 = vmul.f32 %v5616, %v5865
      %v5878 = vmul.f32 %v5617, %v5866
      %v5879 = vmul.f32 %v5618, %v5867
      %v5880 = vmul.f32 %v5619, %v5868
      %v5881 = vmul.f32 %v5620, %v5869
      %v5882 = vmul.f32 %v5621, %v5870
      %5883 = vmatprep.subr.mxu0 %v647
      %5884 = vmatpush1.xpose.msra.mxu0 %v646
      %5885 = vmatprep.subr.mxu0 %v653
      %5886 = vmatpush1.xpose.msra.mxu0 %v652
      %5887 = vmatprep.subr.mxu0 %v659
      %5888 = vmatpush1.xpose.msra.mxu0 %v658
      %5889 = vmatprep.subr.mxu0 %v665
      %5890 = vmatpush1.xpose.msra.mxu0 %v664
      %5891 = vmatprep.subr.mxu0 0.0
      %5892 = vmatpush1.xpose.msra.mxu0 0.0
      %5893 = vmatprep.subr.mxu0 0.0
      %5894 = vmatpush1.xpose.msra.mxu0 0.0
      %5895 = vmatprep.subr.mxu0 0.0
      %5896 = vmatpush1.xpose.msra.mxu0 0.0
      %5897 = vmatprep.subr.mxu0 0.0
      %5898 = vmatpush1.xpose.msra.mxu0 0.0
      %5899 = vmatprep.subr.mxu0 0.0
      %5900 = vmatpush1.xpose.msra.mxu0 0.0
      %5901 = vmatprep.subr.mxu0 0.0
      %5902 = vmatpush1.xpose.msra.mxu0 0.0
      %5903 = vmatprep.subr.mxu0 0.0
      %5904 = vmatpush1.xpose.msra.mxu0 0.0
      %5905 = vmatprep.subr.mxu0 0.0
      %5906 = vmatpush1.xpose.msra.mxu0 0.0
      %5907 = vmatprep.subr.mxu0 0.0
      %5908 = vmatpush1.xpose.msra.mxu0 0.0
      %5909 = vmatprep.subr.mxu0 0.0
      %5910 = vmatpush1.xpose.msra.mxu0 0.0
      %5911 = vmatprep.subr.mxu0 0.0
      %5912 = vmatpush1.xpose.msra.mxu0 0.0
      %5913 = vmatprep.subr.mxu0 0.0
      %5914 = vmatpush1.xpose.msra.mxu0 0.0
      %5915 = vmatprep.subr.mxu0 0.0
      %5916 = vmatpush1.xpose.msra.mxu0 0.0
      %5917 = vmatprep.subr.mxu0 0.0
      %5918 = vmatpush1.xpose.msra.mxu0 0.0
      %5919 = vmatprep.subr.mxu0 0.0
      %5920 = vmatpush1.xpose.msra.mxu0 0.0
      %5921 = vmatprep.subr.mxu0 0.0
      %5922 = vmatpush1.xpose.msra.mxu0 0.0
      %5923 = vmatprep.subr.mxu0 0.0
      %5924 = vmatpush1.xpose.msra.mxu0 0.0
      %5925 = vmatprep.subr.mxu0 0.0
      %5926 = vmatpush1.xpose.msra.mxu0 0.0
      %5927 = vmatprep.subr.mxu0 0.0
      %5928 = vmatpush1.xpose.msra.mxu0 0.0
      %5929 = vmatprep.subr.mxu0 0.0
      %5930 = vmatpush1.xpose.msra.mxu0 0.0
      %5931 = vmatprep.subr.mxu0 0.0
      %5932 = vmatpush1.xpose.msra.mxu0 0.0
      %5933 = vmatprep.subr.mxu0 0.0
      %5934 = vmatpush1.xpose.msra.mxu0 0.0
      %5935 = vmatprep.subr.mxu0 0.0
      %5936 = vmatpush1.xpose.msra.mxu0 0.0
      %5937 = vmatprep.subr.mxu0 0.0
      %5938 = vmatpush1.xpose.msra.mxu0 0.0
      %5939 = vmatprep.subr.mxu0 0.0
      %5940 = vmatpush1.xpose.msra.mxu0 0.0
      %5941 = vmatprep.subr.mxu0 0.0
      %5942 = vmatpush1.xpose.msra.mxu0 0.0
      %5943 = vmatprep.subr.mxu0 0.0
      %5944 = vmatpush1.xpose.msra.mxu0 0.0
      %5945 = vmatprep.subr.mxu0 0.0
      %5946 = vmatpush1.xpose.msra.mxu0 0.0
      %5947 = vmatprep.mubr.f32.mxu0 %v5872
      %5948 = vmatmul.mubr.f32.gmra.mrb[0].mxu0 %v5871
      %v5949 = vpop.f32.mrb[0].mxu0
      %v5950 = vadd.f32 0.0, %v5949
      %v5951 = vpop.f32.mrb[0].mxu0
      %5952 = vmatprep.mubr.f32.mxu0 %v5878
      %5953 = vmatmul.mubr.f32.gmra.mrb[0].mxu0 %v5877
      %v5954 = vpop.f32.mrb[0].mxu0
      %v5955 = vadd.f32 0.0, %v5954
      %v5956 = vpop.f32.mrb[0].mxu0
      %5957 = vdwg.mxu0
      %5958 = vmatprep.subr.mxu0 %v649
      %5959 = vmatpush1.xpose.msra.mxu0 %v648
      %5960 = vmatprep.subr.mxu0 %v655
      %5961 = vmatpush1.xpose.msra.mxu0 %v654
      %5962 = vmatprep.subr.mxu0 %v661
      %5963 = vmatpush1.xpose.msra.mxu0 %v660
      %5964 = vmatprep.subr.mxu0 %v667
      %5965 = vmatpush1.xpose.msra.mxu0 %v666
      %5966 = vmatprep.subr.mxu0 0.0
      %5967 = vmatpush1.xpose.msra.mxu0 0.0
      %5968 = vmatprep.subr.mxu0 0.0
      %5969 = vmatpush1.xpose.msra.mxu0 0.0
      %5970 = vmatprep.subr.mxu0 0.0
      %5971 = vmatpush1.xpose.msra.mxu0 0.0
      %5972 = vmatprep.subr.mxu0 0.0
      %5973 = vmatpush1.xpose.msra.mxu0 0.0
      %5974 = vmatprep.subr.mxu0 0.0
      %5975 = vmatpush1.xpose.msra.mxu0 0.0
      %5976 = vmatprep.subr.mxu0 0.0
      %5977 = vmatpush1.xpose.msra.mxu0 0.0
      %5978 = vmatprep.subr.mxu0 0.0
      %5979 = vmatpush1.xpose.msra.mxu0 0.0
      %5980 = vmatprep.subr.mxu0 0.0
      %5981 = vmatpush1.xpose.msra.mxu0 0.0
      %5982 = vmatprep.subr.mxu0 0.0
      %5983 = vmatpush1.xpose.msra.mxu0 0.0
      %5984 = vmatprep.subr.mxu0 0.0
      %5985 = vmatpush1.xpose.msra.mxu0 0.0
      %5986 = vmatprep.subr.mxu0 0.0
      %5987 = vmatpush1.xpose.msra.mxu0 0.0
      %5988 = vmatprep.subr.mxu0 0.0
      %5989 = vmatpush1.xpose.msra.mxu0 0.0
      %5990 = vmatprep.subr.mxu0 0.0
      %5991 = vmatpush1.xpose.msra.mxu0 0.0
      %5992 = vmatprep.subr.mxu0 0.0
      %5993 = vmatpush1.xpose.msra.mxu0 0.0
      %5994 = vmatprep.subr.mxu0 0.0
      %5995 = vmatpush1.xpose.msra.mxu0 0.0
      %5996 = vmatprep.subr.mxu0 0.0
      %5997 = vmatpush1.xpose.msra.mxu0 0.0
      %5998 = vmatprep.subr.mxu0 0.0
      %5999 = vmatpush1.xpose.msra.mxu0 0.0
      %6000 = vmatprep.subr.mxu0 0.0
      %6001 = vmatpush1.xpose.msra.mxu0 0.0
      %6002 = vmatprep.subr.mxu0 0.0
      %6003 = vmatpush1.xpose.msra.mxu0 0.0
      %6004 = vmatprep.subr.mxu0 0.0
      %6005 = vmatpush1.xpose.msra.mxu0 0.0
      %6006 = vmatprep.subr.mxu0 0.0
      %6007 = vmatpush1.xpose.msra.mxu0 0.0
      %6008 = vmatprep.subr.mxu0 0.0
      %6009 = vmatpush1.xpose.msra.mxu0 0.0
      %6010 = vmatprep.subr.mxu0 0.0
      %6011 = vmatpush1.xpose.msra.mxu0 0.0
      %6012 = vmatprep.subr.mxu0 0.0
      %6013 = vmatpush1.xpose.msra.mxu0 0.0
      %6014 = vmatprep.subr.mxu0 0.0
      %6015 = vmatpush1.xpose.msra.mxu0 0.0
      %6016 = vmatprep.subr.mxu0 0.0
      %6017 = vmatpush1.xpose.msra.mxu0 0.0
      %6018 = vmatprep.subr.mxu0 0.0
      %6019 = vmatpush1.xpose.msra.mxu0 0.0
      %6020 = vmatprep.subr.mxu0 0.0
      %6021 = vmatpush1.xpose.msra.mxu0 0.0
      %6022 = vmatprep.mubr.f32.mxu0 %v5874
      %6023 = vmatmul.mubr.f32.gmra.mrb[0].mxu0 %v5873
      %v6024 = vpop.f32.mrb[0].mxu0
      %v6025 = vadd.f32 %v5950, %v6024
      %v6026 = vpop.f32.mrb[0].mxu0
      %6027 = vmatprep.mubr.f32.mxu0 %v5880
      %6028 = vmatmul.mubr.f32.gmra.mrb[0].mxu0 %v5879
      %v6029 = vpop.f32.mrb[0].mxu0
      %v6030 = vadd.f32 %v5955, %v6029
      %v6031 = vpop.f32.mrb[0].mxu0
      %6032 = vdwg.mxu0
      %6033 = vmatprep.subr.mxu0 %v651
      %6034 = vmatpush1.xpose.msra.mxu0 %v650
      %6035 = vmatprep.subr.mxu0 %v657
      %6036 = vmatpush1.xpose.msra.mxu0 %v656
      %6037 = vmatprep.subr.mxu0 %v663
      %6038 = vmatpush1.xpose.msra.mxu0 %v662
      %6039 = vmatprep.subr.mxu0 %v669
      %6040 = vmatpush1.xpose.msra.mxu0 %v668
      %6041 = vmatprep.subr.mxu0 0.0
      %6042 = vmatpush1.xpose.msra.mxu0 0.0
      %6043 = vmatprep.subr.mxu0 0.0
      %6044 = vmatpush1.xpose.msra.mxu0 0.0
      %6045 = vmatprep.subr.mxu0 0.0
      %6046 = vmatpush1.xpose.msra.mxu0 0.0
      %6047 = vmatprep.subr.mxu0 0.0
      %6048 = vmatpush1.xpose.msra.mxu0 0.0
      %6049 = vmatprep.subr.mxu0 0.0
      %6050 = vmatpush1.xpose.msra.mxu0 0.0
      %6051 = vmatprep.subr.mxu0 0.0
      %6052 = vmatpush1.xpose.msra.mxu0 0.0
      %6053 = vmatprep.subr.mxu0 0.0
      %6054 = vmatpush1.xpose.msra.mxu0 0.0
      %6055 = vmatprep.subr.mxu0 0.0
      %6056 = vmatpush1.xpose.msra.mxu0 0.0
      %6057 = vmatprep.subr.mxu0 0.0
      %6058 = vmatpush1.xpose.msra.mxu0 0.0
      %6059 = vmatprep.subr.mxu0 0.0
      %6060 = vmatpush1.xpose.msra.mxu0 0.0
      %6061 = vmatprep.subr.mxu0 0.0
      %6062 = vmatpush1.xpose.msra.mxu0 0.0
      %6063 = vmatprep.subr.mxu0 0.0
      %6064 = vmatpush1.xpose.msra.mxu0 0.0
      %6065 = vmatprep.subr.mxu0 0.0
      %6066 = vmatpush1.xpose.msra.mxu0 0.0
      %6067 = vmatprep.subr.mxu0 0.0
      %6068 = vmatpush1.xpose.msra.mxu0 0.0
      %6069 = vmatprep.subr.mxu0 0.0
      %6070 = vmatpush1.xpose.msra.mxu0 0.0
      %6071 = vmatprep.subr.mxu0 0.0
      %6072 = vmatpush1.xpose.msra.mxu0 0.0
      %6073 = vmatprep.subr.mxu0 0.0
      %6074 = vmatpush1.xpose.msra.mxu0 0.0
      %6075 = vmatprep.subr.mxu0 0.0
      %6076 = vmatpush1.xpose.msra.mxu0 0.0
      %6077 = vmatprep.subr.mxu0 0.0
      %6078 = vmatpush1.xpose.msra.mxu0 0.0
      %6079 = vmatprep.subr.mxu0 0.0
      %6080 = vmatpush1.xpose.msra.mxu0 0.0
      %6081 = vmatprep.subr.mxu0 0.0
      %6082 = vmatpush1.xpose.msra.mxu0 0.0
      %6083 = vmatprep.subr.mxu0 0.0
      %6084 = vmatpush1.xpose.msra.mxu0 0.0
      %6085 = vmatprep.subr.mxu0 0.0
      %6086 = vmatpush1.xpose.msra.mxu0 0.0
      %6087 = vmatprep.subr.mxu0 0.0
      %6088 = vmatpush1.xpose.msra.mxu0 0.0
      %6089 = vmatprep.subr.mxu0 0.0
      %6090 = vmatpush1.xpose.msra.mxu0 0.0
      %6091 = vmatprep.subr.mxu0 0.0
      %6092 = vmatpush1.xpose.msra.mxu0 0.0
      %6093 = vmatprep.subr.mxu0 0.0
      %6094 = vmatpush1.xpose.msra.mxu0 0.0
      %6095 = vmatprep.subr.mxu0 0.0
      %6096 = vmatpush1.xpose.msra.mxu0 0.0
      %6097 = vmatprep.mubr.f32.mxu0 %v5876
      %6098 = vmatmul.mubr.f32.gmra.mrb[0].mxu0 %v5875
      %v6099 = vpop.f32.mrb[0].mxu0
      %v6100 = vadd.f32 %v6025, %v6099
      %v6101 = vpop.f32.mrb[0].mxu0
      %6102 = vmatprep.mubr.f32.mxu0 %v5882
      %6103 = vmatmul.mubr.f32.gmra.mrb[0].mxu0 %v5881
      %v6104 = vpop.f32.mrb[0].mxu0
      %v6105 = vadd.f32 %v6030, %v6104
      %v6106 = vpop.f32.mrb[0].mxu0
      %6107 = vdwg.mxu0
      %6108 = vmatprep.subr.mxu0 %v5872
      %6109 = vmatpush1.xpose.msra.mxu0 %v5871
      %6110 = vmatprep.subr.mxu0 %v5878
      %6111 = vmatpush1.xpose.msra.mxu0 %v5877
      %6112 = vmatprep.subr.mxu0 0.0
      %6113 = vmatpush1.xpose.msra.mxu0 0.0
      %6114 = vmatprep.subr.mxu0 0.0
      %6115 = vmatpush1.xpose.msra.mxu0 0.0
      %6116 = vmatprep.subr.mxu0 0.0
      %6117 = vmatpush1.xpose.msra.mxu0 0.0
      %6118 = vmatprep.subr.mxu0 0.0
      %6119 = vmatpush1.xpose.msra.mxu0 0.0
      %6120 = vmatprep.subr.mxu0 0.0
      %6121 = vmatpush1.xpose.msra.mxu0 0.0
      %6122 = vmatprep.subr.mxu0 0.0
      %6123 = vmatpush1.xpose.msra.mxu0 0.0
      %6124 = vmatprep.subr.mxu0 0.0
      %6125 = vmatpush1.xpose.msra.mxu0 0.0
      %6126 = vmatprep.subr.mxu0 0.0
      %6127 = vmatpush1.xpose.msra.mxu0 0.0
      %6128 = vmatprep.subr.mxu0 0.0
      %6129 = vmatpush1.xpose.msra.mxu0 0.0
      %6130 = vmatprep.subr.mxu0 0.0
      %6131 = vmatpush1.xpose.msra.mxu0 0.0
      %6132 = vmatprep.subr.mxu0 0.0
      %6133 = vmatpush1.xpose.msra.mxu0 0.0
      %6134 = vmatprep.subr.mxu0 0.0
      %6135 = vmatpush1.xpose.msra.mxu0 0.0
      %6136 = vmatprep.subr.mxu0 0.0
      %6137 = vmatpush1.xpose.msra.mxu0 0.0
      %6138 = vmatprep.subr.mxu0 0.0
      %6139 = vmatpush1.xpose.msra.mxu0 0.0
      %6140 = vmatprep.subr.mxu0 0.0
      %6141 = vmatpush1.xpose.msra.mxu0 0.0
      %6142 = vmatprep.subr.mxu0 0.0
      %6143 = vmatpush1.xpose.msra.mxu0 0.0
      %6144 = vmatprep.subr.mxu0 0.0
      %6145 = vmatpush1.xpose.msra.mxu0 0.0
      %6146 = vmatprep.subr.mxu0 0.0
      %6147 = vmatpush1.xpose.msra.mxu0 0.0
      %6148 = vmatprep.subr.mxu0 0.0
      %6149 = vmatpush1.xpose.msra.mxu0 0.0
      %6150 = vmatprep.subr.mxu0 0.0
      %6151 = vmatpush1.xpose.msra.mxu0 0.0
      %6152 = vmatprep.subr.mxu0 0.0
      %6153 = vmatpush1.xpose.msra.mxu0 0.0
      %6154 = vmatprep.subr.mxu0 0.0
      %6155 = vmatpush1.xpose.msra.mxu0 0.0
      %6156 = vmatprep.subr.mxu0 0.0
      %6157 = vmatpush1.xpose.msra.mxu0 0.0
      %6158 = vmatprep.subr.mxu0 0.0
      %6159 = vmatpush1.xpose.msra.mxu0 0.0
      %6160 = vmatprep.subr.mxu0 0.0
      %6161 = vmatpush1.xpose.msra.mxu0 0.0
      %6162 = vmatprep.subr.mxu0 0.0
      %6163 = vmatpush1.xpose.msra.mxu0 0.0
      %6164 = vmatprep.subr.mxu0 0.0
      %6165 = vmatpush1.xpose.msra.mxu0 0.0
      %6166 = vmatprep.subr.mxu0 0.0
      %6167 = vmatpush1.xpose.msra.mxu0 0.0
      %6168 = vmatprep.subr.mxu0 0.0
      %6169 = vmatpush1.xpose.msra.mxu0 0.0
      %6170 = vmatprep.subr.mxu0 0.0
      %6171 = vmatpush1.xpose.msra.mxu0 0.0
      %6172 = vmatprep.mubr.f32.mxu0 %v5872
      %6173 = vmatmul.mubr.f32.gmra.mrb[0].mxu0 %v5871
      %v6174 = vpop.f32.mrb[0].mxu0
      %v6175 = vadd.f32 0.0, %v6174
      %v6176 = vpop.f32.mrb[0].mxu0
      %6177 = vmatprep.mubr.f32.mxu0 %v5878
      %6178 = vmatmul.mubr.f32.gmra.mrb[0].mxu0 %v5877
      %v6179 = vpop.f32.mrb[0].mxu0
      %v6180 = vadd.f32 0.0, %v6179
      %v6181 = vpop.f32.mrb[0].mxu0
      %6182 = vdwg.mxu0
      %6183 = vmatprep.subr.mxu0 %v5874
      %6184 = vmatpush1.xpose.msra.mxu0 %v5873
      %6185 = vmatprep.subr.mxu0 %v5880
      %6186 = vmatpush1.xpose.msra.mxu0 %v5879
      %6187 = vmatprep.subr.mxu0 0.0
      %6188 = vmatpush1.xpose.msra.mxu0 0.0
      %6189 = vmatprep.subr.mxu0 0.0
      %6190 = vmatpush1.xpose.msra.mxu0 0.0
      %6191 = vmatprep.subr.mxu0 0.0
      %6192 = vmatpush1.xpose.msra.mxu0 0.0
      %6193 = vmatprep.subr.mxu0 0.0
      %6194 = vmatpush1.xpose.msra.mxu0 0.0
      %6195 = vmatprep.subr.mxu0 0.0
      %6196 = vmatpush1.xpose.msra.mxu0 0.0
      %6197 = vmatprep.subr.mxu0 0.0
      %6198 = vmatpush1.xpose.msra.mxu0 0.0
      %6199 = vmatprep.subr.mxu0 0.0
      %6200 = vmatpush1.xpose.msra.mxu0 0.0
      %6201 = vmatprep.subr.mxu0 0.0
      %6202 = vmatpush1.xpose.msra.mxu0 0.0
      %6203 = vmatprep.subr.mxu0 0.0
      %6204 = vmatpush1.xpose.msra.mxu0 0.0
      %6205 = vmatprep.subr.mxu0 0.0
      %6206 = vmatpush1.xpose.msra.mxu0 0.0
      %6207 = vmatprep.subr.mxu0 0.0
      %6208 = vmatpush1.xpose.msra.mxu0 0.0
      %6209 = vmatprep.subr.mxu0 0.0
      %6210 = vmatpush1.xpose.msra.mxu0 0.0
      %6211 = vmatprep.subr.mxu0 0.0
      %6212 = vmatpush1.xpose.msra.mxu0 0.0
      %6213 = vmatprep.subr.mxu0 0.0
      %6214 = vmatpush1.xpose.msra.mxu0 0.0
      %6215 = vmatprep.subr.mxu0 0.0
      %6216 = vmatpush1.xpose.msra.mxu0 0.0
      %6217 = vmatprep.subr.mxu0 0.0
      %6218 = vmatpush1.xpose.msra.mxu0 0.0
      %6219 = vmatprep.subr.mxu0 0.0
      %6220 = vmatpush1.xpose.msra.mxu0 0.0
      %6221 = vmatprep.subr.mxu0 0.0
      %6222 = vmatpush1.xpose.msra.mxu0 0.0
      %6223 = vmatprep.subr.mxu0 0.0
      %6224 = vmatpush1.xpose.msra.mxu0 0.0
      %6225 = vmatprep.subr.mxu0 0.0
      %6226 = vmatpush1.xpose.msra.mxu0 0.0
      %6227 = vmatprep.subr.mxu0 0.0
      %6228 = vmatpush1.xpose.msra.mxu0 0.0
      %6229 = vmatprep.subr.mxu0 0.0
      %6230 = vmatpush1.xpose.msra.mxu0 0.0
      %6231 = vmatprep.subr.mxu0 0.0
      %6232 = vmatpush1.xpose.msra.mxu0 0.0
      %6233 = vmatprep.subr.mxu0 0.0
      %6234 = vmatpush1.xpose.msra.mxu0 0.0
      %6235 = vmatprep.subr.mxu0 0.0
      %6236 = vmatpush1.xpose.msra.mxu0 0.0
      %6237 = vmatprep.subr.mxu0 0.0
      %6238 = vmatpush1.xpose.msra.mxu0 0.0
      %6239 = vmatprep.subr.mxu0 0.0
      %6240 = vmatpush1.xpose.msra.mxu0 0.0
      %6241 = vmatprep.subr.mxu0 0.0
      %6242 = vmatpush1.xpose.msra.mxu0 0.0
      %6243 = vmatprep.subr.mxu0 0.0
      %6244 = vmatpush1.xpose.msra.mxu0 0.0
      %6245 = vmatprep.subr.mxu0 0.0
      %6246 = vmatpush1.xpose.msra.mxu0 0.0
      %6247 = vmatprep.mubr.f32.mxu0 %v5874
      %6248 = vmatmul.mubr.f32.gmra.mrb[0].mxu0 %v5873
      %v6249 = vpop.f32.mrb[0].mxu0
      %v6250 = vadd.f32 %v6175, %v6249
      %v6251 = vpop.f32.mrb[0].mxu0
      %6252 = vmatprep.mubr.f32.mxu0 %v5880
      %6253 = vmatmul.mubr.f32.gmra.mrb[0].mxu0 %v5879
      %v6254 = vpop.f32.mrb[0].mxu0
      %v6255 = vadd.f32 %v6180, %v6254
      %v6256 = vpop.f32.mrb[0].mxu0
      %6257 = vdwg.mxu0
      %6258 = vmatprep.subr.mxu0 %v5876
      %6259 = vmatpush1.xpose.msra.mxu0 %v5875
      %6260 = vmatprep.subr.mxu0 %v5882
      %6261 = vmatpush1.xpose.msra.mxu0 %v5881
      %6262 = vmatprep.subr.mxu0 0.0
      %6263 = vmatpush1.xpose.msra.mxu0 0.0
      %6264 = vmatprep.subr.mxu0 0.0
      %6265 = vmatpush1.xpose.msra.mxu0 0.0
      %6266 = vmatprep.subr.mxu0 0.0
      %6267 = vmatpush1.xpose.msra.mxu0 0.0
      %6268 = vmatprep.subr.mxu0 0.0
      %6269 = vmatpush1.xpose.msra.mxu0 0.0
      %6270 = vmatprep.subr.mxu0 0.0
      %6271 = vmatpush1.xpose.msra.mxu0 0.0
      %6272 = vmatprep.subr.mxu0 0.0
      %6273 = vmatpush1.xpose.msra.mxu0 0.0
      %6274 = vmatprep.subr.mxu0 0.0
      %6275 = vmatpush1.xpose.msra.mxu0 0.0
      %6276 = vmatprep.subr.mxu0 0.0
      %6277 = vmatpush1.xpose.msra.mxu0 0.0
      %6278 = vmatprep.subr.mxu0 0.0
      %6279 = vmatpush1.xpose.msra.mxu0 0.0
      %6280 = vmatprep.subr.mxu0 0.0
      %6281 = vmatpush1.xpose.msra.mxu0 0.0
      %6282 = vmatprep.subr.mxu0 0.0
      %6283 = vmatpush1.xpose.msra.mxu0 0.0
      %6284 = vmatprep.subr.mxu0 0.0
      %6285 = vmatpush1.xpose.msra.mxu0 0.0
      %6286 = vmatprep.subr.mxu0 0.0
      %6287 = vmatpush1.xpose.msra.mxu0 0.0
      %6288 = vmatprep.subr.mxu0 0.0
      %6289 = vmatpush1.xpose.msra.mxu0 0.0
      %6290 = vmatprep.subr.mxu0 0.0
      %6291 = vmatpush1.xpose.msra.mxu0 0.0
      %6292 = vmatprep.subr.mxu0 0.0
      %6293 = vmatpush1.xpose.msra.mxu0 0.0
      %6294 = vmatprep.subr.mxu0 0.0
      %6295 = vmatpush1.xpose.msra.mxu0 0.0
      %6296 = vmatprep.subr.mxu0 0.0
      %6297 = vmatpush1.xpose.msra.mxu0 0.0
      %6298 = vmatprep.subr.mxu0 0.0
      %6299 = vmatpush1.xpose.msra.mxu0 0.0
      %6300 = vmatprep.subr.mxu0 0.0
      %6301 = vmatpush1.xpose.msra.mxu0 0.0
      %6302 = vmatprep.subr.mxu0 0.0
      %6303 = vmatpush1.xpose.msra.mxu0 0.0
      %6304 = vmatprep.subr.mxu0 0.0
      %6305 = vmatpush1.xpose.msra.mxu0 0.0
      %6306 = vmatprep.subr.mxu0 0.0
      %6307 = vmatpush1.xpose.msra.mxu0 0.0
      %6308 = vmatprep.subr.mxu0 0.0
      %6309 = vmatpush1.xpose.msra.mxu0 0.0
      %6310 = vmatprep.subr.mxu0 0.0
      %6311 = vmatpush1.xpose.msra.mxu0 0.0
      %6312 = vmatprep.subr.mxu0 0.0
      %6313 = vmatpush1.xpose.msra.mxu0 0.0
      %6314 = vmatprep.subr.mxu0 0.0
      %6315 = vmatpush1.xpose.msra.mxu0 0.0
      %6316 = vmatprep.subr.mxu0 0.0
      %6317 = vmatpush1.xpose.msra.mxu0 0.0
      %6318 = vmatprep.subr.mxu0 0.0
      %6319 = vmatpush1.xpose.msra.mxu0 0.0
      %6320 = vmatprep.subr.mxu0 0.0
      %6321 = vmatpush1.xpose.msra.mxu0 0.0
      %6322 = vmatprep.mubr.f32.mxu0 %v5876
      %6323 = vmatmul.mubr.f32.gmra.mrb[0].mxu0 %v5875
      %v6324 = vpop.f32.mrb[0].mxu0
      %v6325 = vadd.f32 %v6250, %v6324
      %v6326 = vpop.f32.mrb[0].mxu0
      %6327 = vmatprep.mubr.f32.mxu0 %v5882
      %6328 = vmatmul.mubr.f32.gmra.mrb[0].mxu0 %v5881
      %v6329 = vpop.f32.mrb[0].mxu0
      %v6330 = vadd.f32 %v6255, %v6329
      %v6331 = vpop.f32.mrb[0].mxu0
      %6332 = vdwg.mxu0
      %v6333 = vmul.f32 %v5296, %v6100
      %v6334 = vmul.f32 %v5297, %v6105
      %v6336 = vsel %vm1133, %v6325, 0
      %v6339 = vsel %vm1133, %v6330, 0
      %6341 = vmatprep.subr.mxu0 0.0
      %6342 = vmatpush1.msra.mxu0 %v5296
      %6343 = vmatprep.subr.mxu0 0.0
      %6344 = vmatpush1.msra.mxu0 %v5297
      %6345 = vmatprep.subr.mxu0 0.0
      %6346 = vmatpush1.msra.mxu0 0.0
      %6347 = vmatprep.subr.mxu0 0.0
      %6348 = vmatpush1.msra.mxu0 0.0
      %6349 = vmatprep.subr.mxu0 0.0
      %6350 = vmatpush1.msra.mxu0 0.0
      %6351 = vmatprep.subr.mxu0 0.0
      %6352 = vmatpush1.msra.mxu0 0.0
      %6353 = vmatprep.subr.mxu0 0.0
      %6354 = vmatpush1.msra.mxu0 0.0
      %6355 = vmatprep.subr.mxu0 0.0
      %6356 = vmatpush1.msra.mxu0 0.0
      %6357 = vmatprep.subr.mxu0 0.0
      %6358 = vmatpush1.msra.mxu0 0.0
      %6359 = vmatprep.subr.mxu0 0.0
      %6360 = vmatpush1.msra.mxu0 0.0
      %6361 = vmatprep.subr.mxu0 0.0
      %6362 = vmatpush1.msra.mxu0 0.0
      %6363 = vmatprep.subr.mxu0 0.0
      %6364 = vmatpush1.msra.mxu0 0.0
      %6365 = vmatprep.subr.mxu0 0.0
      %6366 = vmatpush1.msra.mxu0 0.0
      %6367 = vmatprep.subr.mxu0 0.0
      %6368 = vmatpush1.msra.mxu0 0.0
      %6369 = vmatprep.subr.mxu0 0.0
      %6370 = vmatpush1.msra.mxu0 0.0
      %6371 = vmatprep.subr.mxu0 0.0
      %6372 = vmatpush1.msra.mxu0 0.0
      %6373 = vmatprep.subr.mxu0 0.0
      %6374 = vmatpush1.msra.mxu0 0.0
      %6375 = vmatprep.subr.mxu0 0.0
      %6376 = vmatpush1.msra.mxu0 0.0
      %6377 = vmatprep.subr.mxu0 0.0
      %6378 = vmatpush1.msra.mxu0 0.0
      %6379 = vmatprep.subr.mxu0 0.0
      %6380 = vmatpush1.msra.mxu0 0.0
      %6381 = vmatprep.subr.mxu0 0.0
      %6382 = vmatpush1.msra.mxu0 0.0
      %6383 = vmatprep.subr.mxu0 0.0
      %6384 = vmatpush1.msra.mxu0 0.0
      %6385 = vmatprep.subr.mxu0 0.0
      %6386 = vmatpush1.msra.mxu0 0.0
      %6387 = vmatprep.subr.mxu0 0.0
      %6388 = vmatpush1.msra.mxu0 0.0
      %6389 = vmatprep.subr.mxu0 0.0
      %6390 = vmatpush1.msra.mxu0 0.0
      %6391 = vmatprep.subr.mxu0 0.0
      %6392 = vmatpush1.msra.mxu0 0.0
      %6393 = vmatprep.subr.mxu0 0.0
      %6394 = vmatpush1.msra.mxu0 0.0
      %6395 = vmatprep.subr.mxu0 0.0
      %6396 = vmatpush1.msra.mxu0 0.0
      %6397 = vmatprep.subr.mxu0 0.0
      %6398 = vmatpush1.msra.mxu0 0.0
      %6399 = vmatprep.subr.mxu0 0.0
      %6400 = vmatpush1.msra.mxu0 0.0
      %6401 = vmatprep.subr.mxu0 0.0
      %6402 = vmatpush1.msra.mxu0 0.0
      %6403 = vmatprep.subr.mxu0 0.0
      %6404 = vmatpush1.msra.mxu0 0.0
      %6405 = vmatprep.mubr.f32.mxu0 0.0
      %6406 = vmatmul.mubr.f32.gmra.mrb[0].mxu0 %v6336
      %v6407 = vpop.f32.mrb[0].mxu0
      %v6408 = vadd.f32 1e-06, %v6407
      %v6409 = vpop.f32.mrb[0].mxu0
      %6410 = vmatprep.mubr.f32.mxu0 0.0
      %6411 = vmatmul.mubr.f32.gmra.mrb[0].mxu0 %v6339
      %v6412 = vpop.f32.mrb[0].mxu0
      %v6413 = vadd.f32 1e-06, %v6412
      %v6414 = vpop.f32.mrb[0].mxu0
      %6415 = vdwg.mxu0
      %v6416 = vrcp.pop %v6408
      %v6417 = vrcp.pop %v6413
      %v6418 = vmul.f32 %v6333, %v6416
      %v6419 = vmul.f32 %v6334, %v6417
      %v6421 = vsel %vm670, %v6418, 0
      %v6424 = vsel %vm670, %v6419, 0
      %6426 = vmatprep.subr.mxu0 %v647
      %6427 = vmatpush1.msra.mxu0 %v646
      %6428 = vmatprep.subr.mxu0 %v653
      %6429 = vmatpush1.msra.mxu0 %v652
      %6430 = vmatprep.subr.mxu0 %v659
      %6431 = vmatpush1.msra.mxu0 %v658
      %6432 = vmatprep.subr.mxu0 %v665
      %6433 = vmatpush1.msra.mxu0 %v664
      %6434 = vmatprep.subr.mxu0 0.0
      %6435 = vmatpush1.msra.mxu0 0.0
      %6436 = vmatprep.subr.mxu0 0.0
      %6437 = vmatpush1.msra.mxu0 0.0
      %6438 = vmatprep.subr.mxu0 0.0
      %6439 = vmatpush1.msra.mxu0 0.0
      %6440 = vmatprep.subr.mxu0 0.0
      %6441 = vmatpush1.msra.mxu0 0.0
      %6442 = vmatprep.subr.mxu0 0.0
      %6443 = vmatpush1.msra.mxu0 0.0
      %6444 = vmatprep.subr.mxu0 0.0
      %6445 = vmatpush1.msra.mxu0 0.0
      %6446 = vmatprep.subr.mxu0 0.0
      %6447 = vmatpush1.msra.mxu0 0.0
      %6448 = vmatprep.subr.mxu0 0.0
      %6449 = vmatpush1.msra.mxu0 0.0
      %6450 = vmatprep.subr.mxu0 0.0
      %6451 = vmatpush1.msra.mxu0 0.0
      %6452 = vmatprep.subr.mxu0 0.0
      %6453 = vmatpush1.msra.mxu0 0.0
      %6454 = vmatprep.subr.mxu0 0.0
      %6455 = vmatpush1.msra.mxu0 0.0
      %6456 = vmatprep.subr.mxu0 0.0
      %6457 = vmatpush1.msra.mxu0 0.0
      %6458 = vmatprep.subr.mxu0 0.0
      %6459 = vmatpush1.msra.mxu0 0.0
      %6460 = vmatprep.subr.mxu0 0.0
      %6461 = vmatpush1.msra.mxu0 0.0
      %6462 = vmatprep.subr.mxu0 0.0
      %6463 = vmatpush1.msra.mxu0 0.0
      %6464 = vmatprep.subr.mxu0 0.0
      %6465 = vmatpush1.msra.mxu0 0.0
      %6466 = vmatprep.subr.mxu0 0.0
      %6467 = vmatpush1.msra.mxu0 0.0
      %6468 = vmatprep.subr.mxu0 0.0
      %6469 = vmatpush1.msra.mxu0 0.0
      %6470 = vmatprep.subr.mxu0 0.0
      %6471 = vmatpush1.msra.mxu0 0.0
      %6472 = vmatprep.subr.mxu0 0.0
      %6473 = vmatpush1.msra.mxu0 0.0
      %6474 = vmatprep.subr.mxu0 0.0
      %6475 = vmatpush1.msra.mxu0 0.0
      %6476 = vmatprep.subr.mxu0 0.0
      %6477 = vmatpush1.msra.mxu0 0.0
      %6478 = vmatprep.subr.mxu0 0.0
      %6479 = vmatpush1.msra.mxu0 0.0
      %6480 = vmatprep.subr.mxu0 0.0
      %6481 = vmatpush1.msra.mxu0 0.0
      %6482 = vmatprep.subr.mxu0 0.0
      %6483 = vmatpush1.msra.mxu0 0.0
      %6484 = vmatprep.subr.mxu0 0.0
      %6485 = vmatpush1.msra.mxu0 0.0
      %6486 = vmatprep.subr.mxu0 0.0
      %6487 = vmatpush1.msra.mxu0 0.0
      %6488 = vmatprep.subr.mxu0 0.0
      %6489 = vmatpush1.msra.mxu0 0.0
      %6490 = vmatprep.mubr.f32.mxu0 0.0
      %6491 = vmatmul.mubr.f32.gmra.mrb[0].mxu0 %v6421
      %v6492 = vpop.f32.mrb[0].mxu0
      %v6493 = vadd.f32 0.0, %v6492
      %v6494 = vpop.f32.mrb[0].mxu0
      %v6495 = vadd.f32 0.0, %v6494
      %6496 = vmatprep.mubr.f32.mxu0 0.0
      %6497 = vmatmul.mubr.f32.gmra.mrb[0].mxu0 %v6424
      %v6498 = vpop.f32.mrb[0].mxu0
      %v6499 = vadd.f32 0.0, %v6498
      %v6500 = vpop.f32.mrb[0].mxu0
      %v6501 = vadd.f32 0.0, %v6500
      %6502 = vdwg.mxu0
      %6503 = vmatprep.subr.mxu0 %v649
      %6504 = vmatpush1.msra.mxu0 %v648
      %6505 = vmatprep.subr.mxu0 %v655
      %6506 = vmatpush1.msra.mxu0 %v654
      %6507 = vmatprep.subr.mxu0 %v661
      %6508 = vmatpush1.msra.mxu0 %v660
      %6509 = vmatprep.subr.mxu0 %v667
      %6510 = vmatpush1.msra.mxu0 %v666
      %6511 = vmatprep.subr.mxu0 0.0
      %6512 = vmatpush1.msra.mxu0 0.0
      %6513 = vmatprep.subr.mxu0 0.0
      %6514 = vmatpush1.msra.mxu0 0.0
      %6515 = vmatprep.subr.mxu0 0.0
      %6516 = vmatpush1.msra.mxu0 0.0
      %6517 = vmatprep.subr.mxu0 0.0
      %6518 = vmatpush1.msra.mxu0 0.0
      %6519 = vmatprep.subr.mxu0 0.0
      %6520 = vmatpush1.msra.mxu0 0.0
      %6521 = vmatprep.subr.mxu0 0.0
      %6522 = vmatpush1.msra.mxu0 0.0
      %6523 = vmatprep.subr.mxu0 0.0
      %6524 = vmatpush1.msra.mxu0 0.0
      %6525 = vmatprep.subr.mxu0 0.0
      %6526 = vmatpush1.msra.mxu0 0.0
      %6527 = vmatprep.subr.mxu0 0.0
      %6528 = vmatpush1.msra.mxu0 0.0
      %6529 = vmatprep.subr.mxu0 0.0
      %6530 = vmatpush1.msra.mxu0 0.0
      %6531 = vmatprep.subr.mxu0 0.0
      %6532 = vmatpush1.msra.mxu0 0.0
      %6533 = vmatprep.subr.mxu0 0.0
      %6534 = vmatpush1.msra.mxu0 0.0
      %6535 = vmatprep.subr.mxu0 0.0
      %6536 = vmatpush1.msra.mxu0 0.0
      %6537 = vmatprep.subr.mxu0 0.0
      %6538 = vmatpush1.msra.mxu0 0.0
      %6539 = vmatprep.subr.mxu0 0.0
      %6540 = vmatpush1.msra.mxu0 0.0
      %6541 = vmatprep.subr.mxu0 0.0
      %6542 = vmatpush1.msra.mxu0 0.0
      %6543 = vmatprep.subr.mxu0 0.0
      %6544 = vmatpush1.msra.mxu0 0.0
      %6545 = vmatprep.subr.mxu0 0.0
      %6546 = vmatpush1.msra.mxu0 0.0
      %6547 = vmatprep.subr.mxu0 0.0
      %6548 = vmatpush1.msra.mxu0 0.0
      %6549 = vmatprep.subr.mxu0 0.0
      %6550 = vmatpush1.msra.mxu0 0.0
      %6551 = vmatprep.subr.mxu0 0.0
      %6552 = vmatpush1.msra.mxu0 0.0
      %6553 = vmatprep.subr.mxu0 0.0
      %6554 = vmatpush1.msra.mxu0 0.0
      %6555 = vmatprep.subr.mxu0 0.0
      %6556 = vmatpush1.msra.mxu0 0.0
      %6557 = vmatprep.subr.mxu0 0.0
      %6558 = vmatpush1.msra.mxu0 0.0
      %6559 = vmatprep.subr.mxu0 0.0
      %6560 = vmatpush1.msra.mxu0 0.0
      %6561 = vmatprep.subr.mxu0 0.0
      %6562 = vmatpush1.msra.mxu0 0.0
      %6563 = vmatprep.subr.mxu0 0.0
      %6564 = vmatpush1.msra.mxu0 0.0
      %6565 = vmatprep.subr.mxu0 0.0
      %6566 = vmatpush1.msra.mxu0 0.0
      %6567 = vmatprep.mubr.f32.mxu0 0.0
      %6568 = vmatmul.mubr.f32.gmra.mrb[0].mxu0 %v6421
      %v6569 = vpop.f32.mrb[0].mxu0
      %v6570 = vadd.f32 0.0, %v6569
      %v6571 = vpop.f32.mrb[0].mxu0
      %v6572 = vadd.f32 0.0, %v6571
      %6573 = vmatprep.mubr.f32.mxu0 0.0
      %6574 = vmatmul.mubr.f32.gmra.mrb[0].mxu0 %v6424
      %v6575 = vpop.f32.mrb[0].mxu0
      %v6576 = vadd.f32 0.0, %v6575
      %v6577 = vpop.f32.mrb[0].mxu0
      %v6578 = vadd.f32 0.0, %v6577
      %6579 = vdwg.mxu0
      %6580 = vmatprep.subr.mxu0 %v651
      %6581 = vmatpush1.msra.mxu0 %v650
      %6582 = vmatprep.subr.mxu0 %v657
      %6583 = vmatpush1.msra.mxu0 %v656
      %6584 = vmatprep.subr.mxu0 %v663
      %6585 = vmatpush1.msra.mxu0 %v662
      %6586 = vmatprep.subr.mxu0 %v669
      %6587 = vmatpush1.msra.mxu0 %v668
      %6588 = vmatprep.subr.mxu0 0.0
      %6589 = vmatpush1.msra.mxu0 0.0
      %6590 = vmatprep.subr.mxu0 0.0
      %6591 = vmatpush1.msra.mxu0 0.0
      %6592 = vmatprep.subr.mxu0 0.0
      %6593 = vmatpush1.msra.mxu0 0.0
      %6594 = vmatprep.subr.mxu0 0.0
      %6595 = vmatpush1.msra.mxu0 0.0
      %6596 = vmatprep.subr.mxu0 0.0
      %6597 = vmatpush1.msra.mxu0 0.0
      %6598 = vmatprep.subr.mxu0 0.0
      %6599 = vmatpush1.msra.mxu0 0.0
      %6600 = vmatprep.subr.mxu0 0.0
      %6601 = vmatpush1.msra.mxu0 0.0
      %6602 = vmatprep.subr.mxu0 0.0
      %6603 = vmatpush1.msra.mxu0 0.0
      %6604 = vmatprep.subr.mxu0 0.0
      %6605 = vmatpush1.msra.mxu0 0.0
      %6606 = vmatprep.subr.mxu0 0.0
      %6607 = vmatpush1.msra.mxu0 0.0
      %6608 = vmatprep.subr.mxu0 0.0
      %6609 = vmatpush1.msra.mxu0 0.0
      %6610 = vmatprep.subr.mxu0 0.0
      %6611 = vmatpush1.msra.mxu0 0.0
      %6612 = vmatprep.subr.mxu0 0.0
      %6613 = vmatpush1.msra.mxu0 0.0
      %6614 = vmatprep.subr.mxu0 0.0
      %6615 = vmatpush1.msra.mxu0 0.0
      %6616 = vmatprep.subr.mxu0 0.0
      %6617 = vmatpush1.msra.mxu0 0.0
      %6618 = vmatprep.subr.mxu0 0.0
      %6619 = vmatpush1.msra.mxu0 0.0
      %6620 = vmatprep.subr.mxu0 0.0
      %6621 = vmatpush1.msra.mxu0 0.0
      %6622 = vmatprep.subr.mxu0 0.0
      %6623 = vmatpush1.msra.mxu0 0.0
      %6624 = vmatprep.subr.mxu0 0.0
      %6625 = vmatpush1.msra.mxu0 0.0
      %6626 = vmatprep.subr.mxu0 0.0
      %6627 = vmatpush1.msra.mxu0 0.0
      %6628 = vmatprep.subr.mxu0 0.0
      %6629 = vmatpush1.msra.mxu0 0.0
      %6630 = vmatprep.subr.mxu0 0.0
      %6631 = vmatpush1.msra.mxu0 0.0
      %6632 = vmatprep.subr.mxu0 0.0
      %6633 = vmatpush1.msra.mxu0 0.0
      %6634 = vmatprep.subr.mxu0 0.0
      %6635 = vmatpush1.msra.mxu0 0.0
      %6636 = vmatprep.subr.mxu0 0.0
      %6637 = vmatpush1.msra.mxu0 0.0
      %6638 = vmatprep.subr.mxu0 0.0
      %6639 = vmatpush1.msra.mxu0 0.0
      %6640 = vmatprep.subr.mxu0 0.0
      %6641 = vmatpush1.msra.mxu0 0.0
      %6642 = vmatprep.subr.mxu0 0.0
      %6643 = vmatpush1.msra.mxu0 0.0
      %6644 = vmatprep.mubr.f32.mxu0 0.0
      %6645 = vmatmul.mubr.f32.gmra.mrb[0].mxu0 %v6421
      %v6646 = vpop.f32.mrb[0].mxu0
      %v6647 = vadd.f32 0.0, %v6646
      %v6648 = vpop.f32.mrb[0].mxu0
      %v6649 = vadd.f32 0.0, %v6648
      %6650 = vmatprep.mubr.f32.mxu0 0.0
      %6651 = vmatmul.mubr.f32.gmra.mrb[0].mxu0 %v6424
      %v6652 = vpop.f32.mrb[0].mxu0
      %v6653 = vadd.f32 0.0, %v6652
      %v6654 = vpop.f32.mrb[0].mxu0
      %v6655 = vadd.f32 0.0, %v6654
      %6656 = vdwg.mxu0
      %6657 = vmatprep.subr.mxu0 0.0
      %6658 = vmatpush1.xpose.msra.mxu0 %v6421
      %6659 = vmatprep.subr.mxu0 0.0
      %6660 = vmatpush1.xpose.msra.mxu0 %v6424
      %6661 = vmatprep.subr.mxu0 0.0
      %6662 = vmatpush1.xpose.msra.mxu0 0.0
      %6663 = vmatprep.subr.mxu0 0.0
      %6664 = vmatpush1.xpose.msra.mxu0 0.0
      %6665 = vmatprep.subr.mxu0 0.0
      %6666 = vmatpush1.xpose.msra.mxu0 0.0
      %6667 = vmatprep.subr.mxu0 0.0
      %6668 = vmatpush1.xpose.msra.mxu0 0.0
      %6669 = vmatprep.subr.mxu0 0.0
      %6670 = vmatpush1.xpose.msra.mxu0 0.0
      %6671 = vmatprep.subr.mxu0 0.0
      %6672 = vmatpush1.xpose.msra.mxu0 0.0
      %6673 = vmatprep.subr.mxu0 0.0
      %6674 = vmatpush1.xpose.msra.mxu0 0.0
      %6675 = vmatprep.subr.mxu0 0.0
      %6676 = vmatpush1.xpose.msra.mxu0 0.0
      %6677 = vmatprep.subr.mxu0 0.0
      %6678 = vmatpush1.xpose.msra.mxu0 0.0
      %6679 = vmatprep.subr.mxu0 0.0
      %6680 = vmatpush1.xpose.msra.mxu0 0.0
      %6681 = vmatprep.subr.mxu0 0.0
      %6682 = vmatpush1.xpose.msra.mxu0 0.0
      %6683 = vmatprep.subr.mxu0 0.0
      %6684 = vmatpush1.xpose.msra.mxu0 0.0
      %6685 = vmatprep.subr.mxu0 0.0
      %6686 = vmatpush1.xpose.msra.mxu0 0.0
      %6687 = vmatprep.subr.mxu0 0.0
      %6688 = vmatpush1.xpose.msra.mxu0 0.0
      %6689 = vmatprep.subr.mxu0 0.0
      %6690 = vmatpush1.xpose.msra.mxu0 0.0
      %6691 = vmatprep.subr.mxu0 0.0
      %6692 = vmatpush1.xpose.msra.mxu0 0.0
      %6693 = vmatprep.subr.mxu0 0.0
      %6694 = vmatpush1.xpose.msra.mxu0 0.0
      %6695 = vmatprep.subr.mxu0 0.0
      %6696 = vmatpush1.xpose.msra.mxu0 0.0
      %6697 = vmatprep.subr.mxu0 0.0
      %6698 = vmatpush1.xpose.msra.mxu0 0.0
      %6699 = vmatprep.subr.mxu0 0.0
      %6700 = vmatpush1.xpose.msra.mxu0 0.0
      %6701 = vmatprep.subr.mxu0 0.0
      %6702 = vmatpush1.xpose.msra.mxu0 0.0
      %6703 = vmatprep.subr.mxu0 0.0
      %6704 = vmatpush1.xpose.msra.mxu0 0.0
      %6705 = vmatprep.subr.mxu0 0.0
      %6706 = vmatpush1.xpose.msra.mxu0 0.0
      %6707 = vmatprep.subr.mxu0 0.0
      %6708 = vmatpush1.xpose.msra.mxu0 0.0
      %6709 = vmatprep.subr.mxu0 0.0
      %6710 = vmatpush1.xpose.msra.mxu0 0.0
      %6711 = vmatprep.subr.mxu0 0.0
      %6712 = vmatpush1.xpose.msra.mxu0 0.0
      %6713 = vmatprep.subr.mxu0 0.0
      %6714 = vmatpush1.xpose.msra.mxu0 0.0
      %6715 = vmatprep.subr.mxu0 0.0
      %6716 = vmatpush1.xpose.msra.mxu0 0.0
      %6717 = vmatprep.subr.mxu0 0.0
      %6718 = vmatpush1.xpose.msra.mxu0 0.0
      %6719 = vmatprep.subr.mxu0 0.0
      %6720 = vmatpush1.xpose.msra.mxu0 0.0
      %6721 = vmatprep.mubr.f32.mxu0 0.0
      %6722 = vmatmul.mubr.f32.gmra.mrb[0].mxu0 %v6421
      %v6723 = vpop.f32.mrb[0].mxu0
      %v6724 = vadd.f32 0.0, %v6723
      %v6725 = vpop.f32.mrb[0].mxu0
      %6726 = vmatprep.mubr.f32.mxu0 0.0
      %6727 = vmatmul.mubr.f32.gmra.mrb[0].mxu0 %v6424
      %v6728 = vpop.f32.mrb[0].mxu0
      %v6729 = vadd.f32 0.0, %v6728
      %v6730 = vpop.f32.mrb[0].mxu0
      %6731 = vdwg.mxu0
      %v6732 = vmul.f32 %v5871, %v6493
      %v6733 = vmul.f32 %v5872, %v6495
      %v6734 = vmul.f32 %v5873, %v6570
      %v6735 = vmul.f32 %v5874, %v6572
      %v6736 = vmul.f32 %v5875, %v6647
      %v6737 = vmul.f32 %v5876, %v6649
      %v6738 = vmul.f32 %v5877, %v6499
      %v6739 = vmul.f32 %v5878, %v6501
      %v6740 = vmul.f32 %v5879, %v6576
      %v6741 = vmul.f32 %v5880, %v6578
      %v6742 = vmul.f32 %v5881, %v6653
      %v6743 = vmul.f32 %v5882, %v6655
      %v6745 = vsel %vm1133, %v6724, 0
      %v6748 = vsel %vm1133, %v6729, 0
      %6750 = vmatprep.subr.mxu0 %v5872
      %6751 = vmatpush1.msra.mxu0 %v5871
      %6752 = vmatprep.subr.mxu0 %v5878
      %6753 = vmatpush1.msra.mxu0 %v5877
      %6754 = vmatprep.subr.mxu0 0.0
      %6755 = vmatpush1.msra.mxu0 0.0
      %6756 = vmatprep.subr.mxu0 0.0
      %6757 = vmatpush1.msra.mxu0 0.0
      %6758 = vmatprep.subr.mxu0 0.0
      %6759 = vmatpush1.msra.mxu0 0.0
      %6760 = vmatprep.subr.mxu0 0.0
      %6761 = vmatpush1.msra.mxu0 0.0
      %6762 = vmatprep.subr.mxu0 0.0
      %6763 = vmatpush1.msra.mxu0 0.0
      %6764 = vmatprep.subr.mxu0 0.0
      %6765 = vmatpush1.msra.mxu0 0.0
      %6766 = vmatprep.subr.mxu0 0.0
      %6767 = vmatpush1.msra.mxu0 0.0
      %6768 = vmatprep.subr.mxu0 0.0
      %6769 = vmatpush1.msra.mxu0 0.0
      %6770 = vmatprep.subr.mxu0 0.0
      %6771 = vmatpush1.msra.mxu0 0.0
      %6772 = vmatprep.subr.mxu0 0.0
      %6773 = vmatpush1.msra.mxu0 0.0
      %6774 = vmatprep.subr.mxu0 0.0
      %6775 = vmatpush1.msra.mxu0 0.0
      %6776 = vmatprep.subr.mxu0 0.0
      %6777 = vmatpush1.msra.mxu0 0.0
      %6778 = vmatprep.subr.mxu0 0.0
      %6779 = vmatpush1.msra.mxu0 0.0
      %6780 = vmatprep.subr.mxu0 0.0
      %6781 = vmatpush1.msra.mxu0 0.0
      %6782 = vmatprep.subr.mxu0 0.0
      %6783 = vmatpush1.msra.mxu0 0.0
      %6784 = vmatprep.subr.mxu0 0.0
      %6785 = vmatpush1.msra.mxu0 0.0
      %6786 = vmatprep.subr.mxu0 0.0
      %6787 = vmatpush1.msra.mxu0 0.0
      %6788 = vmatprep.subr.mxu0 0.0
      %6789 = vmatpush1.msra.mxu0 0.0
      %6790 = vmatprep.subr.mxu0 0.0
      %6791 = vmatpush1.msra.mxu0 0.0
      %6792 = vmatprep.subr.mxu0 0.0
      %6793 = vmatpush1.msra.mxu0 0.0
      %6794 = vmatprep.subr.mxu0 0.0
      %6795 = vmatpush1.msra.mxu0 0.0
      %6796 = vmatprep.subr.mxu0 0.0
      %6797 = vmatpush1.msra.mxu0 0.0
      %6798 = vmatprep.subr.mxu0 0.0
      %6799 = vmatpush1.msra.mxu0 0.0
      %6800 = vmatprep.subr.mxu0 0.0
      %6801 = vmatpush1.msra.mxu0 0.0
      %6802 = vmatprep.subr.mxu0 0.0
      %6803 = vmatpush1.msra.mxu0 0.0
      %6804 = vmatprep.subr.mxu0 0.0
      %6805 = vmatpush1.msra.mxu0 0.0
      %6806 = vmatprep.subr.mxu0 0.0
      %6807 = vmatpush1.msra.mxu0 0.0
      %6808 = vmatprep.subr.mxu0 0.0
      %6809 = vmatpush1.msra.mxu0 0.0
      %6810 = vmatprep.subr.mxu0 0.0
      %6811 = vmatpush1.msra.mxu0 0.0
      %6812 = vmatprep.subr.mxu0 0.0
      %6813 = vmatpush1.msra.mxu0 0.0
      %6814 = vmatprep.mubr.f32.mxu0 0.0
      %6815 = vmatmul.mubr.f32.gmra.mrb[0].mxu0 %v6745
      %v6816 = vpop.f32.mrb[0].mxu0
      %v6817 = vadd.f32 1e-06, %v6816
      %v6818 = vpop.f32.mrb[0].mxu0
      %v6819 = vadd.f32 1e-06, %v6818
      %6820 = vmatprep.mubr.f32.mxu0 0.0
      %6821 = vmatmul.mubr.f32.gmra.mrb[0].mxu0 %v6748
      %v6822 = vpop.f32.mrb[0].mxu0
      %v6823 = vadd.f32 1e-06, %v6822
      %v6824 = vpop.f32.mrb[0].mxu0
      %v6825 = vadd.f32 1e-06, %v6824
      %6826 = vdwg.mxu0
      %6827 = vmatprep.subr.mxu0 %v5874
      %6828 = vmatpush1.msra.mxu0 %v5873
      %6829 = vmatprep.subr.mxu0 %v5880
      %6830 = vmatpush1.msra.mxu0 %v5879
      %6831 = vmatprep.subr.mxu0 0.0
      %6832 = vmatpush1.msra.mxu0 0.0
      %6833 = vmatprep.subr.mxu0 0.0
      %6834 = vmatpush1.msra.mxu0 0.0
      %6835 = vmatprep.subr.mxu0 0.0
      %6836 = vmatpush1.msra.mxu0 0.0
      %6837 = vmatprep.subr.mxu0 0.0
      %6838 = vmatpush1.msra.mxu0 0.0
      %6839 = vmatprep.subr.mxu0 0.0
      %6840 = vmatpush1.msra.mxu0 0.0
      %6841 = vmatprep.subr.mxu0 0.0
      %6842 = vmatpush1.msra.mxu0 0.0
      %6843 = vmatprep.subr.mxu0 0.0
      %6844 = vmatpush1.msra.mxu0 0.0
      %6845 = vmatprep.subr.mxu0 0.0
      %6846 = vmatpush1.msra.mxu0 0.0
      %6847 = vmatprep.subr.mxu0 0.0
      %6848 = vmatpush1.msra.mxu0 0.0
      %6849 = vmatprep.subr.mxu0 0.0
      %6850 = vmatpush1.msra.mxu0 0.0
      %6851 = vmatprep.subr.mxu0 0.0
      %6852 = vmatpush1.msra.mxu0 0.0
      %6853 = vmatprep.subr.mxu0 0.0
      %6854 = vmatpush1.msra.mxu0 0.0
      %6855 = vmatprep.subr.mxu0 0.0
      %6856 = vmatpush1.msra.mxu0 0.0
      %6857 = vmatprep.subr.mxu0 0.0
      %6858 = vmatpush1.msra.mxu0 0.0
      %6859 = vmatprep.subr.mxu0 0.0
      %6860 = vmatpush1.msra.mxu0 0.0
      %6861 = vmatprep.subr.mxu0 0.0
      %6862 = vmatpush1.msra.mxu0 0.0
      %6863 = vmatprep.subr.mxu0 0.0
      %6864 = vmatpush1.msra.mxu0 0.0
      %6865 = vmatprep.subr.mxu0 0.0
      %6866 = vmatpush1.msra.mxu0 0.0
      %6867 = vmatprep.subr.mxu0 0.0
      %6868 = vmatpush1.msra.mxu0 0.0
      %6869 = vmatprep.subr.mxu0 0.0
      %6870 = vmatpush1.msra.mxu0 0.0
      %6871 = vmatprep.subr.mxu0 0.0
      %6872 = vmatpush1.msra.mxu0 0.0
      %6873 = vmatprep.subr.mxu0 0.0
      %6874 = vmatpush1.msra.mxu0 0.0
      %6875 = vmatprep.subr.mxu0 0.0
      %6876 = vmatpush1.msra.mxu0 0.0
      %6877 = vmatprep.subr.mxu0 0.0
      %6878 = vmatpush1.msra.mxu0 0.0
      %6879 = vmatprep.subr.mxu0 0.0
      %6880 = vmatpush1.msra.mxu0 0.0
      %6881 = vmatprep.subr.mxu0 0.0
      %6882 = vmatpush1.msra.mxu0 0.0
      %6883 = vmatprep.subr.mxu0 0.0
      %6884 = vmatpush1.msra.mxu0 0.0
      %6885 = vmatprep.subr.mxu0 0.0
      %6886 = vmatpush1.msra.mxu0 0.0
      %6887 = vmatprep.subr.mxu0 0.0
      %6888 = vmatpush1.msra.mxu0 0.0
      %6889 = vmatprep.subr.mxu0 0.0
      %6890 = vmatpush1.msra.mxu0 0.0
      %6891 = vmatprep.mubr.f32.mxu0 0.0
      %6892 = vmatmul.mubr.f32.gmra.mrb[0].mxu0 %v6745
      %v6893 = vpop.f32.mrb[0].mxu0
      %v6894 = vadd.f32 1e-06, %v6893
      %v6895 = vpop.f32.mrb[0].mxu0
      %v6896 = vadd.f32 1e-06, %v6895
      %6897 = vmatprep.mubr.f32.mxu0 0.0
      %6898 = vmatmul.mubr.f32.gmra.mrb[0].mxu0 %v6748
      %v6899 = vpop.f32.mrb[0].mxu0
      %v6900 = vadd.f32 1e-06, %v6899
      %v6901 = vpop.f32.mrb[0].mxu0
      %v6902 = vadd.f32 1e-06, %v6901
      %6903 = vdwg.mxu0
      %6904 = vmatprep.subr.mxu0 %v5876
      %6905 = vmatpush1.msra.mxu0 %v5875
      %6906 = vmatprep.subr.mxu0 %v5882
      %6907 = vmatpush1.msra.mxu0 %v5881
      %6908 = vmatprep.subr.mxu0 0.0
      %6909 = vmatpush1.msra.mxu0 0.0
      %6910 = vmatprep.subr.mxu0 0.0
      %6911 = vmatpush1.msra.mxu0 0.0
      %6912 = vmatprep.subr.mxu0 0.0
      %6913 = vmatpush1.msra.mxu0 0.0
      %6914 = vmatprep.subr.mxu0 0.0
      %6915 = vmatpush1.msra.mxu0 0.0
      %6916 = vmatprep.subr.mxu0 0.0
      %6917 = vmatpush1.msra.mxu0 0.0
      %6918 = vmatprep.subr.mxu0 0.0
      %6919 = vmatpush1.msra.mxu0 0.0
      %6920 = vmatprep.subr.mxu0 0.0
      %6921 = vmatpush1.msra.mxu0 0.0
      %6922 = vmatprep.subr.mxu0 0.0
      %6923 = vmatpush1.msra.mxu0 0.0
      %6924 = vmatprep.subr.mxu0 0.0
      %6925 = vmatpush1.msra.mxu0 0.0
      %6926 = vmatprep.subr.mxu0 0.0
      %6927 = vmatpush1.msra.mxu0 0.0
      %6928 = vmatprep.subr.mxu0 0.0
      %6929 = vmatpush1.msra.mxu0 0.0
      %6930 = vmatprep.subr.mxu0 0.0
      %6931 = vmatpush1.msra.mxu0 0.0
      %6932 = vmatprep.subr.mxu0 0.0
      %6933 = vmatpush1.msra.mxu0 0.0
      %6934 = vmatprep.subr.mxu0 0.0
      %6935 = vmatpush1.msra.mxu0 0.0
      %6936 = vmatprep.subr.mxu0 0.0
      %6937 = vmatpush1.msra.mxu0 0.0
      %6938 = vmatprep.subr.mxu0 0.0
      %6939 = vmatpush1.msra.mxu0 0.0
      %6940 = vmatprep.subr.mxu0 0.0
      %6941 = vmatpush1.msra.mxu0 0.0
      %6942 = vmatprep.subr.mxu0 0.0
      %6943 = vmatpush1.msra.mxu0 0.0
      %6944 = vmatprep.subr.mxu0 0.0
      %6945 = vmatpush1.msra.mxu0 0.0
      %6946 = vmatprep.subr.mxu0 0.0
      %6947 = vmatpush1.msra.mxu0 0.0
      %6948 = vmatprep.subr.mxu0 0.0
      %6949 = vmatpush1.msra.mxu0 0.0
      %6950 = vmatprep.subr.mxu0 0.0
      %6951 = vmatpush1.msra.mxu0 0.0
      %6952 = vmatprep.subr.mxu0 0.0
      %6953 = vmatpush1.msra.mxu0 0.0
      %6954 = vmatprep.subr.mxu0 0.0
      %6955 = vmatpush1.msra.mxu0 0.0
      %6956 = vmatprep.subr.mxu0 0.0
      %6957 = vmatpush1.msra.mxu0 0.0
      %6958 = vmatprep.subr.mxu0 0.0
      %6959 = vmatpush1.msra.mxu0 0.0
      %6960 = vmatprep.subr.mxu0 0.0
      %6961 = vmatpush1.msra.mxu0 0.0
      %6962 = vmatprep.subr.mxu0 0.0
      %6963 = vmatpush1.msra.mxu0 0.0
      %6964 = vmatprep.subr.mxu0 0.0
      %6965 = vmatpush1.msra.mxu0 0.0
      %6966 = vmatprep.subr.mxu0 0.0
      %6967 = vmatpush1.msra.mxu0 0.0
      %6968 = vmatprep.mubr.f32.mxu0 0.0
      %6969 = vmatmul.mubr.f32.gmra.mrb[0].mxu0 %v6745
      %v6970 = vpop.f32.mrb[0].mxu0
      %v6971 = vadd.f32 1e-06, %v6970
      %v6972 = vpop.f32.mrb[0].mxu0
      %v6973 = vadd.f32 1e-06, %v6972
      %6974 = vmatprep.mubr.f32.mxu0 0.0
      %6975 = vmatmul.mubr.f32.gmra.mrb[0].mxu0 %v6748
      %v6976 = vpop.f32.mrb[0].mxu0
      %v6977 = vadd.f32 1e-06, %v6976
      %v6978 = vpop.f32.mrb[0].mxu0
      %v6979 = vadd.f32 1e-06, %v6978
      %6980 = vdwg.mxu0
      %v6981 = vrcp.pop %v6817
      %v6982 = vrcp.pop %v6819
      %v6983 = vrcp.pop %v6894
      %v6984 = vrcp.pop %v6896
      %v6985 = vrcp.pop %v6971
      %v6986 = vrcp.pop %v6973
      %v6987 = vrcp.pop %v6823
      %v6988 = vrcp.pop %v6825
      %v6989 = vrcp.pop %v6900
      %v6990 = vrcp.pop %v6902
      %v6991 = vrcp.pop %v6977
      %v6992 = vrcp.pop %v6979
      %v6993 = vmul.f32 %v6732, %v6981
      %v6994 = vmul.f32 %v6733, %v6982
      %v6995 = vmul.f32 %v6734, %v6983
      %v6996 = vmul.f32 %v6735, %v6984
      %v6997 = vmul.f32 %v6736, %v6985
      %v6998 = vmul.f32 %v6737, %v6986
      %v6999 = vmul.f32 %v6738, %v6987
      %v7000 = vmul.f32 %v6739, %v6988
      %v7001 = vmul.f32 %v6740, %v6989
      %v7002 = vmul.f32 %v6741, %v6990
      %v7003 = vmul.f32 %v6742, %v6991
      %v7004 = vmul.f32 %v6743, %v6992
      %7005 = vmatprep.subr.mxu0 %v647
      %7006 = vmatpush1.xpose.msra.mxu0 %v646
      %7007 = vmatprep.subr.mxu0 %v653
      %7008 = vmatpush1.xpose.msra.mxu0 %v652
      %7009 = vmatprep.subr.mxu0 %v659
      %7010 = vmatpush1.xpose.msra.mxu0 %v658
      %7011 = vmatprep.subr.mxu0 %v665
      %7012 = vmatpush1.xpose.msra.mxu0 %v664
      %7013 = vmatprep.subr.mxu0 0.0
      %7014 = vmatpush1.xpose.msra.mxu0 0.0
      %7015 = vmatprep.subr.mxu0 0.0
      %7016 = vmatpush1.xpose.msra.mxu0 0.0
      %7017 = vmatprep.subr.mxu0 0.0
      %7018 = vmatpush1.xpose.msra.mxu0 0.0
      %7019 = vmatprep.subr.mxu0 0.0
      %7020 = vmatpush1.xpose.msra.mxu0 0.0
      %7021 = vmatprep.subr.mxu0 0.0
      %7022 = vmatpush1.xpose.msra.mxu0 0.0
      %7023 = vmatprep.subr.mxu0 0.0
      %7024 = vmatpush1.xpose.msra.mxu0 0.0
      %7025 = vmatprep.subr.mxu0 0.0
      %7026 = vmatpush1.xpose.msra.mxu0 0.0
      %7027 = vmatprep.subr.mxu0 0.0
      %7028 = vmatpush1.xpose.msra.mxu0 0.0
      %7029 = vmatprep.subr.mxu0 0.0
      %7030 = vmatpush1.xpose.msra.mxu0 0.0
      %7031 = vmatprep.subr.mxu0 0.0
      %7032 = vmatpush1.xpose.msra.mxu0 0.0
      %7033 = vmatprep.subr.mxu0 0.0
      %7034 = vmatpush1.xpose.msra.mxu0 0.0
      %7035 = vmatprep.subr.mxu0 0.0
      %7036 = vmatpush1.xpose.msra.mxu0 0.0
      %7037 = vmatprep.subr.mxu0 0.0
      %7038 = vmatpush1.xpose.msra.mxu0 0.0
      %7039 = vmatprep.subr.mxu0 0.0
      %7040 = vmatpush1.xpose.msra.mxu0 0.0
      %7041 = vmatprep.subr.mxu0 0.0
      %7042 = vmatpush1.xpose.msra.mxu0 0.0
      %7043 = vmatprep.subr.mxu0 0.0
      %7044 = vmatpush1.xpose.msra.mxu0 0.0
      %7045 = vmatprep.subr.mxu0 0.0
      %7046 = vmatpush1.xpose.msra.mxu0 0.0
      %7047 = vmatprep.subr.mxu0 0.0
      %7048 = vmatpush1.xpose.msra.mxu0 0.0
      %7049 = vmatprep.subr.mxu0 0.0
      %7050 = vmatpush1.xpose.msra.mxu0 0.0
      %7051 = vmatprep.subr.mxu0 0.0
      %7052 = vmatpush1.xpose.msra.mxu0 0.0
      %7053 = vmatprep.subr.mxu0 0.0
      %7054 = vmatpush1.xpose.msra.mxu0 0.0
      %7055 = vmatprep.subr.mxu0 0.0
      %7056 = vmatpush1.xpose.msra.mxu0 0.0
      %7057 = vmatprep.subr.mxu0 0.0
      %7058 = vmatpush1.xpose.msra.mxu0 0.0
      %7059 = vmatprep.subr.mxu0 0.0
      %7060 = vmatpush1.xpose.msra.mxu0 0.0
      %7061 = vmatprep.subr.mxu0 0.0
      %7062 = vmatpush1.xpose.msra.mxu0 0.0
      %7063 = vmatprep.subr.mxu0 0.0
      %7064 = vmatpush1.xpose.msra.mxu0 0.0
      %7065 = vmatprep.subr.mxu0 0.0
      %7066 = vmatpush1.xpose.msra.mxu0 0.0
      %7067 = vmatprep.subr.mxu0 0.0
      %7068 = vmatpush1.xpose.msra.mxu0 0.0
      %7069 = vmatprep.mubr.f32.mxu0 %v6994
      %7070 = vmatmul.mubr.f32.gmra.mrb[0].mxu0 %v6993
      %v7071 = vpop.f32.mrb[0].mxu0
      %v7072 = vadd.f32 0.0, %v7071
      %v7073 = vpop.f32.mrb[0].mxu0
      %7074 = vmatprep.mubr.f32.mxu0 %v7000
      %7075 = vmatmul.mubr.f32.gmra.mrb[0].mxu0 %v6999
      %v7076 = vpop.f32.mrb[0].mxu0
      %v7077 = vadd.f32 0.0, %v7076
      %v7078 = vpop.f32.mrb[0].mxu0
      %7079 = vdwg.mxu0
      %7080 = vmatprep.subr.mxu0 %v649
      %7081 = vmatpush1.xpose.msra.mxu0 %v648
      %7082 = vmatprep.subr.mxu0 %v655
      %7083 = vmatpush1.xpose.msra.mxu0 %v654
      %7084 = vmatprep.subr.mxu0 %v661
      %7085 = vmatpush1.xpose.msra.mxu0 %v660
      %7086 = vmatprep.subr.mxu0 %v667
      %7087 = vmatpush1.xpose.msra.mxu0 %v666
      %7088 = vmatprep.subr.mxu0 0.0
      %7089 = vmatpush1.xpose.msra.mxu0 0.0
      %7090 = vmatprep.subr.mxu0 0.0
      %7091 = vmatpush1.xpose.msra.mxu0 0.0
      %7092 = vmatprep.subr.mxu0 0.0
      %7093 = vmatpush1.xpose.msra.mxu0 0.0
      %7094 = vmatprep.subr.mxu0 0.0
      %7095 = vmatpush1.xpose.msra.mxu0 0.0
      %7096 = vmatprep.subr.mxu0 0.0
      %7097 = vmatpush1.xpose.msra.mxu0 0.0
      %7098 = vmatprep.subr.mxu0 0.0
      %7099 = vmatpush1.xpose.msra.mxu0 0.0
      %7100 = vmatprep.subr.mxu0 0.0
      %7101 = vmatpush1.xpose.msra.mxu0 0.0
      %7102 = vmatprep.subr.mxu0 0.0
      %7103 = vmatpush1.xpose.msra.mxu0 0.0
      %7104 = vmatprep.subr.mxu0 0.0
      %7105 = vmatpush1.xpose.msra.mxu0 0.0
      %7106 = vmatprep.subr.mxu0 0.0
      %7107 = vmatpush1.xpose.msra.mxu0 0.0
      %7108 = vmatprep.subr.mxu0 0.0
      %7109 = vmatpush1.xpose.msra.mxu0 0.0
      %7110 = vmatprep.subr.mxu0 0.0
      %7111 = vmatpush1.xpose.msra.mxu0 0.0
      %7112 = vmatprep.subr.mxu0 0.0
      %7113 = vmatpush1.xpose.msra.mxu0 0.0
      %7114 = vmatprep.subr.mxu0 0.0
      %7115 = vmatpush1.xpose.msra.mxu0 0.0
      %7116 = vmatprep.subr.mxu0 0.0
      %7117 = vmatpush1.xpose.msra.mxu0 0.0
      %7118 = vmatprep.subr.mxu0 0.0
      %7119 = vmatpush1.xpose.msra.mxu0 0.0
      %7120 = vmatprep.subr.mxu0 0.0
      %7121 = vmatpush1.xpose.msra.mxu0 0.0
      %7122 = vmatprep.subr.mxu0 0.0
      %7123 = vmatpush1.xpose.msra.mxu0 0.0
      %7124 = vmatprep.subr.mxu0 0.0
      %7125 = vmatpush1.xpose.msra.mxu0 0.0
      %7126 = vmatprep.subr.mxu0 0.0
      %7127 = vmatpush1.xpose.msra.mxu0 0.0
      %7128 = vmatprep.subr.mxu0 0.0
      %7129 = vmatpush1.xpose.msra.mxu0 0.0
      %7130 = vmatprep.subr.mxu0 0.0
      %7131 = vmatpush1.xpose.msra.mxu0 0.0
      %7132 = vmatprep.subr.mxu0 0.0
      %7133 = vmatpush1.xpose.msra.mxu0 0.0
      %7134 = vmatprep.subr.mxu0 0.0
      %7135 = vmatpush1.xpose.msra.mxu0 0.0
      %7136 = vmatprep.subr.mxu0 0.0
      %7137 = vmatpush1.xpose.msra.mxu0 0.0
      %7138 = vmatprep.subr.mxu0 0.0
      %7139 = vmatpush1.xpose.msra.mxu0 0.0
      %7140 = vmatprep.subr.mxu0 0.0
      %7141 = vmatpush1.xpose.msra.mxu0 0.0
      %7142 = vmatprep.subr.mxu0 0.0
      %7143 = vmatpush1.xpose.msra.mxu0 0.0
      %7144 = vmatprep.mubr.f32.mxu0 %v6996
      %7145 = vmatmul.mubr.f32.gmra.mrb[0].mxu0 %v6995
      %v7146 = vpop.f32.mrb[0].mxu0
      %v7147 = vadd.f32 %v7072, %v7146
      %v7148 = vpop.f32.mrb[0].mxu0
      %7149 = vmatprep.mubr.f32.mxu0 %v7002
      %7150 = vmatmul.mubr.f32.gmra.mrb[0].mxu0 %v7001
      %v7151 = vpop.f32.mrb[0].mxu0
      %v7152 = vadd.f32 %v7077, %v7151
      %v7153 = vpop.f32.mrb[0].mxu0
      %7154 = vdwg.mxu0
      %7155 = vmatprep.subr.mxu0 %v651
      %7156 = vmatpush1.xpose.msra.mxu0 %v650
      %7157 = vmatprep.subr.mxu0 %v657
      %7158 = vmatpush1.xpose.msra.mxu0 %v656
      %7159 = vmatprep.subr.mxu0 %v663
      %7160 = vmatpush1.xpose.msra.mxu0 %v662
      %7161 = vmatprep.subr.mxu0 %v669
      %7162 = vmatpush1.xpose.msra.mxu0 %v668
      %7163 = vmatprep.subr.mxu0 0.0
      %7164 = vmatpush1.xpose.msra.mxu0 0.0
      %7165 = vmatprep.subr.mxu0 0.0
      %7166 = vmatpush1.xpose.msra.mxu0 0.0
      %7167 = vmatprep.subr.mxu0 0.0
      %7168 = vmatpush1.xpose.msra.mxu0 0.0
      %7169 = vmatprep.subr.mxu0 0.0
      %7170 = vmatpush1.xpose.msra.mxu0 0.0
      %7171 = vmatprep.subr.mxu0 0.0
      %7172 = vmatpush1.xpose.msra.mxu0 0.0
      %7173 = vmatprep.subr.mxu0 0.0
      %7174 = vmatpush1.xpose.msra.mxu0 0.0
      %7175 = vmatprep.subr.mxu0 0.0
      %7176 = vmatpush1.xpose.msra.mxu0 0.0
      %7177 = vmatprep.subr.mxu0 0.0
      %7178 = vmatpush1.xpose.msra.mxu0 0.0
      %7179 = vmatprep.subr.mxu0 0.0
      %7180 = vmatpush1.xpose.msra.mxu0 0.0
      %7181 = vmatprep.subr.mxu0 0.0
      %7182 = vmatpush1.xpose.msra.mxu0 0.0
      %7183 = vmatprep.subr.mxu0 0.0
      %7184 = vmatpush1.xpose.msra.mxu0 0.0
      %7185 = vmatprep.subr.mxu0 0.0
      %7186 = vmatpush1.xpose.msra.mxu0 0.0
      %7187 = vmatprep.subr.mxu0 0.0
      %7188 = vmatpush1.xpose.msra.mxu0 0.0
      %7189 = vmatprep.subr.mxu0 0.0
      %7190 = vmatpush1.xpose.msra.mxu0 0.0
      %7191 = vmatprep.subr.mxu0 0.0
      %7192 = vmatpush1.xpose.msra.mxu0 0.0
      %7193 = vmatprep.subr.mxu0 0.0
      %7194 = vmatpush1.xpose.msra.mxu0 0.0
      %7195 = vmatprep.subr.mxu0 0.0
      %7196 = vmatpush1.xpose.msra.mxu0 0.0
      %7197 = vmatprep.subr.mxu0 0.0
      %7198 = vmatpush1.xpose.msra.mxu0 0.0
      %7199 = vmatprep.subr.mxu0 0.0
      %7200 = vmatpush1.xpose.msra.mxu0 0.0
      %7201 = vmatprep.subr.mxu0 0.0
      %7202 = vmatpush1.xpose.msra.mxu0 0.0
      %7203 = vmatprep.subr.mxu0 0.0
      %7204 = vmatpush1.xpose.msra.mxu0 0.0
      %7205 = vmatprep.subr.mxu0 0.0
      %7206 = vmatpush1.xpose.msra.mxu0 0.0
      %7207 = vmatprep.subr.mxu0 0.0
      %7208 = vmatpush1.xpose.msra.mxu0 0.0
      %7209 = vmatprep.subr.mxu0 0.0
      %7210 = vmatpush1.xpose.msra.mxu0 0.0
      %7211 = vmatprep.subr.mxu0 0.0
      %7212 = vmatpush1.xpose.msra.mxu0 0.0
      %7213 = vmatprep.subr.mxu0 0.0
      %7214 = vmatpush1.xpose.msra.mxu0 0.0
      %7215 = vmatprep.subr.mxu0 0.0
      %7216 = vmatpush1.xpose.msra.mxu0 0.0
      %7217 = vmatprep.subr.mxu0 0.0
      %7218 = vmatpush1.xpose.msra.mxu0 0.0
      %7219 = vmatprep.mubr.f32.mxu0 %v6998
      %7220 = vmatmul.mubr.f32.gmra.mrb[0].mxu0 %v6997
      %v7221 = vpop.f32.mrb[0].mxu0
      %v7222 = vadd.f32 %v7147, %v7221
      %v7223 = vpop.f32.mrb[0].mxu0
      %7224 = vmatprep.mubr.f32.mxu0 %v7004
      %7225 = vmatmul.mubr.f32.gmra.mrb[0].mxu0 %v7003
      %v7226 = vpop.f32.mrb[0].mxu0
      %v7227 = vadd.f32 %v7152, %v7226
      %v7228 = vpop.f32.mrb[0].mxu0
      %7229 = vdwg.mxu0
      %7230 = vmatprep.subr.mxu0 %v6994
      %7231 = vmatpush1.xpose.msra.mxu0 %v6993
      %7232 = vmatprep.subr.mxu0 %v7000
      %7233 = vmatpush1.xpose.msra.mxu0 %v6999
      %7234 = vmatprep.subr.mxu0 0.0
      %7235 = vmatpush1.xpose.msra.mxu0 0.0
      %7236 = vmatprep.subr.mxu0 0.0
      %7237 = vmatpush1.xpose.msra.mxu0 0.0
      %7238 = vmatprep.subr.mxu0 0.0
      %7239 = vmatpush1.xpose.msra.mxu0 0.0
      %7240 = vmatprep.subr.mxu0 0.0
      %7241 = vmatpush1.xpose.msra.mxu0 0.0
      %7242 = vmatprep.subr.mxu0 0.0
      %7243 = vmatpush1.xpose.msra.mxu0 0.0
      %7244 = vmatprep.subr.mxu0 0.0
      %7245 = vmatpush1.xpose.msra.mxu0 0.0
      %7246 = vmatprep.subr.mxu0 0.0
      %7247 = vmatpush1.xpose.msra.mxu0 0.0
      %7248 = vmatprep.subr.mxu0 0.0
      %7249 = vmatpush1.xpose.msra.mxu0 0.0
      %7250 = vmatprep.subr.mxu0 0.0
      %7251 = vmatpush1.xpose.msra.mxu0 0.0
      %7252 = vmatprep.subr.mxu0 0.0
      %7253 = vmatpush1.xpose.msra.mxu0 0.0
      %7254 = vmatprep.subr.mxu0 0.0
      %7255 = vmatpush1.xpose.msra.mxu0 0.0
      %7256 = vmatprep.subr.mxu0 0.0
      %7257 = vmatpush1.xpose.msra.mxu0 0.0
      %7258 = vmatprep.subr.mxu0 0.0
      %7259 = vmatpush1.xpose.msra.mxu0 0.0
      %7260 = vmatprep.subr.mxu0 0.0
      %7261 = vmatpush1.xpose.msra.mxu0 0.0
      %7262 = vmatprep.subr.mxu0 0.0
      %7263 = vmatpush1.xpose.msra.mxu0 0.0
      %7264 = vmatprep.subr.mxu0 0.0
      %7265 = vmatpush1.xpose.msra.mxu0 0.0
      %7266 = vmatprep.subr.mxu0 0.0
      %7267 = vmatpush1.xpose.msra.mxu0 0.0
      %7268 = vmatprep.subr.mxu0 0.0
      %7269 = vmatpush1.xpose.msra.mxu0 0.0
      %7270 = vmatprep.subr.mxu0 0.0
      %7271 = vmatpush1.xpose.msra.mxu0 0.0
      %7272 = vmatprep.subr.mxu0 0.0
      %7273 = vmatpush1.xpose.msra.mxu0 0.0
      %7274 = vmatprep.subr.mxu0 0.0
      %7275 = vmatpush1.xpose.msra.mxu0 0.0
      %7276 = vmatprep.subr.mxu0 0.0
      %7277 = vmatpush1.xpose.msra.mxu0 0.0
      %7278 = vmatprep.subr.mxu0 0.0
      %7279 = vmatpush1.xpose.msra.mxu0 0.0
      %7280 = vmatprep.subr.mxu0 0.0
      %7281 = vmatpush1.xpose.msra.mxu0 0.0
      %7282 = vmatprep.subr.mxu0 0.0
      %7283 = vmatpush1.xpose.msra.mxu0 0.0
      %7284 = vmatprep.subr.mxu0 0.0
      %7285 = vmatpush1.xpose.msra.mxu0 0.0
      %7286 = vmatprep.subr.mxu0 0.0
      %7287 = vmatpush1.xpose.msra.mxu0 0.0
      %7288 = vmatprep.subr.mxu0 0.0
      %7289 = vmatpush1.xpose.msra.mxu0 0.0
      %7290 = vmatprep.subr.mxu0 0.0
      %7291 = vmatpush1.xpose.msra.mxu0 0.0
      %7292 = vmatprep.subr.mxu0 0.0
      %7293 = vmatpush1.xpose.msra.mxu0 0.0
      %7294 = vmatprep.mubr.f32.mxu0 %v6994
      %7295 = vmatmul.mubr.f32.gmra.mrb[0].mxu0 %v6993
      %v7296 = vpop.f32.mrb[0].mxu0
      %v7297 = vadd.f32 0.0, %v7296
      %v7298 = vpop.f32.mrb[0].mxu0
      %7299 = vmatprep.mubr.f32.mxu0 %v7000
      %7300 = vmatmul.mubr.f32.gmra.mrb[0].mxu0 %v6999
      %v7301 = vpop.f32.mrb[0].mxu0
      %v7302 = vadd.f32 0.0, %v7301
      %v7303 = vpop.f32.mrb[0].mxu0
      %7304 = vdwg.mxu0
      %7305 = vmatprep.subr.mxu0 %v6996
      %7306 = vmatpush1.xpose.msra.mxu0 %v6995
      %7307 = vmatprep.subr.mxu0 %v7002
      %7308 = vmatpush1.xpose.msra.mxu0 %v7001
      %7309 = vmatprep.subr.mxu0 0.0
      %7310 = vmatpush1.xpose.msra.mxu0 0.0
      %7311 = vmatprep.subr.mxu0 0.0
      %7312 = vmatpush1.xpose.msra.mxu0 0.0
      %7313 = vmatprep.subr.mxu0 0.0
      %7314 = vmatpush1.xpose.msra.mxu0 0.0
      %7315 = vmatprep.subr.mxu0 0.0
      %7316 = vmatpush1.xpose.msra.mxu0 0.0
      %7317 = vmatprep.subr.mxu0 0.0
      %7318 = vmatpush1.xpose.msra.mxu0 0.0
      %7319 = vmatprep.subr.mxu0 0.0
      %7320 = vmatpush1.xpose.msra.mxu0 0.0
      %7321 = vmatprep.subr.mxu0 0.0
      %7322 = vmatpush1.xpose.msra.mxu0 0.0
      %7323 = vmatprep.subr.mxu0 0.0
      %7324 = vmatpush1.xpose.msra.mxu0 0.0
      %7325 = vmatprep.subr.mxu0 0.0
      %7326 = vmatpush1.xpose.msra.mxu0 0.0
      %7327 = vmatprep.subr.mxu0 0.0
      %7328 = vmatpush1.xpose.msra.mxu0 0.0
      %7329 = vmatprep.subr.mxu0 0.0
      %7330 = vmatpush1.xpose.msra.mxu0 0.0
      %7331 = vmatprep.subr.mxu0 0.0
      %7332 = vmatpush1.xpose.msra.mxu0 0.0
      %7333 = vmatprep.subr.mxu0 0.0
      %7334 = vmatpush1.xpose.msra.mxu0 0.0
      %7335 = vmatprep.subr.mxu0 0.0
      %7336 = vmatpush1.xpose.msra.mxu0 0.0
      %7337 = vmatprep.subr.mxu0 0.0
      %7338 = vmatpush1.xpose.msra.mxu0 0.0
      %7339 = vmatprep.subr.mxu0 0.0
      %7340 = vmatpush1.xpose.msra.mxu0 0.0
      %7341 = vmatprep.subr.mxu0 0.0
      %7342 = vmatpush1.xpose.msra.mxu0 0.0
      %7343 = vmatprep.subr.mxu0 0.0
      %7344 = vmatpush1.xpose.msra.mxu0 0.0
      %7345 = vmatprep.subr.mxu0 0.0
      %7346 = vmatpush1.xpose.msra.mxu0 0.0
      %7347 = vmatprep.subr.mxu0 0.0
      %7348 = vmatpush1.xpose.msra.mxu0 0.0
      %7349 = vmatprep.subr.mxu0 0.0
      %7350 = vmatpush1.xpose.msra.mxu0 0.0
      %7351 = vmatprep.subr.mxu0 0.0
      %7352 = vmatpush1.xpose.msra.mxu0 0.0
      %7353 = vmatprep.subr.mxu0 0.0
      %7354 = vmatpush1.xpose.msra.mxu0 0.0
      %7355 = vmatprep.subr.mxu0 0.0
      %7356 = vmatpush1.xpose.msra.mxu0 0.0
      %7357 = vmatprep.subr.mxu0 0.0
      %7358 = vmatpush1.xpose.msra.mxu0 0.0
      %7359 = vmatprep.subr.mxu0 0.0
      %7360 = vmatpush1.xpose.msra.mxu0 0.0
      %7361 = vmatprep.subr.mxu0 0.0
      %7362 = vmatpush1.xpose.msra.mxu0 0.0
      %7363 = vmatprep.subr.mxu0 0.0
      %7364 = vmatpush1.xpose.msra.mxu0 0.0
      %7365 = vmatprep.subr.mxu0 0.0
      %7366 = vmatpush1.xpose.msra.mxu0 0.0
      %7367 = vmatprep.subr.mxu0 0.0
      %7368 = vmatpush1.xpose.msra.mxu0 0.0
      %7369 = vmatprep.mubr.f32.mxu0 %v6996
      %7370 = vmatmul.mubr.f32.gmra.mrb[0].mxu0 %v6995
      %v7371 = vpop.f32.mrb[0].mxu0
      %v7372 = vadd.f32 %v7297, %v7371
      %v7373 = vpop.f32.mrb[0].mxu0
      %7374 = vmatprep.mubr.f32.mxu0 %v7002
      %7375 = vmatmul.mubr.f32.gmra.mrb[0].mxu0 %v7001
      %v7376 = vpop.f32.mrb[0].mxu0
      %v7377 = vadd.f32 %v7302, %v7376
      %v7378 = vpop.f32.mrb[0].mxu0
      %7379 = vdwg.mxu0
      %7380 = vmatprep.subr.mxu0 %v6998
      %7381 = vmatpush1.xpose.msra.mxu0 %v6997
      %7382 = vmatprep.subr.mxu0 %v7004
      %7383 = vmatpush1.xpose.msra.mxu0 %v7003
      %7384 = vmatprep.subr.mxu0 0.0
      %7385 = vmatpush1.xpose.msra.mxu0 0.0
      %7386 = vmatprep.subr.mxu0 0.0
      %7387 = vmatpush1.xpose.msra.mxu0 0.0
      %7388 = vmatprep.subr.mxu0 0.0
      %7389 = vmatpush1.xpose.msra.mxu0 0.0
      %7390 = vmatprep.subr.mxu0 0.0
      %7391 = vmatpush1.xpose.msra.mxu0 0.0
      %7392 = vmatprep.subr.mxu0 0.0
      %7393 = vmatpush1.xpose.msra.mxu0 0.0
      %7394 = vmatprep.subr.mxu0 0.0
      %7395 = vmatpush1.xpose.msra.mxu0 0.0
      %7396 = vmatprep.subr.mxu0 0.0
      %7397 = vmatpush1.xpose.msra.mxu0 0.0
      %7398 = vmatprep.subr.mxu0 0.0
      %7399 = vmatpush1.xpose.msra.mxu0 0.0
      %7400 = vmatprep.subr.mxu0 0.0
      %7401 = vmatpush1.xpose.msra.mxu0 0.0
      %7402 = vmatprep.subr.mxu0 0.0
      %7403 = vmatpush1.xpose.msra.mxu0 0.0
      %7404 = vmatprep.subr.mxu0 0.0
      %7405 = vmatpush1.xpose.msra.mxu0 0.0
      %7406 = vmatprep.subr.mxu0 0.0
      %7407 = vmatpush1.xpose.msra.mxu0 0.0
      %7408 = vmatprep.subr.mxu0 0.0
      %7409 = vmatpush1.xpose.msra.mxu0 0.0
      %7410 = vmatprep.subr.mxu0 0.0
      %7411 = vmatpush1.xpose.msra.mxu0 0.0
      %7412 = vmatprep.subr.mxu0 0.0
      %7413 = vmatpush1.xpose.msra.mxu0 0.0
      %7414 = vmatprep.subr.mxu0 0.0
      %7415 = vmatpush1.xpose.msra.mxu0 0.0
      %7416 = vmatprep.subr.mxu0 0.0
      %7417 = vmatpush1.xpose.msra.mxu0 0.0
      %7418 = vmatprep.subr.mxu0 0.0
      %7419 = vmatpush1.xpose.msra.mxu0 0.0
      %7420 = vmatprep.subr.mxu0 0.0
      %7421 = vmatpush1.xpose.msra.mxu0 0.0
      %7422 = vmatprep.subr.mxu0 0.0
      %7423 = vmatpush1.xpose.msra.mxu0 0.0
      %7424 = vmatprep.subr.mxu0 0.0
      %7425 = vmatpush1.xpose.msra.mxu0 0.0
      %7426 = vmatprep.subr.mxu0 0.0
      %7427 = vmatpush1.xpose.msra.mxu0 0.0
      %7428 = vmatprep.subr.mxu0 0.0
      %7429 = vmatpush1.xpose.msra.mxu0 0.0
      %7430 = vmatprep.subr.mxu0 0.0
      %7431 = vmatpush1.xpose.msra.mxu0 0.0
      %7432 = vmatprep.subr.mxu0 0.0
      %7433 = vmatpush1.xpose.msra.mxu0 0.0
      %7434 = vmatprep.subr.mxu0 0.0
      %7435 = vmatpush1.xpose.msra.mxu0 0.0
      %7436 = vmatprep.subr.mxu0 0.0
      %7437 = vmatpush1.xpose.msra.mxu0 0.0
      %7438 = vmatprep.subr.mxu0 0.0
      %7439 = vmatpush1.xpose.msra.mxu0 0.0
      %7440 = vmatprep.subr.mxu0 0.0
      %7441 = vmatpush1.xpose.msra.mxu0 0.0
      %7442 = vmatprep.subr.mxu0 0.0
      %7443 = vmatpush1.xpose.msra.mxu0 0.0
      %7444 = vmatprep.mubr.f32.mxu0 %v6998
      %7445 = vmatmul.mubr.f32.gmra.mrb[0].mxu0 %v6997
      %v7446 = vpop.f32.mrb[0].mxu0
      %v7447 = vadd.f32 %v7372, %v7446
      %v7448 = vpop.f32.mrb[0].mxu0
      %7449 = vmatprep.mubr.f32.mxu0 %v7004
      %7450 = vmatmul.mubr.f32.gmra.mrb[0].mxu0 %v7003
      %v7451 = vpop.f32.mrb[0].mxu0
      %v7452 = vadd.f32 %v7377, %v7451
      %v7453 = vpop.f32.mrb[0].mxu0
      %7454 = vdwg.mxu0
      %v7455 = vmul.f32 %v6418, %v7222
      %v7456 = vmul.f32 %v6419, %v7227
      %v7458 = vsel %vm1133, %v7447, 0
      %v7461 = vsel %vm1133, %v7452, 0
      %7463 = vmatprep.subr.mxu0 0.0
      %7464 = vmatpush1.msra.mxu0 %v6418
      %7465 = vmatprep.subr.mxu0 0.0
      %7466 = vmatpush1.msra.mxu0 %v6419
      %7467 = vmatprep.subr.mxu0 0.0
      %7468 = vmatpush1.msra.mxu0 0.0
      %7469 = vmatprep.subr.mxu0 0.0
      %7470 = vmatpush1.msra.mxu0 0.0
      %7471 = vmatprep.subr.mxu0 0.0
      %7472 = vmatpush1.msra.mxu0 0.0
      %7473 = vmatprep.subr.mxu0 0.0
      %7474 = vmatpush1.msra.mxu0 0.0
      %7475 = vmatprep.subr.mxu0 0.0
      %7476 = vmatpush1.msra.mxu0 0.0
      %7477 = vmatprep.subr.mxu0 0.0
      %7478 = vmatpush1.msra.mxu0 0.0
      %7479 = vmatprep.subr.mxu0 0.0
      %7480 = vmatpush1.msra.mxu0 0.0
      %7481 = vmatprep.subr.mxu0 0.0
      %7482 = vmatpush1.msra.mxu0 0.0
      %7483 = vmatprep.subr.mxu0 0.0
      %7484 = vmatpush1.msra.mxu0 0.0
      %7485 = vmatprep.subr.mxu0 0.0
      %7486 = vmatpush1.msra.mxu0 0.0
      %7487 = vmatprep.subr.mxu0 0.0
      %7488 = vmatpush1.msra.mxu0 0.0
      %7489 = vmatprep.subr.mxu0 0.0
      %7490 = vmatpush1.msra.mxu0 0.0
      %7491 = vmatprep.subr.mxu0 0.0
      %7492 = vmatpush1.msra.mxu0 0.0
      %7493 = vmatprep.subr.mxu0 0.0
      %7494 = vmatpush1.msra.mxu0 0.0
      %7495 = vmatprep.subr.mxu0 0.0
      %7496 = vmatpush1.msra.mxu0 0.0
      %7497 = vmatprep.subr.mxu0 0.0
      %7498 = vmatpush1.msra.mxu0 0.0
      %7499 = vmatprep.subr.mxu0 0.0
      %7500 = vmatpush1.msra.mxu0 0.0
      %7501 = vmatprep.subr.mxu0 0.0
      %7502 = vmatpush1.msra.mxu0 0.0
      %7503 = vmatprep.subr.mxu0 0.0
      %7504 = vmatpush1.msra.mxu0 0.0
      %7505 = vmatprep.subr.mxu0 0.0
      %7506 = vmatpush1.msra.mxu0 0.0
      %7507 = vmatprep.subr.mxu0 0.0
      %7508 = vmatpush1.msra.mxu0 0.0
      %7509 = vmatprep.subr.mxu0 0.0
      %7510 = vmatpush1.msra.mxu0 0.0
      %7511 = vmatprep.subr.mxu0 0.0
      %7512 = vmatpush1.msra.mxu0 0.0
      %7513 = vmatprep.subr.mxu0 0.0
      %7514 = vmatpush1.msra.mxu0 0.0
      %7515 = vmatprep.subr.mxu0 0.0
      %7516 = vmatpush1.msra.mxu0 0.0
      %7517 = vmatprep.subr.mxu0 0.0
      %7518 = vmatpush1.msra.mxu0 0.0
      %7519 = vmatprep.subr.mxu0 0.0
      %7520 = vmatpush1.msra.mxu0 0.0
      %7521 = vmatprep.subr.mxu0 0.0
      %7522 = vmatpush1.msra.mxu0 0.0
      %7523 = vmatprep.subr.mxu0 0.0
      %7524 = vmatpush1.msra.mxu0 0.0
      %7525 = vmatprep.subr.mxu0 0.0
      %7526 = vmatpush1.msra.mxu0 0.0
      %7527 = vmatprep.mubr.f32.mxu0 0.0
      %7528 = vmatmul.mubr.f32.gmra.mrb[0].mxu0 %v7458
      %v7529 = vpop.f32.mrb[0].mxu0
      %v7530 = vadd.f32 1e-06, %v7529
      %v7531 = vpop.f32.mrb[0].mxu0
      %7532 = vmatprep.mubr.f32.mxu0 0.0
      %7533 = vmatmul.mubr.f32.gmra.mrb[0].mxu0 %v7461
      %v7534 = vpop.f32.mrb[0].mxu0
      %v7535 = vadd.f32 1e-06, %v7534
      %v7536 = vpop.f32.mrb[0].mxu0
      %7537 = vdwg.mxu0
      %v7538 = vrcp.pop %v7530
      %v7539 = vrcp.pop %v7535
      %v7540 = vmul.f32 %v7455, %v7538
      %v7541 = vmul.f32 %v7456, %v7539
      %v7543 = vsel %vm670, %v7540, 0
      %v7546 = vsel %vm670, %v7541, 0
      %7548 = vmatprep.subr.mxu0 %v647
      %7549 = vmatpush1.msra.mxu0 %v646
      %7550 = vmatprep.subr.mxu0 %v653
      %7551 = vmatpush1.msra.mxu0 %v652
      %7552 = vmatprep.subr.mxu0 %v659
      %7553 = vmatpush1.msra.mxu0 %v658
      %7554 = vmatprep.subr.mxu0 %v665
      %7555 = vmatpush1.msra.mxu0 %v664
      %7556 = vmatprep.subr.mxu0 0.0
      %7557 = vmatpush1.msra.mxu0 0.0
      %7558 = vmatprep.subr.mxu0 0.0
      %7559 = vmatpush1.msra.mxu0 0.0
      %7560 = vmatprep.subr.mxu0 0.0
      %7561 = vmatpush1.msra.mxu0 0.0
      %7562 = vmatprep.subr.mxu0 0.0
      %7563 = vmatpush1.msra.mxu0 0.0
      %7564 = vmatprep.subr.mxu0 0.0
      %7565 = vmatpush1.msra.mxu0 0.0
      %7566 = vmatprep.subr.mxu0 0.0
      %7567 = vmatpush1.msra.mxu0 0.0
      %7568 = vmatprep.subr.mxu0 0.0
      %7569 = vmatpush1.msra.mxu0 0.0
      %7570 = vmatprep.subr.mxu0 0.0
      %7571 = vmatpush1.msra.mxu0 0.0
      %7572 = vmatprep.subr.mxu0 0.0
      %7573 = vmatpush1.msra.mxu0 0.0
      %7574 = vmatprep.subr.mxu0 0.0
      %7575 = vmatpush1.msra.mxu0 0.0
      %7576 = vmatprep.subr.mxu0 0.0
      %7577 = vmatpush1.msra.mxu0 0.0
      %7578 = vmatprep.subr.mxu0 0.0
      %7579 = vmatpush1.msra.mxu0 0.0
      %7580 = vmatprep.subr.mxu0 0.0
      %7581 = vmatpush1.msra.mxu0 0.0
      %7582 = vmatprep.subr.mxu0 0.0
      %7583 = vmatpush1.msra.mxu0 0.0
      %7584 = vmatprep.subr.mxu0 0.0
      %7585 = vmatpush1.msra.mxu0 0.0
      %7586 = vmatprep.subr.mxu0 0.0
      %7587 = vmatpush1.msra.mxu0 0.0
      %7588 = vmatprep.subr.mxu0 0.0
      %7589 = vmatpush1.msra.mxu0 0.0
      %7590 = vmatprep.subr.mxu0 0.0
      %7591 = vmatpush1.msra.mxu0 0.0
      %7592 = vmatprep.subr.mxu0 0.0
      %7593 = vmatpush1.msra.mxu0 0.0
      %7594 = vmatprep.subr.mxu0 0.0
      %7595 = vmatpush1.msra.mxu0 0.0
      %7596 = vmatprep.subr.mxu0 0.0
      %7597 = vmatpush1.msra.mxu0 0.0
      %7598 = vmatprep.subr.mxu0 0.0
      %7599 = vmatpush1.msra.mxu0 0.0
      %7600 = vmatprep.subr.mxu0 0.0
      %7601 = vmatpush1.msra.mxu0 0.0
      %7602 = vmatprep.subr.mxu0 0.0
      %7603 = vmatpush1.msra.mxu0 0.0
      %7604 = vmatprep.subr.mxu0 0.0
      %7605 = vmatpush1.msra.mxu0 0.0
      %7606 = vmatprep.subr.mxu0 0.0
      %7607 = vmatpush1.msra.mxu0 0.0
      %7608 = vmatprep.subr.mxu0 0.0
      %7609 = vmatpush1.msra.mxu0 0.0
      %7610 = vmatprep.subr.mxu0 0.0
      %7611 = vmatpush1.msra.mxu0 0.0
      %7612 = vmatprep.mubr.f32.mxu0 0.0
      %7613 = vmatmul.mubr.f32.gmra.mrb[0].mxu0 %v7543
      %v7614 = vpop.f32.mrb[0].mxu0
      %v7615 = vadd.f32 0.0, %v7614
      %v7616 = vpop.f32.mrb[0].mxu0
      %v7617 = vadd.f32 0.0, %v7616
      %7618 = vmatprep.mubr.f32.mxu0 0.0
      %7619 = vmatmul.mubr.f32.gmra.mrb[0].mxu0 %v7546
      %v7620 = vpop.f32.mrb[0].mxu0
      %v7621 = vadd.f32 0.0, %v7620
      %v7622 = vpop.f32.mrb[0].mxu0
      %v7623 = vadd.f32 0.0, %v7622
      %7624 = vdwg.mxu0
      %7625 = vmatprep.subr.mxu0 %v649
      %7626 = vmatpush1.msra.mxu0 %v648
      %7627 = vmatprep.subr.mxu0 %v655
      %7628 = vmatpush1.msra.mxu0 %v654
      %7629 = vmatprep.subr.mxu0 %v661
      %7630 = vmatpush1.msra.mxu0 %v660
      %7631 = vmatprep.subr.mxu0 %v667
      %7632 = vmatpush1.msra.mxu0 %v666
      %7633 = vmatprep.subr.mxu0 0.0
      %7634 = vmatpush1.msra.mxu0 0.0
      %7635 = vmatprep.subr.mxu0 0.0
      %7636 = vmatpush1.msra.mxu0 0.0
      %7637 = vmatprep.subr.mxu0 0.0
      %7638 = vmatpush1.msra.mxu0 0.0
      %7639 = vmatprep.subr.mxu0 0.0
      %7640 = vmatpush1.msra.mxu0 0.0
      %7641 = vmatprep.subr.mxu0 0.0
      %7642 = vmatpush1.msra.mxu0 0.0
      %7643 = vmatprep.subr.mxu0 0.0
      %7644 = vmatpush1.msra.mxu0 0.0
      %7645 = vmatprep.subr.mxu0 0.0
      %7646 = vmatpush1.msra.mxu0 0.0
      %7647 = vmatprep.subr.mxu0 0.0
      %7648 = vmatpush1.msra.mxu0 0.0
      %7649 = vmatprep.subr.mxu0 0.0
      %7650 = vmatpush1.msra.mxu0 0.0
      %7651 = vmatprep.subr.mxu0 0.0
      %7652 = vmatpush1.msra.mxu0 0.0
      %7653 = vmatprep.subr.mxu0 0.0
      %7654 = vmatpush1.msra.mxu0 0.0
      %7655 = vmatprep.subr.mxu0 0.0
      %7656 = vmatpush1.msra.mxu0 0.0
      %7657 = vmatprep.subr.mxu0 0.0
      %7658 = vmatpush1.msra.mxu0 0.0
      %7659 = vmatprep.subr.mxu0 0.0
      %7660 = vmatpush1.msra.mxu0 0.0
      %7661 = vmatprep.subr.mxu0 0.0
      %7662 = vmatpush1.msra.mxu0 0.0
      %7663 = vmatprep.subr.mxu0 0.0
      %7664 = vmatpush1.msra.mxu0 0.0
      %7665 = vmatprep.subr.mxu0 0.0
      %7666 = vmatpush1.msra.mxu0 0.0
      %7667 = vmatprep.subr.mxu0 0.0
      %7668 = vmatpush1.msra.mxu0 0.0
      %7669 = vmatprep.subr.mxu0 0.0
      %7670 = vmatpush1.msra.mxu0 0.0
      %7671 = vmatprep.subr.mxu0 0.0
      %7672 = vmatpush1.msra.mxu0 0.0
      %7673 = vmatprep.subr.mxu0 0.0
      %7674 = vmatpush1.msra.mxu0 0.0
      %7675 = vmatprep.subr.mxu0 0.0
      %7676 = vmatpush1.msra.mxu0 0.0
      %7677 = vmatprep.subr.mxu0 0.0
      %7678 = vmatpush1.msra.mxu0 0.0
      %7679 = vmatprep.subr.mxu0 0.0
      %7680 = vmatpush1.msra.mxu0 0.0
      %7681 = vmatprep.subr.mxu0 0.0
      %7682 = vmatpush1.msra.mxu0 0.0
      %7683 = vmatprep.subr.mxu0 0.0
      %7684 = vmatpush1.msra.mxu0 0.0
      %7685 = vmatprep.subr.mxu0 0.0
      %7686 = vmatpush1.msra.mxu0 0.0
      %7687 = vmatprep.subr.mxu0 0.0
      %7688 = vmatpush1.msra.mxu0 0.0
      %7689 = vmatprep.mubr.f32.mxu0 0.0
      %7690 = vmatmul.mubr.f32.gmra.mrb[0].mxu0 %v7543
      %v7691 = vpop.f32.mrb[0].mxu0
      %v7692 = vadd.f32 0.0, %v7691
      %v7693 = vpop.f32.mrb[0].mxu0
      %v7694 = vadd.f32 0.0, %v7693
      %7695 = vmatprep.mubr.f32.mxu0 0.0
      %7696 = vmatmul.mubr.f32.gmra.mrb[0].mxu0 %v7546
      %v7697 = vpop.f32.mrb[0].mxu0
      %v7698 = vadd.f32 0.0, %v7697
      %v7699 = vpop.f32.mrb[0].mxu0
      %v7700 = vadd.f32 0.0, %v7699
      %7701 = vdwg.mxu0
      %7702 = vmatprep.subr.mxu0 %v651
      %7703 = vmatpush1.msra.mxu0 %v650
      %7704 = vmatprep.subr.mxu0 %v657
      %7705 = vmatpush1.msra.mxu0 %v656
      %7706 = vmatprep.subr.mxu0 %v663
      %7707 = vmatpush1.msra.mxu0 %v662
      %7708 = vmatprep.subr.mxu0 %v669
      %7709 = vmatpush1.msra.mxu0 %v668
      %7710 = vmatprep.subr.mxu0 0.0
      %7711 = vmatpush1.msra.mxu0 0.0
      %7712 = vmatprep.subr.mxu0 0.0
      %7713 = vmatpush1.msra.mxu0 0.0
      %7714 = vmatprep.subr.mxu0 0.0
      %7715 = vmatpush1.msra.mxu0 0.0
      %7716 = vmatprep.subr.mxu0 0.0
      %7717 = vmatpush1.msra.mxu0 0.0
      %7718 = vmatprep.subr.mxu0 0.0
      %7719 = vmatpush1.msra.mxu0 0.0
      %7720 = vmatprep.subr.mxu0 0.0
      %7721 = vmatpush1.msra.mxu0 0.0
      %7722 = vmatprep.subr.mxu0 0.0
      %7723 = vmatpush1.msra.mxu0 0.0
      %7724 = vmatprep.subr.mxu0 0.0
      %7725 = vmatpush1.msra.mxu0 0.0
      %7726 = vmatprep.subr.mxu0 0.0
      %7727 = vmatpush1.msra.mxu0 0.0
      %7728 = vmatprep.subr.mxu0 0.0
      %7729 = vmatpush1.msra.mxu0 0.0
      %7730 = vmatprep.subr.mxu0 0.0
      %7731 = vmatpush1.msra.mxu0 0.0
      %7732 = vmatprep.subr.mxu0 0.0
      %7733 = vmatpush1.msra.mxu0 0.0
      %7734 = vmatprep.subr.mxu0 0.0
      %7735 = vmatpush1.msra.mxu0 0.0
      %7736 = vmatprep.subr.mxu0 0.0
      %7737 = vmatpush1.msra.mxu0 0.0
      %7738 = vmatprep.subr.mxu0 0.0
      %7739 = vmatpush1.msra.mxu0 0.0
      %7740 = vmatprep.subr.mxu0 0.0
      %7741 = vmatpush1.msra.mxu0 0.0
      %7742 = vmatprep.subr.mxu0 0.0
      %7743 = vmatpush1.msra.mxu0 0.0
      %7744 = vmatprep.subr.mxu0 0.0
      %7745 = vmatpush1.msra.mxu0 0.0
      %7746 = vmatprep.subr.mxu0 0.0
      %7747 = vmatpush1.msra.mxu0 0.0
      %7748 = vmatprep.subr.mxu0 0.0
      %7749 = vmatpush1.msra.mxu0 0.0
      %7750 = vmatprep.subr.mxu0 0.0
      %7751 = vmatpush1.msra.mxu0 0.0
      %7752 = vmatprep.subr.mxu0 0.0
      %7753 = vmatpush1.msra.mxu0 0.0
      %7754 = vmatprep.subr.mxu0 0.0
      %7755 = vmatpush1.msra.mxu0 0.0
      %7756 = vmatprep.subr.mxu0 0.0
      %7757 = vmatpush1.msra.mxu0 0.0
      %7758 = vmatprep.subr.mxu0 0.0
      %7759 = vmatpush1.msra.mxu0 0.0
      %7760 = vmatprep.subr.mxu0 0.0
      %7761 = vmatpush1.msra.mxu0 0.0
      %7762 = vmatprep.subr.mxu0 0.0
      %7763 = vmatpush1.msra.mxu0 0.0
      %7764 = vmatprep.subr.mxu0 0.0
      %7765 = vmatpush1.msra.mxu0 0.0
      %7766 = vmatprep.mubr.f32.mxu0 0.0
      %7767 = vmatmul.mubr.f32.gmra.mrb[0].mxu0 %v7543
      %v7768 = vpop.f32.mrb[0].mxu0
      %v7769 = vadd.f32 0.0, %v7768
      %v7770 = vpop.f32.mrb[0].mxu0
      %v7771 = vadd.f32 0.0, %v7770
      %7772 = vmatprep.mubr.f32.mxu0 0.0
      %7773 = vmatmul.mubr.f32.gmra.mrb[0].mxu0 %v7546
      %v7774 = vpop.f32.mrb[0].mxu0
      %v7775 = vadd.f32 0.0, %v7774
      %v7776 = vpop.f32.mrb[0].mxu0
      %v7777 = vadd.f32 0.0, %v7776
      %7778 = vdwg.mxu0
      %7779 = vmatprep.subr.mxu0 0.0
      %7780 = vmatpush1.xpose.msra.mxu0 %v7543
      %7781 = vmatprep.subr.mxu0 0.0
      %7782 = vmatpush1.xpose.msra.mxu0 %v7546
      %7783 = vmatprep.subr.mxu0 0.0
      %7784 = vmatpush1.xpose.msra.mxu0 0.0
      %7785 = vmatprep.subr.mxu0 0.0
      %7786 = vmatpush1.xpose.msra.mxu0 0.0
      %7787 = vmatprep.subr.mxu0 0.0
      %7788 = vmatpush1.xpose.msra.mxu0 0.0
      %7789 = vmatprep.subr.mxu0 0.0
      %7790 = vmatpush1.xpose.msra.mxu0 0.0
      %7791 = vmatprep.subr.mxu0 0.0
      %7792 = vmatpush1.xpose.msra.mxu0 0.0
      %7793 = vmatprep.subr.mxu0 0.0
      %7794 = vmatpush1.xpose.msra.mxu0 0.0
      %7795 = vmatprep.subr.mxu0 0.0
      %7796 = vmatpush1.xpose.msra.mxu0 0.0
      %7797 = vmatprep.subr.mxu0 0.0
      %7798 = vmatpush1.xpose.msra.mxu0 0.0
      %7799 = vmatprep.subr.mxu0 0.0
      %7800 = vmatpush1.xpose.msra.mxu0 0.0
      %7801 = vmatprep.subr.mxu0 0.0
      %7802 = vmatpush1.xpose.msra.mxu0 0.0
      %7803 = vmatprep.subr.mxu0 0.0
      %7804 = vmatpush1.xpose.msra.mxu0 0.0
      %7805 = vmatprep.subr.mxu0 0.0
      %7806 = vmatpush1.xpose.msra.mxu0 0.0
      %7807 = vmatprep.subr.mxu0 0.0
      %7808 = vmatpush1.xpose.msra.mxu0 0.0
      %7809 = vmatprep.subr.mxu0 0.0
      %7810 = vmatpush1.xpose.msra.mxu0 0.0
      %7811 = vmatprep.subr.mxu0 0.0
      %7812 = vmatpush1.xpose.msra.mxu0 0.0
      %7813 = vmatprep.subr.mxu0 0.0
      %7814 = vmatpush1.xpose.msra.mxu0 0.0
      %7815 = vmatprep.subr.mxu0 0.0
      %7816 = vmatpush1.xpose.msra.mxu0 0.0
      %7817 = vmatprep.subr.mxu0 0.0
      %7818 = vmatpush1.xpose.msra.mxu0 0.0
      %7819 = vmatprep.subr.mxu0 0.0
      %7820 = vmatpush1.xpose.msra.mxu0 0.0
      %7821 = vmatprep.subr.mxu0 0.0
      %7822 = vmatpush1.xpose.msra.mxu0 0.0
      %7823 = vmatprep.subr.mxu0 0.0
      %7824 = vmatpush1.xpose.msra.mxu0 0.0
      %7825 = vmatprep.subr.mxu0 0.0
      %7826 = vmatpush1.xpose.msra.mxu0 0.0
      %7827 = vmatprep.subr.mxu0 0.0
      %7828 = vmatpush1.xpose.msra.mxu0 0.0
      %7829 = vmatprep.subr.mxu0 0.0
      %7830 = vmatpush1.xpose.msra.mxu0 0.0
      %7831 = vmatprep.subr.mxu0 0.0
      %7832 = vmatpush1.xpose.msra.mxu0 0.0
      %7833 = vmatprep.subr.mxu0 0.0
      %7834 = vmatpush1.xpose.msra.mxu0 0.0
      %7835 = vmatprep.subr.mxu0 0.0
      %7836 = vmatpush1.xpose.msra.mxu0 0.0
      %7837 = vmatprep.subr.mxu0 0.0
      %7838 = vmatpush1.xpose.msra.mxu0 0.0
      %7839 = vmatprep.subr.mxu0 0.0
      %7840 = vmatpush1.xpose.msra.mxu0 0.0
      %7841 = vmatprep.subr.mxu0 0.0
      %7842 = vmatpush1.xpose.msra.mxu0 0.0
      %7843 = vmatprep.mubr.f32.mxu0 0.0
      %7844 = vmatmul.mubr.f32.gmra.mrb[0].mxu0 %v7543
      %v7845 = vpop.f32.mrb[0].mxu0
      %v7846 = vadd.f32 0.0, %v7845
      %v7847 = vpop.f32.mrb[0].mxu0
      %7848 = vmatprep.mubr.f32.mxu0 0.0
      %7849 = vmatmul.mubr.f32.gmra.mrb[0].mxu0 %v7546
      %v7850 = vpop.f32.mrb[0].mxu0
      %v7851 = vadd.f32 0.0, %v7850
      %v7852 = vpop.f32.mrb[0].mxu0
      %7853 = vdwg.mxu0
      %v7854 = vmul.f32 %v6993, %v7615
      %v7855 = vmul.f32 %v6994, %v7617
      %v7856 = vmul.f32 %v6995, %v7692
      %v7857 = vmul.f32 %v6996, %v7694
      %v7858 = vmul.f32 %v6997, %v7769
      %v7859 = vmul.f32 %v6998, %v7771
      %v7860 = vmul.f32 %v6999, %v7621
      %v7861 = vmul.f32 %v7000, %v7623
      %v7862 = vmul.f32 %v7001, %v7698
      %v7863 = vmul.f32 %v7002, %v7700
      %v7864 = vmul.f32 %v7003, %v7775
      %v7865 = vmul.f32 %v7004, %v7777
      %v7867 = vsel %vm1133, %v7846, 0
      %v7870 = vsel %vm1133, %v7851, 0
      %7872 = vmatprep.subr.mxu0 %v6994
      %7873 = vmatpush1.msra.mxu0 %v6993
      %7874 = vmatprep.subr.mxu0 %v7000
      %7875 = vmatpush1.msra.mxu0 %v6999
      %7876 = vmatprep.subr.mxu0 0.0
      %7877 = vmatpush1.msra.mxu0 0.0
      %7878 = vmatprep.subr.mxu0 0.0
      %7879 = vmatpush1.msra.mxu0 0.0
      %7880 = vmatprep.subr.mxu0 0.0
      %7881 = vmatpush1.msra.mxu0 0.0
      %7882 = vmatprep.subr.mxu0 0.0
      %7883 = vmatpush1.msra.mxu0 0.0
      %7884 = vmatprep.subr.mxu0 0.0
      %7885 = vmatpush1.msra.mxu0 0.0
      %7886 = vmatprep.subr.mxu0 0.0
      %7887 = vmatpush1.msra.mxu0 0.0
      %7888 = vmatprep.subr.mxu0 0.0
      %7889 = vmatpush1.msra.mxu0 0.0
      %7890 = vmatprep.subr.mxu0 0.0
      %7891 = vmatpush1.msra.mxu0 0.0
      %7892 = vmatprep.subr.mxu0 0.0
      %7893 = vmatpush1.msra.mxu0 0.0
      %7894 = vmatprep.subr.mxu0 0.0
      %7895 = vmatpush1.msra.mxu0 0.0
      %7896 = vmatprep.subr.mxu0 0.0
      %7897 = vmatpush1.msra.mxu0 0.0
      %7898 = vmatprep.subr.mxu0 0.0
      %7899 = vmatpush1.msra.mxu0 0.0
      %7900 = vmatprep.subr.mxu0 0.0
      %7901 = vmatpush1.msra.mxu0 0.0
      %7902 = vmatprep.subr.mxu0 0.0
      %7903 = vmatpush1.msra.mxu0 0.0
      %7904 = vmatprep.subr.mxu0 0.0
      %7905 = vmatpush1.msra.mxu0 0.0
      %7906 = vmatprep.subr.mxu0 0.0
      %7907 = vmatpush1.msra.mxu0 0.0
      %7908 = vmatprep.subr.mxu0 0.0
      %7909 = vmatpush1.msra.mxu0 0.0
      %7910 = vmatprep.subr.mxu0 0.0
      %7911 = vmatpush1.msra.mxu0 0.0
      %7912 = vmatprep.subr.mxu0 0.0
      %7913 = vmatpush1.msra.mxu0 0.0
      %7914 = vmatprep.subr.mxu0 0.0
      %7915 = vmatpush1.msra.mxu0 0.0
      %7916 = vmatprep.subr.mxu0 0.0
      %7917 = vmatpush1.msra.mxu0 0.0
      %7918 = vmatprep.subr.mxu0 0.0
      %7919 = vmatpush1.msra.mxu0 0.0
      %7920 = vmatprep.subr.mxu0 0.0
      %7921 = vmatpush1.msra.mxu0 0.0
      %7922 = vmatprep.subr.mxu0 0.0
      %7923 = vmatpush1.msra.mxu0 0.0
      %7924 = vmatprep.subr.mxu0 0.0
      %7925 = vmatpush1.msra.mxu0 0.0
      %7926 = vmatprep.subr.mxu0 0.0
      %7927 = vmatpush1.msra.mxu0 0.0
      %7928 = vmatprep.subr.mxu0 0.0
      %7929 = vmatpush1.msra.mxu0 0.0
      %7930 = vmatprep.subr.mxu0 0.0
      %7931 = vmatpush1.msra.mxu0 0.0
      %7932 = vmatprep.subr.mxu0 0.0
      %7933 = vmatpush1.msra.mxu0 0.0
      %7934 = vmatprep.subr.mxu0 0.0
      %7935 = vmatpush1.msra.mxu0 0.0
      %7936 = vmatprep.mubr.f32.mxu0 0.0
      %7937 = vmatmul.mubr.f32.gmra.mrb[0].mxu0 %v7867
      %v7938 = vpop.f32.mrb[0].mxu0
      %v7939 = vadd.f32 1e-06, %v7938
      %v7940 = vpop.f32.mrb[0].mxu0
      %v7941 = vadd.f32 1e-06, %v7940
      %7942 = vmatprep.mubr.f32.mxu0 0.0
      %7943 = vmatmul.mubr.f32.gmra.mrb[0].mxu0 %v7870
      %v7944 = vpop.f32.mrb[0].mxu0
      %v7945 = vadd.f32 1e-06, %v7944
      %v7946 = vpop.f32.mrb[0].mxu0
      %v7947 = vadd.f32 1e-06, %v7946
      %7948 = vdwg.mxu0
      %7949 = vmatprep.subr.mxu0 %v6996
      %7950 = vmatpush1.msra.mxu0 %v6995
      %7951 = vmatprep.subr.mxu0 %v7002
      %7952 = vmatpush1.msra.mxu0 %v7001
      %7953 = vmatprep.subr.mxu0 0.0
      %7954 = vmatpush1.msra.mxu0 0.0
      %7955 = vmatprep.subr.mxu0 0.0
      %7956 = vmatpush1.msra.mxu0 0.0
      %7957 = vmatprep.subr.mxu0 0.0
      %7958 = vmatpush1.msra.mxu0 0.0
      %7959 = vmatprep.subr.mxu0 0.0
      %7960 = vmatpush1.msra.mxu0 0.0
      %7961 = vmatprep.subr.mxu0 0.0
      %7962 = vmatpush1.msra.mxu0 0.0
      %7963 = vmatprep.subr.mxu0 0.0
      %7964 = vmatpush1.msra.mxu0 0.0
      %7965 = vmatprep.subr.mxu0 0.0
      %7966 = vmatpush1.msra.mxu0 0.0
      %7967 = vmatprep.subr.mxu0 0.0
      %7968 = vmatpush1.msra.mxu0 0.0
      %7969 = vmatprep.subr.mxu0 0.0
      %7970 = vmatpush1.msra.mxu0 0.0
      %7971 = vmatprep.subr.mxu0 0.0
      %7972 = vmatpush1.msra.mxu0 0.0
      %7973 = vmatprep.subr.mxu0 0.0
      %7974 = vmatpush1.msra.mxu0 0.0
      %7975 = vmatprep.subr.mxu0 0.0
      %7976 = vmatpush1.msra.mxu0 0.0
      %7977 = vmatprep.subr.mxu0 0.0
      %7978 = vmatpush1.msra.mxu0 0.0
      %7979 = vmatprep.subr.mxu0 0.0
      %7980 = vmatpush1.msra.mxu0 0.0
      %7981 = vmatprep.subr.mxu0 0.0
      %7982 = vmatpush1.msra.mxu0 0.0
      %7983 = vmatprep.subr.mxu0 0.0
      %7984 = vmatpush1.msra.mxu0 0.0
      %7985 = vmatprep.subr.mxu0 0.0
      %7986 = vmatpush1.msra.mxu0 0.0
      %7987 = vmatprep.subr.mxu0 0.0
      %7988 = vmatpush1.msra.mxu0 0.0
      %7989 = vmatprep.subr.mxu0 0.0
      %7990 = vmatpush1.msra.mxu0 0.0
      %7991 = vmatprep.subr.mxu0 0.0
      %7992 = vmatpush1.msra.mxu0 0.0
      %7993 = vmatprep.subr.mxu0 0.0
      %7994 = vmatpush1.msra.mxu0 0.0
      %7995 = vmatprep.subr.mxu0 0.0
      %7996 = vmatpush1.msra.mxu0 0.0
      %7997 = vmatprep.subr.mxu0 0.0
      %7998 = vmatpush1.msra.mxu0 0.0
      %7999 = vmatprep.subr.mxu0 0.0
      %8000 = vmatpush1.msra.mxu0 0.0
      %8001 = vmatprep.subr.mxu0 0.0
      %8002 = vmatpush1.msra.mxu0 0.0
      %8003 = vmatprep.subr.mxu0 0.0
      %8004 = vmatpush1.msra.mxu0 0.0
      %8005 = vmatprep.subr.mxu0 0.0
      %8006 = vmatpush1.msra.mxu0 0.0
      %8007 = vmatprep.subr.mxu0 0.0
      %8008 = vmatpush1.msra.mxu0 0.0
      %8009 = vmatprep.subr.mxu0 0.0
      %8010 = vmatpush1.msra.mxu0 0.0
      %8011 = vmatprep.subr.mxu0 0.0
      %8012 = vmatpush1.msra.mxu0 0.0
      %8013 = vmatprep.mubr.f32.mxu0 0.0
      %8014 = vmatmul.mubr.f32.gmra.mrb[0].mxu0 %v7867
      %v8015 = vpop.f32.mrb[0].mxu0
      %v8016 = vadd.f32 1e-06, %v8015
      %v8017 = vpop.f32.mrb[0].mxu0
      %v8018 = vadd.f32 1e-06, %v8017
      %8019 = vmatprep.mubr.f32.mxu0 0.0
      %8020 = vmatmul.mubr.f32.gmra.mrb[0].mxu0 %v7870
      %v8021 = vpop.f32.mrb[0].mxu0
      %v8022 = vadd.f32 1e-06, %v8021
      %v8023 = vpop.f32.mrb[0].mxu0
      %v8024 = vadd.f32 1e-06, %v8023
      %8025 = vdwg.mxu0
      %8026 = vmatprep.subr.mxu0 %v6998
      %8027 = vmatpush1.msra.mxu0 %v6997
      %8028 = vmatprep.subr.mxu0 %v7004
      %8029 = vmatpush1.msra.mxu0 %v7003
      %8030 = vmatprep.subr.mxu0 0.0
      %8031 = vmatpush1.msra.mxu0 0.0
      %8032 = vmatprep.subr.mxu0 0.0
      %8033 = vmatpush1.msra.mxu0 0.0
      %8034 = vmatprep.subr.mxu0 0.0
      %8035 = vmatpush1.msra.mxu0 0.0
      %8036 = vmatprep.subr.mxu0 0.0
      %8037 = vmatpush1.msra.mxu0 0.0
      %8038 = vmatprep.subr.mxu0 0.0
      %8039 = vmatpush1.msra.mxu0 0.0
      %8040 = vmatprep.subr.mxu0 0.0
      %8041 = vmatpush1.msra.mxu0 0.0
      %8042 = vmatprep.subr.mxu0 0.0
      %8043 = vmatpush1.msra.mxu0 0.0
      %8044 = vmatprep.subr.mxu0 0.0
      %8045 = vmatpush1.msra.mxu0 0.0
      %8046 = vmatprep.subr.mxu0 0.0
      %8047 = vmatpush1.msra.mxu0 0.0
      %8048 = vmatprep.subr.mxu0 0.0
      %8049 = vmatpush1.msra.mxu0 0.0
      %8050 = vmatprep.subr.mxu0 0.0
      %8051 = vmatpush1.msra.mxu0 0.0
      %8052 = vmatprep.subr.mxu0 0.0
      %8053 = vmatpush1.msra.mxu0 0.0
      %8054 = vmatprep.subr.mxu0 0.0
      %8055 = vmatpush1.msra.mxu0 0.0
      %8056 = vmatprep.subr.mxu0 0.0
      %8057 = vmatpush1.msra.mxu0 0.0
      %8058 = vmatprep.subr.mxu0 0.0
      %8059 = vmatpush1.msra.mxu0 0.0
      %8060 = vmatprep.subr.mxu0 0.0
      %8061 = vmatpush1.msra.mxu0 0.0
      %8062 = vmatprep.subr.mxu0 0.0
      %8063 = vmatpush1.msra.mxu0 0.0
      %8064 = vmatprep.subr.mxu0 0.0
      %8065 = vmatpush1.msra.mxu0 0.0
      %8066 = vmatprep.subr.mxu0 0.0
      %8067 = vmatpush1.msra.mxu0 0.0
      %8068 = vmatprep.subr.mxu0 0.0
      %8069 = vmatpush1.msra.mxu0 0.0
      %8070 = vmatprep.subr.mxu0 0.0
      %8071 = vmatpush1.msra.mxu0 0.0
      %8072 = vmatprep.subr.mxu0 0.0
      %8073 = vmatpush1.msra.mxu0 0.0
      %8074 = vmatprep.subr.mxu0 0.0
      %8075 = vmatpush1.msra.mxu0 0.0
      %8076 = vmatprep.subr.mxu0 0.0
      %8077 = vmatpush1.msra.mxu0 0.0
      %8078 = vmatprep.subr.mxu0 0.0
      %8079 = vmatpush1.msra.mxu0 0.0
      %8080 = vmatprep.subr.mxu0 0.0
      %8081 = vmatpush1.msra.mxu0 0.0
      %8082 = vmatprep.subr.mxu0 0.0
      %8083 = vmatpush1.msra.mxu0 0.0
      %8084 = vmatprep.subr.mxu0 0.0
      %8085 = vmatpush1.msra.mxu0 0.0
      %8086 = vmatprep.subr.mxu0 0.0
      %8087 = vmatpush1.msra.mxu0 0.0
      %8088 = vmatprep.subr.mxu0 0.0
      %8089 = vmatpush1.msra.mxu0 0.0
      %8090 = vmatprep.mubr.f32.mxu0 0.0
      %8091 = vmatmul.mubr.f32.gmra.mrb[0].mxu0 %v7867
      %v8092 = vpop.f32.mrb[0].mxu0
      %v8093 = vadd.f32 1e-06, %v8092
      %v8094 = vpop.f32.mrb[0].mxu0
      %v8095 = vadd.f32 1e-06, %v8094
      %8096 = vmatprep.mubr.f32.mxu0 0.0
      %8097 = vmatmul.mubr.f32.gmra.mrb[0].mxu0 %v7870
      %v8098 = vpop.f32.mrb[0].mxu0
      %v8099 = vadd.f32 1e-06, %v8098
      %v8100 = vpop.f32.mrb[0].mxu0
      %v8101 = vadd.f32 1e-06, %v8100
      %8102 = vdwg.mxu0
      %v8103 = vrcp.pop %v7939
      %v8104 = vrcp.pop %v7941
      %v8105 = vrcp.pop %v8016
      %v8106 = vrcp.pop %v8018
      %v8107 = vrcp.pop %v8093
      %v8108 = vrcp.pop %v8095
      %v8109 = vrcp.pop %v7945
      %v8110 = vrcp.pop %v7947
      %v8111 = vrcp.pop %v8022
      %v8112 = vrcp.pop %v8024
      %v8113 = vrcp.pop %v8099
      %v8114 = vrcp.pop %v8101
      %v8115 = vmul.f32 %v7854, %v8103
      %v8116 = vmul.f32 %v7855, %v8104
      %v8117 = vmul.f32 %v7856, %v8105
      %v8118 = vmul.f32 %v7857, %v8106
      %v8119 = vmul.f32 %v7858, %v8107
      %v8120 = vmul.f32 %v7859, %v8108
      %v8121 = vmul.f32 %v7860, %v8109
      %v8122 = vmul.f32 %v7861, %v8110
      %v8123 = vmul.f32 %v7862, %v8111
      %v8124 = vmul.f32 %v7863, %v8112
      %v8125 = vmul.f32 %v7864, %v8113
      %v8126 = vmul.f32 %v7865, %v8114
      %8127 = vxpose.xlu0.b32.start [1/16] %v7540, 128
      %8128 = vxpose.xlu0.b32.cont [2/16] %v7541, 128
      %8129 = vxpose.xlu0.b32.cont [3/16] 0.0, 128
      %8130 = vxpose.xlu0.b32.cont [4/16] 0.0, 128
      %8131 = vxpose.xlu0.b32.cont [5/16] 0.0, 128
      %8132 = vxpose.xlu0.b32.cont [6/16] 0.0, 128
      %8133 = vxpose.xlu0.b32.cont [7/16] 0.0, 128
      %8134 = vxpose.xlu0.b32.cont [8/16] 0.0, 128
      %8135 = vxpose.xlu0.b32.cont [9/16] 0.0, 128
      %8136 = vxpose.xlu0.b32.cont [10/16] 0.0, 128
      %8137 = vxpose.xlu0.b32.cont [11/16] 0.0, 128
      %8138 = vxpose.xlu0.b32.cont [12/16] 0.0, 128
      %8139 = vxpose.xlu0.b32.cont [13/16] 0.0, 128
      %8140 = vxpose.xlu0.b32.cont [14/16] 0.0, 128
      %8141 = vxpose.xlu0.b32.cont [15/16] 0.0, 128
      %8142 = vxpose.xlu0.b32.end [16/16] 0.0, 128
      %v8143 = vpop.trf.xlu0
      %v8144 = vpop.trf.xlu0
      %v8145 = vpop.trf.xlu0
      %v8146 = vpop.trf.xlu0
      %v8147 = vpop.trf.xlu0
      %v8148 = vpop.trf.xlu0
      %v8149 = vpop.trf.xlu0
      %v8150 = vpop.trf.xlu0
      %v8151 = vpop.trf.xlu0
      %v8152 = vpop.trf.xlu0
      %v8153 = vpop.trf.xlu0
      %v8154 = vpop.trf.xlu0
      %v8155 = vpop.trf.xlu0
      %v8156 = vpop.trf.xlu0
      %v8157 = vpop.trf.xlu0
      %v8158 = vpop.trf.xlu0
      %v8160 = vsel %vm1133, %v8143, 0
      %v8163 = vsel %vm1133, %v8144, 0
      %v8166 = vsel %vm1133, %v8145, 0
      %v8169 = vsel %vm1133, %v8146, 0
      %8171 = vmatprep.subr.mxu0 %v8116
      %8172 = vmatpush1.msra.mxu0 %v8115
      %8173 = vmatprep.subr.mxu0 %v8122
      %8174 = vmatpush1.msra.mxu0 %v8121
      %8175 = vmatprep.subr.mxu0 0.0
      %8176 = vmatpush1.msra.mxu0 0.0
      %8177 = vmatprep.subr.mxu0 0.0
      %8178 = vmatpush1.msra.mxu0 0.0
      %8179 = vmatprep.subr.mxu0 0.0
      %8180 = vmatpush1.msra.mxu0 0.0
      %8181 = vmatprep.subr.mxu0 0.0
      %8182 = vmatpush1.msra.mxu0 0.0
      %8183 = vmatprep.subr.mxu0 0.0
      %8184 = vmatpush1.msra.mxu0 0.0
      %8185 = vmatprep.subr.mxu0 0.0
      %8186 = vmatpush1.msra.mxu0 0.0
      %8187 = vmatprep.subr.mxu0 0.0
      %8188 = vmatpush1.msra.mxu0 0.0
      %8189 = vmatprep.subr.mxu0 0.0
      %8190 = vmatpush1.msra.mxu0 0.0
      %8191 = vmatprep.subr.mxu0 0.0
      %8192 = vmatpush1.msra.mxu0 0.0
      %8193 = vmatprep.subr.mxu0 0.0
      %8194 = vmatpush1.msra.mxu0 0.0
      %8195 = vmatprep.subr.mxu0 0.0
      %8196 = vmatpush1.msra.mxu0 0.0
      %8197 = vmatprep.subr.mxu0 0.0
      %8198 = vmatpush1.msra.mxu0 0.0
      %8199 = vmatprep.subr.mxu0 0.0
      %8200 = vmatpush1.msra.mxu0 0.0
      %8201 = vmatprep.subr.mxu0 0.0
      %8202 = vmatpush1.msra.mxu0 0.0
      %8203 = vmatprep.subr.mxu0 0.0
      %8204 = vmatpush1.msra.mxu0 0.0
      %8205 = vmatprep.subr.mxu0 0.0
      %8206 = vmatpush1.msra.mxu0 0.0
      %8207 = vmatprep.subr.mxu0 0.0
      %8208 = vmatpush1.msra.mxu0 0.0
      %8209 = vmatprep.subr.mxu0 0.0
      %8210 = vmatpush1.msra.mxu0 0.0
      %8211 = vmatprep.subr.mxu0 0.0
      %8212 = vmatpush1.msra.mxu0 0.0
      %8213 = vmatprep.subr.mxu0 0.0
      %8214 = vmatpush1.msra.mxu0 0.0
      %8215 = vmatprep.subr.mxu0 0.0
      %8216 = vmatpush1.msra.mxu0 0.0
      %8217 = vmatprep.subr.mxu0 0.0
      %8218 = vmatpush1.msra.mxu0 0.0
      %8219 = vmatprep.subr.mxu0 0.0
      %8220 = vmatpush1.msra.mxu0 0.0
      %8221 = vmatprep.subr.mxu0 0.0
      %8222 = vmatpush1.msra.mxu0 0.0
      %8223 = vmatprep.subr.mxu0 0.0
      %8224 = vmatpush1.msra.mxu0 0.0
      %8225 = vmatprep.subr.mxu0 0.0
      %8226 = vmatpush1.msra.mxu0 0.0
      %8227 = vmatprep.subr.mxu0 0.0
      %8228 = vmatpush1.msra.mxu0 0.0
      %8229 = vmatprep.subr.mxu0 0.0
      %8230 = vmatpush1.msra.mxu0 0.0
      %8231 = vmatprep.subr.mxu0 0.0
      %8232 = vmatpush1.msra.mxu0 0.0
      %8233 = vmatprep.subr.mxu0 0.0
      %8234 = vmatpush1.msra.mxu0 0.0
      %8235 = vmatprep.mubr.f32.mxu0 0.0
      %8236 = vmatmul.mubr.f32.gmra.mrb[0].mxu0 %v8160
      %v8237 = vpop.f32.mrb[0].mxu0
      %v8238 = vadd.f32 0.0, %v8237
      %v8239 = vpop.f32.mrb[0].mxu0
      %v8240 = vadd.f32 0.0, %v8239
      %8241 = vmatprep.mubr.f32.mxu0 0.0
      %8242 = vmatmul.mubr.f32.gmra.mrb[0].mxu0 %v8163
      %v8243 = vpop.f32.mrb[0].mxu0
      %v8244 = vadd.f32 0.0, %v8243
      %v8245 = vpop.f32.mrb[0].mxu0
      %v8246 = vadd.f32 0.0, %v8245
      %8247 = vmatprep.mubr.f32.mxu0 0.0
      %8248 = vmatmul.mubr.f32.gmra.mrb[0].mxu0 %v8166
      %v8249 = vpop.f32.mrb[0].mxu0
      %v8250 = vadd.f32 0.0, %v8249
      %v8251 = vpop.f32.mrb[0].mxu0
      %v8252 = vadd.f32 0.0, %v8251
      %8253 = vmatprep.mubr.f32.mxu0 0.0
      %8254 = vmatmul.mubr.f32.gmra.mrb[0].mxu0 %v8169
      %v8255 = vpop.f32.mrb[0].mxu0
      %v8256 = vadd.f32 0.0, %v8255
      %v8257 = vpop.f32.mrb[0].mxu0
      %v8258 = vadd.f32 0.0, %v8257
      %8259 = vdwg.mxu0
      %8260 = vmatprep.subr.mxu0 %v8118
      %8261 = vmatpush1.msra.mxu0 %v8117
      %8262 = vmatprep.subr.mxu0 %v8124
      %8263 = vmatpush1.msra.mxu0 %v8123
      %8264 = vmatprep.subr.mxu0 0.0
      %8265 = vmatpush1.msra.mxu0 0.0
      %8266 = vmatprep.subr.mxu0 0.0
      %8267 = vmatpush1.msra.mxu0 0.0
      %8268 = vmatprep.subr.mxu0 0.0
      %8269 = vmatpush1.msra.mxu0 0.0
      %8270 = vmatprep.subr.mxu0 0.0
      %8271 = vmatpush1.msra.mxu0 0.0
      %8272 = vmatprep.subr.mxu0 0.0
      %8273 = vmatpush1.msra.mxu0 0.0
      %8274 = vmatprep.subr.mxu0 0.0
      %8275 = vmatpush1.msra.mxu0 0.0
      %8276 = vmatprep.subr.mxu0 0.0
      %8277 = vmatpush1.msra.mxu0 0.0
      %8278 = vmatprep.subr.mxu0 0.0
      %8279 = vmatpush1.msra.mxu0 0.0
      %8280 = vmatprep.subr.mxu0 0.0
      %8281 = vmatpush1.msra.mxu0 0.0
      %8282 = vmatprep.subr.mxu0 0.0
      %8283 = vmatpush1.msra.mxu0 0.0
      %8284 = vmatprep.subr.mxu0 0.0
      %8285 = vmatpush1.msra.mxu0 0.0
      %8286 = vmatprep.subr.mxu0 0.0
      %8287 = vmatpush1.msra.mxu0 0.0
      %8288 = vmatprep.subr.mxu0 0.0
      %8289 = vmatpush1.msra.mxu0 0.0
      %8290 = vmatprep.subr.mxu0 0.0
      %8291 = vmatpush1.msra.mxu0 0.0
      %8292 = vmatprep.subr.mxu0 0.0
      %8293 = vmatpush1.msra.mxu0 0.0
      %8294 = vmatprep.subr.mxu0 0.0
      %8295 = vmatpush1.msra.mxu0 0.0
      %8296 = vmatprep.subr.mxu0 0.0
      %8297 = vmatpush1.msra.mxu0 0.0
      %8298 = vmatprep.subr.mxu0 0.0
      %8299 = vmatpush1.msra.mxu0 0.0
      %8300 = vmatprep.subr.mxu0 0.0
      %8301 = vmatpush1.msra.mxu0 0.0
      %8302 = vmatprep.subr.mxu0 0.0
      %8303 = vmatpush1.msra.mxu0 0.0
      %8304 = vmatprep.subr.mxu0 0.0
      %8305 = vmatpush1.msra.mxu0 0.0
      %8306 = vmatprep.subr.mxu0 0.0
      %8307 = vmatpush1.msra.mxu0 0.0
      %8308 = vmatprep.subr.mxu0 0.0
      %8309 = vmatpush1.msra.mxu0 0.0
      %8310 = vmatprep.subr.mxu0 0.0
      %8311 = vmatpush1.msra.mxu0 0.0
      %8312 = vmatprep.subr.mxu0 0.0
      %8313 = vmatpush1.msra.mxu0 0.0
      %8314 = vmatprep.subr.mxu0 0.0
      %8315 = vmatpush1.msra.mxu0 0.0
      %8316 = vmatprep.subr.mxu0 0.0
      %8317 = vmatpush1.msra.mxu0 0.0
      %8318 = vmatprep.subr.mxu0 0.0
      %8319 = vmatpush1.msra.mxu0 0.0
      %8320 = vmatprep.subr.mxu0 0.0
      %8321 = vmatpush1.msra.mxu0 0.0
      %8322 = vmatprep.subr.mxu0 0.0
      %8323 = vmatpush1.msra.mxu0 0.0
      %8324 = vmatprep.mubr.f32.mxu0 0.0
      %8325 = vmatmul.mubr.f32.gmra.mrb[0].mxu0 %v8160
      %v8326 = vpop.f32.mrb[0].mxu0
      %v8327 = vadd.f32 0.0, %v8326
      %v8328 = vpop.f32.mrb[0].mxu0
      %v8329 = vadd.f32 0.0, %v8328
      %8330 = vmatprep.mubr.f32.mxu0 0.0
      %8331 = vmatmul.mubr.f32.gmra.mrb[0].mxu0 %v8163
      %v8332 = vpop.f32.mrb[0].mxu0
      %v8333 = vadd.f32 0.0, %v8332
      %v8334 = vpop.f32.mrb[0].mxu0
      %v8335 = vadd.f32 0.0, %v8334
      %8336 = vmatprep.mubr.f32.mxu0 0.0
      %8337 = vmatmul.mubr.f32.gmra.mrb[0].mxu0 %v8166
      %v8338 = vpop.f32.mrb[0].mxu0
      %v8339 = vadd.f32 0.0, %v8338
      %v8340 = vpop.f32.mrb[0].mxu0
      %v8341 = vadd.f32 0.0, %v8340
      %8342 = vmatprep.mubr.f32.mxu0 0.0
      %8343 = vmatmul.mubr.f32.gmra.mrb[0].mxu0 %v8169
      %v8344 = vpop.f32.mrb[0].mxu0
      %v8345 = vadd.f32 0.0, %v8344
      %v8346 = vpop.f32.mrb[0].mxu0
      %v8347 = vadd.f32 0.0, %v8346
      %8348 = vdwg.mxu0
      %8349 = vmatprep.subr.mxu0 %v8120
      %8350 = vmatpush1.msra.mxu0 %v8119
      %8351 = vmatprep.subr.mxu0 %v8126
      %8352 = vmatpush1.msra.mxu0 %v8125
      %8353 = vmatprep.subr.mxu0 0.0
      %8354 = vmatpush1.msra.mxu0 0.0
      %8355 = vmatprep.subr.mxu0 0.0
      %8356 = vmatpush1.msra.mxu0 0.0
      %8357 = vmatprep.subr.mxu0 0.0
      %8358 = vmatpush1.msra.mxu0 0.0
      %8359 = vmatprep.subr.mxu0 0.0
      %8360 = vmatpush1.msra.mxu0 0.0
      %8361 = vmatprep.subr.mxu0 0.0
      %8362 = vmatpush1.msra.mxu0 0.0
      %8363 = vmatprep.subr.mxu0 0.0
      %8364 = vmatpush1.msra.mxu0 0.0
      %8365 = vmatprep.subr.mxu0 0.0
      %8366 = vmatpush1.msra.mxu0 0.0
      %8367 = vmatprep.subr.mxu0 0.0
      %8368 = vmatpush1.msra.mxu0 0.0
      %8369 = vmatprep.subr.mxu0 0.0
      %8370 = vmatpush1.msra.mxu0 0.0
      %8371 = vmatprep.subr.mxu0 0.0
      %8372 = vmatpush1.msra.mxu0 0.0
      %8373 = vmatprep.subr.mxu0 0.0
      %8374 = vmatpush1.msra.mxu0 0.0
      %8375 = vmatprep.subr.mxu0 0.0
      %8376 = vmatpush1.msra.mxu0 0.0
      %8377 = vmatprep.subr.mxu0 0.0
      %8378 = vmatpush1.msra.mxu0 0.0
      %8379 = vmatprep.subr.mxu0 0.0
      %8380 = vmatpush1.msra.mxu0 0.0
      %8381 = vmatprep.subr.mxu0 0.0
      %8382 = vmatpush1.msra.mxu0 0.0
      %8383 = vmatprep.subr.mxu0 0.0
      %8384 = vmatpush1.msra.mxu0 0.0
      %8385 = vmatprep.subr.mxu0 0.0
      %8386 = vmatpush1.msra.mxu0 0.0
      %8387 = vmatprep.subr.mxu0 0.0
      %8388 = vmatpush1.msra.mxu0 0.0
      %8389 = vmatprep.subr.mxu0 0.0
      %8390 = vmatpush1.msra.mxu0 0.0
      %8391 = vmatprep.subr.mxu0 0.0
      %8392 = vmatpush1.msra.mxu0 0.0
      %8393 = vmatprep.subr.mxu0 0.0
      %8394 = vmatpush1.msra.mxu0 0.0
      %8395 = vmatprep.subr.mxu0 0.0
      %8396 = vmatpush1.msra.mxu0 0.0
      %8397 = vmatprep.subr.mxu0 0.0
      %8398 = vmatpush1.msra.mxu0 0.0
      %8399 = vmatprep.subr.mxu0 0.0
      %8400 = vmatpush1.msra.mxu0 0.0
      %8401 = vmatprep.subr.mxu0 0.0
      %8402 = vmatpush1.msra.mxu0 0.0
      %8403 = vmatprep.subr.mxu0 0.0
      %8404 = vmatpush1.msra.mxu0 0.0
      %8405 = vmatprep.subr.mxu0 0.0
      %8406 = vmatpush1.msra.mxu0 0.0
      %8407 = vmatprep.subr.mxu0 0.0
      %8408 = vmatpush1.msra.mxu0 0.0
      %8409 = vmatprep.subr.mxu0 0.0
      %8410 = vmatpush1.msra.mxu0 0.0
      %8411 = vmatprep.subr.mxu0 0.0
      %8412 = vmatpush1.msra.mxu0 0.0
      %8413 = vmatprep.mubr.f32.mxu0 0.0
      %8414 = vmatmul.mubr.f32.gmra.mrb[0].mxu0 %v8160
      %v8415 = vpop.f32.mrb[0].mxu0
      %v8416 = vadd.f32 0.0, %v8415
      %v8417 = vpop.f32.mrb[0].mxu0
      %v8418 = vadd.f32 0.0, %v8417
      %8419 = vmatprep.mubr.f32.mxu0 0.0
      %8420 = vmatmul.mubr.f32.gmra.mrb[0].mxu0 %v8163
      %v8421 = vpop.f32.mrb[0].mxu0
      %v8422 = vadd.f32 0.0, %v8421
      %v8423 = vpop.f32.mrb[0].mxu0
      %v8424 = vadd.f32 0.0, %v8423
      %8425 = vmatprep.mubr.f32.mxu0 0.0
      %8426 = vmatmul.mubr.f32.gmra.mrb[0].mxu0 %v8166
      %v8427 = vpop.f32.mrb[0].mxu0
      %v8428 = vadd.f32 0.0, %v8427
      %v8429 = vpop.f32.mrb[0].mxu0
      %v8430 = vadd.f32 0.0, %v8429
      %8431 = vmatprep.mubr.f32.mxu0 0.0
      %8432 = vmatmul.mubr.f32.gmra.mrb[0].mxu0 %v8169
      %v8433 = vpop.f32.mrb[0].mxu0
      %v8434 = vadd.f32 0.0, %v8433
      %v8435 = vpop.f32.mrb[0].mxu0
      %v8436 = vadd.f32 0.0, %v8435
      %8437 = vdwg.mxu0
      %v8438 = vld [vmem:[%s3] sm:$0xff]
      %v8439 = vld [vmem:[%s4] sm:$0xff]
      %v8441 = vsel %vm670, %v8438, 0
      %8443 = vmatprep.subr.mxu0 %v8240
      %8444 = vmatpush1.msra.mxu0 %v8238
      %8445 = vmatprep.subr.mxu0 %v8246
      %8446 = vmatpush1.msra.mxu0 %v8244
      %8447 = vmatprep.subr.mxu0 %v8252
      %8448 = vmatpush1.msra.mxu0 %v8250
      %8449 = vmatprep.subr.mxu0 %v8258
      %8450 = vmatpush1.msra.mxu0 %v8256
      %8451 = vmatprep.subr.mxu0 0.0
      %8452 = vmatpush1.msra.mxu0 0.0
      %8453 = vmatprep.subr.mxu0 0.0
      %8454 = vmatpush1.msra.mxu0 0.0
      %8455 = vmatprep.subr.mxu0 0.0
      %8456 = vmatpush1.msra.mxu0 0.0
      %8457 = vmatprep.subr.mxu0 0.0
      %8458 = vmatpush1.msra.mxu0 0.0
      %8459 = vmatprep.subr.mxu0 0.0
      %8460 = vmatpush1.msra.mxu0 0.0
      %8461 = vmatprep.subr.mxu0 0.0
      %8462 = vmatpush1.msra.mxu0 0.0
      %8463 = vmatprep.subr.mxu0 0.0
      %8464 = vmatpush1.msra.mxu0 0.0
      %8465 = vmatprep.subr.mxu0 0.0
      %8466 = vmatpush1.msra.mxu0 0.0
      %8467 = vmatprep.subr.mxu0 0.0
      %8468 = vmatpush1.msra.mxu0 0.0
      %8469 = vmatprep.subr.mxu0 0.0
      %8470 = vmatpush1.msra.mxu0 0.0
      %8471 = vmatprep.subr.mxu0 0.0
      %8472 = vmatpush1.msra.mxu0 0.0
      %8473 = vmatprep.subr.mxu0 0.0
      %8474 = vmatpush1.msra.mxu0 0.0
      %8475 = vmatprep.subr.mxu0 0.0
      %8476 = vmatpush1.msra.mxu0 0.0
      %8477 = vmatprep.subr.mxu0 0.0
      %8478 = vmatpush1.msra.mxu0 0.0
      %8479 = vmatprep.subr.mxu0 0.0
      %8480 = vmatpush1.msra.mxu0 0.0
      %8481 = vmatprep.subr.mxu0 0.0
      %8482 = vmatpush1.msra.mxu0 0.0
      %8483 = vmatprep.subr.mxu0 0.0
      %8484 = vmatpush1.msra.mxu0 0.0
      %8485 = vmatprep.subr.mxu0 0.0
      %8486 = vmatpush1.msra.mxu0 0.0
      %8487 = vmatprep.subr.mxu0 0.0
      %8488 = vmatpush1.msra.mxu0 0.0
      %8489 = vmatprep.subr.mxu0 0.0
      %8490 = vmatpush1.msra.mxu0 0.0
      %8491 = vmatprep.subr.mxu0 0.0
      %8492 = vmatpush1.msra.mxu0 0.0
      %8493 = vmatprep.subr.mxu0 0.0
      %8494 = vmatpush1.msra.mxu0 0.0
      %8495 = vmatprep.subr.mxu0 0.0
      %8496 = vmatpush1.msra.mxu0 0.0
      %8497 = vmatprep.subr.mxu0 0.0
      %8498 = vmatpush1.msra.mxu0 0.0
      %8499 = vmatprep.subr.mxu0 0.0
      %8500 = vmatpush1.msra.mxu0 0.0
      %8501 = vmatprep.subr.mxu0 0.0
      %8502 = vmatpush1.msra.mxu0 0.0
      %8503 = vmatprep.subr.mxu0 0.0
      %8504 = vmatpush1.msra.mxu0 0.0
      %8505 = vmatprep.subr.mxu0 0.0
      %8506 = vmatpush1.msra.mxu0 0.0
      %8507 = vmatprep.mubr.f32.mxu0 0.0
      %8508 = vmatmul.mubr.f32.gmra.mrb[0].mxu0 %v8441
      %v8509 = vpop.f32.mrb[0].mxu0
      %v8510 = vadd.f32 0.0, %v8509
      %v8511 = vpop.f32.mrb[0].mxu0
      %v8512 = vadd.f32 0.0, %v8511
      %8513 = vdwg.mxu0
      %8514 = vmatprep.subr.mxu0 %v8329
      %8515 = vmatpush1.msra.mxu0 %v8327
      %8516 = vmatprep.subr.mxu0 %v8335
      %8517 = vmatpush1.msra.mxu0 %v8333
      %8518 = vmatprep.subr.mxu0 %v8341
      %8519 = vmatpush1.msra.mxu0 %v8339
      %8520 = vmatprep.subr.mxu0 %v8347
      %8521 = vmatpush1.msra.mxu0 %v8345
      %8522 = vmatprep.subr.mxu0 0.0
      %8523 = vmatpush1.msra.mxu0 0.0
      %8524 = vmatprep.subr.mxu0 0.0
      %8525 = vmatpush1.msra.mxu0 0.0
      %8526 = vmatprep.subr.mxu0 0.0
      %8527 = vmatpush1.msra.mxu0 0.0
      %8528 = vmatprep.subr.mxu0 0.0
      %8529 = vmatpush1.msra.mxu0 0.0
      %8530 = vmatprep.subr.mxu0 0.0
      %8531 = vmatpush1.msra.mxu0 0.0
      %8532 = vmatprep.subr.mxu0 0.0
      %8533 = vmatpush1.msra.mxu0 0.0
      %8534 = vmatprep.subr.mxu0 0.0
      %8535 = vmatpush1.msra.mxu0 0.0
      %8536 = vmatprep.subr.mxu0 0.0
      %8537 = vmatpush1.msra.mxu0 0.0
      %8538 = vmatprep.subr.mxu0 0.0
      %8539 = vmatpush1.msra.mxu0 0.0
      %8540 = vmatprep.subr.mxu0 0.0
      %8541 = vmatpush1.msra.mxu0 0.0
      %8542 = vmatprep.subr.mxu0 0.0
      %8543 = vmatpush1.msra.mxu0 0.0
      %8544 = vmatprep.subr.mxu0 0.0
      %8545 = vmatpush1.msra.mxu0 0.0
      %8546 = vmatprep.subr.mxu0 0.0
      %8547 = vmatpush1.msra.mxu0 0.0
      %8548 = vmatprep.subr.mxu0 0.0
      %8549 = vmatpush1.msra.mxu0 0.0
      %8550 = vmatprep.subr.mxu0 0.0
      %8551 = vmatpush1.msra.mxu0 0.0
      %8552 = vmatprep.subr.mxu0 0.0
      %8553 = vmatpush1.msra.mxu0 0.0
      %8554 = vmatprep.subr.mxu0 0.0
      %8555 = vmatpush1.msra.mxu0 0.0
      %8556 = vmatprep.subr.mxu0 0.0
      %8557 = vmatpush1.msra.mxu0 0.0
      %8558 = vmatprep.subr.mxu0 0.0
      %8559 = vmatpush1.msra.mxu0 0.0
      %8560 = vmatprep.subr.mxu0 0.0
      %8561 = vmatpush1.msra.mxu0 0.0
      %8562 = vmatprep.subr.mxu0 0.0
      %8563 = vmatpush1.msra.mxu0 0.0
      %8564 = vmatprep.subr.mxu0 0.0
      %8565 = vmatpush1.msra.mxu0 0.0
      %8566 = vmatprep.subr.mxu0 0.0
      %8567 = vmatpush1.msra.mxu0 0.0
      %8568 = vmatprep.subr.mxu0 0.0
      %8569 = vmatpush1.msra.mxu0 0.0
      %8570 = vmatprep.subr.mxu0 0.0
      %8571 = vmatpush1.msra.mxu0 0.0
      %8572 = vmatprep.subr.mxu0 0.0
      %8573 = vmatpush1.msra.mxu0 0.0
      %8574 = vmatprep.subr.mxu0 0.0
      %8575 = vmatpush1.msra.mxu0 0.0
      %8576 = vmatprep.subr.mxu0 0.0
      %8577 = vmatpush1.msra.mxu0 0.0
      %8578 = vmatprep.mubr.f32.mxu0 0.0
      %8579 = vmatmul.mubr.f32.gmra.mrb[0].mxu0 %v8441
      %v8580 = vpop.f32.mrb[0].mxu0
      %v8581 = vadd.f32 0.0, %v8580
      %v8582 = vpop.f32.mrb[0].mxu0
      %v8583 = vadd.f32 0.0, %v8582
      %8584 = vdwg.mxu0
      %8585 = vmatprep.subr.mxu0 %v8418
      %8586 = vmatpush1.msra.mxu0 %v8416
      %8587 = vmatprep.subr.mxu0 %v8424
      %8588 = vmatpush1.msra.mxu0 %v8422
      %8589 = vmatprep.subr.mxu0 %v8430
      %8590 = vmatpush1.msra.mxu0 %v8428
      %8591 = vmatprep.subr.mxu0 %v8436
      %8592 = vmatpush1.msra.mxu0 %v8434
      %8593 = vmatprep.subr.mxu0 0.0
      %8594 = vmatpush1.msra.mxu0 0.0
      %8595 = vmatprep.subr.mxu0 0.0
      %8596 = vmatpush1.msra.mxu0 0.0
      %8597 = vmatprep.subr.mxu0 0.0
      %8598 = vmatpush1.msra.mxu0 0.0
      %8599 = vmatprep.subr.mxu0 0.0
      %8600 = vmatpush1.msra.mxu0 0.0
      %8601 = vmatprep.subr.mxu0 0.0
      %8602 = vmatpush1.msra.mxu0 0.0
      %8603 = vmatprep.subr.mxu0 0.0
      %8604 = vmatpush1.msra.mxu0 0.0
      %8605 = vmatprep.subr.mxu0 0.0
      %8606 = vmatpush1.msra.mxu0 0.0
      %8607 = vmatprep.subr.mxu0 0.0
      %8608 = vmatpush1.msra.mxu0 0.0
      %8609 = vmatprep.subr.mxu0 0.0
      %8610 = vmatpush1.msra.mxu0 0.0
      %8611 = vmatprep.subr.mxu0 0.0
      %8612 = vmatpush1.msra.mxu0 0.0
      %8613 = vmatprep.subr.mxu0 0.0
      %8614 = vmatpush1.msra.mxu0 0.0
      %8615 = vmatprep.subr.mxu0 0.0
      %8616 = vmatpush1.msra.mxu0 0.0
      %8617 = vmatprep.subr.mxu0 0.0
      %8618 = vmatpush1.msra.mxu0 0.0
      %8619 = vmatprep.subr.mxu0 0.0
      %8620 = vmatpush1.msra.mxu0 0.0
      %8621 = vmatprep.subr.mxu0 0.0
      %8622 = vmatpush1.msra.mxu0 0.0
      %8623 = vmatprep.subr.mxu0 0.0
      %8624 = vmatpush1.msra.mxu0 0.0
      %8625 = vmatprep.subr.mxu0 0.0
      %8626 = vmatpush1.msra.mxu0 0.0
      %8627 = vmatprep.subr.mxu0 0.0
      %8628 = vmatpush1.msra.mxu0 0.0
      %8629 = vmatprep.subr.mxu0 0.0
      %8630 = vmatpush1.msra.mxu0 0.0
      %8631 = vmatprep.subr.mxu0 0.0
      %8632 = vmatpush1.msra.mxu0 0.0
      %8633 = vmatprep.subr.mxu0 0.0
      %8634 = vmatpush1.msra.mxu0 0.0
      %8635 = vmatprep.subr.mxu0 0.0
      %8636 = vmatpush1.msra.mxu0 0.0
      %8637 = vmatprep.subr.mxu0 0.0
      %8638 = vmatpush1.msra.mxu0 0.0
      %8639 = vmatprep.subr.mxu0 0.0
      %8640 = vmatpush1.msra.mxu0 0.0
      %8641 = vmatprep.subr.mxu0 0.0
      %8642 = vmatpush1.msra.mxu0 0.0
      %8643 = vmatprep.subr.mxu0 0.0
      %8644 = vmatpush1.msra.mxu0 0.0
      %8645 = vmatprep.subr.mxu0 0.0
      %8646 = vmatpush1.msra.mxu0 0.0
      %8647 = vmatprep.subr.mxu0 0.0
      %8648 = vmatpush1.msra.mxu0 0.0
      %8649 = vmatprep.mubr.f32.mxu0 0.0
      %8650 = vmatmul.mubr.f32.gmra.mrb[0].mxu0 %v8441
      %v8651 = vpop.f32.mrb[0].mxu0
      %v8652 = vadd.f32 0.0, %v8651
      %v8653 = vpop.f32.mrb[0].mxu0
      %v8654 = vadd.f32 0.0, %v8653
      %8655 = vdwg.mxu0
      %8657 = vset.pattern.permute.xlu0 0
      %8658 = vperm.xlu0 %8657, %v8439
      %v8659 = vpop.permute.xlu0 %8658
      %v8661 = vadd.f32 %v8510, %v8659
      %v8662 = vadd.f32 %v8512, %v8659
      %v8663 = vld [vmem:[%s266] sm:$0xff]
      %v8664 = vld [vmem:[%s266 + $0x8] sm:$0xff]
      %v8665 = vadd.f32 %v8661, %v8663
      %v8666 = vadd.f32 %v8662, %v8664
      %v8667 = vmax.f32 %v8665, 0.0
      %v8668 = vmax.f32 %v8666, 0.0
      %8669 = vst [vmem:[%s278] sm:$0xff] %v8667
      %8670 = vst [vmem:[%s278 + $0x8] sm:$0xff] %v8668
      %v8671 = vadd.f32 %v8581, %v8659
      %v8672 = vadd.f32 %v8583, %v8659
      %v8673 = vld [vmem:[%s428] sm:$0xff]
      %v8674 = vld [vmem:[%s428 + $0x8] sm:$0xff]
      %v8675 = vadd.f32 %v8671, %v8673
      %v8676 = vadd.f32 %v8672, %v8674
      %v8677 = vmax.f32 %v8675, 0.0
      %v8678 = vmax.f32 %v8676, 0.0
      %s8679 = scalar_lea.vmem %s278, 16
      %8680 = vst [vmem:[%s8679] sm:$0xff] %v8677
      %8681 = vst [vmem:[%s8679 + $0x8] sm:$0xff] %v8678
      %v8682 = vadd.f32 %v8652, %v8659
      %v8683 = vadd.f32 %v8654, %v8659
      %v8684 = vld [vmem:[%s536] sm:$0xff]
      %v8685 = vld [vmem:[%s536 + $0x8] sm:$0xff]
      %v8686 = vadd.f32 %v8682, %v8684
      %v8687 = vadd.f32 %v8683, %v8685
      %v8688 = vmax.f32 %v8686, 0.0
      %v8689 = vmax.f32 %v8687, 0.0
      %s8690 = scalar_lea.vmem %s278, 32
      %8691 = vst [vmem:[%s8690] sm:$0xff] %v8688
      %8692 = vst [vmem:[%s8690 + $0x8] sm:$0xff] %v8689
      %s8693 = smul.u32 3, %s17
      %p8694 = scmp.lt.s32.totalorder %s8693, 5
      %s8695 = scalar_select %p8694, %s8693, 5
      %s8696 = smul.addr %s8695, 2
      %s8697 = smul.addr %s8696, 8
      %s8698 = scalar_lea.vmem %s6, %s8697
      // Predicated region
      $region45: #{hamburger_v1_forward.1} parent=43 // pred_check
        %p8699 = pneg %p171
      $region46: #{hamburger_v1_forward.1} parent=43 // pred_check_branch
        %8701 = sbr.rel (%p8699) target = $region48
      $region47: #{hamburger_v1_forward.1} parent=43 // pred_region
        %s8702 = smul.u32 3, %s17
      $region48: #{hamburger_v1_forward.1} parent=43 // pred_fallthru
        _
    $region44: #{hamburger_v1_forward.1} parent=5 // pred_fallthru
      _
    %p8703 = scmp.le.s32.totalorder 2, %s12
    // Predicated region
    $region49: #{hamburger_v1_forward.1} parent=5 // pred_check
      %p8704 = pneg %p8703
    $region50: #{hamburger_v1_forward.1} parent=5 // pred_check_branch
      %8706 = sbr.rel (%p8704) target = $region52
    $region51: #{hamburger_v1_forward.1} parent=5 // pred_region
      %s8707 = ssub.s32 %s12, 2
      // Predicated region
      $region53: #{hamburger_v1_forward.1} parent=51 // pred_check
        %p8708 = pneg %p177
      $region54: #{hamburger_v1_forward.1} parent=51 // pred_check_branch
        %8710 = sbr.rel (%p8708) target = $region56
      $region55: #{hamburger_v1_forward.1} parent=51 // pred_region
        %s8711 = smul.u32 3, %s18
        %p8712 = scmp.lt.s32.totalorder %s8711, 5
        %s8713 = scalar_select %p8712, %s8711, 5
        %s8714 = smul.addr %s8713, 2
        %s8715 = smul.addr %s8714, 8
        %s8716 = scalar_lea.vmem %s6, %s8715
      $region56: #{hamburger_v1_forward.1} parent=51 // pred_fallthru
        _
    $region52: #{hamburger_v1_forward.1} parent=5 // pred_fallthru
      _
  $region6: #{hamburger_v1_forward.1} parent=0 // loop_footer
    %s16 = sadd.s32 1, %s12
  $region7: #{hamburger_v1_forward.1} parent=0 // loop_footer_branch
    %11 = sbr.rel target = $region3
  $region8: #{hamburger_v1_forward.1} parent=0 // loop_exit
    _

</llo_original>
